<compile_context>
chip_gen: v7x
topology: tpu7x:2x2x1
jax: 0.10.0
libtpu: 0.0.40
codegen_flags: <defaults>
</compile_context>

<pallas_src>
import functools
import math

import jax
import jax.numpy as jnp
from jax.experimental import pallas as pl
from jax.experimental.pallas import tpu as pltpu

LRELU_SLOPE = 0.01  # nn.LeakyReLU() default negative_slope


def _round_up(x, m):
    return (x + m - 1) // m * m


def _lrelu(x):
    return jnp.where(x >= 0, x, LRELU_SLOPE * x)


# ----------------------------- Pallas kernels -------------------------------

def _make_branch_kernel(H, W, Cp_out):
    """Kernel A: shared dx-concat input ->
         left  branch: conv_l1 -> 2x2 avg-pool           (out_res, f32)
         right branch: lrelu -> conv_r1 -> lrelu         (h, bf16)
    """
    HW = H * W

    def kernel(xs_ref, wl_ref, wr_ref, pool_ref, out_res_ref, h_ref):
        # ---- left branch: conv_l1 over the 3 kernel rows (K = 3*Cp_in) ----
        acc_l = jnp.zeros((HW, Cp_out), jnp.float32)
        for dy in range(3):
            a = xs_ref[0, dy * W:dy * W + HW, :]          # (HW, 3*Cp_in) bf16
            acc_l = acc_l + jnp.dot(a, wl_ref[dy],
                                    preferred_element_type=jnp.float32)
        # 2x2 avg pool as a small bf16 matmul (0.25 entries), f32 accumulation.
        out_res_ref[0] = jnp.dot(pool_ref[...], acc_l.astype(jnp.bfloat16),
                                 preferred_element_type=jnp.float32)

        # ---- right branch: pre-lrelu -> conv_r1 -> post-lrelu ----
        acc_r = jnp.zeros((HW, Cp_out), jnp.float32)
        for dy in range(3):
            a = xs_ref[0, dy * W:dy * W + HW, :]
            a = _lrelu(a)                                 # once per dy slab
            acc_r = acc_r + jnp.dot(a, wr_ref[dy],
                                    preferred_element_type=jnp.float32)
        h_ref[0] = _lrelu(acc_r).astype(jnp.bfloat16)

    return kernel


def _make_out_kernel(H, W, Cp_out):
    """Kernel B: conv_r2 -> 2x2 avg-pool -> + residual (left-branch output)."""
    HW = H * W

    def kernel(hs_ref, w_ref, pool_ref, res_ref, out_ref):
        acc = jnp.zeros((HW, Cp_out), jnp.float32)
        for dy in range(3):
            a = hs_ref[0, dy * W:dy * W + HW, :]          # (HW, 3*Cp_out) bf16
            acc = acc + jnp.dot(a, w_ref[dy],
                                preferred_element_type=jnp.float32)
        pooled = jnp.dot(pool_ref[...], acc.astype(jnp.bfloat16),
                         preferred_element_type=jnp.float32)
        out_ref[0] = pooled + res_ref[0]

    return kernel


# --------------------------- pallas_call wrappers ----------------------------

_COMPILER_PARAMS = pltpu.CompilerParams(
    dimension_semantics=("parallel",),          # batch axis -> megacore sharding
    vmem_limit_bytes=32 * 1024 * 1024)


def _branch_call(xs, w_l, w_r, pool_mat, *, H, W):
    B, HpW, K3 = xs.shape
    Cp_out = w_l.shape[-1]
    HW, HW4 = H * W, (H // 2) * (W // 2)

    flops = 2 * 2 * B * HW * (3 * K3) * Cp_out + 2 * B * HW4 * HW * Cp_out
    bytes_accessed = int(xs.size * 2 + w_l.size * 2 + w_r.size * 2
                         + pool_mat.size * 2
                         + B * HW4 * Cp_out * 4 + B * HW * Cp_out * 2)

    out_res, h = pl.pallas_call(
        _make_branch_kernel(H, W, Cp_out),
        grid=(B,),
        in_specs=[
            pl.BlockSpec((1, HpW, K3), lambda b: (b, 0, 0)),
            pl.BlockSpec((3, K3, Cp_out), lambda b: (0, 0, 0)),
            pl.BlockSpec((3, K3, Cp_out), lambda b: (0, 0, 0)),
            pl.BlockSpec((HW4, HW), lambda b: (0, 0)),
        ],
        out_specs=(
            pl.BlockSpec((1, HW4, Cp_out), lambda b: (b, 0, 0)),
            pl.BlockSpec((1, HW, Cp_out), lambda b: (b, 0, 0)),
        ),
        out_shape=(
            jax.ShapeDtypeStruct((B, HW4, Cp_out), jnp.float32),
            jax.ShapeDtypeStruct((B, HW, Cp_out), jnp.bfloat16),
        ),
        compiler_params=_COMPILER_PARAMS,
        cost_estimate=pl.CostEstimate(flops=flops, transcendentals=0,
                                      bytes_accessed=bytes_accessed),
    )(xs, w_l, w_r, pool_mat)
    return out_res, h


def _out_call(hs, w_r2, pool_mat, out_res, *, H, W):
    B, HpW, K3 = hs.shape
    Cp_out = w_r2.shape[-1]
    HW, HW4 = H * W, (H // 2) * (W // 2)

    flops = 2 * B * HW * (3 * K3) * Cp_out + 2 * B * HW4 * HW * Cp_out
    bytes_accessed = int(hs.size * 2 + w_r2.size * 2 + pool_mat.size * 2
                         + out_res.size * 4 + B * HW4 * Cp_out * 4)

    return pl.pallas_call(
        _make_out_kernel(H, W, Cp_out),
        grid=(B,),
        in_specs=[
            pl.BlockSpec((1, HpW, K3), lambda b: (b, 0, 0)),
            pl.BlockSpec((3, K3, Cp_out), lambda b: (0, 0, 0)),
            pl.BlockSpec((HW4, HW), lambda b: (0, 0)),
            pl.BlockSpec((1, HW4, Cp_out), lambda b: (b, 0, 0)),
        ],
        out_specs=pl.BlockSpec((1, HW4, Cp_out), lambda b: (b, 0, 0)),
        out_shape=jax.ShapeDtypeStruct((B, HW4, Cp_out), jnp.float32),
        compiler_params=_COMPILER_PARAMS,
        cost_estimate=pl.CostEstimate(flops=flops, transcendentals=0,
                                      bytes_accessed=bytes_accessed),
    )(hs, w_r2, pool_mat, out_res)


# ------------------------------ JAX glue ------------------------------------

def _dx_concat(x_nhwc):
    """(B, H, W, Cp) -> (B, (H+2)*W, 3*Cp).

    Zero-pad by 1 in H and W, concatenate the 3 dx (kernel-column) taps on the
    lane (channel) axis, and flatten (H+2, W) onto the sublane axis.  The conv
    kernels then read the tap for kernel-row dy by slicing rows
    [dy*W, dy*W + H*W) -- a cheap, aligned sublane slice -- and contract over
    K = 3*Cp in a single MXU matmul per dy.
    """
    B, H, W, C = x_nhwc.shape
    xp = jnp.pad(x_nhwc, ((0, 0), (1, 1), (1, 1), (0, 0)))
    xs = jnp.concatenate([xp[:, :, dx:dx + W, :] for dx in range(3)], axis=-1)
    return xs.reshape(B, (H + 2) * W, 3 * C)


def _pool_matrix(H, W, dtype=jnp.bfloat16):
    """(H*W/4, H*W) matrix with 0.25 where a pixel belongs to a 2x2 pool cell."""
    HW, HW4 = H * W, (H // 2) * (W // 2)
    r = jnp.arange(HW)
    cell = (r // W // 2) * (W // 2) + (r % W) // 2
    k = jnp.arange(HW4)
    return ((cell[None, :] == k[:, None]).astype(jnp.float32) * 0.25).astype(dtype)


def res_block_down(params, x_nchw, *, out_channel):
    """Forward pass of ResBlockDown.  x in PyTorch NCHW layout, float32."""
    w_l1, w_r1, w_r2 = params["w_l1"], params["w_r1"], params["w_r2"]
    pool_mat = params["pool_mat"]
    B, Cin, H, W = x_nchw.shape
    assert H % 2 == 0 and W % 2 == 0 and W % 8 == 0
    Cp_in = w_l1.shape[1] // 3
    Cp_out = w_l1.shape[2]

    # NCHW -> NHWC (channels on the 128-lane axis), channel-pad, cast to bf16.
    x = jnp.transpose(x_nchw, (0, 2, 3, 1))
    x = jnp.pad(x, ((0, 0), (0, 0), (0, 0), (0, Cp_in - Cin))).astype(jnp.bfloat16)
    xs = _dx_concat(x)                                   # (B, (H+2)*W, 3*Cp_in)

    # Kernel A: left branch (conv_l1 + pool) and right branch (lrelu->conv_r1->lrelu)
    # fused in one pallas_call sharing the single dx-concatenated input block.
    out_res, h = _branch_call(xs, w_l1, w_r1, pool_mat, H=H, W=W)

    # TODO(synk): emit `hs` directly from kernel A (in-kernel W shifts) to drop
    # this XLA pad/concat round-trip of the intermediate activation.
    hs = _dx_concat(h.reshape(B, H, W, Cp_out))          # (B, (H+2)*W, 3*Cp_out)

    # Kernel B: conv_r2 -> avg-pool -> + out_res
    out = _out_call(hs, w_r2, pool_mat, out_res, H=H, W=W)

    out = out.reshape(B, H // 2, W // 2, Cp_out)[..., :out_channel]
    return jnp.transpose(out, (0, 3, 1, 2))              # back to NCHW


# --------------------------- parameter setup --------------------------------

def _spectral_normalize(w, key, n_iter=5):
    out_c = w.shape[0]
    wm = w.reshape(out_c, -1)
    u = jax.random.normal(key, (out_c,), jnp.float32)
    u = u / (jnp.linalg.norm(u) + 1e-12)
    v = None
    for _ in range(n_iter):
        v = wm.T @ u
        v = v / (jnp.linalg.norm(v) + 1e-12)
        u = wm @ v
        u = u / (jnp.linalg.norm(u) + 1e-12)
    sigma = u @ (wm @ v)
    return w / sigma


def _pack_weight(w_oihw, cp_in, cp_out):
    """OIHW f32 -> (kh, 3*Cp_in, Cp_out) bf16 K-concat layout (done once at init)."""
    cout, cin, _, _ = w_oihw.shape
    w = jnp.transpose(w_oihw, (2, 3, 1, 0))              # (kh, kw, Cin, Cout)
    w = jnp.pad(w, ((0, 0), (0, 0), (0, cp_in - cin), (0, cp_out - cout)))
    # Row index of the K axis = dx * Cp_in + cin, matching the input lane concat.
    return w.reshape(3, 3 * cp_in, cp_out).astype(jnp.bfloat16)


def init_res_block_down(key, in_channel, out_channel, H, W):
    cp_in = _round_up(in_channel, 128)
    cp_out = _round_up(out_channel, 128)
    ks = jax.random.split(key, 6)

    def sn_conv(w_key, u_key, oc, ic):
        fan_in = ic * 9
        w = jax.random.normal(w_key, (oc, ic, 3, 3), jnp.float32) / math.sqrt(fan_in)
        return _spectral_normalize(w, u_key)

    w_l1 = sn_conv(ks[0], ks[1], out_channel, in_channel)
    w_r1 = sn_conv(ks[2], ks[3], out_channel, in_channel)
    w_r2 = sn_conv(ks[4], ks[5], out_channel, out_channel)

    params = {
        "w_l1": _pack_weight(w_l1, cp_in, cp_out),
        "w_r1": _pack_weight(w_r1, cp_in, cp_out),
        "w_r2": _pack_weight(w_r2, cp_out, cp_out),
        "pool_mat": _pool_matrix(H, W),                  # bf16, built once
    }
    ref_weights = {"w_l1": w_l1, "w_r1": w_r1, "w_r2": w_r2}
    return params, ref_weights


# ----------------------- pure-JAX reference (NCHW) --------------------------

def reference_forward(w_l1, w_r1, w_r2, x_nchw):
    dn = ("NCHW", "OIHW", "NCHW")

    def conv(x, w):
        return jax.lax.conv_general_dilated(
            x, w, window_strides=(1, 1), padding=((1, 1), (1, 1)),
            dimension_numbers=dn)

    def pool(x):
        b, c, h, w = x.shape
        return x.reshape(b, c, h // 2, 2, w // 2, 2).mean(axis=(3, 5))

    out_res = pool(conv(x_nchw, w_l1))
    out = _lrelu(x_nchw)
    out = conv(out, w_r1)
    out = _lrelu(out)
    out = conv(out, w_r2)
    out = pool(out)
    return out_res + out


# --------------------------------- main --------------------------------------

if __name__ == "__main__":
    key = jax.random.PRNGKey(0)
    kx, kp = jax.random.split(key)

    B, IN_C, OUT_C, H, W = 2, 32, 64, 16, 16
    x = jax.random.normal(kx, (B, IN_C, H, W), jnp.float32)     # PyTorch NCHW input
    params, ref_w = init_res_block_down(kp, IN_C, OUT_C, H, W)

    fwd = jax.jit(functools.partial(res_block_down, out_channel=OUT_C))
    out = fwd(params, x)
    jax.block_until_ready(out)

    assert out.shape == (B, OUT_C, H // 2, W // 2)
    assert bool(jnp.all(jnp.isfinite(out)))

    ref = reference_forward(ref_w["w_l1"], ref_w["w_r1"], ref_w["w_r2"], x)
    rel_err = float(jnp.linalg.norm(out - ref) / (jnp.linalg.norm(ref) + 1e-12))
    assert rel_err < 2e-2, f"relative error too large: {rel_err:.4f}"

    print("KERNEL_OK")
</pallas_src>

<mosaic_0001>
module attributes {stable_mosaic.version = 11 : i64} {
  func.func @kernel(%arg0: i32, %arg1: memref<1x288x384xbf16, #tpu.memory_space<vmem>>, %arg2: memref<3x384x128xbf16, #tpu.memory_space<vmem>>, %arg3: memref<3x384x128xbf16, #tpu.memory_space<vmem>>, %arg4: memref<64x256xbf16, #tpu.memory_space<vmem>>, %arg5: memref<1x64x128xf32, #tpu.memory_space<vmem>>, %arg6: memref<1x256x128xbf16, #tpu.memory_space<vmem>>) attributes {dimension_semantics = [#tpu.dimension_semantics<parallel>], iteration_bounds = array<i64: 2>, scalar_prefetch = 0 : i64, scratch_operands = 0 : i64, tpu.core_type = #tpu.core_type<tc>, window_params = [{transform_indices = @transform_0, window_bounds = array<i64: 1, 288, 384>}, {pipeline_mode = #tpu.pipeline_mode<synchronous>, transform_indices = @transform_1, window_bounds = array<i64: 3, 384, 128>}, {pipeline_mode = #tpu.pipeline_mode<synchronous>, transform_indices = @transform_2, window_bounds = array<i64: 3, 384, 128>}, {pipeline_mode = #tpu.pipeline_mode<synchronous>, transform_indices = @transform_3, window_bounds = array<i64: 64, 256>}, {transform_indices = @transform_4, window_bounds = array<i64: 1, 64, 128>}, {transform_indices = @transform_5, window_bounds = array<i64: 1, 256, 128>}]} {
    %cst = arith.constant 0.000000e+00 : f32
    %0 = vector.broadcast %cst : f32 to vector<256x128xf32>
    %c0 = arith.constant 0 : index
    %c0_0 = arith.constant 0 : index
    %c0_1 = arith.constant 0 : index
    %1 = vector.load %arg1[%c0, %c0_0, %c0_1] : memref<1x288x384xbf16, #tpu.memory_space<vmem>>, vector<1x256x384xbf16>
    %2 = vector.shape_cast %1 : vector<1x256x384xbf16> to vector<256x384xbf16>
    %c0_2 = arith.constant 0 : index
    %c0_3 = arith.constant 0 : index
    %c0_4 = arith.constant 0 : index
    %3 = vector.load %arg2[%c0_2, %c0_3, %c0_4] : memref<3x384x128xbf16, #tpu.memory_space<vmem>>, vector<1x384x128xbf16>
    %4 = vector.shape_cast %3 : vector<1x384x128xbf16> to vector<384x128xbf16>
    %cst_5 = arith.constant dense<0.000000e+00> : vector<256x128xf32>
    %5 = tpu.matmul %2, %4, %cst_5 {dimension_numbers = #tpu.dot_dimension_numbers<[1], [0], [0], [1], [0, 0, 1, 1], [], []>} : vector<256x384xbf16>, vector<384x128xbf16>, vector<256x128xf32> -> vector<256x128xf32>
    %6 = arith.addf %0, %5 : vector<256x128xf32>
    %c0_6 = arith.constant 0 : index
    %c16 = arith.constant 16 : index
    %c0_7 = arith.constant 0 : index
    %7 = vector.load %arg1[%c0_6, %c16, %c0_7] : memref<1x288x384xbf16, #tpu.memory_space<vmem>>, vector<1x256x384xbf16>
    %8 = vector.shape_cast %7 : vector<1x256x384xbf16> to vector<256x384xbf16>
    %c1 = arith.constant 1 : index
    %c0_8 = arith.constant 0 : index
    %c0_9 = arith.constant 0 : index
    %9 = vector.load %arg2[%c1, %c0_8, %c0_9] : memref<3x384x128xbf16, #tpu.memory_space<vmem>>, vector<1x384x128xbf16>
    %10 = vector.shape_cast %9 : vector<1x384x128xbf16> to vector<384x128xbf16>
    %cst_10 = arith.constant dense<0.000000e+00> : vector<256x128xf32>
    %11 = tpu.matmul %8, %10, %cst_10 {dimension_numbers = #tpu.dot_dimension_numbers<[1], [0], [0], [1], [0, 0, 1, 1], [], []>} : vector<256x384xbf16>, vector<384x128xbf16>, vector<256x128xf32> -> vector<256x128xf32>
    %12 = arith.addf %6, %11 : vector<256x128xf32>
    %c0_11 = arith.constant 0 : index
    %c32 = arith.constant 32 : index
    %c0_12 = arith.constant 0 : index
    %13 = vector.load %arg1[%c0_11, %c32, %c0_12] : memref<1x288x384xbf16, #tpu.memory_space<vmem>>, vector<1x256x384xbf16>
    %14 = vector.shape_cast %13 : vector<1x256x384xbf16> to vector<256x384xbf16>
    %c2 = arith.constant 2 : index
    %c0_13 = arith.constant 0 : index
    %c0_14 = arith.constant 0 : index
    %15 = vector.load %arg2[%c2, %c0_13, %c0_14] : memref<3x384x128xbf16, #tpu.memory_space<vmem>>, vector<1x384x128xbf16>
    %16 = vector.shape_cast %15 : vector<1x384x128xbf16> to vector<384x128xbf16>
    %cst_15 = arith.constant dense<0.000000e+00> : vector<256x128xf32>
    %17 = tpu.matmul %14, %16, %cst_15 {dimension_numbers = #tpu.dot_dimension_numbers<[1], [0], [0], [1], [0, 0, 1, 1], [], []>} : vector<256x384xbf16>, vector<384x128xbf16>, vector<256x128xf32> -> vector<256x128xf32>
    %18 = arith.addf %12, %17 : vector<256x128xf32>
    %c0_16 = arith.constant 0 : index
    %c0_17 = arith.constant 0 : index
    %19 = vector.load %arg4[%c0_16, %c0_17] : memref<64x256xbf16, #tpu.memory_space<vmem>>, vector<64x256xbf16>
    %20 = arith.truncf %18 : vector<256x128xf32> to vector<256x128xbf16>
    %cst_18 = arith.constant dense<0.000000e+00> : vector<64x128xf32>
    %21 = tpu.matmul %19, %20, %cst_18 {dimension_numbers = #tpu.dot_dimension_numbers<[1], [0], [0], [1], [0, 0, 1, 1], [], []>} : vector<64x256xbf16>, vector<256x128xbf16>, vector<64x128xf32> -> vector<64x128xf32>
    %c0_19 = arith.constant 0 : index
    %c0_20 = arith.constant 0 : index
    %c0_21 = arith.constant 0 : index
    %22 = vector.load %arg5[%c0_19, %c0_20, %c0_21] : memref<1x64x128xf32, #tpu.memory_space<vmem>>, vector<1x64x128xf32>
    %23 = vector.shape_cast %22 : vector<1x64x128xf32> to vector<64x128xf32>
    %24 = vector.shape_cast %21 : vector<64x128xf32> to vector<1x64x128xf32>
    tpu.vector_store %arg5[%c0_19, %c0_20, %c0_21], %24 {strides = array<i32>} : memref<1x64x128xf32, #tpu.memory_space<vmem>>, vector<1x64x128xf32>,
    %cst_22 = arith.constant 0.000000e+00 : f32
    %25 = vector.broadcast %cst_22 : f32 to vector<256x128xf32>
    %c0_23 = arith.constant 0 : index
    %c0_24 = arith.constant 0 : index
    %c0_25 = arith.constant 0 : index
    %26 = vector.load %arg1[%c0_23, %c0_24, %c0_25] : memref<1x288x384xbf16, #tpu.memory_space<vmem>>, vector<1x256x384xbf16>
    %27 = vector.shape_cast %26 : vector<1x256x384xbf16> to vector<256x384xbf16>
    %cst_26 = arith.constant 0.000000e+00 : bf16
    %28 = vector.broadcast %cst_26 : bf16 to vector<256x384xbf16>
    %29 = arith.cmpf oge, %27, %28 : vector<256x384xbf16>
    %cst_27 = arith.constant 1.000980e-02 : bf16
    %30 = vector.broadcast %cst_27 : bf16 to vector<256x384xbf16>
    %31 = arith.mulf %30, %27 : vector<256x384xbf16>
    %32 = arith.select %29, %27, %31 : vector<256x384xi1>, vector<256x384xbf16>
    %c0_28 = arith.constant 0 : index
    %c0_29 = arith.constant 0 : index
    %c0_30 = arith.constant 0 : index
    %33 = vector.load %arg3[%c0_28, %c0_29, %c0_30] : memref<3x384x128xbf16, #tpu.memory_space<vmem>>, vector<1x384x128xbf16>
    %34 = vector.shape_cast %33 : vector<1x384x128xbf16> to vector<384x128xbf16>
    %cst_31 = arith.constant dense<0.000000e+00> : vector<256x128xf32>
    %35 = tpu.matmul %32, %34, %cst_31 {dimension_numbers = #tpu.dot_dimension_numbers<[1], [0], [0], [1], [0, 0, 1, 1], [], []>} : vector<256x384xbf16>, vector<384x128xbf16>, vector<256x128xf32> -> vector<256x128xf32>
    %36 = arith.addf %25, %35 : vector<256x128xf32>
    %c0_32 = arith.constant 0 : index
    %c16_33 = arith.constant 16 : index
    %c0_34 = arith.constant 0 : index
    %37 = vector.load %arg1[%c0_32, %c16_33, %c0_34] : memref<1x288x384xbf16, #tpu.memory_space<vmem>>, vector<1x256x384xbf16>
    %38 = vector.shape_cast %37 : vector<1x256x384xbf16> to vector<256x384xbf16>
    %cst_35 = arith.constant 0.000000e+00 : bf16
    %39 = vector.broadcast %cst_35 : bf16 to vector<256x384xbf16>
    %40 = arith.cmpf oge, %38, %39 : vector<256x384xbf16>
    %cst_36 = arith.constant 1.000980e-02 : bf16
    %41 = vector.broadcast %cst_36 : bf16 to vector<256x384xbf16>
    %42 = arith.mulf %41, %38 : vector<256x384xbf16>
    %43 = arith.select %40, %38, %42 : vector<256x384xi1>, vector<256x384xbf16>
    %c1_37 = arith.constant 1 : index
    %c0_38 = arith.constant 0 : index
    %c0_39 = arith.constant 0 : index
    %44 = vector.load %arg3[%c1_37, %c0_38, %c0_39] : memref<3x384x128xbf16, #tpu.memory_space<vmem>>, vector<1x384x128xbf16>
    %45 = vector.shape_cast %44 : vector<1x384x128xbf16> to vector<384x128xbf16>
    %cst_40 = arith.constant dense<0.000000e+00> : vector<256x128xf32>
    %46 = tpu.matmul %43, %45, %cst_40 {dimension_numbers = #tpu.dot_dimension_numbers<[1], [0], [0], [1], [0, 0, 1, 1], [], []>} : vector<256x384xbf16>, vector<384x128xbf16>, vector<256x128xf32> -> vector<256x128xf32>
    %47 = arith.addf %36, %46 : vector<256x128xf32>
    %c0_41 = arith.constant 0 : index
    %c32_42 = arith.constant 32 : index
    %c0_43 = arith.constant 0 : index
    %48 = vector.load %arg1[%c0_41, %c32_42, %c0_43] : memref<1x288x384xbf16, #tpu.memory_space<vmem>>, vector<1x256x384xbf16>
    %49 = vector.shape_cast %48 : vector<1x256x384xbf16> to vector<256x384xbf16>
    %cst_44 = arith.constant 0.000000e+00 : bf16
    %50 = vector.broadcast %cst_44 : bf16 to vector<256x384xbf16>
    %51 = arith.cmpf oge, %49, %50 : vector<256x384xbf16>
    %cst_45 = arith.constant 1.000980e-02 : bf16
    %52 = vector.broadcast %cst_45 : bf16 to vector<256x384xbf16>
    %53 = arith.mulf %52, %49 : vector<256x384xbf16>
    %54 = arith.select %51, %49, %53 : vector<256x384xi1>, vector<256x384xbf16>
    %c2_46 = arith.constant 2 : index
    %c0_47 = arith.constant 0 : index
    %c0_48 = arith.constant 0 : index
    %55 = vector.load %arg3[%c2_46, %c0_47, %c0_48] : memref<3x384x128xbf16, #tpu.memory_space<vmem>>, vector<1x384x128xbf16>
    %56 = vector.shape_cast %55 : vector<1x384x128xbf16> to vector<384x128xbf16>
    %cst_49 = arith.constant dense<0.000000e+00> : vector<256x128xf32>
    %57 = tpu.matmul %54, %56, %cst_49 {dimension_numbers = #tpu.dot_dimension_numbers<[1], [0], [0], [1], [0, 0, 1, 1], [], []>} : vector<256x384xbf16>, vector<384x128xbf16>, vector<256x128xf32> -> vector<256x128xf32>
    %58 = arith.addf %47, %57 : vector<256x128xf32>
    %cst_50 = arith.constant 0.000000e+00 : f32
    %59 = vector.broadcast %cst_50 : f32 to vector<256x128xf32>
    %60 = arith.cmpf oge, %58, %59 : vector<256x128xf32>
    %cst_51 = arith.constant 0.00999999977 : f32
    %61 = vector.broadcast %cst_51 : f32 to vector<256x128xf32>
    %62 = arith.mulf %61, %58 : vector<256x128xf32>
    %63 = arith.select %60, %58, %62 : vector<256x128xi1>, vector<256x128xf32>
    %64 = arith.truncf %63 : vector<256x128xf32> to vector<256x128xbf16>
    %c0_52 = arith.constant 0 : index
    %c0_53 = arith.constant 0 : index
    %c0_54 = arith.constant 0 : index
    %65 = vector.load %arg6[%c0_52, %c0_53, %c0_54] : memref<1x256x128xbf16, #tpu.memory_space<vmem>>, vector<1x256x128xbf16>
    %66 = vector.shape_cast %65 : vector<1x256x128xbf16> to vector<256x128xbf16>
    %67 = vector.shape_cast %64 : vector<256x128xbf16> to vector<1x256x128xbf16>
    tpu.vector_store %arg6[%c0_52, %c0_53, %c0_54], %67 {strides = array<i32>} : memref<1x256x128xbf16, #tpu.memory_space<vmem>>, vector<1x256x128xbf16>,
    return
  }
  func.func @transform_0(%arg0: i32) -> (i32, i32, i32) {
    %c0_i32 = arith.constant 0 : i32
    %c0_i32_0 = arith.constant 0 : i32
    %c0_i32_1 = arith.constant 0 : i32
    return %arg0, %c0_i32, %c0_i32_0 : i32, i32, i32
  }
  func.func @transform_1(%arg0: i32) -> (i32, i32, i32) {
    %c0_i32 = arith.constant 0 : i32
    %c0_i32_0 = arith.constant 0 : i32
    %c0_i32_1 = arith.constant 0 : i32
    %c0_i32_2 = arith.constant 0 : i32
    return %c0_i32, %c0_i32_0, %c0_i32_1 : i32, i32, i32
  }
  func.func @transform_2(%arg0: i32) -> (i32, i32, i32) {
    %c0_i32 = arith.constant 0 : i32
    %c0_i32_0 = arith.constant 0 : i32
    %c0_i32_1 = arith.constant 0 : i32
    %c0_i32_2 = arith.constant 0 : i32
    return %c0_i32, %c0_i32_0, %c0_i32_1 : i32, i32, i32
  }
  func.func @transform_3(%arg0: i32) -> (i32, i32) {
    %c0_i32 = arith.constant 0 : i32
    %c0_i32_0 = arith.constant 0 : i32
    %c0_i32_1 = arith.constant 0 : i32
    return %c0_i32, %c0_i32_0 : i32, i32
  }
  func.func @transform_4(%arg0: i32) -> (i32, i32, i32) {
    %c0_i32 = arith.constant 0 : i32
    %c0_i32_0 = arith.constant 0 : i32
    %c0_i32_1 = arith.constant 0 : i32
    return %arg0, %c0_i32, %c0_i32_0 : i32, i32, i32
  }
  func.func @transform_5(%arg0: i32) -> (i32, i32, i32) {
    %c0_i32 = arith.constant 0 : i32
    %c0_i32_0 = arith.constant 0 : i32
    %c0_i32_1 = arith.constant 0 : i32
    return %arg0, %c0_i32, %c0_i32_0 : i32, i32, i32
  }
}

module attributes {stable_mosaic.version = 11 : i64} {
  func.func @kernel(%arg0: i32, %arg1: memref<1x288x384xbf16, #tpu.memory_space<vmem>>, %arg2: memref<3x384x128xbf16, #tpu.memory_space<vmem>>, %arg3: memref<64x256xbf16, #tpu.memory_space<vmem>>, %arg4: memref<1x64x128xf32, #tpu.memory_space<vmem>>, %arg5: memref<1x64x128xf32, #tpu.memory_space<vmem>>) attributes {dimension_semantics = [#tpu.dimension_semantics<parallel>], iteration_bounds = array<i64: 2>, scalar_prefetch = 0 : i64, scratch_operands = 0 : i64, tpu.core_type = #tpu.core_type<tc>, window_params = [{transform_indices = @transform_0, window_bounds = array<i64: 1, 288, 384>}, {pipeline_mode = #tpu.pipeline_mode<synchronous>, transform_indices = @transform_1, window_bounds = array<i64: 3, 384, 128>}, {pipeline_mode = #tpu.pipeline_mode<synchronous>, transform_indices = @transform_2, window_bounds = array<i64: 64, 256>}, {transform_indices = @transform_3, window_bounds = array<i64: 1, 64, 128>}, {transform_indices = @transform_4, window_bounds = array<i64: 1, 64, 128>}]} {
    %cst = arith.constant 0.000000e+00 : f32
    %0 = vector.broadcast %cst : f32 to vector<256x128xf32>
    %c0 = arith.constant 0 : index
    %c0_0 = arith.constant 0 : index
    %c0_1 = arith.constant 0 : index
    %1 = vector.load %arg1[%c0, %c0_0, %c0_1] : memref<1x288x384xbf16, #tpu.memory_space<vmem>>, vector<1x256x384xbf16>
    %2 = vector.shape_cast %1 : vector<1x256x384xbf16> to vector<256x384xbf16>
    %c0_2 = arith.constant 0 : index
    %c0_3 = arith.constant 0 : index
    %c0_4 = arith.constant 0 : index
    %3 = vector.load %arg2[%c0_2, %c0_3, %c0_4] : memref<3x384x128xbf16, #tpu.memory_space<vmem>>, vector<1x384x128xbf16>
    %4 = vector.shape_cast %3 : vector<1x384x128xbf16> to vector<384x128xbf16>
    %cst_5 = arith.constant dense<0.000000e+00> : vector<256x128xf32>
    %5 = tpu.matmul %2, %4, %cst_5 {dimension_numbers = #tpu.dot_dimension_numbers<[1], [0], [0], [1], [0, 0, 1, 1], [], []>} : vector<256x384xbf16>, vector<384x128xbf16>, vector<256x128xf32> -> vector<256x128xf32>
    %6 = arith.addf %0, %5 : vector<256x128xf32>
    %c0_6 = arith.constant 0 : index
    %c16 = arith.constant 16 : index
    %c0_7 = arith.constant 0 : index
    %7 = vector.load %arg1[%c0_6, %c16, %c0_7] : memref<1x288x384xbf16, #tpu.memory_space<vmem>>, vector<1x256x384xbf16>
    %8 = vector.shape_cast %7 : vector<1x256x384xbf16> to vector<256x384xbf16>
    %c1 = arith.constant 1 : index
    %c0_8 = arith.constant 0 : index
    %c0_9 = arith.constant 0 : index
    %9 = vector.load %arg2[%c1, %c0_8, %c0_9] : memref<3x384x128xbf16, #tpu.memory_space<vmem>>, vector<1x384x128xbf16>
    %10 = vector.shape_cast %9 : vector<1x384x128xbf16> to vector<384x128xbf16>
    %cst_10 = arith.constant dense<0.000000e+00> : vector<256x128xf32>
    %11 = tpu.matmul %8, %10, %cst_10 {dimension_numbers = #tpu.dot_dimension_numbers<[1], [0], [0], [1], [0, 0, 1, 1], [], []>} : vector<256x384xbf16>, vector<384x128xbf16>, vector<256x128xf32> -> vector<256x128xf32>
    %12 = arith.addf %6, %11 : vector<256x128xf32>
    %c0_11 = arith.constant 0 : index
    %c32 = arith.constant 32 : index
    %c0_12 = arith.constant 0 : index
    %13 = vector.load %arg1[%c0_11, %c32, %c0_12] : memref<1x288x384xbf16, #tpu.memory_space<vmem>>, vector<1x256x384xbf16>
    %14 = vector.shape_cast %13 : vector<1x256x384xbf16> to vector<256x384xbf16>
    %c2 = arith.constant 2 : index
    %c0_13 = arith.constant 0 : index
    %c0_14 = arith.constant 0 : index
    %15 = vector.load %arg2[%c2, %c0_13, %c0_14] : memref<3x384x128xbf16, #tpu.memory_space<vmem>>, vector<1x384x128xbf16>
    %16 = vector.shape_cast %15 : vector<1x384x128xbf16> to vector<384x128xbf16>
    %cst_15 = arith.constant dense<0.000000e+00> : vector<256x128xf32>
    %17 = tpu.matmul %14, %16, %cst_15 {dimension_numbers = #tpu.dot_dimension_numbers<[1], [0], [0], [1], [0, 0, 1, 1], [], []>} : vector<256x384xbf16>, vector<384x128xbf16>, vector<256x128xf32> -> vector<256x128xf32>
    %18 = arith.addf %12, %17 : vector<256x128xf32>
    %c0_16 = arith.constant 0 : index
    %c0_17 = arith.constant 0 : index
    %19 = vector.load %arg3[%c0_16, %c0_17] : memref<64x256xbf16, #tpu.memory_space<vmem>>, vector<64x256xbf16>
    %20 = arith.truncf %18 : vector<256x128xf32> to vector<256x128xbf16>
    %cst_18 = arith.constant dense<0.000000e+00> : vector<64x128xf32>
    %21 = tpu.matmul %19, %20, %cst_18 {dimension_numbers = #tpu.dot_dimension_numbers<[1], [0], [0], [1], [0, 0, 1, 1], [], []>} : vector<64x256xbf16>, vector<256x128xbf16>, vector<64x128xf32> -> vector<64x128xf32>
    %c0_19 = arith.constant 0 : index
    %c0_20 = arith.constant 0 : index
    %c0_21 = arith.constant 0 : index
    %22 = vector.load %arg4[%c0_19, %c0_20, %c0_21] : memref<1x64x128xf32, #tpu.memory_space<vmem>>, vector<1x64x128xf32>
    %23 = vector.shape_cast %22 : vector<1x64x128xf32> to vector<64x128xf32>
    %24 = arith.addf %21, %23 : vector<64x128xf32>
    %c0_22 = arith.constant 0 : index
    %c0_23 = arith.constant 0 : index
    %c0_24 = arith.constant 0 : index
    %25 = vector.load %arg5[%c0_22, %c0_23, %c0_24] : memref<1x64x128xf32, #tpu.memory_space<vmem>>, vector<1x64x128xf32>
    %26 = vector.shape_cast %25 : vector<1x64x128xf32> to vector<64x128xf32>
    %27 = vector.shape_cast %24 : vector<64x128xf32> to vector<1x64x128xf32>
    tpu.vector_store %arg5[%c0_22, %c0_23, %c0_24], %27 {strides = array<i32>} : memref<1x64x128xf32, #tpu.memory_space<vmem>>, vector<1x64x128xf32>,
    return
  }
  func.func @transform_0(%arg0: i32) -> (i32, i32, i32) {
    %c0_i32 = arith.constant 0 : i32
    %c0_i32_0 = arith.constant 0 : i32
    %c0_i32_1 = arith.constant 0 : i32
    return %arg0, %c0_i32, %c0_i32_0 : i32, i32, i32
  }
  func.func @transform_1(%arg0: i32) -> (i32, i32, i32) {
    %c0_i32 = arith.constant 0 : i32
    %c0_i32_0 = arith.constant 0 : i32
    %c0_i32_1 = arith.constant 0 : i32
    %c0_i32_2 = arith.constant 0 : i32
    return %c0_i32, %c0_i32_0, %c0_i32_1 : i32, i32, i32
  }
  func.func @transform_2(%arg0: i32) -> (i32, i32) {
    %c0_i32 = arith.constant 0 : i32
    %c0_i32_0 = arith.constant 0 : i32
    %c0_i32_1 = arith.constant 0 : i32
    return %c0_i32, %c0_i32_0 : i32, i32
  }
  func.func @transform_3(%arg0: i32) -> (i32, i32, i32) {
    %c0_i32 = arith.constant 0 : i32
    %c0_i32_0 = arith.constant 0 : i32
    %c0_i32_1 = arith.constant 0 : i32
    return %arg0, %c0_i32, %c0_i32_0 : i32, i32, i32
  }
  func.func @transform_4(%arg0: i32) -> (i32, i32, i32) {
    %c0_i32 = arith.constant 0 : i32
    %c0_i32_0 = arith.constant 0 : i32
    %c0_i32_1 = arith.constant 0 : i32
    return %arg0, %c0_i32, %c0_i32_0 : i32, i32, i32
  }
}

</mosaic_0001>

<llo_original>
// kernel: res_block_down.3
$region0: #{res_block_down.3}
  #allocation0 [shape = 'u32[]', space=smem, size = 0x4, offset = 0x4, fixed_abs, tag = 'smem constant byte address 0x4 - core index']
  #allocation1 [shape = 'u32[144,128]{1,0:T(1,128)}', space=vmem, size = 0x12000, scoped, tag = 'internal scratch']
  %s0 = inlined_call_operand.vmem [shape: bf16[2,288,384], index: 0, kind: input, shape index: {}]
  %s1 = inlined_call_operand.vmem [shape: bf16[3,384,128], index: 1, kind: input, shape index: {}]
  %s2 = inlined_call_operand.vmem [shape: bf16[64,256], index: 2, kind: input, shape index: {}]
  %s3 = inlined_call_operand.vmem [shape: f32[2,64,128], index: 3, kind: input, shape index: {}]
  %s4 = inlined_call_operand.vmem [shape: f32[2,64,128], index: 4, kind: output, shape index: {}]
  %s5 = sld [smem:[#allocation0]]
  $region49: #{res_block_down.3} parent=0
    _
  %s7 = ssub.s32 1, %s5
  %s8 = scalar_select 0, %s7, %s5
  loop: start=0, step=1, limit=4
  $region2: #{res_block_down.3} parent=0 // loop_pre_header
    _
  $region3: #{res_block_down.3} parent=0 // loop_header
    %s10 = sphi 0, %s14
    %p11 = scmp.ge.s32.totalorder %s10, 4
    %s20 = sphi 0, %s22
    %s23 = sphi 0, %s20
    %s24 = sphi 0, %s23
    %s40 = sphi 0, %s24
    %s44 = sphi 0, %s44
    %s46 = sphi 0, %s44
    %s47 = sphi 0, %s46
    %s61 = sphi 0, %s47
    %s65 = sphi 0, %s65
    %s67 = sphi 0, %s65
    %s68 = sphi 0, %s67
    %s82 = sphi 0, %s68
    %s88 = sphi 0, %s90
    %s91 = sphi 0, %s88
    %s92 = sphi 0, %s91
    %s108 = sphi 0, %s92
    %s114 = sphi 0, %s116
    %s117 = sphi 0, %s114
    %s118 = sphi 0, %s117
    %s134 = sphi 0, %s118
  $region4: #{res_block_down.3} parent=0 // loop_header_branch
    %13 = sbr.rel (%p11) target = $region8
  $region5: #{res_block_down.3} parent=0 // loop_body
    %s15 = ssub.s32 %s10, 1
    %s16 = ssub.s32 %s10, 2
    %s17 = sadd.s32 %s10, 1
    %s18 = ssub.s32 %s10, %s17
    %p19 = scmp.eq.s32.totalorder %s18, 0
    %s21 = sadd.s32 %s20, 1
    %s22 = scalar_select %p19, %s20, %s21
    %p25 = pneg %p19
    %p26 = scmp.eq.s32.totalorder %s10, 1
    %p27 = por %p25, %p26
    %p28 = scmp.ne.s32.totalorder %s20, %s23
    %p29 = scmp.eq.s32.totalorder %s10, 0
    %p30 = por %p28, %p29
    %p31 = scmp.ne.s32.totalorder %s20, %s23
    %p32 = scmp.eq.s32.totalorder %s15, 1
    %p33 = por %p31, %p32
    %p34 = scmp.ne.s32.totalorder %s23, %s24
    %p35 = scmp.eq.s32.totalorder %s15, 0
    %p36 = por %p34, %p35
    %p37 = scmp.ne.s32.totalorder %s23, %s24
    %p38 = scmp.eq.s32.totalorder %s16, 1
    %p39 = por %p37, %p38
    %p41 = scmp.ne.s32.totalorder %s24, %s40
    %p42 = scmp.eq.s32.totalorder %s16, 0
    %p43 = por %p41, %p42
    %s45 = sadd.s32 %s44, 1
    %p48 = scmp.eq.s32.totalorder %s10, 1
    %p49 = scmp.ne.s32.totalorder %s44, %s46
    %p50 = scmp.eq.s32.totalorder %s10, 0
    %p51 = por %p49, %p50
    %p52 = scmp.ne.s32.totalorder %s44, %s46
    %p53 = scmp.eq.s32.totalorder %s15, 1
    %p54 = por %p52, %p53
    %p55 = scmp.ne.s32.totalorder %s46, %s47
    %p56 = scmp.eq.s32.totalorder %s15, 0
    %p57 = por %p55, %p56
    %p58 = scmp.ne.s32.totalorder %s46, %s47
    %p59 = scmp.eq.s32.totalorder %s16, 1
    %p60 = por %p58, %p59
    %p62 = scmp.ne.s32.totalorder %s47, %s61
    %p63 = scmp.eq.s32.totalorder %s16, 0
    %p64 = por %p62, %p63
    %s66 = sadd.s32 %s65, 1
    %p69 = scmp.eq.s32.totalorder %s10, 1
    %p70 = scmp.ne.s32.totalorder %s65, %s67
    %p71 = scmp.eq.s32.totalorder %s10, 0
    %p72 = por %p70, %p71
    %p73 = scmp.ne.s32.totalorder %s65, %s67
    %p74 = scmp.eq.s32.totalorder %s15, 1
    %p75 = por %p73, %p74
    %p76 = scmp.ne.s32.totalorder %s67, %s68
    %p77 = scmp.eq.s32.totalorder %s15, 0
    %p78 = por %p76, %p77
    %p79 = scmp.ne.s32.totalorder %s67, %s68
    %p80 = scmp.eq.s32.totalorder %s16, 1
    %p81 = por %p79, %p80
    %p83 = scmp.ne.s32.totalorder %s68, %s82
    %p84 = scmp.eq.s32.totalorder %s16, 0
    %p85 = por %p83, %p84
    %s86 = ssub.s32 %s10, %s17
    %p87 = scmp.eq.s32.totalorder %s86, 0
    %s89 = sadd.s32 %s88, 1
    %s90 = scalar_select %p87, %s88, %s89
    %p93 = pneg %p87
    %p94 = scmp.eq.s32.totalorder %s10, 1
    %p95 = por %p93, %p94
    %p96 = scmp.ne.s32.totalorder %s88, %s91
    %p97 = scmp.eq.s32.totalorder %s10, 0
    %p98 = por %p96, %p97
    %p99 = scmp.ne.s32.totalorder %s88, %s91
    %p100 = scmp.eq.s32.totalorder %s15, 1
    %p101 = por %p99, %p100
    %p102 = scmp.ne.s32.totalorder %s91, %s92
    %p103 = scmp.eq.s32.totalorder %s15, 0
    %p104 = por %p102, %p103
    %p105 = scmp.ne.s32.totalorder %s91, %s92
    %p106 = scmp.eq.s32.totalorder %s16, 1
    %p107 = por %p105, %p106
    %p109 = scmp.ne.s32.totalorder %s92, %s108
    %p110 = scmp.eq.s32.totalorder %s16, 0
    %p111 = por %p109, %p110
    %s112 = ssub.s32 %s10, %s17
    %p113 = scmp.eq.s32.totalorder %s112, 0
    %s115 = sadd.s32 %s114, 1
    %s116 = scalar_select %p113, %s114, %s115
    %p119 = pneg %p113
    %p120 = scmp.eq.s32.totalorder %s10, 1
    %p121 = por %p119, %p120
    %p122 = scmp.ne.s32.totalorder %s114, %s117
    %p123 = scmp.eq.s32.totalorder %s10, 0
    %p124 = por %p122, %p123
    %p125 = scmp.ne.s32.totalorder %s114, %s117
    %p126 = scmp.eq.s32.totalorder %s15, 1
    %p127 = por %p125, %p126
    %p128 = scmp.ne.s32.totalorder %s117, %s118
    %p129 = scmp.eq.s32.totalorder %s15, 0
    %p130 = por %p128, %p129
    %p131 = scmp.ne.s32.totalorder %s117, %s118
    %p132 = scmp.eq.s32.totalorder %s16, 1
    %p133 = por %p131, %p132
    %p135 = scmp.ne.s32.totalorder %s118, %s134
    %p136 = scmp.eq.s32.totalorder %s16, 0
    %p137 = por %p135, %p136
    %p138 = scmp.le.s32.totalorder 1, %s10
    %p139 = scmp.lt.s32.totalorder %s10, 3
    %p140 = pnand %p138, %p139
    %p141 = pneg %p140
    // Predicated region
    $region9: #{res_block_down.3} parent=5 // pred_check
      _
    $region10: #{res_block_down.3} parent=5 // pred_check_branch
      %143 = sbr.rel (%p140) target = $region12
    $region11: #{res_block_down.3} parent=5 // pred_region
      %s144 = ssub.s32 %s10, 1
      // Predicated region
      $region13: #{res_block_down.3} parent=11 // pred_check
        %p145 = pneg %p57
      $region14: #{res_block_down.3} parent=11 // pred_check_branch
        %147 = sbr.rel (%p145) target = $region16
      $region15: #{res_block_down.3} parent=11 // pred_region
        _
      $region16: #{res_block_down.3} parent=11 // pred_fallthru
        _
      // Predicated region
      $region17: #{res_block_down.3} parent=11 // pred_check
        %p148 = pneg %p78
      $region18: #{res_block_down.3} parent=11 // pred_check_branch
        %150 = sbr.rel (%p148) target = $region20
      $region19: #{res_block_down.3} parent=11 // pred_region
        _
      $region20: #{res_block_down.3} parent=11 // pred_fallthru
        _
    $region12: #{res_block_down.3} parent=5 // pred_fallthru
      _
    %p151 = scmp.lt.s32.totalorder %s10, 2
    // Predicated region
    $region21: #{res_block_down.3} parent=5 // pred_check
      %p152 = pneg %p151
    $region22: #{res_block_down.3} parent=5 // pred_check_branch
      %154 = sbr.rel (%p152) target = $region24
    $region23: #{res_block_down.3} parent=5 // pred_region
      // Predicated region
      $region25: #{res_block_down.3} parent=23 // pred_check
        %p155 = pneg %p30
      $region26: #{res_block_down.3} parent=23 // pred_check_branch
        %157 = sbr.rel (%p155) target = $region28
      $region27: #{res_block_down.3} parent=23 // pred_region
        %p158 = scmp.lt.s32.totalorder %s10, 1
        %s159 = scalar_select %p158, %s10, 1
        %s160 = smul.addr %s159, 108
        %s161 = smul.addr %s160, 4
        %s162 = scalar_lea.vmem %s0, %s161
      $region28: #{res_block_down.3} parent=23 // pred_fallthru
        _
      // Predicated region
      $region29: #{res_block_down.3} parent=23 // pred_check
        %p163 = pneg %p98
      $region30: #{res_block_down.3} parent=23 // pred_check_branch
        %165 = sbr.rel (%p163) target = $region32
      $region31: #{res_block_down.3} parent=23 // pred_region
        %p166 = scmp.lt.s32.totalorder %s10, 1
        %s167 = scalar_select %p166, %s10, 1
        %s168 = smul.addr %s167, 8
        %s169 = smul.addr %s168, 8
        %s170 = scalar_lea.vmem %s3, %s169
      $region32: #{res_block_down.3} parent=23 // pred_fallthru
        _
    $region24: #{res_block_down.3} parent=5 // pred_fallthru
      _
    %p171 = scmp.le.s32.totalorder 1, %s10
    %p172 = scmp.lt.s32.totalorder %s10, 3
    %p173 = pnand %p171, %p172
    %p174 = pneg %p173
    // Predicated region
    $region33: #{res_block_down.3} parent=5 // pred_check
      _
    $region34: #{res_block_down.3} parent=5 // pred_check_branch
      %176 = sbr.rel (%p173) target = $region36
    $region35: #{res_block_down.3} parent=5 // pred_region
      %s177 = ssub.s32 %s10, 1
      %p178 = scmp.lt.s32.totalorder %s15, 1
      %s179 = scalar_select %p178, %s15, 1
      %s180 = smul.addr %s179, 108
      %s181 = smul.addr %s180, 4
      %s182 = scalar_lea.vmem %s0, %s181
      %p183 = pneg %p36
      %p184 = pneg %p33
      %p185 = pneg %p57
      %p186 = pneg %p54
      %p187 = pneg %p78
      %p188 = pneg %p75
      %p189 = scmp.lt.s32.totalorder %s15, 1
      %s190 = scalar_select %p189, %s15, 1
      %s191 = smul.addr %s190, 8
      %s192 = smul.addr %s191, 8
      %s193 = scalar_lea.vmem %s3, %s192
      %p194 = pneg %p104
      %p195 = pneg %p101
      %p196 = pneg %p130
      %p197 = pneg %p127
      %p198 = scmp.lt.s32.totalorder %s15, 1
      %s199 = scalar_select %p198, %s15, 1
      %s200 = smul.addr %s199, 8
      %s201 = smul.addr %s200, 8
      %s202 = scalar_lea.vmem %s4, %s201
      %p203 = scmp.lt.s32.totalorder %s15, 1
      %s204 = scalar_select %p203, %s15, 1
      %s205 = smul.addr %s204, 108
      %s206 = smul.addr %s205, 4
      %s207 = scalar_lea.vmem %s0, %s206
      %p208 = scmp.lt.s32.totalorder %s15, 1
      %s209 = scalar_select %p208, %s15, 1
      %s210 = smul.addr %s209, 8
      %s211 = smul.addr %s210, 8
      %s212 = scalar_lea.vmem %s3, %s211
      %p213 = scmp.lt.s32.totalorder %s15, 1
      %s214 = scalar_select %p213, %s15, 1
      %s215 = smul.addr %s214, 8
      %s216 = smul.addr %s215, 8
      %s217 = scalar_lea.vmem %s4, %s216
      %v219 = vld [vmem:[%s207] sm:$0xff]
      %v220 = vld [vmem:[%s207 + $0x8] sm:$0xf]
      %v221 = vld [vmem:[%s207 + $0xc] sm:$0xff]
      %v222 = vld [vmem:[%s207 + $0x14] sm:$0xf]
      %v223 = vld [vmem:[%s207 + $0x18] sm:$0xff]
      %v224 = vld [vmem:[%s207 + $0x20] sm:$0xf]
      %v225 = vld [vmem:[%s207 + $0x24] sm:$0xff]
      %v226 = vld [vmem:[%s207 + $0x2c] sm:$0xf]
      %v227 = vld [vmem:[%s207 + $0x30] sm:$0xff]
      %v228 = vld [vmem:[%s207 + $0x38] sm:$0xf]
      %v229 = vld [vmem:[%s207 + $0x3c] sm:$0xff]
      %v230 = vld [vmem:[%s207 + $0x44] sm:$0xf]
      %v231 = vld [vmem:[%s207 + $0x48] sm:$0xff]
      %v232 = vld [vmem:[%s207 + $0x50] sm:$0xf]
      %v233 = vld [vmem:[%s207 + $0x54] sm:$0xff]
      %v234 = vld [vmem:[%s207 + $0x5c] sm:$0xf]
      %v235 = vld [vmem:[%s207 + $0x60] sm:$0xff]
      %v236 = vld [vmem:[%s207 + $0x68] sm:$0xf]
      %v237 = vld [vmem:[%s207 + $0x6c] sm:$0xff]
      %v238 = vld [vmem:[%s207 + $0x74] sm:$0xf]
      %v239 = vld [vmem:[%s207 + $0x78] sm:$0xff]
      %v240 = vld [vmem:[%s207 + $0x80] sm:$0xf]
      %v241 = vld [vmem:[%s207 + $0x84] sm:$0xff]
      %v242 = vld [vmem:[%s207 + $0x8c] sm:$0xf]
      %v243 = vld [vmem:[%s207 + $0x90] sm:$0xff]
      %v244 = vld [vmem:[%s207 + $0x98] sm:$0xf]
      %v245 = vld [vmem:[%s207 + $0x9c] sm:$0xff]
      %v246 = vld [vmem:[%s207 + $0xa4] sm:$0xf]
      %v247 = vld [vmem:[%s207 + $0xa8] sm:$0xff]
      %v248 = vld [vmem:[%s207 + $0xb0] sm:$0xf]
      %v249 = vld [vmem:[%s207 + $0xb4] sm:$0xff]
      %v250 = vld [vmem:[%s207 + $0xbc] sm:$0xf]
      %v251 = vld [vmem:[%s207 + $0xc0] sm:$0xff]
      %v252 = vld [vmem:[%s207 + $0xc8] sm:$0xf]
      %v253 = vld [vmem:[%s207 + $0xcc] sm:$0xff]
      %v254 = vld [vmem:[%s207 + $0xd4] sm:$0xf]
      %v255 = vld [vmem:[%s207 + $0xd8] sm:$0xff]
      %v256 = vld [vmem:[%s207 + $0xe0] sm:$0xf]
      %v257 = vld [vmem:[%s207 + $0xe4] sm:$0xff]
      %v258 = vld [vmem:[%s207 + $0xec] sm:$0xf]
      %v259 = vld [vmem:[%s207 + $0xf0] sm:$0xff]
      %v260 = vld [vmem:[%s207 + $0xf8] sm:$0xf]
      %v261 = vld [vmem:[%s207 + $0xfc] sm:$0xff]
      %v262 = vld [vmem:[%s207 + $0x104] sm:$0xf]
      %v263 = vld [vmem:[%s207 + $0x108] sm:$0xff]
      %v264 = vld [vmem:[%s207 + $0x110] sm:$0xf]
      %v265 = vld [vmem:[%s207 + $0x114] sm:$0xff]
      %v266 = vld [vmem:[%s207 + $0x11c] sm:$0xf]
      %v267 = vld [vmem:[%s207 + $0x120] sm:$0xff]
      %v268 = vld [vmem:[%s207 + $0x128] sm:$0xf]
      %v269 = vld [vmem:[%s207 + $0x12c] sm:$0xff]
      %v270 = vld [vmem:[%s207 + $0x134] sm:$0xf]
      %v271 = vld [vmem:[%s207 + $0x138] sm:$0xff]
      %v272 = vld [vmem:[%s207 + $0x140] sm:$0xf]
      %v273 = vld [vmem:[%s207 + $0x144] sm:$0xff]
      %v274 = vld [vmem:[%s207 + $0x14c] sm:$0xf]
      %v275 = vld [vmem:[%s207 + $0x150] sm:$0xff]
      %v276 = vld [vmem:[%s207 + $0x158] sm:$0xf]
      %v277 = vld [vmem:[%s207 + $0x15c] sm:$0xff]
      %v278 = vld [vmem:[%s207 + $0x164] sm:$0xf]
      %v279 = vld [vmem:[%s207 + $0x168] sm:$0xff]
      %v280 = vld [vmem:[%s207 + $0x170] sm:$0xf]
      %v281 = vld [vmem:[%s207 + $0x174] sm:$0xff]
      %v282 = vld [vmem:[%s207 + $0x17c] sm:$0xf]
      %v283 = vld [vmem:[%s1] sm:$0xf]
      %v284 = vld [vmem:[%s1 + $0x4] sm:$0xf]
      %v285 = vld [vmem:[%s1 + $0x8] sm:$0xf]
      %v286 = vld [vmem:[%s1 + $0xc] sm:$0xf]
      %v287 = vld [vmem:[%s1 + $0x10] sm:$0xf]
      %v288 = vld [vmem:[%s1 + $0x14] sm:$0xf]
      %v289 = vld [vmem:[%s1 + $0x18] sm:$0xf]
      %v290 = vld [vmem:[%s1 + $0x1c] sm:$0xf]
      %v291 = vld [vmem:[%s1 + $0x20] sm:$0xf]
      %v292 = vld [vmem:[%s1 + $0x24] sm:$0xf]
      %v293 = vld [vmem:[%s1 + $0x28] sm:$0xf]
      %v294 = vld [vmem:[%s1 + $0x2c] sm:$0xf]
      %v295 = vld [vmem:[%s1 + $0x30] sm:$0xf]
      %v296 = vld [vmem:[%s1 + $0x34] sm:$0xf]
      %v297 = vld [vmem:[%s1 + $0x38] sm:$0xf]
      %v298 = vld [vmem:[%s1 + $0x3c] sm:$0xf]
      %v299 = vld [vmem:[%s1 + $0x40] sm:$0xf]
      %v300 = vld [vmem:[%s1 + $0x44] sm:$0xf]
      %v301 = vld [vmem:[%s1 + $0x48] sm:$0xf]
      %v302 = vld [vmem:[%s1 + $0x4c] sm:$0xf]
      %v303 = vld [vmem:[%s1 + $0x50] sm:$0xf]
      %v304 = vld [vmem:[%s1 + $0x54] sm:$0xf]
      %v305 = vld [vmem:[%s1 + $0x58] sm:$0xf]
      %v306 = vld [vmem:[%s1 + $0x5c] sm:$0xf]
      %v307 = vld [vmem:[%s1 + $0x60] sm:$0xf]
      %v308 = vld [vmem:[%s1 + $0x64] sm:$0xf]
      %v309 = vld [vmem:[%s1 + $0x68] sm:$0xf]
      %v310 = vld [vmem:[%s1 + $0x6c] sm:$0xf]
      %v311 = vld [vmem:[%s1 + $0x70] sm:$0xf]
      %v312 = vld [vmem:[%s1 + $0x74] sm:$0xf]
      %v313 = vld [vmem:[%s1 + $0x78] sm:$0xf]
      %v314 = vld [vmem:[%s1 + $0x7c] sm:$0xf]
      %v315 = vld [vmem:[%s1 + $0x80] sm:$0xf]
      %v316 = vld [vmem:[%s1 + $0x84] sm:$0xf]
      %v317 = vld [vmem:[%s1 + $0x88] sm:$0xf]
      %v318 = vld [vmem:[%s1 + $0x8c] sm:$0xf]
      %v319 = vld [vmem:[%s1 + $0x90] sm:$0xf]
      %v320 = vld [vmem:[%s1 + $0x94] sm:$0xf]
      %v321 = vld [vmem:[%s1 + $0x98] sm:$0xf]
      %v322 = vld [vmem:[%s1 + $0x9c] sm:$0xf]
      %v323 = vld [vmem:[%s1 + $0xa0] sm:$0xf]
      %v324 = vld [vmem:[%s1 + $0xa4] sm:$0xf]
      %v325 = vld [vmem:[%s1 + $0xa8] sm:$0xf]
      %v326 = vld [vmem:[%s1 + $0xac] sm:$0xf]
      %v327 = vld [vmem:[%s1 + $0xb0] sm:$0xf]
      %v328 = vld [vmem:[%s1 + $0xb4] sm:$0xf]
      %v329 = vld [vmem:[%s1 + $0xb8] sm:$0xf]
      %v330 = vld [vmem:[%s1 + $0xbc] sm:$0xf]
      %v331 = vld [vmem:[%s207 + $0x180] sm:$0xff]
      %v332 = vld [vmem:[%s207 + $0x188] sm:$0xf]
      %v333 = vld [vmem:[%s207 + $0x18c] sm:$0xff]
      %v334 = vld [vmem:[%s207 + $0x194] sm:$0xf]
      %s335 = scalar_lea.vmem %s1, 192
      %v336 = vld [vmem:[%s335] sm:$0xf]
      %v337 = vld [vmem:[%s335 + $0x4] sm:$0xf]
      %v338 = vld [vmem:[%s335 + $0x8] sm:$0xf]
      %v339 = vld [vmem:[%s335 + $0xc] sm:$0xf]
      %v340 = vld [vmem:[%s335 + $0x10] sm:$0xf]
      %v341 = vld [vmem:[%s335 + $0x14] sm:$0xf]
      %v342 = vld [vmem:[%s335 + $0x18] sm:$0xf]
      %v343 = vld [vmem:[%s335 + $0x1c] sm:$0xf]
      %v344 = vld [vmem:[%s335 + $0x20] sm:$0xf]
      %v345 = vld [vmem:[%s335 + $0x24] sm:$0xf]
      %v346 = vld [vmem:[%s335 + $0x28] sm:$0xf]
      %v347 = vld [vmem:[%s335 + $0x2c] sm:$0xf]
      %v348 = vld [vmem:[%s335 + $0x30] sm:$0xf]
      %v349 = vld [vmem:[%s335 + $0x34] sm:$0xf]
      %v350 = vld [vmem:[%s335 + $0x38] sm:$0xf]
      %v351 = vld [vmem:[%s335 + $0x3c] sm:$0xf]
      %v352 = vld [vmem:[%s335 + $0x40] sm:$0xf]
      %v353 = vld [vmem:[%s335 + $0x44] sm:$0xf]
      %v354 = vld [vmem:[%s335 + $0x48] sm:$0xf]
      %v355 = vld [vmem:[%s335 + $0x4c] sm:$0xf]
      %v356 = vld [vmem:[%s335 + $0x50] sm:$0xf]
      %v357 = vld [vmem:[%s335 + $0x54] sm:$0xf]
      %v358 = vld [vmem:[%s335 + $0x58] sm:$0xf]
      %v359 = vld [vmem:[%s335 + $0x5c] sm:$0xf]
      %v360 = vld [vmem:[%s335 + $0x60] sm:$0xf]
      %v361 = vld [vmem:[%s335 + $0x64] sm:$0xf]
      %v362 = vld [vmem:[%s335 + $0x68] sm:$0xf]
      %v363 = vld [vmem:[%s335 + $0x6c] sm:$0xf]
      %v364 = vld [vmem:[%s335 + $0x70] sm:$0xf]
      %v365 = vld [vmem:[%s335 + $0x74] sm:$0xf]
      %v366 = vld [vmem:[%s335 + $0x78] sm:$0xf]
      %v367 = vld [vmem:[%s335 + $0x7c] sm:$0xf]
      %v368 = vld [vmem:[%s335 + $0x80] sm:$0xf]
      %v369 = vld [vmem:[%s335 + $0x84] sm:$0xf]
      %v370 = vld [vmem:[%s335 + $0x88] sm:$0xf]
      %v371 = vld [vmem:[%s335 + $0x8c] sm:$0xf]
      %v372 = vld [vmem:[%s335 + $0x90] sm:$0xf]
      %v373 = vld [vmem:[%s335 + $0x94] sm:$0xf]
      %v374 = vld [vmem:[%s335 + $0x98] sm:$0xf]
      %v375 = vld [vmem:[%s335 + $0x9c] sm:$0xf]
      %v376 = vld [vmem:[%s335 + $0xa0] sm:$0xf]
      %v377 = vld [vmem:[%s335 + $0xa4] sm:$0xf]
      %v378 = vld [vmem:[%s335 + $0xa8] sm:$0xf]
      %v379 = vld [vmem:[%s335 + $0xac] sm:$0xf]
      %v380 = vld [vmem:[%s335 + $0xb0] sm:$0xf]
      %v381 = vld [vmem:[%s335 + $0xb4] sm:$0xf]
      %v382 = vld [vmem:[%s335 + $0xb8] sm:$0xf]
      %v383 = vld [vmem:[%s335 + $0xbc] sm:$0xf]
      %v448 = vunpack.c.l.b16 %v223
      %v449 = vunpack.c.h.b16 %v223
      %v450 = vunpack.c.l.b16 %v224
      %v451 = vunpack.c.l.b16 %v225
      %v452 = vunpack.c.h.b16 %v225
      %v453 = vunpack.c.l.b16 %v226
      %v454 = vunpack.c.l.b16 %v227
      %v455 = vunpack.c.h.b16 %v227
      %v456 = vunpack.c.l.b16 %v228
      %v457 = vunpack.c.l.b16 %v229
      %v458 = vunpack.c.h.b16 %v229
      %v459 = vunpack.c.l.b16 %v230
      %v460 = vunpack.c.l.b16 %v231
      %v461 = vunpack.c.h.b16 %v231
      %v462 = vunpack.c.l.b16 %v232
      %v463 = vunpack.c.l.b16 %v233
      %v464 = vunpack.c.h.b16 %v233
      %v465 = vunpack.c.l.b16 %v234
      %v466 = vunpack.c.l.b16 %v235
      %v467 = vunpack.c.h.b16 %v235
      %v468 = vunpack.c.l.b16 %v236
      %v469 = vunpack.c.l.b16 %v237
      %v470 = vunpack.c.h.b16 %v237
      %v471 = vunpack.c.l.b16 %v238
      %v472 = vunpack.c.l.b16 %v239
      %v473 = vunpack.c.h.b16 %v239
      %v474 = vunpack.c.l.b16 %v240
      %v475 = vunpack.c.l.b16 %v241
      %v476 = vunpack.c.h.b16 %v241
      %v477 = vunpack.c.l.b16 %v242
      %v478 = vunpack.c.l.b16 %v243
      %v479 = vunpack.c.h.b16 %v243
      %v480 = vunpack.c.l.b16 %v244
      %v481 = vunpack.c.l.b16 %v245
      %v482 = vunpack.c.h.b16 %v245
      %v483 = vunpack.c.l.b16 %v246
      %v484 = vunpack.c.l.b16 %v247
      %v485 = vunpack.c.h.b16 %v247
      %v486 = vunpack.c.l.b16 %v248
      %v487 = vunpack.c.l.b16 %v249
      %v488 = vunpack.c.h.b16 %v249
      %v489 = vunpack.c.l.b16 %v250
      %v490 = vunpack.c.l.b16 %v251
      %v491 = vunpack.c.h.b16 %v251
      %v492 = vunpack.c.l.b16 %v252
      %v493 = vunpack.c.l.b16 %v253
      %v494 = vunpack.c.h.b16 %v253
      %v495 = vunpack.c.l.b16 %v254
      %v496 = vunpack.c.l.b16 %v255
      %v497 = vunpack.c.h.b16 %v255
      %v498 = vunpack.c.l.b16 %v256
      %v499 = vunpack.c.l.b16 %v257
      %v500 = vunpack.c.h.b16 %v257
      %v501 = vunpack.c.l.b16 %v258
      %v502 = vunpack.c.l.b16 %v259
      %v503 = vunpack.c.h.b16 %v259
      %v504 = vunpack.c.l.b16 %v260
      %v505 = vunpack.c.l.b16 %v261
      %v506 = vunpack.c.h.b16 %v261
      %v507 = vunpack.c.l.b16 %v262
      %v508 = vunpack.c.l.b16 %v263
      %v509 = vunpack.c.h.b16 %v263
      %v510 = vunpack.c.l.b16 %v264
      %v511 = vunpack.c.l.b16 %v265
      %v512 = vunpack.c.h.b16 %v265
      %v513 = vunpack.c.l.b16 %v266
      %v514 = vunpack.c.l.b16 %v267
      %v515 = vunpack.c.h.b16 %v267
      %v516 = vunpack.c.l.b16 %v268
      %v517 = vunpack.c.l.b16 %v269
      %v518 = vunpack.c.h.b16 %v269
      %v519 = vunpack.c.l.b16 %v270
      %v520 = vunpack.c.l.b16 %v271
      %v521 = vunpack.c.h.b16 %v271
      %v522 = vunpack.c.l.b16 %v272
      %v523 = vunpack.c.l.b16 %v273
      %v524 = vunpack.c.h.b16 %v273
      %v525 = vunpack.c.l.b16 %v274
      %v526 = vunpack.c.l.b16 %v275
      %v527 = vunpack.c.h.b16 %v275
      %v528 = vunpack.c.l.b16 %v276
      %v529 = vunpack.c.l.b16 %v277
      %v530 = vunpack.c.h.b16 %v277
      %v531 = vunpack.c.l.b16 %v278
      %v532 = vunpack.c.l.b16 %v279
      %v533 = vunpack.c.h.b16 %v279
      %v534 = vunpack.c.l.b16 %v280
      %v535 = vunpack.c.l.b16 %v281
      %v536 = vunpack.c.h.b16 %v281
      %v537 = vunpack.c.l.b16 %v282
      %v538 = vunpack.c.l.b16 %v331
      %v539 = vunpack.c.h.b16 %v331
      %v540 = vunpack.c.l.b16 %v332
      %v541 = vunpack.c.l.b16 %v333
      %v542 = vunpack.c.h.b16 %v333
      %v543 = vunpack.c.l.b16 %v334
      %v544 = vpack.c.b16 %v451, %v448
      %v545 = vpack.c.b16 %v452, %v449
      %v546 = vpack.c.b16 %v453, %v450
      %v547 = vpack.c.b16 %v457, %v454
      %v548 = vpack.c.b16 %v458, %v455
      %v549 = vpack.c.b16 %v459, %v456
      %v550 = vpack.c.b16 %v463, %v460
      %v551 = vpack.c.b16 %v464, %v461
      %v552 = vpack.c.b16 %v465, %v462
      %v553 = vpack.c.b16 %v469, %v466
      %v554 = vpack.c.b16 %v470, %v467
      %v555 = vpack.c.b16 %v471, %v468
      %v556 = vpack.c.b16 %v475, %v472
      %v557 = vpack.c.b16 %v476, %v473
      %v558 = vpack.c.b16 %v477, %v474
      %v559 = vpack.c.b16 %v481, %v478
      %v560 = vpack.c.b16 %v482, %v479
      %v561 = vpack.c.b16 %v483, %v480
      %v562 = vpack.c.b16 %v487, %v484
      %v563 = vpack.c.b16 %v488, %v485
      %v564 = vpack.c.b16 %v489, %v486
      %v565 = vpack.c.b16 %v493, %v490
      %v566 = vpack.c.b16 %v494, %v491
      %v567 = vpack.c.b16 %v495, %v492
      %v568 = vpack.c.b16 %v499, %v496
      %v569 = vpack.c.b16 %v500, %v497
      %v570 = vpack.c.b16 %v501, %v498
      %v571 = vpack.c.b16 %v505, %v502
      %v572 = vpack.c.b16 %v506, %v503
      %v573 = vpack.c.b16 %v507, %v504
      %v574 = vpack.c.b16 %v511, %v508
      %v575 = vpack.c.b16 %v512, %v509
      %v576 = vpack.c.b16 %v513, %v510
      %v577 = vpack.c.b16 %v517, %v514
      %v578 = vpack.c.b16 %v518, %v515
      %v579 = vpack.c.b16 %v519, %v516
      %v580 = vpack.c.b16 %v523, %v520
      %v581 = vpack.c.b16 %v524, %v521
      %v582 = vpack.c.b16 %v525, %v522
      %v583 = vpack.c.b16 %v529, %v526
      %v584 = vpack.c.b16 %v530, %v527
      %v585 = vpack.c.b16 %v531, %v528
      %v586 = vpack.c.b16 %v535, %v532
      %v587 = vpack.c.b16 %v536, %v533
      %v588 = vpack.c.b16 %v537, %v534
      %v589 = vpack.c.b16 %v541, %v538
      %v590 = vpack.c.b16 %v542, %v539
      %v591 = vpack.c.b16 %v543, %v540
      %v688 = vunpack.c.l.b16 %v336
      %v689 = vunpack.c.l.b16 %v337
      %v690 = vunpack.c.l.b16 %v338
      %v691 = vunpack.c.l.b16 %v339
      %v692 = vunpack.c.l.b16 %v340
      %v693 = vunpack.c.l.b16 %v341
      %v694 = vunpack.c.l.b16 %v342
      %v695 = vunpack.c.l.b16 %v343
      %v696 = vunpack.c.l.b16 %v344
      %v697 = vunpack.c.l.b16 %v345
      %v698 = vunpack.c.l.b16 %v346
      %v699 = vunpack.c.l.b16 %v347
      %v700 = vunpack.c.l.b16 %v348
      %v701 = vunpack.c.l.b16 %v349
      %v702 = vunpack.c.l.b16 %v350
      %v703 = vunpack.c.l.b16 %v351
      %v704 = vunpack.c.l.b16 %v352
      %v705 = vunpack.c.l.b16 %v353
      %v706 = vunpack.c.l.b16 %v354
      %v707 = vunpack.c.l.b16 %v355
      %v708 = vunpack.c.l.b16 %v356
      %v709 = vunpack.c.l.b16 %v357
      %v710 = vunpack.c.l.b16 %v358
      %v711 = vunpack.c.l.b16 %v359
      %v712 = vunpack.c.l.b16 %v360
      %v713 = vunpack.c.l.b16 %v361
      %v714 = vunpack.c.l.b16 %v362
      %v715 = vunpack.c.l.b16 %v363
      %v716 = vunpack.c.l.b16 %v364
      %v717 = vunpack.c.l.b16 %v365
      %v718 = vunpack.c.l.b16 %v366
      %v719 = vunpack.c.l.b16 %v367
      %v720 = vunpack.c.l.b16 %v368
      %v721 = vunpack.c.l.b16 %v369
      %v722 = vunpack.c.l.b16 %v370
      %v723 = vunpack.c.l.b16 %v371
      %v724 = vunpack.c.l.b16 %v372
      %v725 = vunpack.c.l.b16 %v373
      %v726 = vunpack.c.l.b16 %v374
      %v727 = vunpack.c.l.b16 %v375
      %v728 = vunpack.c.l.b16 %v376
      %v729 = vunpack.c.l.b16 %v377
      %v730 = vunpack.c.l.b16 %v378
      %v731 = vunpack.c.l.b16 %v379
      %v732 = vunpack.c.l.b16 %v380
      %v733 = vunpack.c.l.b16 %v381
      %v734 = vunpack.c.l.b16 %v382
      %v735 = vunpack.c.l.b16 %v383
      %v736 = vpack.c.b16 %v689, %v688
      %v737 = vpack.c.b16 %v691, %v690
      %v738 = vpack.c.b16 %v693, %v692
      %v739 = vpack.c.b16 %v695, %v694
      %v740 = vpack.c.b16 %v697, %v696
      %v741 = vpack.c.b16 %v699, %v698
      %v742 = vpack.c.b16 %v701, %v700
      %v743 = vpack.c.b16 %v703, %v702
      %v744 = vpack.c.b16 %v705, %v704
      %v745 = vpack.c.b16 %v707, %v706
      %v746 = vpack.c.b16 %v709, %v708
      %v747 = vpack.c.b16 %v711, %v710
      %v748 = vpack.c.b16 %v713, %v712
      %v749 = vpack.c.b16 %v715, %v714
      %v750 = vpack.c.b16 %v717, %v716
      %v751 = vpack.c.b16 %v719, %v718
      %v752 = vpack.c.b16 %v721, %v720
      %v753 = vpack.c.b16 %v723, %v722
      %v754 = vpack.c.b16 %v725, %v724
      %v755 = vpack.c.b16 %v727, %v726
      %v756 = vpack.c.b16 %v729, %v728
      %v757 = vpack.c.b16 %v731, %v730
      %v758 = vpack.c.b16 %v733, %v732
      %v759 = vpack.c.b16 %v735, %v734
      %784 = vmatprep.subr.bf16.mxu0 0
      %785 = vmatpush1.bf16.msra.mxu0 %v736
      %786 = vmatprep.subr.bf16.mxu0 0
      %787 = vmatpush1.bf16.msra.mxu0 %v737
      %788 = vmatprep.subr.bf16.mxu0 0
      %789 = vmatpush1.bf16.msra.mxu0 %v738
      %790 = vmatprep.subr.bf16.mxu0 0
      %791 = vmatpush1.bf16.msra.mxu0 %v739
      %792 = vmatprep.subr.bf16.mxu0 0
      %793 = vmatpush1.bf16.msra.mxu0 %v740
      %794 = vmatprep.subr.bf16.mxu0 0
      %795 = vmatpush1.bf16.msra.mxu0 %v741
      %796 = vmatprep.subr.bf16.mxu0 0
      %797 = vmatpush1.bf16.msra.mxu0 %v742
      %798 = vmatprep.subr.bf16.mxu0 0
      %799 = vmatpush1.bf16.msra.mxu0 %v743
      %800 = vmatprep.subr.bf16.mxu0 0
      %801 = vmatpush1.bf16.msra.mxu0 %v744
      %802 = vmatprep.subr.bf16.mxu0 0
      %803 = vmatpush1.bf16.msra.mxu0 %v745
      %804 = vmatprep.subr.bf16.mxu0 0
      %805 = vmatpush1.bf16.msra.mxu0 %v746
      %806 = vmatprep.subr.bf16.mxu0 0
      %807 = vmatpush1.bf16.msra.mxu0 %v747
      %808 = vmatprep.subr.bf16.mxu0 0
      %809 = vmatpush1.bf16.msra.mxu0 %v748
      %810 = vmatprep.subr.bf16.mxu0 0
      %811 = vmatpush1.bf16.msra.mxu0 %v749
      %812 = vmatprep.subr.bf16.mxu0 0
      %813 = vmatpush1.bf16.msra.mxu0 %v750
      %814 = vmatprep.subr.bf16.mxu0 0
      %815 = vmatpush1.bf16.msra.mxu0 %v751
      %816 = vmatprep.mubr.bf16.mxu0 %v545
      %817 = vmatmul.mubr.bf16.gmra.mrb[0].mxu0 %v544
      %v818 = vpop.f32.mrb[0].mxu0
      %v819 = vadd.f32 0.0, %v818
      %v820 = vpop.f32.mrb[0].mxu0
      %v821 = vpop.f32.mrb[0].mxu0
      %v822 = vadd.f32 0.0, %v821
      %v823 = vpop.f32.mrb[0].mxu0
      %824 = vmatprep.mubr.bf16.mxu0 %v548
      %825 = vmatmul.mubr.bf16.gmra.mrb[0].mxu0 %v547
      %v826 = vpop.f32.mrb[0].mxu0
      %v827 = vadd.f32 0.0, %v826
      %v828 = vpop.f32.mrb[0].mxu0
      %v829 = vpop.f32.mrb[0].mxu0
      %v830 = vadd.f32 0.0, %v829
      %v831 = vpop.f32.mrb[0].mxu0
      %832 = vmatprep.mubr.bf16.mxu0 %v551
      %833 = vmatmul.mubr.bf16.gmra.mrb[0].mxu0 %v550
      %v834 = vpop.f32.mrb[0].mxu0
      %v835 = vadd.f32 0.0, %v834
      %v836 = vpop.f32.mrb[0].mxu0
      %v837 = vpop.f32.mrb[0].mxu0
      %v838 = vadd.f32 0.0, %v837
      %v839 = vpop.f32.mrb[0].mxu0
      %840 = vmatprep.mubr.bf16.mxu0 %v554
      %841 = vmatmul.mubr.bf16.gmra.mrb[0].mxu0 %v553
      %v842 = vpop.f32.mrb[0].mxu0
      %v843 = vadd.f32 0.0, %v842
      %v844 = vpop.f32.mrb[0].mxu0
      %v845 = vpop.f32.mrb[0].mxu0
      %v846 = vadd.f32 0.0, %v845
      %v847 = vpop.f32.mrb[0].mxu0
      %848 = vmatprep.mubr.bf16.mxu0 %v557
      %849 = vmatmul.mubr.bf16.gmra.mrb[0].mxu0 %v556
      %v850 = vpop.f32.mrb[0].mxu0
      %v851 = vadd.f32 0.0, %v850
      %v852 = vpop.f32.mrb[0].mxu0
      %v853 = vpop.f32.mrb[0].mxu0
      %v854 = vadd.f32 0.0, %v853
      %v855 = vpop.f32.mrb[0].mxu0
      %856 = vmatprep.mubr.bf16.mxu0 %v560
      %857 = vmatmul.mubr.bf16.gmra.mrb[0].mxu0 %v559
      %v858 = vpop.f32.mrb[0].mxu0
      %v859 = vadd.f32 0.0, %v858
      %v860 = vpop.f32.mrb[0].mxu0
      %v861 = vpop.f32.mrb[0].mxu0
      %v862 = vadd.f32 0.0, %v861
      %v863 = vpop.f32.mrb[0].mxu0
      %864 = vmatprep.mubr.bf16.mxu0 %v563
      %865 = vmatmul.mubr.bf16.gmra.mrb[0].mxu0 %v562
      %v866 = vpop.f32.mrb[0].mxu0
      %v867 = vadd.f32 0.0, %v866
      %v868 = vpop.f32.mrb[0].mxu0
      %v869 = vpop.f32.mrb[0].mxu0
      %v870 = vadd.f32 0.0, %v869
      %v871 = vpop.f32.mrb[0].mxu0
      %872 = vmatprep.mubr.bf16.mxu0 %v566
      %873 = vmatmul.mubr.bf16.gmra.mrb[0].mxu0 %v565
      %v874 = vpop.f32.mrb[0].mxu0
      %v875 = vadd.f32 0.0, %v874
      %v876 = vpop.f32.mrb[0].mxu0
      %v877 = vpop.f32.mrb[0].mxu0
      %v878 = vadd.f32 0.0, %v877
      %v879 = vpop.f32.mrb[0].mxu0
      %880 = vmatprep.mubr.bf16.mxu0 %v569
      %881 = vmatmul.mubr.bf16.gmra.mrb[0].mxu0 %v568
      %v882 = vpop.f32.mrb[0].mxu0
      %v883 = vadd.f32 0.0, %v882
      %v884 = vpop.f32.mrb[0].mxu0
      %v885 = vpop.f32.mrb[0].mxu0
      %v886 = vadd.f32 0.0, %v885
      %v887 = vpop.f32.mrb[0].mxu0
      %888 = vmatprep.mubr.bf16.mxu0 %v572
      %889 = vmatmul.mubr.bf16.gmra.mrb[0].mxu0 %v571
      %v890 = vpop.f32.mrb[0].mxu0
      %v891 = vadd.f32 0.0, %v890
      %v892 = vpop.f32.mrb[0].mxu0
      %v893 = vpop.f32.mrb[0].mxu0
      %v894 = vadd.f32 0.0, %v893
      %v895 = vpop.f32.mrb[0].mxu0
      %896 = vmatprep.mubr.bf16.mxu0 %v575
      %897 = vmatmul.mubr.bf16.gmra.mrb[0].mxu0 %v574
      %v898 = vpop.f32.mrb[0].mxu0
      %v899 = vadd.f32 0.0, %v898
      %v900 = vpop.f32.mrb[0].mxu0
      %v901 = vpop.f32.mrb[0].mxu0
      %v902 = vadd.f32 0.0, %v901
      %v903 = vpop.f32.mrb[0].mxu0
      %904 = vmatprep.mubr.bf16.mxu0 %v578
      %905 = vmatmul.mubr.bf16.gmra.mrb[0].mxu0 %v577
      %v906 = vpop.f32.mrb[0].mxu0
      %v907 = vadd.f32 0.0, %v906
      %v908 = vpop.f32.mrb[0].mxu0
      %v909 = vpop.f32.mrb[0].mxu0
      %v910 = vadd.f32 0.0, %v909
      %v911 = vpop.f32.mrb[0].mxu0
      %912 = vmatprep.mubr.bf16.mxu0 %v581
      %913 = vmatmul.mubr.bf16.gmra.mrb[0].mxu0 %v580
      %v914 = vpop.f32.mrb[0].mxu0
      %v915 = vadd.f32 0.0, %v914
      %v916 = vpop.f32.mrb[0].mxu0
      %v917 = vpop.f32.mrb[0].mxu0
      %v918 = vadd.f32 0.0, %v917
      %v919 = vpop.f32.mrb[0].mxu0
      %920 = vmatprep.mubr.bf16.mxu0 %v584
      %921 = vmatmul.mubr.bf16.gmra.mrb[0].mxu0 %v583
      %v922 = vpop.f32.mrb[0].mxu0
      %v923 = vadd.f32 0.0, %v922
      %v924 = vpop.f32.mrb[0].mxu0
      %v925 = vpop.f32.mrb[0].mxu0
      %v926 = vadd.f32 0.0, %v925
      %v927 = vpop.f32.mrb[0].mxu0
      %928 = vmatprep.mubr.bf16.mxu0 %v587
      %929 = vmatmul.mubr.bf16.gmra.mrb[0].mxu0 %v586
      %v930 = vpop.f32.mrb[0].mxu0
      %v931 = vadd.f32 0.0, %v930
      %v932 = vpop.f32.mrb[0].mxu0
      %v933 = vpop.f32.mrb[0].mxu0
      %v934 = vadd.f32 0.0, %v933
      %v935 = vpop.f32.mrb[0].mxu0
      %936 = vmatprep.mubr.bf16.mxu0 %v590
      %937 = vmatmul.mubr.bf16.gmra.mrb[0].mxu0 %v589
      %v938 = vpop.f32.mrb[0].mxu0
      %v939 = vadd.f32 0.0, %v938
      %v940 = vpop.f32.mrb[0].mxu0
      %v941 = vpop.f32.mrb[0].mxu0
      %v942 = vadd.f32 0.0, %v941
      %v943 = vpop.f32.mrb[0].mxu0
      %944 = vdwg.mxu0
      %945 = vmatprep.subr.bf16.mxu0 0
      %946 = vmatpush1.bf16.msra.mxu0 %v752
      %947 = vmatprep.subr.bf16.mxu0 0
      %948 = vmatpush1.bf16.msra.mxu0 %v753
      %949 = vmatprep.subr.bf16.mxu0 0
      %950 = vmatpush1.bf16.msra.mxu0 %v754
      %951 = vmatprep.subr.bf16.mxu0 0
      %952 = vmatpush1.bf16.msra.mxu0 %v755
      %953 = vmatprep.subr.bf16.mxu0 0
      %954 = vmatpush1.bf16.msra.mxu0 %v756
      %955 = vmatprep.subr.bf16.mxu0 0
      %956 = vmatpush1.bf16.msra.mxu0 %v757
      %957 = vmatprep.subr.bf16.mxu0 0
      %958 = vmatpush1.bf16.msra.mxu0 %v758
      %959 = vmatprep.subr.bf16.mxu0 0
      %960 = vmatpush1.bf16.msra.mxu0 %v759
      %961 = vmatprep.subr.bf16.mxu0 0
      %962 = vmatpush1.bf16.msra.mxu0 0
      %963 = vmatprep.subr.bf16.mxu0 0
      %964 = vmatpush1.bf16.msra.mxu0 0
      %965 = vmatprep.subr.bf16.mxu0 0
      %966 = vmatpush1.bf16.msra.mxu0 0
      %967 = vmatprep.subr.bf16.mxu0 0
      %968 = vmatpush1.bf16.msra.mxu0 0
      %969 = vmatprep.subr.bf16.mxu0 0
      %970 = vmatpush1.bf16.msra.mxu0 0
      %971 = vmatprep.subr.bf16.mxu0 0
      %972 = vmatpush1.bf16.msra.mxu0 0
      %973 = vmatprep.subr.bf16.mxu0 0
      %974 = vmatpush1.bf16.msra.mxu0 0
      %975 = vmatprep.subr.bf16.mxu0 0
      %976 = vmatpush1.bf16.msra.mxu0 0
      %977 = vmatprep.mubr.bf16.mxu0 0
      %978 = vmatmul.mubr.bf16.gmra.mrb[0].mxu0 %v546
      %v979 = vpop.f32.mrb[0].mxu0
      %v980 = vadd.f32 %v819, %v979
      %v981 = vpop.f32.mrb[0].mxu0
      %v982 = vpop.f32.mrb[0].mxu0
      %v983 = vadd.f32 %v822, %v982
      %v984 = vpop.f32.mrb[0].mxu0
      %985 = vmatprep.mubr.bf16.mxu0 0
      %986 = vmatmul.mubr.bf16.gmra.mrb[0].mxu0 %v549
      %v987 = vpop.f32.mrb[0].mxu0
      %v988 = vadd.f32 %v827, %v987
      %v989 = vpop.f32.mrb[0].mxu0
      %v990 = vpop.f32.mrb[0].mxu0
      %v991 = vadd.f32 %v830, %v990
      %v992 = vpop.f32.mrb[0].mxu0
      %993 = vmatprep.mubr.bf16.mxu0 0
      %994 = vmatmul.mubr.bf16.gmra.mrb[0].mxu0 %v552
      %v995 = vpop.f32.mrb[0].mxu0
      %v996 = vadd.f32 %v835, %v995
      %v997 = vpop.f32.mrb[0].mxu0
      %v998 = vpop.f32.mrb[0].mxu0
      %v999 = vadd.f32 %v838, %v998
      %v1000 = vpop.f32.mrb[0].mxu0
      %1001 = vmatprep.mubr.bf16.mxu0 0
      %1002 = vmatmul.mubr.bf16.gmra.mrb[0].mxu0 %v555
      %v1003 = vpop.f32.mrb[0].mxu0
      %v1004 = vadd.f32 %v843, %v1003
      %v1005 = vpop.f32.mrb[0].mxu0
      %v1006 = vpop.f32.mrb[0].mxu0
      %v1007 = vadd.f32 %v846, %v1006
      %v1008 = vpop.f32.mrb[0].mxu0
      %1009 = vmatprep.mubr.bf16.mxu0 0
      %1010 = vmatmul.mubr.bf16.gmra.mrb[0].mxu0 %v558
      %v1011 = vpop.f32.mrb[0].mxu0
      %v1012 = vadd.f32 %v851, %v1011
      %v1013 = vpop.f32.mrb[0].mxu0
      %v1014 = vpop.f32.mrb[0].mxu0
      %v1015 = vadd.f32 %v854, %v1014
      %v1016 = vpop.f32.mrb[0].mxu0
      %1017 = vmatprep.mubr.bf16.mxu0 0
      %1018 = vmatmul.mubr.bf16.gmra.mrb[0].mxu0 %v561
      %v1019 = vpop.f32.mrb[0].mxu0
      %v1020 = vadd.f32 %v859, %v1019
      %v1021 = vpop.f32.mrb[0].mxu0
      %v1022 = vpop.f32.mrb[0].mxu0
      %v1023 = vadd.f32 %v862, %v1022
      %v1024 = vpop.f32.mrb[0].mxu0
      %1025 = vmatprep.mubr.bf16.mxu0 0
      %1026 = vmatmul.mubr.bf16.gmra.mrb[0].mxu0 %v564
      %v1027 = vpop.f32.mrb[0].mxu0
      %v1028 = vadd.f32 %v867, %v1027
      %v1029 = vpop.f32.mrb[0].mxu0
      %v1030 = vpop.f32.mrb[0].mxu0
      %v1031 = vadd.f32 %v870, %v1030
      %v1032 = vpop.f32.mrb[0].mxu0
      %1033 = vmatprep.mubr.bf16.mxu0 0
      %1034 = vmatmul.mubr.bf16.gmra.mrb[0].mxu0 %v567
      %v1035 = vpop.f32.mrb[0].mxu0
      %v1036 = vadd.f32 %v875, %v1035
      %v1037 = vpop.f32.mrb[0].mxu0
      %v1038 = vpop.f32.mrb[0].mxu0
      %v1039 = vadd.f32 %v878, %v1038
      %v1040 = vpop.f32.mrb[0].mxu0
      %1041 = vmatprep.mubr.bf16.mxu0 0
      %1042 = vmatmul.mubr.bf16.gmra.mrb[0].mxu0 %v570
      %v1043 = vpop.f32.mrb[0].mxu0
      %v1044 = vadd.f32 %v883, %v1043
      %v1045 = vpop.f32.mrb[0].mxu0
      %v1046 = vpop.f32.mrb[0].mxu0
      %v1047 = vadd.f32 %v886, %v1046
      %v1048 = vpop.f32.mrb[0].mxu0
      %1049 = vmatprep.mubr.bf16.mxu0 0
      %1050 = vmatmul.mubr.bf16.gmra.mrb[0].mxu0 %v573
      %v1051 = vpop.f32.mrb[0].mxu0
      %v1052 = vadd.f32 %v891, %v1051
      %v1053 = vpop.f32.mrb[0].mxu0
      %v1054 = vpop.f32.mrb[0].mxu0
      %v1055 = vadd.f32 %v894, %v1054
      %v1056 = vpop.f32.mrb[0].mxu0
      %1057 = vmatprep.mubr.bf16.mxu0 0
      %1058 = vmatmul.mubr.bf16.gmra.mrb[0].mxu0 %v576
      %v1059 = vpop.f32.mrb[0].mxu0
      %v1060 = vadd.f32 %v899, %v1059
      %v1061 = vpop.f32.mrb[0].mxu0
      %v1062 = vpop.f32.mrb[0].mxu0
      %v1063 = vadd.f32 %v902, %v1062
      %v1064 = vpop.f32.mrb[0].mxu0
      %1065 = vmatprep.mubr.bf16.mxu0 0
      %1066 = vmatmul.mubr.bf16.gmra.mrb[0].mxu0 %v579
      %v1067 = vpop.f32.mrb[0].mxu0
      %v1068 = vadd.f32 %v907, %v1067
      %v1069 = vpop.f32.mrb[0].mxu0
      %v1070 = vpop.f32.mrb[0].mxu0
      %v1071 = vadd.f32 %v910, %v1070
      %v1072 = vpop.f32.mrb[0].mxu0
      %1073 = vmatprep.mubr.bf16.mxu0 0
      %1074 = vmatmul.mubr.bf16.gmra.mrb[0].mxu0 %v582
      %v1075 = vpop.f32.mrb[0].mxu0
      %v1076 = vadd.f32 %v915, %v1075
      %v1077 = vpop.f32.mrb[0].mxu0
      %v1078 = vpop.f32.mrb[0].mxu0
      %v1079 = vadd.f32 %v918, %v1078
      %v1080 = vpop.f32.mrb[0].mxu0
      %1081 = vmatprep.mubr.bf16.mxu0 0
      %1082 = vmatmul.mubr.bf16.gmra.mrb[0].mxu0 %v585
      %v1083 = vpop.f32.mrb[0].mxu0
      %v1084 = vadd.f32 %v923, %v1083
      %v1085 = vpop.f32.mrb[0].mxu0
      %v1086 = vpop.f32.mrb[0].mxu0
      %v1087 = vadd.f32 %v926, %v1086
      %v1088 = vpop.f32.mrb[0].mxu0
      %1089 = vmatprep.mubr.bf16.mxu0 0
      %1090 = vmatmul.mubr.bf16.gmra.mrb[0].mxu0 %v588
      %v1091 = vpop.f32.mrb[0].mxu0
      %v1092 = vadd.f32 %v931, %v1091
      %v1093 = vpop.f32.mrb[0].mxu0
      %v1094 = vpop.f32.mrb[0].mxu0
      %v1095 = vadd.f32 %v934, %v1094
      %v1096 = vpop.f32.mrb[0].mxu0
      %1097 = vmatprep.mubr.bf16.mxu0 0
      %1098 = vmatmul.mubr.bf16.gmra.mrb[0].mxu0 %v591
      %v1099 = vpop.f32.mrb[0].mxu0
      %v1100 = vadd.f32 %v939, %v1099
      %v1101 = vpop.f32.mrb[0].mxu0
      %v1102 = vpop.f32.mrb[0].mxu0
      %v1103 = vadd.f32 %v942, %v1102
      %v1104 = vpop.f32.mrb[0].mxu0
      %1105 = vdwg.mxu0
      %v1110 = vunpack.c.l.b16 %v219
      %v1111 = vunpack.c.h.b16 %v219
      %v1112 = vunpack.c.l.b16 %v220
      %v1113 = vunpack.c.l.b16 %v221
      %v1114 = vunpack.c.h.b16 %v221
      %v1115 = vunpack.c.l.b16 %v222
      %v1116 = vpack.c.b16 %v1113, %v1110
      %v1117 = vpack.c.b16 %v1114, %v1111
      %v1118 = vpack.c.b16 %v1115, %v1112
      %v1170 = vunpack.c.l.b16 %v283
      %v1171 = vunpack.c.l.b16 %v284
      %v1172 = vunpack.c.l.b16 %v285
      %v1173 = vunpack.c.l.b16 %v286
      %v1174 = vunpack.c.l.b16 %v287
      %v1175 = vunpack.c.l.b16 %v288
      %v1176 = vunpack.c.l.b16 %v289
      %v1177 = vunpack.c.l.b16 %v290
      %v1178 = vunpack.c.l.b16 %v291
      %v1179 = vunpack.c.l.b16 %v292
      %v1180 = vunpack.c.l.b16 %v293
      %v1181 = vunpack.c.l.b16 %v294
      %v1182 = vunpack.c.l.b16 %v295
      %v1183 = vunpack.c.l.b16 %v296
      %v1184 = vunpack.c.l.b16 %v297
      %v1185 = vunpack.c.l.b16 %v298
      %v1186 = vunpack.c.l.b16 %v299
      %v1187 = vunpack.c.l.b16 %v300
      %v1188 = vunpack.c.l.b16 %v301
      %v1189 = vunpack.c.l.b16 %v302
      %v1190 = vunpack.c.l.b16 %v303
      %v1191 = vunpack.c.l.b16 %v304
      %v1192 = vunpack.c.l.b16 %v305
      %v1193 = vunpack.c.l.b16 %v306
      %v1194 = vunpack.c.l.b16 %v307
      %v1195 = vunpack.c.l.b16 %v308
      %v1196 = vunpack.c.l.b16 %v309
      %v1197 = vunpack.c.l.b16 %v310
      %v1198 = vunpack.c.l.b16 %v311
      %v1199 = vunpack.c.l.b16 %v312
      %v1200 = vunpack.c.l.b16 %v313
      %v1201 = vunpack.c.l.b16 %v314
      %v1202 = vunpack.c.l.b16 %v315
      %v1203 = vunpack.c.l.b16 %v316
      %v1204 = vunpack.c.l.b16 %v317
      %v1205 = vunpack.c.l.b16 %v318
      %v1206 = vunpack.c.l.b16 %v319
      %v1207 = vunpack.c.l.b16 %v320
      %v1208 = vunpack.c.l.b16 %v321
      %v1209 = vunpack.c.l.b16 %v322
      %v1210 = vunpack.c.l.b16 %v323
      %v1211 = vunpack.c.l.b16 %v324
      %v1212 = vunpack.c.l.b16 %v325
      %v1213 = vunpack.c.l.b16 %v326
      %v1214 = vunpack.c.l.b16 %v327
      %v1215 = vunpack.c.l.b16 %v328
      %v1216 = vunpack.c.l.b16 %v329
      %v1217 = vunpack.c.l.b16 %v330
      %v1218 = vpack.c.b16 %v1171, %v1170
      %v1219 = vpack.c.b16 %v1173, %v1172
      %v1220 = vpack.c.b16 %v1175, %v1174
      %v1221 = vpack.c.b16 %v1177, %v1176
      %v1222 = vpack.c.b16 %v1179, %v1178
      %v1223 = vpack.c.b16 %v1181, %v1180
      %v1224 = vpack.c.b16 %v1183, %v1182
      %v1225 = vpack.c.b16 %v1185, %v1184
      %v1226 = vpack.c.b16 %v1187, %v1186
      %v1227 = vpack.c.b16 %v1189, %v1188
      %v1228 = vpack.c.b16 %v1191, %v1190
      %v1229 = vpack.c.b16 %v1193, %v1192
      %v1230 = vpack.c.b16 %v1195, %v1194
      %v1231 = vpack.c.b16 %v1197, %v1196
      %v1232 = vpack.c.b16 %v1199, %v1198
      %v1233 = vpack.c.b16 %v1201, %v1200
      %v1234 = vpack.c.b16 %v1203, %v1202
      %v1235 = vpack.c.b16 %v1205, %v1204
      %v1236 = vpack.c.b16 %v1207, %v1206
      %v1237 = vpack.c.b16 %v1209, %v1208
      %v1238 = vpack.c.b16 %v1211, %v1210
      %v1239 = vpack.c.b16 %v1213, %v1212
      %v1240 = vpack.c.b16 %v1215, %v1214
      %v1241 = vpack.c.b16 %v1217, %v1216
      %1266 = vmatprep.subr.bf16.mxu0 0
      %1267 = vmatpush1.bf16.msra.mxu0 %v1218
      %1268 = vmatprep.subr.bf16.mxu0 0
      %1269 = vmatpush1.bf16.msra.mxu0 %v1219
      %1270 = vmatprep.subr.bf16.mxu0 0
      %1271 = vmatpush1.bf16.msra.mxu0 %v1220
      %1272 = vmatprep.subr.bf16.mxu0 0
      %1273 = vmatpush1.bf16.msra.mxu0 %v1221
      %1274 = vmatprep.subr.bf16.mxu0 0
      %1275 = vmatpush1.bf16.msra.mxu0 %v1222
      %1276 = vmatprep.subr.bf16.mxu0 0
      %1277 = vmatpush1.bf16.msra.mxu0 %v1223
      %1278 = vmatprep.subr.bf16.mxu0 0
      %1279 = vmatpush1.bf16.msra.mxu0 %v1224
      %1280 = vmatprep.subr.bf16.mxu0 0
      %1281 = vmatpush1.bf16.msra.mxu0 %v1225
      %1282 = vmatprep.subr.bf16.mxu0 0
      %1283 = vmatpush1.bf16.msra.mxu0 %v1226
      %1284 = vmatprep.subr.bf16.mxu0 0
      %1285 = vmatpush1.bf16.msra.mxu0 %v1227
      %1286 = vmatprep.subr.bf16.mxu0 0
      %1287 = vmatpush1.bf16.msra.mxu0 %v1228
      %1288 = vmatprep.subr.bf16.mxu0 0
      %1289 = vmatpush1.bf16.msra.mxu0 %v1229
      %1290 = vmatprep.subr.bf16.mxu0 0
      %1291 = vmatpush1.bf16.msra.mxu0 %v1230
      %1292 = vmatprep.subr.bf16.mxu0 0
      %1293 = vmatpush1.bf16.msra.mxu0 %v1231
      %1294 = vmatprep.subr.bf16.mxu0 0
      %1295 = vmatpush1.bf16.msra.mxu0 %v1232
      %1296 = vmatprep.subr.bf16.mxu0 0
      %1297 = vmatpush1.bf16.msra.mxu0 %v1233
      %1298 = vmatprep.mubr.bf16.mxu0 %v1117
      %1299 = vmatmul.mubr.bf16.gmra.mrb[0].mxu0 %v1116
      %v1300 = vpop.f32.mrb[0].mxu0
      %v1301 = vadd.f32 %v980, %v1300
      %v1302 = vpop.f32.mrb[0].mxu0
      %v1303 = vpop.f32.mrb[0].mxu0
      %v1304 = vadd.f32 %v983, %v1303
      %v1305 = vpop.f32.mrb[0].mxu0
      %1306 = vmatprep.mubr.bf16.mxu0 %v545
      %1307 = vmatmul.mubr.bf16.gmra.mrb[0].mxu0 %v544
      %v1308 = vpop.f32.mrb[0].mxu0
      %v1309 = vadd.f32 %v988, %v1308
      %v1310 = vpop.f32.mrb[0].mxu0
      %v1311 = vpop.f32.mrb[0].mxu0
      %v1312 = vadd.f32 %v991, %v1311
      %v1313 = vpop.f32.mrb[0].mxu0
      %1314 = vmatprep.mubr.bf16.mxu0 %v548
      %1315 = vmatmul.mubr.bf16.gmra.mrb[0].mxu0 %v547
      %v1316 = vpop.f32.mrb[0].mxu0
      %v1317 = vadd.f32 %v996, %v1316
      %v1318 = vpop.f32.mrb[0].mxu0
      %v1319 = vpop.f32.mrb[0].mxu0
      %v1320 = vadd.f32 %v999, %v1319
      %v1321 = vpop.f32.mrb[0].mxu0
      %1322 = vmatprep.mubr.bf16.mxu0 %v551
      %1323 = vmatmul.mubr.bf16.gmra.mrb[0].mxu0 %v550
      %v1324 = vpop.f32.mrb[0].mxu0
      %v1325 = vadd.f32 %v1004, %v1324
      %v1326 = vpop.f32.mrb[0].mxu0
      %v1327 = vpop.f32.mrb[0].mxu0
      %v1328 = vadd.f32 %v1007, %v1327
      %v1329 = vpop.f32.mrb[0].mxu0
      %1330 = vmatprep.mubr.bf16.mxu0 %v554
      %1331 = vmatmul.mubr.bf16.gmra.mrb[0].mxu0 %v553
      %v1332 = vpop.f32.mrb[0].mxu0
      %v1333 = vadd.f32 %v1012, %v1332
      %v1334 = vpop.f32.mrb[0].mxu0
      %v1335 = vpop.f32.mrb[0].mxu0
      %v1336 = vadd.f32 %v1015, %v1335
      %v1337 = vpop.f32.mrb[0].mxu0
      %1338 = vmatprep.mubr.bf16.mxu0 %v557
      %1339 = vmatmul.mubr.bf16.gmra.mrb[0].mxu0 %v556
      %v1340 = vpop.f32.mrb[0].mxu0
      %v1341 = vadd.f32 %v1020, %v1340
      %v1342 = vpop.f32.mrb[0].mxu0
      %v1343 = vpop.f32.mrb[0].mxu0
      %v1344 = vadd.f32 %v1023, %v1343
      %v1345 = vpop.f32.mrb[0].mxu0
      %1346 = vmatprep.mubr.bf16.mxu0 %v560
      %1347 = vmatmul.mubr.bf16.gmra.mrb[0].mxu0 %v559
      %v1348 = vpop.f32.mrb[0].mxu0
      %v1349 = vadd.f32 %v1028, %v1348
      %v1350 = vpop.f32.mrb[0].mxu0
      %v1351 = vpop.f32.mrb[0].mxu0
      %v1352 = vadd.f32 %v1031, %v1351
      %v1353 = vpop.f32.mrb[0].mxu0
      %1354 = vmatprep.mubr.bf16.mxu0 %v563
      %1355 = vmatmul.mubr.bf16.gmra.mrb[0].mxu0 %v562
      %v1356 = vpop.f32.mrb[0].mxu0
      %v1357 = vadd.f32 %v1036, %v1356
      %v1358 = vpop.f32.mrb[0].mxu0
      %v1359 = vpop.f32.mrb[0].mxu0
      %v1360 = vadd.f32 %v1039, %v1359
      %v1361 = vpop.f32.mrb[0].mxu0
      %1362 = vmatprep.mubr.bf16.mxu0 %v566
      %1363 = vmatmul.mubr.bf16.gmra.mrb[0].mxu0 %v565
      %v1364 = vpop.f32.mrb[0].mxu0
      %v1365 = vadd.f32 %v1044, %v1364
      %v1366 = vpop.f32.mrb[0].mxu0
      %v1367 = vpop.f32.mrb[0].mxu0
      %v1368 = vadd.f32 %v1047, %v1367
      %v1369 = vpop.f32.mrb[0].mxu0
      %1370 = vmatprep.mubr.bf16.mxu0 %v569
      %1371 = vmatmul.mubr.bf16.gmra.mrb[0].mxu0 %v568
      %v1372 = vpop.f32.mrb[0].mxu0
      %v1373 = vadd.f32 %v1052, %v1372
      %v1374 = vpop.f32.mrb[0].mxu0
      %v1375 = vpop.f32.mrb[0].mxu0
      %v1376 = vadd.f32 %v1055, %v1375
      %v1377 = vpop.f32.mrb[0].mxu0
      %1378 = vmatprep.mubr.bf16.mxu0 %v572
      %1379 = vmatmul.mubr.bf16.gmra.mrb[0].mxu0 %v571
      %v1380 = vpop.f32.mrb[0].mxu0
      %v1381 = vadd.f32 %v1060, %v1380
      %v1382 = vpop.f32.mrb[0].mxu0
      %v1383 = vpop.f32.mrb[0].mxu0
      %v1384 = vadd.f32 %v1063, %v1383
      %v1385 = vpop.f32.mrb[0].mxu0
      %1386 = vmatprep.mubr.bf16.mxu0 %v575
      %1387 = vmatmul.mubr.bf16.gmra.mrb[0].mxu0 %v574
      %v1388 = vpop.f32.mrb[0].mxu0
      %v1389 = vadd.f32 %v1068, %v1388
      %v1390 = vpop.f32.mrb[0].mxu0
      %v1391 = vpop.f32.mrb[0].mxu0
      %v1392 = vadd.f32 %v1071, %v1391
      %v1393 = vpop.f32.mrb[0].mxu0
      %1394 = vmatprep.mubr.bf16.mxu0 %v578
      %1395 = vmatmul.mubr.bf16.gmra.mrb[0].mxu0 %v577
      %v1396 = vpop.f32.mrb[0].mxu0
      %v1397 = vadd.f32 %v1076, %v1396
      %v1398 = vpop.f32.mrb[0].mxu0
      %v1399 = vpop.f32.mrb[0].mxu0
      %v1400 = vadd.f32 %v1079, %v1399
      %v1401 = vpop.f32.mrb[0].mxu0
      %1402 = vmatprep.mubr.bf16.mxu0 %v581
      %1403 = vmatmul.mubr.bf16.gmra.mrb[0].mxu0 %v580
      %v1404 = vpop.f32.mrb[0].mxu0
      %v1405 = vadd.f32 %v1084, %v1404
      %v1406 = vpop.f32.mrb[0].mxu0
      %v1407 = vpop.f32.mrb[0].mxu0
      %v1408 = vadd.f32 %v1087, %v1407
      %v1409 = vpop.f32.mrb[0].mxu0
      %1410 = vmatprep.mubr.bf16.mxu0 %v584
      %1411 = vmatmul.mubr.bf16.gmra.mrb[0].mxu0 %v583
      %v1412 = vpop.f32.mrb[0].mxu0
      %v1413 = vadd.f32 %v1092, %v1412
      %v1414 = vpop.f32.mrb[0].mxu0
      %v1415 = vpop.f32.mrb[0].mxu0
      %v1416 = vadd.f32 %v1095, %v1415
      %v1417 = vpop.f32.mrb[0].mxu0
      %1418 = vmatprep.mubr.bf16.mxu0 %v587
      %1419 = vmatmul.mubr.bf16.gmra.mrb[0].mxu0 %v586
      %v1420 = vpop.f32.mrb[0].mxu0
      %v1421 = vadd.f32 %v1100, %v1420
      %v1422 = vpop.f32.mrb[0].mxu0
      %v1423 = vpop.f32.mrb[0].mxu0
      %v1424 = vadd.f32 %v1103, %v1423
      %v1425 = vpop.f32.mrb[0].mxu0
      %1426 = vdwg.mxu0
      %1427 = vmatprep.subr.bf16.mxu0 0
      %1428 = vmatpush1.bf16.msra.mxu0 %v1234
      %1429 = vmatprep.subr.bf16.mxu0 0
      %1430 = vmatpush1.bf16.msra.mxu0 %v1235
      %1431 = vmatprep.subr.bf16.mxu0 0
      %1432 = vmatpush1.bf16.msra.mxu0 %v1236
      %1433 = vmatprep.subr.bf16.mxu0 0
      %1434 = vmatpush1.bf16.msra.mxu0 %v1237
      %1435 = vmatprep.subr.bf16.mxu0 0
      %1436 = vmatpush1.bf16.msra.mxu0 %v1238
      %1437 = vmatprep.subr.bf16.mxu0 0
      %1438 = vmatpush1.bf16.msra.mxu0 %v1239
      %1439 = vmatprep.subr.bf16.mxu0 0
      %1440 = vmatpush1.bf16.msra.mxu0 %v1240
      %1441 = vmatprep.subr.bf16.mxu0 0
      %1442 = vmatpush1.bf16.msra.mxu0 %v1241
      %1443 = vmatprep.subr.bf16.mxu0 0
      %1444 = vmatpush1.bf16.msra.mxu0 0
      %1445 = vmatprep.subr.bf16.mxu0 0
      %1446 = vmatpush1.bf16.msra.mxu0 0
      %1447 = vmatprep.subr.bf16.mxu0 0
      %1448 = vmatpush1.bf16.msra.mxu0 0
      %1449 = vmatprep.subr.bf16.mxu0 0
      %1450 = vmatpush1.bf16.msra.mxu0 0
      %1451 = vmatprep.subr.bf16.mxu0 0
      %1452 = vmatpush1.bf16.msra.mxu0 0
      %1453 = vmatprep.subr.bf16.mxu0 0
      %1454 = vmatpush1.bf16.msra.mxu0 0
      %1455 = vmatprep.subr.bf16.mxu0 0
      %1456 = vmatpush1.bf16.msra.mxu0 0
      %1457 = vmatprep.subr.bf16.mxu0 0
      %1458 = vmatpush1.bf16.msra.mxu0 0
      %1459 = vmatprep.mubr.bf16.mxu0 0
      %1460 = vmatmul.mubr.bf16.gmra.mrb[0].mxu0 %v1118
      %v1461 = vpop.f32.mrb[0].mxu0
      %v1462 = vadd.f32 %v1301, %v1461
      %v1463 = vpop.f32.mrb[0].mxu0
      %v1464 = vpop.f32.mrb[0].mxu0
      %v1465 = vadd.f32 %v1304, %v1464
      %v1466 = vpop.f32.mrb[0].mxu0
      %1467 = vmatprep.mubr.bf16.mxu0 0
      %1468 = vmatmul.mubr.bf16.gmra.mrb[0].mxu0 %v546
      %v1469 = vpop.f32.mrb[0].mxu0
      %v1470 = vadd.f32 %v1309, %v1469
      %v1471 = vpop.f32.mrb[0].mxu0
      %v1472 = vpop.f32.mrb[0].mxu0
      %v1473 = vadd.f32 %v1312, %v1472
      %v1474 = vpop.f32.mrb[0].mxu0
      %1475 = vmatprep.mubr.bf16.mxu0 0
      %1476 = vmatmul.mubr.bf16.gmra.mrb[0].mxu0 %v549
      %v1477 = vpop.f32.mrb[0].mxu0
      %v1478 = vadd.f32 %v1317, %v1477
      %v1479 = vpop.f32.mrb[0].mxu0
      %v1480 = vpop.f32.mrb[0].mxu0
      %v1481 = vadd.f32 %v1320, %v1480
      %v1482 = vpop.f32.mrb[0].mxu0
      %1483 = vmatprep.mubr.bf16.mxu0 0
      %1484 = vmatmul.mubr.bf16.gmra.mrb[0].mxu0 %v552
      %v1485 = vpop.f32.mrb[0].mxu0
      %v1486 = vadd.f32 %v1325, %v1485
      %v1487 = vpop.f32.mrb[0].mxu0
      %v1488 = vpop.f32.mrb[0].mxu0
      %v1489 = vadd.f32 %v1328, %v1488
      %v1490 = vpop.f32.mrb[0].mxu0
      %1491 = vmatprep.mubr.bf16.mxu0 0
      %1492 = vmatmul.mubr.bf16.gmra.mrb[0].mxu0 %v555
      %v1493 = vpop.f32.mrb[0].mxu0
      %v1494 = vadd.f32 %v1333, %v1493
      %v1495 = vpop.f32.mrb[0].mxu0
      %v1496 = vpop.f32.mrb[0].mxu0
      %v1497 = vadd.f32 %v1336, %v1496
      %v1498 = vpop.f32.mrb[0].mxu0
      %1499 = vmatprep.mubr.bf16.mxu0 0
      %1500 = vmatmul.mubr.bf16.gmra.mrb[0].mxu0 %v558
      %v1501 = vpop.f32.mrb[0].mxu0
      %v1502 = vadd.f32 %v1341, %v1501
      %v1503 = vpop.f32.mrb[0].mxu0
      %v1504 = vpop.f32.mrb[0].mxu0
      %v1505 = vadd.f32 %v1344, %v1504
      %v1506 = vpop.f32.mrb[0].mxu0
      %1507 = vmatprep.mubr.bf16.mxu0 0
      %1508 = vmatmul.mubr.bf16.gmra.mrb[0].mxu0 %v561
      %v1509 = vpop.f32.mrb[0].mxu0
      %v1510 = vadd.f32 %v1349, %v1509
      %v1511 = vpop.f32.mrb[0].mxu0
      %v1512 = vpop.f32.mrb[0].mxu0
      %v1513 = vadd.f32 %v1352, %v1512
      %v1514 = vpop.f32.mrb[0].mxu0
      %1515 = vmatprep.mubr.bf16.mxu0 0
      %1516 = vmatmul.mubr.bf16.gmra.mrb[0].mxu0 %v564
      %v1517 = vpop.f32.mrb[0].mxu0
      %v1518 = vadd.f32 %v1357, %v1517
      %v1519 = vpop.f32.mrb[0].mxu0
      %v1520 = vpop.f32.mrb[0].mxu0
      %v1521 = vadd.f32 %v1360, %v1520
      %v1522 = vpop.f32.mrb[0].mxu0
      %1523 = vmatprep.mubr.bf16.mxu0 0
      %1524 = vmatmul.mubr.bf16.gmra.mrb[0].mxu0 %v567
      %v1525 = vpop.f32.mrb[0].mxu0
      %v1526 = vadd.f32 %v1365, %v1525
      %v1527 = vpop.f32.mrb[0].mxu0
      %v1528 = vpop.f32.mrb[0].mxu0
      %v1529 = vadd.f32 %v1368, %v1528
      %v1530 = vpop.f32.mrb[0].mxu0
      %1531 = vmatprep.mubr.bf16.mxu0 0
      %1532 = vmatmul.mubr.bf16.gmra.mrb[0].mxu0 %v570
      %v1533 = vpop.f32.mrb[0].mxu0
      %v1534 = vadd.f32 %v1373, %v1533
      %v1535 = vpop.f32.mrb[0].mxu0
      %v1536 = vpop.f32.mrb[0].mxu0
      %v1537 = vadd.f32 %v1376, %v1536
      %v1538 = vpop.f32.mrb[0].mxu0
      %1539 = vmatprep.mubr.bf16.mxu0 0
      %1540 = vmatmul.mubr.bf16.gmra.mrb[0].mxu0 %v573
      %v1541 = vpop.f32.mrb[0].mxu0
      %v1542 = vadd.f32 %v1381, %v1541
      %v1543 = vpop.f32.mrb[0].mxu0
      %v1544 = vpop.f32.mrb[0].mxu0
      %v1545 = vadd.f32 %v1384, %v1544
      %v1546 = vpop.f32.mrb[0].mxu0
      %1547 = vmatprep.mubr.bf16.mxu0 0
      %1548 = vmatmul.mubr.bf16.gmra.mrb[0].mxu0 %v576
      %v1549 = vpop.f32.mrb[0].mxu0
      %v1550 = vadd.f32 %v1389, %v1549
      %v1551 = vpop.f32.mrb[0].mxu0
      %v1552 = vpop.f32.mrb[0].mxu0
      %v1553 = vadd.f32 %v1392, %v1552
      %v1554 = vpop.f32.mrb[0].mxu0
      %1555 = vmatprep.mubr.bf16.mxu0 0
      %1556 = vmatmul.mubr.bf16.gmra.mrb[0].mxu0 %v579
      %v1557 = vpop.f32.mrb[0].mxu0
      %v1558 = vadd.f32 %v1397, %v1557
      %v1559 = vpop.f32.mrb[0].mxu0
      %v1560 = vpop.f32.mrb[0].mxu0
      %v1561 = vadd.f32 %v1400, %v1560
      %v1562 = vpop.f32.mrb[0].mxu0
      %1563 = vmatprep.mubr.bf16.mxu0 0
      %1564 = vmatmul.mubr.bf16.gmra.mrb[0].mxu0 %v582
      %v1565 = vpop.f32.mrb[0].mxu0
      %v1566 = vadd.f32 %v1405, %v1565
      %v1567 = vpop.f32.mrb[0].mxu0
      %v1568 = vpop.f32.mrb[0].mxu0
      %v1569 = vadd.f32 %v1408, %v1568
      %v1570 = vpop.f32.mrb[0].mxu0
      %1571 = vmatprep.mubr.bf16.mxu0 0
      %1572 = vmatmul.mubr.bf16.gmra.mrb[0].mxu0 %v585
      %v1573 = vpop.f32.mrb[0].mxu0
      %v1574 = vadd.f32 %v1413, %v1573
      %v1575 = vpop.f32.mrb[0].mxu0
      %v1576 = vpop.f32.mrb[0].mxu0
      %v1577 = vadd.f32 %v1416, %v1576
      %v1578 = vpop.f32.mrb[0].mxu0
      %1579 = vmatprep.mubr.bf16.mxu0 0
      %1580 = vmatmul.mubr.bf16.gmra.mrb[0].mxu0 %v588
      %v1581 = vpop.f32.mrb[0].mxu0
      %v1582 = vadd.f32 %v1421, %v1581
      %v1583 = vpop.f32.mrb[0].mxu0
      %v1584 = vpop.f32.mrb[0].mxu0
      %v1585 = vadd.f32 %v1424, %v1584
      %v1586 = vpop.f32.mrb[0].mxu0
      %1587 = vdwg.mxu0
      %v1588 = vld [vmem:[%s207 + $0x30] sm:$0xff]
      %v1589 = vld [vmem:[%s207 + $0x38] sm:$0xf]
      %v1590 = vld [vmem:[%s207 + $0x3c] sm:$0xff]
      %v1591 = vld [vmem:[%s207 + $0x44] sm:$0xf]
      %v1592 = vld [vmem:[%s207 + $0x48] sm:$0xff]
      %v1593 = vld [vmem:[%s207 + $0x50] sm:$0xf]
      %v1594 = vld [vmem:[%s207 + $0x54] sm:$0xff]
      %v1595 = vld [vmem:[%s207 + $0x5c] sm:$0xf]
      %v1596 = vld [vmem:[%s207 + $0x60] sm:$0xff]
      %v1597 = vld [vmem:[%s207 + $0x68] sm:$0xf]
      %v1598 = vld [vmem:[%s207 + $0x6c] sm:$0xff]
      %v1599 = vld [vmem:[%s207 + $0x74] sm:$0xf]
      %v1600 = vld [vmem:[%s207 + $0x78] sm:$0xff]
      %v1601 = vld [vmem:[%s207 + $0x80] sm:$0xf]
      %v1602 = vld [vmem:[%s207 + $0x84] sm:$0xff]
      %v1603 = vld [vmem:[%s207 + $0x8c] sm:$0xf]
      %v1604 = vld [vmem:[%s207 + $0x90] sm:$0xff]
      %v1605 = vld [vmem:[%s207 + $0x98] sm:$0xf]
      %v1606 = vld [vmem:[%s207 + $0x9c] sm:$0xff]
      %v1607 = vld [vmem:[%s207 + $0xa4] sm:$0xf]
      %v1608 = vld [vmem:[%s207 + $0xa8] sm:$0xff]
      %v1609 = vld [vmem:[%s207 + $0xb0] sm:$0xf]
      %v1610 = vld [vmem:[%s207 + $0xb4] sm:$0xff]
      %v1611 = vld [vmem:[%s207 + $0xbc] sm:$0xf]
      %v1612 = vld [vmem:[%s207 + $0xc0] sm:$0xff]
      %v1613 = vld [vmem:[%s207 + $0xc8] sm:$0xf]
      %v1614 = vld [vmem:[%s207 + $0xcc] sm:$0xff]
      %v1615 = vld [vmem:[%s207 + $0xd4] sm:$0xf]
      %v1616 = vld [vmem:[%s207 + $0xd8] sm:$0xff]
      %v1617 = vld [vmem:[%s207 + $0xe0] sm:$0xf]
      %v1618 = vld [vmem:[%s207 + $0xe4] sm:$0xff]
      %v1619 = vld [vmem:[%s207 + $0xec] sm:$0xf]
      %v1620 = vld [vmem:[%s207 + $0xf0] sm:$0xff]
      %v1621 = vld [vmem:[%s207 + $0xf8] sm:$0xf]
      %v1622 = vld [vmem:[%s207 + $0xfc] sm:$0xff]
      %v1623 = vld [vmem:[%s207 + $0x104] sm:$0xf]
      %v1624 = vld [vmem:[%s207 + $0x108] sm:$0xff]
      %v1625 = vld [vmem:[%s207 + $0x110] sm:$0xf]
      %v1626 = vld [vmem:[%s207 + $0x114] sm:$0xff]
      %v1627 = vld [vmem:[%s207 + $0x11c] sm:$0xf]
      %v1628 = vld [vmem:[%s207 + $0x120] sm:$0xff]
      %v1629 = vld [vmem:[%s207 + $0x128] sm:$0xf]
      %v1630 = vld [vmem:[%s207 + $0x12c] sm:$0xff]
      %v1631 = vld [vmem:[%s207 + $0x134] sm:$0xf]
      %v1632 = vld [vmem:[%s207 + $0x138] sm:$0xff]
      %v1633 = vld [vmem:[%s207 + $0x140] sm:$0xf]
      %v1634 = vld [vmem:[%s207 + $0x144] sm:$0xff]
      %v1635 = vld [vmem:[%s207 + $0x14c] sm:$0xf]
      %v1636 = vld [vmem:[%s207 + $0x150] sm:$0xff]
      %v1637 = vld [vmem:[%s207 + $0x158] sm:$0xf]
      %v1638 = vld [vmem:[%s207 + $0x15c] sm:$0xff]
      %v1639 = vld [vmem:[%s207 + $0x164] sm:$0xf]
      %v1640 = vld [vmem:[%s207 + $0x168] sm:$0xff]
      %v1641 = vld [vmem:[%s207 + $0x170] sm:$0xf]
      %v1642 = vld [vmem:[%s207 + $0x174] sm:$0xff]
      %v1643 = vld [vmem:[%s207 + $0x17c] sm:$0xf]
      %v1644 = vld [vmem:[%s207 + $0x180] sm:$0xff]
      %v1645 = vld [vmem:[%s207 + $0x188] sm:$0xf]
      %v1646 = vld [vmem:[%s207 + $0x18c] sm:$0xff]
      %v1647 = vld [vmem:[%s207 + $0x194] sm:$0xf]
      %v1648 = vld [vmem:[%s207 + $0x198] sm:$0xff]
      %v1649 = vld [vmem:[%s207 + $0x1a0] sm:$0xf]
      %v1650 = vld [vmem:[%s207 + $0x1a4] sm:$0xff]
      %v1651 = vld [vmem:[%s207 + $0x1ac] sm:$0xf]
      %s1652 = scalar_lea.vmem %s1, 384
      %v1653 = vld [vmem:[%s1652] sm:$0xf]
      %v1654 = vld [vmem:[%s1652 + $0x4] sm:$0xf]
      %v1655 = vld [vmem:[%s1652 + $0x8] sm:$0xf]
      %v1656 = vld [vmem:[%s1652 + $0xc] sm:$0xf]
      %v1657 = vld [vmem:[%s1652 + $0x10] sm:$0xf]
      %v1658 = vld [vmem:[%s1652 + $0x14] sm:$0xf]
      %v1659 = vld [vmem:[%s1652 + $0x18] sm:$0xf]
      %v1660 = vld [vmem:[%s1652 + $0x1c] sm:$0xf]
      %v1661 = vld [vmem:[%s1652 + $0x20] sm:$0xf]
      %v1662 = vld [vmem:[%s1652 + $0x24] sm:$0xf]
      %v1663 = vld [vmem:[%s1652 + $0x28] sm:$0xf]
      %v1664 = vld [vmem:[%s1652 + $0x2c] sm:$0xf]
      %v1665 = vld [vmem:[%s1652 + $0x30] sm:$0xf]
      %v1666 = vld [vmem:[%s1652 + $0x34] sm:$0xf]
      %v1667 = vld [vmem:[%s1652 + $0x38] sm:$0xf]
      %v1668 = vld [vmem:[%s1652 + $0x3c] sm:$0xf]
      %v1669 = vld [vmem:[%s1652 + $0x40] sm:$0xf]
      %v1670 = vld [vmem:[%s1652 + $0x44] sm:$0xf]
      %v1671 = vld [vmem:[%s1652 + $0x48] sm:$0xf]
      %v1672 = vld [vmem:[%s1652 + $0x4c] sm:$0xf]
      %v1673 = vld [vmem:[%s1652 + $0x50] sm:$0xf]
      %v1674 = vld [vmem:[%s1652 + $0x54] sm:$0xf]
      %v1675 = vld [vmem:[%s1652 + $0x58] sm:$0xf]
      %v1676 = vld [vmem:[%s1652 + $0x5c] sm:$0xf]
      %v1677 = vld [vmem:[%s1652 + $0x60] sm:$0xf]
      %v1678 = vld [vmem:[%s1652 + $0x64] sm:$0xf]
      %v1679 = vld [vmem:[%s1652 + $0x68] sm:$0xf]
      %v1680 = vld [vmem:[%s1652 + $0x6c] sm:$0xf]
      %v1681 = vld [vmem:[%s1652 + $0x70] sm:$0xf]
      %v1682 = vld [vmem:[%s1652 + $0x74] sm:$0xf]
      %v1683 = vld [vmem:[%s1652 + $0x78] sm:$0xf]
      %v1684 = vld [vmem:[%s1652 + $0x7c] sm:$0xf]
      %v1685 = vld [vmem:[%s1652 + $0x80] sm:$0xf]
      %v1686 = vld [vmem:[%s1652 + $0x84] sm:$0xf]
      %v1687 = vld [vmem:[%s1652 + $0x88] sm:$0xf]
      %v1688 = vld [vmem:[%s1652 + $0x8c] sm:$0xf]
      %v1689 = vld [vmem:[%s1652 + $0x90] sm:$0xf]
      %v1690 = vld [vmem:[%s1652 + $0x94] sm:$0xf]
      %v1691 = vld [vmem:[%s1652 + $0x98] sm:$0xf]
      %v1692 = vld [vmem:[%s1652 + $0x9c] sm:$0xf]
      %v1693 = vld [vmem:[%s1652 + $0xa0] sm:$0xf]
      %v1694 = vld [vmem:[%s1652 + $0xa4] sm:$0xf]
      %v1695 = vld [vmem:[%s1652 + $0xa8] sm:$0xf]
      %v1696 = vld [vmem:[%s1652 + $0xac] sm:$0xf]
      %v1697 = vld [vmem:[%s1652 + $0xb0] sm:$0xf]
      %v1698 = vld [vmem:[%s1652 + $0xb4] sm:$0xf]
      %v1699 = vld [vmem:[%s1652 + $0xb8] sm:$0xf]
      %v1700 = vld [vmem:[%s1652 + $0xbc] sm:$0xf]
      %v1765 = vunpack.c.l.b16 %v1588
      %v1766 = vunpack.c.h.b16 %v1588
      %v1767 = vunpack.c.l.b16 %v1589
      %v1768 = vunpack.c.l.b16 %v1590
      %v1769 = vunpack.c.h.b16 %v1590
      %v1770 = vunpack.c.l.b16 %v1591
      %v1771 = vunpack.c.l.b16 %v1592
      %v1772 = vunpack.c.h.b16 %v1592
      %v1773 = vunpack.c.l.b16 %v1593
      %v1774 = vunpack.c.l.b16 %v1594
      %v1775 = vunpack.c.h.b16 %v1594
      %v1776 = vunpack.c.l.b16 %v1595
      %v1777 = vunpack.c.l.b16 %v1596
      %v1778 = vunpack.c.h.b16 %v1596
      %v1779 = vunpack.c.l.b16 %v1597
      %v1780 = vunpack.c.l.b16 %v1598
      %v1781 = vunpack.c.h.b16 %v1598
      %v1782 = vunpack.c.l.b16 %v1599
      %v1783 = vunpack.c.l.b16 %v1600
      %v1784 = vunpack.c.h.b16 %v1600
      %v1785 = vunpack.c.l.b16 %v1601
      %v1786 = vunpack.c.l.b16 %v1602
      %v1787 = vunpack.c.h.b16 %v1602
      %v1788 = vunpack.c.l.b16 %v1603
      %v1789 = vunpack.c.l.b16 %v1604
      %v1790 = vunpack.c.h.b16 %v1604
      %v1791 = vunpack.c.l.b16 %v1605
      %v1792 = vunpack.c.l.b16 %v1606
      %v1793 = vunpack.c.h.b16 %v1606
      %v1794 = vunpack.c.l.b16 %v1607
      %v1795 = vunpack.c.l.b16 %v1608
      %v1796 = vunpack.c.h.b16 %v1608
      %v1797 = vunpack.c.l.b16 %v1609
      %v1798 = vunpack.c.l.b16 %v1610
      %v1799 = vunpack.c.h.b16 %v1610
      %v1800 = vunpack.c.l.b16 %v1611
      %v1801 = vunpack.c.l.b16 %v1612
      %v1802 = vunpack.c.h.b16 %v1612
      %v1803 = vunpack.c.l.b16 %v1613
      %v1804 = vunpack.c.l.b16 %v1614
      %v1805 = vunpack.c.h.b16 %v1614
      %v1806 = vunpack.c.l.b16 %v1615
      %v1807 = vunpack.c.l.b16 %v1616
      %v1808 = vunpack.c.h.b16 %v1616
      %v1809 = vunpack.c.l.b16 %v1617
      %v1810 = vunpack.c.l.b16 %v1618
      %v1811 = vunpack.c.h.b16 %v1618
      %v1812 = vunpack.c.l.b16 %v1619
      %v1813 = vunpack.c.l.b16 %v1620
      %v1814 = vunpack.c.h.b16 %v1620
      %v1815 = vunpack.c.l.b16 %v1621
      %v1816 = vunpack.c.l.b16 %v1622
      %v1817 = vunpack.c.h.b16 %v1622
      %v1818 = vunpack.c.l.b16 %v1623
      %v1819 = vunpack.c.l.b16 %v1624
      %v1820 = vunpack.c.h.b16 %v1624
      %v1821 = vunpack.c.l.b16 %v1625
      %v1822 = vunpack.c.l.b16 %v1626
      %v1823 = vunpack.c.h.b16 %v1626
      %v1824 = vunpack.c.l.b16 %v1627
      %v1825 = vunpack.c.l.b16 %v1628
      %v1826 = vunpack.c.h.b16 %v1628
      %v1827 = vunpack.c.l.b16 %v1629
      %v1828 = vunpack.c.l.b16 %v1630
      %v1829 = vunpack.c.h.b16 %v1630
      %v1830 = vunpack.c.l.b16 %v1631
      %v1831 = vunpack.c.l.b16 %v1632
      %v1832 = vunpack.c.h.b16 %v1632
      %v1833 = vunpack.c.l.b16 %v1633
      %v1834 = vunpack.c.l.b16 %v1634
      %v1835 = vunpack.c.h.b16 %v1634
      %v1836 = vunpack.c.l.b16 %v1635
      %v1837 = vunpack.c.l.b16 %v1636
      %v1838 = vunpack.c.h.b16 %v1636
      %v1839 = vunpack.c.l.b16 %v1637
      %v1840 = vunpack.c.l.b16 %v1638
      %v1841 = vunpack.c.h.b16 %v1638
      %v1842 = vunpack.c.l.b16 %v1639
      %v1843 = vunpack.c.l.b16 %v1640
      %v1844 = vunpack.c.h.b16 %v1640
      %v1845 = vunpack.c.l.b16 %v1641
      %v1846 = vunpack.c.l.b16 %v1642
      %v1847 = vunpack.c.h.b16 %v1642
      %v1848 = vunpack.c.l.b16 %v1643
      %v1849 = vunpack.c.l.b16 %v1644
      %v1850 = vunpack.c.h.b16 %v1644
      %v1851 = vunpack.c.l.b16 %v1645
      %v1852 = vunpack.c.l.b16 %v1646
      %v1853 = vunpack.c.h.b16 %v1646
      %v1854 = vunpack.c.l.b16 %v1647
      %v1855 = vunpack.c.l.b16 %v1648
      %v1856 = vunpack.c.h.b16 %v1648
      %v1857 = vunpack.c.l.b16 %v1649
      %v1858 = vunpack.c.l.b16 %v1650
      %v1859 = vunpack.c.h.b16 %v1650
      %v1860 = vunpack.c.l.b16 %v1651
      %v1861 = vpack.c.b16 %v1768, %v1765
      %v1862 = vpack.c.b16 %v1769, %v1766
      %v1863 = vpack.c.b16 %v1770, %v1767
      %v1864 = vpack.c.b16 %v1774, %v1771
      %v1865 = vpack.c.b16 %v1775, %v1772
      %v1866 = vpack.c.b16 %v1776, %v1773
      %v1867 = vpack.c.b16 %v1780, %v1777
      %v1868 = vpack.c.b16 %v1781, %v1778
      %v1869 = vpack.c.b16 %v1782, %v1779
      %v1870 = vpack.c.b16 %v1786, %v1783
      %v1871 = vpack.c.b16 %v1787, %v1784
      %v1872 = vpack.c.b16 %v1788, %v1785
      %v1873 = vpack.c.b16 %v1792, %v1789
      %v1874 = vpack.c.b16 %v1793, %v1790
      %v1875 = vpack.c.b16 %v1794, %v1791
      %v1876 = vpack.c.b16 %v1798, %v1795
      %v1877 = vpack.c.b16 %v1799, %v1796
      %v1878 = vpack.c.b16 %v1800, %v1797
      %v1879 = vpack.c.b16 %v1804, %v1801
      %v1880 = vpack.c.b16 %v1805, %v1802
      %v1881 = vpack.c.b16 %v1806, %v1803
      %v1882 = vpack.c.b16 %v1810, %v1807
      %v1883 = vpack.c.b16 %v1811, %v1808
      %v1884 = vpack.c.b16 %v1812, %v1809
      %v1885 = vpack.c.b16 %v1816, %v1813
      %v1886 = vpack.c.b16 %v1817, %v1814
      %v1887 = vpack.c.b16 %v1818, %v1815
      %v1888 = vpack.c.b16 %v1822, %v1819
      %v1889 = vpack.c.b16 %v1823, %v1820
      %v1890 = vpack.c.b16 %v1824, %v1821
      %v1891 = vpack.c.b16 %v1828, %v1825
      %v1892 = vpack.c.b16 %v1829, %v1826
      %v1893 = vpack.c.b16 %v1830, %v1827
      %v1894 = vpack.c.b16 %v1834, %v1831
      %v1895 = vpack.c.b16 %v1835, %v1832
      %v1896 = vpack.c.b16 %v1836, %v1833
      %v1897 = vpack.c.b16 %v1840, %v1837
      %v1898 = vpack.c.b16 %v1841, %v1838
      %v1899 = vpack.c.b16 %v1842, %v1839
      %v1900 = vpack.c.b16 %v1846, %v1843
      %v1901 = vpack.c.b16 %v1847, %v1844
      %v1902 = vpack.c.b16 %v1848, %v1845
      %v1903 = vpack.c.b16 %v1852, %v1849
      %v1904 = vpack.c.b16 %v1853, %v1850
      %v1905 = vpack.c.b16 %v1854, %v1851
      %v1906 = vpack.c.b16 %v1858, %v1855
      %v1907 = vpack.c.b16 %v1859, %v1856
      %v1908 = vpack.c.b16 %v1860, %v1857
      %v2005 = vunpack.c.l.b16 %v1653
      %v2006 = vunpack.c.l.b16 %v1654
      %v2007 = vunpack.c.l.b16 %v1655
      %v2008 = vunpack.c.l.b16 %v1656
      %v2009 = vunpack.c.l.b16 %v1657
      %v2010 = vunpack.c.l.b16 %v1658
      %v2011 = vunpack.c.l.b16 %v1659
      %v2012 = vunpack.c.l.b16 %v1660
      %v2013 = vunpack.c.l.b16 %v1661
      %v2014 = vunpack.c.l.b16 %v1662
      %v2015 = vunpack.c.l.b16 %v1663
      %v2016 = vunpack.c.l.b16 %v1664
      %v2017 = vunpack.c.l.b16 %v1665
      %v2018 = vunpack.c.l.b16 %v1666
      %v2019 = vunpack.c.l.b16 %v1667
      %v2020 = vunpack.c.l.b16 %v1668
      %v2021 = vunpack.c.l.b16 %v1669
      %v2022 = vunpack.c.l.b16 %v1670
      %v2023 = vunpack.c.l.b16 %v1671
      %v2024 = vunpack.c.l.b16 %v1672
      %v2025 = vunpack.c.l.b16 %v1673
      %v2026 = vunpack.c.l.b16 %v1674
      %v2027 = vunpack.c.l.b16 %v1675
      %v2028 = vunpack.c.l.b16 %v1676
      %v2029 = vunpack.c.l.b16 %v1677
      %v2030 = vunpack.c.l.b16 %v1678
      %v2031 = vunpack.c.l.b16 %v1679
      %v2032 = vunpack.c.l.b16 %v1680
      %v2033 = vunpack.c.l.b16 %v1681
      %v2034 = vunpack.c.l.b16 %v1682
      %v2035 = vunpack.c.l.b16 %v1683
      %v2036 = vunpack.c.l.b16 %v1684
      %v2037 = vunpack.c.l.b16 %v1685
      %v2038 = vunpack.c.l.b16 %v1686
      %v2039 = vunpack.c.l.b16 %v1687
      %v2040 = vunpack.c.l.b16 %v1688
      %v2041 = vunpack.c.l.b16 %v1689
      %v2042 = vunpack.c.l.b16 %v1690
      %v2043 = vunpack.c.l.b16 %v1691
      %v2044 = vunpack.c.l.b16 %v1692
      %v2045 = vunpack.c.l.b16 %v1693
      %v2046 = vunpack.c.l.b16 %v1694
      %v2047 = vunpack.c.l.b16 %v1695
      %v2048 = vunpack.c.l.b16 %v1696
      %v2049 = vunpack.c.l.b16 %v1697
      %v2050 = vunpack.c.l.b16 %v1698
      %v2051 = vunpack.c.l.b16 %v1699
      %v2052 = vunpack.c.l.b16 %v1700
      %v2053 = vpack.c.b16 %v2006, %v2005
      %v2054 = vpack.c.b16 %v2008, %v2007
      %v2055 = vpack.c.b16 %v2010, %v2009
      %v2056 = vpack.c.b16 %v2012, %v2011
      %v2057 = vpack.c.b16 %v2014, %v2013
      %v2058 = vpack.c.b16 %v2016, %v2015
      %v2059 = vpack.c.b16 %v2018, %v2017
      %v2060 = vpack.c.b16 %v2020, %v2019
      %v2061 = vpack.c.b16 %v2022, %v2021
      %v2062 = vpack.c.b16 %v2024, %v2023
      %v2063 = vpack.c.b16 %v2026, %v2025
      %v2064 = vpack.c.b16 %v2028, %v2027
      %v2065 = vpack.c.b16 %v2030, %v2029
      %v2066 = vpack.c.b16 %v2032, %v2031
      %v2067 = vpack.c.b16 %v2034, %v2033
      %v2068 = vpack.c.b16 %v2036, %v2035
      %v2069 = vpack.c.b16 %v2038, %v2037
      %v2070 = vpack.c.b16 %v2040, %v2039
      %v2071 = vpack.c.b16 %v2042, %v2041
      %v2072 = vpack.c.b16 %v2044, %v2043
      %v2073 = vpack.c.b16 %v2046, %v2045
      %v2074 = vpack.c.b16 %v2048, %v2047
      %v2075 = vpack.c.b16 %v2050, %v2049
      %v2076 = vpack.c.b16 %v2052, %v2051
      %2101 = vmatprep.subr.bf16.mxu0 0
      %2102 = vmatpush1.bf16.msra.mxu0 %v2053
      %2103 = vmatprep.subr.bf16.mxu0 0
      %2104 = vmatpush1.bf16.msra.mxu0 %v2054
      %2105 = vmatprep.subr.bf16.mxu0 0
      %2106 = vmatpush1.bf16.msra.mxu0 %v2055
      %2107 = vmatprep.subr.bf16.mxu0 0
      %2108 = vmatpush1.bf16.msra.mxu0 %v2056
      %2109 = vmatprep.subr.bf16.mxu0 0
      %2110 = vmatpush1.bf16.msra.mxu0 %v2057
      %2111 = vmatprep.subr.bf16.mxu0 0
      %2112 = vmatpush1.bf16.msra.mxu0 %v2058
      %2113 = vmatprep.subr.bf16.mxu0 0
      %2114 = vmatpush1.bf16.msra.mxu0 %v2059
      %2115 = vmatprep.subr.bf16.mxu0 0
      %2116 = vmatpush1.bf16.msra.mxu0 %v2060
      %2117 = vmatprep.subr.bf16.mxu0 0
      %2118 = vmatpush1.bf16.msra.mxu0 %v2061
      %2119 = vmatprep.subr.bf16.mxu0 0
      %2120 = vmatpush1.bf16.msra.mxu0 %v2062
      %2121 = vmatprep.subr.bf16.mxu0 0
      %2122 = vmatpush1.bf16.msra.mxu0 %v2063
      %2123 = vmatprep.subr.bf16.mxu0 0
      %2124 = vmatpush1.bf16.msra.mxu0 %v2064
      %2125 = vmatprep.subr.bf16.mxu0 0
      %2126 = vmatpush1.bf16.msra.mxu0 %v2065
      %2127 = vmatprep.subr.bf16.mxu0 0
      %2128 = vmatpush1.bf16.msra.mxu0 %v2066
      %2129 = vmatprep.subr.bf16.mxu0 0
      %2130 = vmatpush1.bf16.msra.mxu0 %v2067
      %2131 = vmatprep.subr.bf16.mxu0 0
      %2132 = vmatpush1.bf16.msra.mxu0 %v2068
      %2133 = vmatprep.mubr.bf16.mxu0 %v1862
      %2134 = vmatmul.mubr.bf16.gmra.mrb[0].mxu0 %v1861
      %v2135 = vpop.f32.mrb[0].mxu0
      %v2136 = vadd.f32 0.0, %v2135
      %v2137 = vpop.f32.mrb[0].mxu0
      %v2138 = vpop.f32.mrb[0].mxu0
      %v2139 = vadd.f32 0.0, %v2138
      %v2140 = vpop.f32.mrb[0].mxu0
      %2141 = vmatprep.mubr.bf16.mxu0 %v1865
      %2142 = vmatmul.mubr.bf16.gmra.mrb[0].mxu0 %v1864
      %v2143 = vpop.f32.mrb[0].mxu0
      %v2144 = vadd.f32 0.0, %v2143
      %v2145 = vpop.f32.mrb[0].mxu0
      %v2146 = vpop.f32.mrb[0].mxu0
      %v2147 = vadd.f32 0.0, %v2146
      %v2148 = vpop.f32.mrb[0].mxu0
      %2149 = vmatprep.mubr.bf16.mxu0 %v1868
      %2150 = vmatmul.mubr.bf16.gmra.mrb[0].mxu0 %v1867
      %v2151 = vpop.f32.mrb[0].mxu0
      %v2152 = vadd.f32 0.0, %v2151
      %v2153 = vpop.f32.mrb[0].mxu0
      %v2154 = vpop.f32.mrb[0].mxu0
      %v2155 = vadd.f32 0.0, %v2154
      %v2156 = vpop.f32.mrb[0].mxu0
      %2157 = vmatprep.mubr.bf16.mxu0 %v1871
      %2158 = vmatmul.mubr.bf16.gmra.mrb[0].mxu0 %v1870
      %v2159 = vpop.f32.mrb[0].mxu0
      %v2160 = vadd.f32 0.0, %v2159
      %v2161 = vpop.f32.mrb[0].mxu0
      %v2162 = vpop.f32.mrb[0].mxu0
      %v2163 = vadd.f32 0.0, %v2162
      %v2164 = vpop.f32.mrb[0].mxu0
      %2165 = vmatprep.mubr.bf16.mxu0 %v1874
      %2166 = vmatmul.mubr.bf16.gmra.mrb[0].mxu0 %v1873
      %v2167 = vpop.f32.mrb[0].mxu0
      %v2168 = vadd.f32 0.0, %v2167
      %v2169 = vpop.f32.mrb[0].mxu0
      %v2170 = vpop.f32.mrb[0].mxu0
      %v2171 = vadd.f32 0.0, %v2170
      %v2172 = vpop.f32.mrb[0].mxu0
      %2173 = vmatprep.mubr.bf16.mxu0 %v1877
      %2174 = vmatmul.mubr.bf16.gmra.mrb[0].mxu0 %v1876
      %v2175 = vpop.f32.mrb[0].mxu0
      %v2176 = vadd.f32 0.0, %v2175
      %v2177 = vpop.f32.mrb[0].mxu0
      %v2178 = vpop.f32.mrb[0].mxu0
      %v2179 = vadd.f32 0.0, %v2178
      %v2180 = vpop.f32.mrb[0].mxu0
      %2181 = vmatprep.mubr.bf16.mxu0 %v1880
      %2182 = vmatmul.mubr.bf16.gmra.mrb[0].mxu0 %v1879
      %v2183 = vpop.f32.mrb[0].mxu0
      %v2184 = vadd.f32 0.0, %v2183
      %v2185 = vpop.f32.mrb[0].mxu0
      %v2186 = vpop.f32.mrb[0].mxu0
      %v2187 = vadd.f32 0.0, %v2186
      %v2188 = vpop.f32.mrb[0].mxu0
      %2189 = vmatprep.mubr.bf16.mxu0 %v1883
      %2190 = vmatmul.mubr.bf16.gmra.mrb[0].mxu0 %v1882
      %v2191 = vpop.f32.mrb[0].mxu0
      %v2192 = vadd.f32 0.0, %v2191
      %v2193 = vpop.f32.mrb[0].mxu0
      %v2194 = vpop.f32.mrb[0].mxu0
      %v2195 = vadd.f32 0.0, %v2194
      %v2196 = vpop.f32.mrb[0].mxu0
      %2197 = vmatprep.mubr.bf16.mxu0 %v1886
      %2198 = vmatmul.mubr.bf16.gmra.mrb[0].mxu0 %v1885
      %v2199 = vpop.f32.mrb[0].mxu0
      %v2200 = vadd.f32 0.0, %v2199
      %v2201 = vpop.f32.mrb[0].mxu0
      %v2202 = vpop.f32.mrb[0].mxu0
      %v2203 = vadd.f32 0.0, %v2202
      %v2204 = vpop.f32.mrb[0].mxu0
      %2205 = vmatprep.mubr.bf16.mxu0 %v1889
      %2206 = vmatmul.mubr.bf16.gmra.mrb[0].mxu0 %v1888
      %v2207 = vpop.f32.mrb[0].mxu0
      %v2208 = vadd.f32 0.0, %v2207
      %v2209 = vpop.f32.mrb[0].mxu0
      %v2210 = vpop.f32.mrb[0].mxu0
      %v2211 = vadd.f32 0.0, %v2210
      %v2212 = vpop.f32.mrb[0].mxu0
      %2213 = vmatprep.mubr.bf16.mxu0 %v1892
      %2214 = vmatmul.mubr.bf16.gmra.mrb[0].mxu0 %v1891
      %v2215 = vpop.f32.mrb[0].mxu0
      %v2216 = vadd.f32 0.0, %v2215
      %v2217 = vpop.f32.mrb[0].mxu0
      %v2218 = vpop.f32.mrb[0].mxu0
      %v2219 = vadd.f32 0.0, %v2218
      %v2220 = vpop.f32.mrb[0].mxu0
      %2221 = vmatprep.mubr.bf16.mxu0 %v1895
      %2222 = vmatmul.mubr.bf16.gmra.mrb[0].mxu0 %v1894
      %v2223 = vpop.f32.mrb[0].mxu0
      %v2224 = vadd.f32 0.0, %v2223
      %v2225 = vpop.f32.mrb[0].mxu0
      %v2226 = vpop.f32.mrb[0].mxu0
      %v2227 = vadd.f32 0.0, %v2226
      %v2228 = vpop.f32.mrb[0].mxu0
      %2229 = vmatprep.mubr.bf16.mxu0 %v1898
      %2230 = vmatmul.mubr.bf16.gmra.mrb[0].mxu0 %v1897
      %v2231 = vpop.f32.mrb[0].mxu0
      %v2232 = vadd.f32 0.0, %v2231
      %v2233 = vpop.f32.mrb[0].mxu0
      %v2234 = vpop.f32.mrb[0].mxu0
      %v2235 = vadd.f32 0.0, %v2234
      %v2236 = vpop.f32.mrb[0].mxu0
      %2237 = vmatprep.mubr.bf16.mxu0 %v1901
      %2238 = vmatmul.mubr.bf16.gmra.mrb[0].mxu0 %v1900
      %v2239 = vpop.f32.mrb[0].mxu0
      %v2240 = vadd.f32 0.0, %v2239
      %v2241 = vpop.f32.mrb[0].mxu0
      %v2242 = vpop.f32.mrb[0].mxu0
      %v2243 = vadd.f32 0.0, %v2242
      %v2244 = vpop.f32.mrb[0].mxu0
      %2245 = vmatprep.mubr.bf16.mxu0 %v1904
      %2246 = vmatmul.mubr.bf16.gmra.mrb[0].mxu0 %v1903
      %v2247 = vpop.f32.mrb[0].mxu0
      %v2248 = vadd.f32 0.0, %v2247
      %v2249 = vpop.f32.mrb[0].mxu0
      %v2250 = vpop.f32.mrb[0].mxu0
      %v2251 = vadd.f32 0.0, %v2250
      %v2252 = vpop.f32.mrb[0].mxu0
      %2253 = vmatprep.mubr.bf16.mxu0 %v1907
      %2254 = vmatmul.mubr.bf16.gmra.mrb[0].mxu0 %v1906
      %v2255 = vpop.f32.mrb[0].mxu0
      %v2256 = vadd.f32 0.0, %v2255
      %v2257 = vpop.f32.mrb[0].mxu0
      %v2258 = vpop.f32.mrb[0].mxu0
      %v2259 = vadd.f32 0.0, %v2258
      %v2260 = vpop.f32.mrb[0].mxu0
      %2261 = vdwg.mxu0
      %2262 = vmatprep.subr.bf16.mxu0 0
      %2263 = vmatpush1.bf16.msra.mxu0 %v2069
      %2264 = vmatprep.subr.bf16.mxu0 0
      %2265 = vmatpush1.bf16.msra.mxu0 %v2070
      %2266 = vmatprep.subr.bf16.mxu0 0
      %2267 = vmatpush1.bf16.msra.mxu0 %v2071
      %2268 = vmatprep.subr.bf16.mxu0 0
      %2269 = vmatpush1.bf16.msra.mxu0 %v2072
      %2270 = vmatprep.subr.bf16.mxu0 0
      %2271 = vmatpush1.bf16.msra.mxu0 %v2073
      %2272 = vmatprep.subr.bf16.mxu0 0
      %2273 = vmatpush1.bf16.msra.mxu0 %v2074
      %2274 = vmatprep.subr.bf16.mxu0 0
      %2275 = vmatpush1.bf16.msra.mxu0 %v2075
      %2276 = vmatprep.subr.bf16.mxu0 0
      %2277 = vmatpush1.bf16.msra.mxu0 %v2076
      %2278 = vmatprep.subr.bf16.mxu0 0
      %2279 = vmatpush1.bf16.msra.mxu0 0
      %2280 = vmatprep.subr.bf16.mxu0 0
      %2281 = vmatpush1.bf16.msra.mxu0 0
      %2282 = vmatprep.subr.bf16.mxu0 0
      %2283 = vmatpush1.bf16.msra.mxu0 0
      %2284 = vmatprep.subr.bf16.mxu0 0
      %2285 = vmatpush1.bf16.msra.mxu0 0
      %2286 = vmatprep.subr.bf16.mxu0 0
      %2287 = vmatpush1.bf16.msra.mxu0 0
      %2288 = vmatprep.subr.bf16.mxu0 0
      %2289 = vmatpush1.bf16.msra.mxu0 0
      %2290 = vmatprep.subr.bf16.mxu0 0
      %2291 = vmatpush1.bf16.msra.mxu0 0
      %2292 = vmatprep.subr.bf16.mxu0 0
      %2293 = vmatpush1.bf16.msra.mxu0 0
      %2294 = vmatprep.mubr.bf16.mxu0 0
      %2295 = vmatmul.mubr.bf16.gmra.mrb[0].mxu0 %v1863
      %v2296 = vpop.f32.mrb[0].mxu0
      %v2297 = vadd.f32 %v2136, %v2296
      %v2298 = vpop.f32.mrb[0].mxu0
      %v2299 = vpop.f32.mrb[0].mxu0
      %v2300 = vadd.f32 %v2139, %v2299
      %v2301 = vpop.f32.mrb[0].mxu0
      %2302 = vmatprep.mubr.bf16.mxu0 0
      %2303 = vmatmul.mubr.bf16.gmra.mrb[0].mxu0 %v1866
      %v2304 = vpop.f32.mrb[0].mxu0
      %v2305 = vadd.f32 %v2144, %v2304
      %v2306 = vpop.f32.mrb[0].mxu0
      %v2307 = vpop.f32.mrb[0].mxu0
      %v2308 = vadd.f32 %v2147, %v2307
      %v2309 = vpop.f32.mrb[0].mxu0
      %2310 = vmatprep.mubr.bf16.mxu0 0
      %2311 = vmatmul.mubr.bf16.gmra.mrb[0].mxu0 %v1869
      %v2312 = vpop.f32.mrb[0].mxu0
      %v2313 = vadd.f32 %v2152, %v2312
      %v2314 = vpop.f32.mrb[0].mxu0
      %v2315 = vpop.f32.mrb[0].mxu0
      %v2316 = vadd.f32 %v2155, %v2315
      %v2317 = vpop.f32.mrb[0].mxu0
      %2318 = vmatprep.mubr.bf16.mxu0 0
      %2319 = vmatmul.mubr.bf16.gmra.mrb[0].mxu0 %v1872
      %v2320 = vpop.f32.mrb[0].mxu0
      %v2321 = vadd.f32 %v2160, %v2320
      %v2322 = vpop.f32.mrb[0].mxu0
      %v2323 = vpop.f32.mrb[0].mxu0
      %v2324 = vadd.f32 %v2163, %v2323
      %v2325 = vpop.f32.mrb[0].mxu0
      %2326 = vmatprep.mubr.bf16.mxu0 0
      %2327 = vmatmul.mubr.bf16.gmra.mrb[0].mxu0 %v1875
      %v2328 = vpop.f32.mrb[0].mxu0
      %v2329 = vadd.f32 %v2168, %v2328
      %v2330 = vpop.f32.mrb[0].mxu0
      %v2331 = vpop.f32.mrb[0].mxu0
      %v2332 = vadd.f32 %v2171, %v2331
      %v2333 = vpop.f32.mrb[0].mxu0
      %2334 = vmatprep.mubr.bf16.mxu0 0
      %2335 = vmatmul.mubr.bf16.gmra.mrb[0].mxu0 %v1878
      %v2336 = vpop.f32.mrb[0].mxu0
      %v2337 = vadd.f32 %v2176, %v2336
      %v2338 = vpop.f32.mrb[0].mxu0
      %v2339 = vpop.f32.mrb[0].mxu0
      %v2340 = vadd.f32 %v2179, %v2339
      %v2341 = vpop.f32.mrb[0].mxu0
      %2342 = vmatprep.mubr.bf16.mxu0 0
      %2343 = vmatmul.mubr.bf16.gmra.mrb[0].mxu0 %v1881
      %v2344 = vpop.f32.mrb[0].mxu0
      %v2345 = vadd.f32 %v2184, %v2344
      %v2346 = vpop.f32.mrb[0].mxu0
      %v2347 = vpop.f32.mrb[0].mxu0
      %v2348 = vadd.f32 %v2187, %v2347
      %v2349 = vpop.f32.mrb[0].mxu0
      %2350 = vmatprep.mubr.bf16.mxu0 0
      %2351 = vmatmul.mubr.bf16.gmra.mrb[0].mxu0 %v1884
      %v2352 = vpop.f32.mrb[0].mxu0
      %v2353 = vadd.f32 %v2192, %v2352
      %v2354 = vpop.f32.mrb[0].mxu0
      %v2355 = vpop.f32.mrb[0].mxu0
      %v2356 = vadd.f32 %v2195, %v2355
      %v2357 = vpop.f32.mrb[0].mxu0
      %2358 = vmatprep.mubr.bf16.mxu0 0
      %2359 = vmatmul.mubr.bf16.gmra.mrb[0].mxu0 %v1887
      %v2360 = vpop.f32.mrb[0].mxu0
      %v2361 = vadd.f32 %v2200, %v2360
      %v2362 = vpop.f32.mrb[0].mxu0
      %v2363 = vpop.f32.mrb[0].mxu0
      %v2364 = vadd.f32 %v2203, %v2363
      %v2365 = vpop.f32.mrb[0].mxu0
      %2366 = vmatprep.mubr.bf16.mxu0 0
      %2367 = vmatmul.mubr.bf16.gmra.mrb[0].mxu0 %v1890
      %v2368 = vpop.f32.mrb[0].mxu0
      %v2369 = vadd.f32 %v2208, %v2368
      %v2370 = vpop.f32.mrb[0].mxu0
      %v2371 = vpop.f32.mrb[0].mxu0
      %v2372 = vadd.f32 %v2211, %v2371
      %v2373 = vpop.f32.mrb[0].mxu0
      %2374 = vmatprep.mubr.bf16.mxu0 0
      %2375 = vmatmul.mubr.bf16.gmra.mrb[0].mxu0 %v1893
      %v2376 = vpop.f32.mrb[0].mxu0
      %v2377 = vadd.f32 %v2216, %v2376
      %v2378 = vpop.f32.mrb[0].mxu0
      %v2379 = vpop.f32.mrb[0].mxu0
      %v2380 = vadd.f32 %v2219, %v2379
      %v2381 = vpop.f32.mrb[0].mxu0
      %2382 = vmatprep.mubr.bf16.mxu0 0
      %2383 = vmatmul.mubr.bf16.gmra.mrb[0].mxu0 %v1896
      %v2384 = vpop.f32.mrb[0].mxu0
      %v2385 = vadd.f32 %v2224, %v2384
      %v2386 = vpop.f32.mrb[0].mxu0
      %v2387 = vpop.f32.mrb[0].mxu0
      %v2388 = vadd.f32 %v2227, %v2387
      %v2389 = vpop.f32.mrb[0].mxu0
      %2390 = vmatprep.mubr.bf16.mxu0 0
      %2391 = vmatmul.mubr.bf16.gmra.mrb[0].mxu0 %v1899
      %v2392 = vpop.f32.mrb[0].mxu0
      %v2393 = vadd.f32 %v2232, %v2392
      %v2394 = vpop.f32.mrb[0].mxu0
      %v2395 = vpop.f32.mrb[0].mxu0
      %v2396 = vadd.f32 %v2235, %v2395
      %v2397 = vpop.f32.mrb[0].mxu0
      %2398 = vmatprep.mubr.bf16.mxu0 0
      %2399 = vmatmul.mubr.bf16.gmra.mrb[0].mxu0 %v1902
      %v2400 = vpop.f32.mrb[0].mxu0
      %v2401 = vadd.f32 %v2240, %v2400
      %v2402 = vpop.f32.mrb[0].mxu0
      %v2403 = vpop.f32.mrb[0].mxu0
      %v2404 = vadd.f32 %v2243, %v2403
      %v2405 = vpop.f32.mrb[0].mxu0
      %2406 = vmatprep.mubr.bf16.mxu0 0
      %2407 = vmatmul.mubr.bf16.gmra.mrb[0].mxu0 %v1905
      %v2408 = vpop.f32.mrb[0].mxu0
      %v2409 = vadd.f32 %v2248, %v2408
      %v2410 = vpop.f32.mrb[0].mxu0
      %v2411 = vpop.f32.mrb[0].mxu0
      %v2412 = vadd.f32 %v2251, %v2411
      %v2413 = vpop.f32.mrb[0].mxu0
      %2414 = vmatprep.mubr.bf16.mxu0 0
      %2415 = vmatmul.mubr.bf16.gmra.mrb[0].mxu0 %v1908
      %v2416 = vpop.f32.mrb[0].mxu0
      %v2417 = vadd.f32 %v2256, %v2416
      %v2418 = vpop.f32.mrb[0].mxu0
      %v2419 = vpop.f32.mrb[0].mxu0
      %v2420 = vadd.f32 %v2259, %v2419
      %v2421 = vpop.f32.mrb[0].mxu0
      %2422 = vdwg.mxu0
      %v2423 = vadd.f32 %v1462, %v2297
      %v2424 = vadd.f32 %v1465, %v2300
      %v2425 = vadd.f32 %v1470, %v2305
      %v2426 = vadd.f32 %v1473, %v2308
      %v2427 = vadd.f32 %v1478, %v2313
      %v2428 = vadd.f32 %v1481, %v2316
      %v2429 = vadd.f32 %v1486, %v2321
      %v2430 = vadd.f32 %v1489, %v2324
      %v2431 = vadd.f32 %v1494, %v2329
      %v2432 = vadd.f32 %v1497, %v2332
      %v2433 = vadd.f32 %v1502, %v2337
      %v2434 = vadd.f32 %v1505, %v2340
      %v2435 = vadd.f32 %v1510, %v2345
      %v2436 = vadd.f32 %v1513, %v2348
      %v2437 = vadd.f32 %v1518, %v2353
      %v2438 = vadd.f32 %v1521, %v2356
      %v2439 = vadd.f32 %v1526, %v2361
      %v2440 = vadd.f32 %v1529, %v2364
      %v2441 = vadd.f32 %v1534, %v2369
      %v2442 = vadd.f32 %v1537, %v2372
      %v2443 = vadd.f32 %v1542, %v2377
      %v2444 = vadd.f32 %v1545, %v2380
      %v2445 = vadd.f32 %v1550, %v2385
      %v2446 = vadd.f32 %v1553, %v2388
      %v2447 = vadd.f32 %v1558, %v2393
      %v2448 = vadd.f32 %v1561, %v2396
      %v2449 = vadd.f32 %v1566, %v2401
      %v2450 = vadd.f32 %v1569, %v2404
      %v2451 = vadd.f32 %v1574, %v2409
      %v2452 = vadd.f32 %v1577, %v2412
      %v2453 = vadd.f32 %v1582, %v2417
      %v2454 = vadd.f32 %v1585, %v2420
      %v2455 = vld [vmem:[%s2] sm:$0xff]
      %v2456 = vld [vmem:[%s2 + $0x8] sm:$0xff]
      %v2457 = vld [vmem:[%s2 + $0x10] sm:$0xff]
      %v2458 = vld [vmem:[%s2 + $0x18] sm:$0xff]
      %v2459 = vld [vmem:[%s2 + $0x20] sm:$0xff]
      %v2460 = vld [vmem:[%s2 + $0x28] sm:$0xff]
      %v2461 = vld [vmem:[%s2 + $0x30] sm:$0xff]
      %v2462 = vld [vmem:[%s2 + $0x38] sm:$0xff]
      %v2463 = vpack.c.bf16 %v2424, %v2423
      %v2464 = vpack.c.bf16 %v2426, %v2425
      %v2465 = vpack.c.bf16 %v2428, %v2427
      %v2466 = vpack.c.bf16 %v2430, %v2429
      %v2467 = vpack.c.bf16 %v2432, %v2431
      %v2468 = vpack.c.bf16 %v2434, %v2433
      %v2469 = vpack.c.bf16 %v2436, %v2435
      %v2470 = vpack.c.bf16 %v2438, %v2437
      %v2471 = vpack.c.bf16 %v2440, %v2439
      %v2472 = vpack.c.bf16 %v2442, %v2441
      %v2473 = vpack.c.bf16 %v2444, %v2443
      %v2474 = vpack.c.bf16 %v2446, %v2445
      %v2475 = vpack.c.bf16 %v2448, %v2447
      %v2476 = vpack.c.bf16 %v2450, %v2449
      %v2477 = vpack.c.bf16 %v2452, %v2451
      %v2478 = vpack.c.bf16 %v2454, %v2453
      %v2479 = vld [vmem:[%s212] sm:$0xff]
      %v2480 = vld [vmem:[%s212 + $0x8] sm:$0xff]
      %v2481 = vld [vmem:[%s212 + $0x10] sm:$0xff]
      %v2482 = vld [vmem:[%s212 + $0x18] sm:$0xff]
      %v2483 = vld [vmem:[%s212 + $0x20] sm:$0xff]
      %v2484 = vld [vmem:[%s212 + $0x28] sm:$0xff]
      %v2485 = vld [vmem:[%s212 + $0x30] sm:$0xff]
      %v2486 = vld [vmem:[%s212 + $0x38] sm:$0xff]
      %v2495 = vunpack.c.l.b16 %v2455
      %v2496 = vunpack.c.h.b16 %v2455
      %v2497 = vunpack.c.l.b16 %v2456
      %v2498 = vunpack.c.h.b16 %v2456
      %v2499 = vunpack.c.l.b16 %v2457
      %v2500 = vunpack.c.h.b16 %v2457
      %v2501 = vunpack.c.l.b16 %v2458
      %v2502 = vunpack.c.h.b16 %v2458
      %v2503 = vunpack.c.l.b16 %v2459
      %v2504 = vunpack.c.h.b16 %v2459
      %v2505 = vunpack.c.l.b16 %v2460
      %v2506 = vunpack.c.h.b16 %v2460
      %v2507 = vunpack.c.l.b16 %v2461
      %v2508 = vunpack.c.h.b16 %v2461
      %v2509 = vunpack.c.l.b16 %v2462
      %v2510 = vunpack.c.h.b16 %v2462
      %v2511 = vpack.c.b16 %v2497, %v2495
      %v2512 = vpack.c.b16 %v2498, %v2496
      %v2513 = vpack.c.b16 %v2501, %v2499
      %v2514 = vpack.c.b16 %v2502, %v2500
      %v2515 = vpack.c.b16 %v2505, %v2503
      %v2516 = vpack.c.b16 %v2506, %v2504
      %v2517 = vpack.c.b16 %v2509, %v2507
      %v2518 = vpack.c.b16 %v2510, %v2508
      %2527 = vmatprep.subr.bf16.mxu0 0
      %2528 = vmatpush1.bf16.msra.mxu0 %v2463
      %2529 = vmatprep.subr.bf16.mxu0 0
      %2530 = vmatpush1.bf16.msra.mxu0 %v2464
      %2531 = vmatprep.subr.bf16.mxu0 0
      %2532 = vmatpush1.bf16.msra.mxu0 %v2465
      %2533 = vmatprep.subr.bf16.mxu0 0
      %2534 = vmatpush1.bf16.msra.mxu0 %v2466
      %2535 = vmatprep.subr.bf16.mxu0 0
      %2536 = vmatpush1.bf16.msra.mxu0 %v2467
      %2537 = vmatprep.subr.bf16.mxu0 0
      %2538 = vmatpush1.bf16.msra.mxu0 %v2468
      %2539 = vmatprep.subr.bf16.mxu0 0
      %2540 = vmatpush1.bf16.msra.mxu0 %v2469
      %2541 = vmatprep.subr.bf16.mxu0 0
      %2542 = vmatpush1.bf16.msra.mxu0 %v2470
      %2543 = vmatprep.subr.bf16.mxu0 0
      %2544 = vmatpush1.bf16.msra.mxu0 %v2471
      %2545 = vmatprep.subr.bf16.mxu0 0
      %2546 = vmatpush1.bf16.msra.mxu0 %v2472
      %2547 = vmatprep.subr.bf16.mxu0 0
      %2548 = vmatpush1.bf16.msra.mxu0 %v2473
      %2549 = vmatprep.subr.bf16.mxu0 0
      %2550 = vmatpush1.bf16.msra.mxu0 %v2474
      %2551 = vmatprep.subr.bf16.mxu0 0
      %2552 = vmatpush1.bf16.msra.mxu0 %v2475
      %2553 = vmatprep.subr.bf16.mxu0 0
      %2554 = vmatpush1.bf16.msra.mxu0 %v2476
      %2555 = vmatprep.subr.bf16.mxu0 0
      %2556 = vmatpush1.bf16.msra.mxu0 %v2477
      %2557 = vmatprep.subr.bf16.mxu0 0
      %2558 = vmatpush1.bf16.msra.mxu0 %v2478
      %2559 = vmatprep.mubr.bf16.mxu0 %v2512
      %2560 = vmatmul.mubr.bf16.gmra.mrb[0].mxu0 %v2511
      %v2561 = vpop.f32.mrb[0].mxu0
      %v2562 = vadd.f32 %v2479, %v2561
      %v2563 = vpop.f32.mrb[0].mxu0
      %v2564 = vpop.f32.mrb[0].mxu0
      %v2565 = vadd.f32 %v2480, %v2564
      %v2566 = vpop.f32.mrb[0].mxu0
      %2567 = vmatprep.mubr.bf16.mxu0 %v2514
      %2568 = vmatmul.mubr.bf16.gmra.mrb[0].mxu0 %v2513
      %v2569 = vpop.f32.mrb[0].mxu0
      %v2570 = vadd.f32 %v2481, %v2569
      %v2571 = vpop.f32.mrb[0].mxu0
      %v2572 = vpop.f32.mrb[0].mxu0
      %v2573 = vadd.f32 %v2482, %v2572
      %v2574 = vpop.f32.mrb[0].mxu0
      %2575 = vmatprep.mubr.bf16.mxu0 %v2516
      %2576 = vmatmul.mubr.bf16.gmra.mrb[0].mxu0 %v2515
      %v2577 = vpop.f32.mrb[0].mxu0
      %v2578 = vadd.f32 %v2483, %v2577
      %v2579 = vpop.f32.mrb[0].mxu0
      %v2580 = vpop.f32.mrb[0].mxu0
      %v2581 = vadd.f32 %v2484, %v2580
      %v2582 = vpop.f32.mrb[0].mxu0
      %2583 = vmatprep.mubr.bf16.mxu0 %v2518
      %2584 = vmatmul.mubr.bf16.gmra.mrb[0].mxu0 %v2517
      %v2585 = vpop.f32.mrb[0].mxu0
      %v2586 = vadd.f32 %v2485, %v2585
      %v2587 = vpop.f32.mrb[0].mxu0
      %v2588 = vpop.f32.mrb[0].mxu0
      %v2589 = vadd.f32 %v2486, %v2588
      %v2590 = vpop.f32.mrb[0].mxu0
      %2591 = vdwg.mxu0
      %2592 = vst [vmem:[%s217] sm:$0xff] %v2562
      %2593 = vst [vmem:[%s217 + $0x8] sm:$0xff] %v2565
      %2594 = vst [vmem:[%s217 + $0x10] sm:$0xff] %v2570
      %2595 = vst [vmem:[%s217 + $0x18] sm:$0xff] %v2573
      %2596 = vst [vmem:[%s217 + $0x20] sm:$0xff] %v2578
      %2597 = vst [vmem:[%s217 + $0x28] sm:$0xff] %v2581
      %2598 = vst [vmem:[%s217 + $0x30] sm:$0xff] %v2586
      %2599 = vst [vmem:[%s217 + $0x38] sm:$0xff] %v2589
      %p2600 = scmp.lt.s32.totalorder %s15, 1
      %s2601 = scalar_select %p2600, %s15, 1
      %s2602 = smul.addr %s2601, 8
      %s2603 = smul.addr %s2602, 8
      %s2604 = scalar_lea.vmem %s4, %s2603
      // Predicated region
      $region37: #{res_block_down.3} parent=35 // pred_check
        %p2605 = pneg %p127
      $region38: #{res_block_down.3} parent=35 // pred_check_branch
        %2607 = sbr.rel (%p2605) target = $region40
      $region39: #{res_block_down.3} parent=35 // pred_region
        _
      $region40: #{res_block_down.3} parent=35 // pred_fallthru
        _
    $region36: #{res_block_down.3} parent=5 // pred_fallthru
      _
    %p2608 = scmp.le.s32.totalorder 2, %s10
    // Predicated region
    $region41: #{res_block_down.3} parent=5 // pred_check
      %p2609 = pneg %p2608
    $region42: #{res_block_down.3} parent=5 // pred_check_branch
      %2611 = sbr.rel (%p2609) target = $region44
    $region43: #{res_block_down.3} parent=5 // pred_region
      %s2612 = ssub.s32 %s10, 2
      // Predicated region
      $region45: #{res_block_down.3} parent=43 // pred_check
        %p2613 = pneg %p133
      $region46: #{res_block_down.3} parent=43 // pred_check_branch
        %2615 = sbr.rel (%p2613) target = $region48
      $region47: #{res_block_down.3} parent=43 // pred_region
        %p2616 = scmp.lt.s32.totalorder %s16, 1
        %s2617 = scalar_select %p2616, %s16, 1
        %s2618 = smul.addr %s2617, 8
        %s2619 = smul.addr %s2618, 8
        %s2620 = scalar_lea.vmem %s4, %s2619
      $region48: #{res_block_down.3} parent=43 // pred_fallthru
        _
    $region44: #{res_block_down.3} parent=5 // pred_fallthru
      _
  $region6: #{res_block_down.3} parent=0 // loop_footer
    %s14 = sadd.s32 1, %s10
  $region7: #{res_block_down.3} parent=0 // loop_footer_branch
    %9 = sbr.rel target = $region3
  $region8: #{res_block_down.3} parent=0 // loop_exit
    _

// kernel: res_block_down.2
$region0: #{res_block_down.2}
  #allocation0 [shape = 'u32[]', space=smem, size = 0x4, offset = 0x4, fixed_abs, tag = 'smem constant byte address 0x4 - core index']
  #allocation1 [shape = 'u32[144,128]{1,0:T(1,128)}', space=vmem, size = 0x12000, scoped, tag = 'internal scratch']
  %s0 = inlined_call_operand.vmem [shape: bf16[2,288,384], index: 0, kind: input, shape index: {}]
  %s1 = inlined_call_operand.vmem [shape: bf16[3,384,128], index: 1, kind: input, shape index: {}]
  %s2 = inlined_call_operand.vmem [shape: bf16[3,384,128], index: 2, kind: input, shape index: {}]
  %s3 = inlined_call_operand.vmem [shape: bf16[64,256], index: 3, kind: input, shape index: {}]
  %s4 = inlined_call_operand.vmem [shape: f32[2,64,128], index: 4, kind: output, shape index: {0}]
  %s5 = inlined_call_operand.vmem [shape: bf16[2,256,128], index: 5, kind: output, shape index: {1}]
  %6 = xla_tuple %s4, %s5
  %s7 = sld [smem:[#allocation0]]
  $region57: #{res_block_down.2} parent=0
    _
  %s9 = ssub.s32 1, %s7
  %s10 = scalar_select 0, %s9, %s7
  loop: start=0, step=1, limit=4
  $region2: #{res_block_down.2} parent=0 // loop_pre_header
    _
  $region3: #{res_block_down.2} parent=0 // loop_header
    %s12 = sphi 0, %s16
    %p13 = scmp.ge.s32.totalorder %s12, 4
    %s22 = sphi 0, %s24
    %s25 = sphi 0, %s22
    %s26 = sphi 0, %s25
    %s42 = sphi 0, %s26
    %s46 = sphi 0, %s46
    %s48 = sphi 0, %s46
    %s49 = sphi 0, %s48
    %s63 = sphi 0, %s49
    %s67 = sphi 0, %s67
    %s69 = sphi 0, %s67
    %s70 = sphi 0, %s69
    %s84 = sphi 0, %s70
    %s88 = sphi 0, %s88
    %s90 = sphi 0, %s88
    %s91 = sphi 0, %s90
    %s105 = sphi 0, %s91
    %s111 = sphi 0, %s113
    %s114 = sphi 0, %s111
    %s115 = sphi 0, %s114
    %s131 = sphi 0, %s115
    %s137 = sphi 0, %s139
    %s140 = sphi 0, %s137
    %s141 = sphi 0, %s140
    %s157 = sphi 0, %s141
  $region4: #{res_block_down.2} parent=0 // loop_header_branch
    %15 = sbr.rel (%p13) target = $region8
  $region5: #{res_block_down.2} parent=0 // loop_body
    %s17 = ssub.s32 %s12, 1
    %s18 = ssub.s32 %s12, 2
    %s19 = sadd.s32 %s12, 1
    %s20 = ssub.s32 %s12, %s19
    %p21 = scmp.eq.s32.totalorder %s20, 0
    %s23 = sadd.s32 %s22, 1
    %s24 = scalar_select %p21, %s22, %s23
    %p27 = pneg %p21
    %p28 = scmp.eq.s32.totalorder %s12, 1
    %p29 = por %p27, %p28
    %p30 = scmp.ne.s32.totalorder %s22, %s25
    %p31 = scmp.eq.s32.totalorder %s12, 0
    %p32 = por %p30, %p31
    %p33 = scmp.ne.s32.totalorder %s22, %s25
    %p34 = scmp.eq.s32.totalorder %s17, 1
    %p35 = por %p33, %p34
    %p36 = scmp.ne.s32.totalorder %s25, %s26
    %p37 = scmp.eq.s32.totalorder %s17, 0
    %p38 = por %p36, %p37
    %p39 = scmp.ne.s32.totalorder %s25, %s26
    %p40 = scmp.eq.s32.totalorder %s18, 1
    %p41 = por %p39, %p40
    %p43 = scmp.ne.s32.totalorder %s26, %s42
    %p44 = scmp.eq.s32.totalorder %s18, 0
    %p45 = por %p43, %p44
    %s47 = sadd.s32 %s46, 1
    %p50 = scmp.eq.s32.totalorder %s12, 1
    %p51 = scmp.ne.s32.totalorder %s46, %s48
    %p52 = scmp.eq.s32.totalorder %s12, 0
    %p53 = por %p51, %p52
    %p54 = scmp.ne.s32.totalorder %s46, %s48
    %p55 = scmp.eq.s32.totalorder %s17, 1
    %p56 = por %p54, %p55
    %p57 = scmp.ne.s32.totalorder %s48, %s49
    %p58 = scmp.eq.s32.totalorder %s17, 0
    %p59 = por %p57, %p58
    %p60 = scmp.ne.s32.totalorder %s48, %s49
    %p61 = scmp.eq.s32.totalorder %s18, 1
    %p62 = por %p60, %p61
    %p64 = scmp.ne.s32.totalorder %s49, %s63
    %p65 = scmp.eq.s32.totalorder %s18, 0
    %p66 = por %p64, %p65
    %s68 = sadd.s32 %s67, 1
    %p71 = scmp.eq.s32.totalorder %s12, 1
    %p72 = scmp.ne.s32.totalorder %s67, %s69
    %p73 = scmp.eq.s32.totalorder %s12, 0
    %p74 = por %p72, %p73
    %p75 = scmp.ne.s32.totalorder %s67, %s69
    %p76 = scmp.eq.s32.totalorder %s17, 1
    %p77 = por %p75, %p76
    %p78 = scmp.ne.s32.totalorder %s69, %s70
    %p79 = scmp.eq.s32.totalorder %s17, 0
    %p80 = por %p78, %p79
    %p81 = scmp.ne.s32.totalorder %s69, %s70
    %p82 = scmp.eq.s32.totalorder %s18, 1
    %p83 = por %p81, %p82
    %p85 = scmp.ne.s32.totalorder %s70, %s84
    %p86 = scmp.eq.s32.totalorder %s18, 0
    %p87 = por %p85, %p86
    %s89 = sadd.s32 %s88, 1
    %p92 = scmp.eq.s32.totalorder %s12, 1
    %p93 = scmp.ne.s32.totalorder %s88, %s90
    %p94 = scmp.eq.s32.totalorder %s12, 0
    %p95 = por %p93, %p94
    %p96 = scmp.ne.s32.totalorder %s88, %s90
    %p97 = scmp.eq.s32.totalorder %s17, 1
    %p98 = por %p96, %p97
    %p99 = scmp.ne.s32.totalorder %s90, %s91
    %p100 = scmp.eq.s32.totalorder %s17, 0
    %p101 = por %p99, %p100
    %p102 = scmp.ne.s32.totalorder %s90, %s91
    %p103 = scmp.eq.s32.totalorder %s18, 1
    %p104 = por %p102, %p103
    %p106 = scmp.ne.s32.totalorder %s91, %s105
    %p107 = scmp.eq.s32.totalorder %s18, 0
    %p108 = por %p106, %p107
    %s109 = ssub.s32 %s12, %s19
    %p110 = scmp.eq.s32.totalorder %s109, 0
    %s112 = sadd.s32 %s111, 1
    %s113 = scalar_select %p110, %s111, %s112
    %p116 = pneg %p110
    %p117 = scmp.eq.s32.totalorder %s12, 1
    %p118 = por %p116, %p117
    %p119 = scmp.ne.s32.totalorder %s111, %s114
    %p120 = scmp.eq.s32.totalorder %s12, 0
    %p121 = por %p119, %p120
    %p122 = scmp.ne.s32.totalorder %s111, %s114
    %p123 = scmp.eq.s32.totalorder %s17, 1
    %p124 = por %p122, %p123
    %p125 = scmp.ne.s32.totalorder %s114, %s115
    %p126 = scmp.eq.s32.totalorder %s17, 0
    %p127 = por %p125, %p126
    %p128 = scmp.ne.s32.totalorder %s114, %s115
    %p129 = scmp.eq.s32.totalorder %s18, 1
    %p130 = por %p128, %p129
    %p132 = scmp.ne.s32.totalorder %s115, %s131
    %p133 = scmp.eq.s32.totalorder %s18, 0
    %p134 = por %p132, %p133
    %s135 = ssub.s32 %s12, %s19
    %p136 = scmp.eq.s32.totalorder %s135, 0
    %s138 = sadd.s32 %s137, 1
    %s139 = scalar_select %p136, %s137, %s138
    %p142 = pneg %p136
    %p143 = scmp.eq.s32.totalorder %s12, 1
    %p144 = por %p142, %p143
    %p145 = scmp.ne.s32.totalorder %s137, %s140
    %p146 = scmp.eq.s32.totalorder %s12, 0
    %p147 = por %p145, %p146
    %p148 = scmp.ne.s32.totalorder %s137, %s140
    %p149 = scmp.eq.s32.totalorder %s17, 1
    %p150 = por %p148, %p149
    %p151 = scmp.ne.s32.totalorder %s140, %s141
    %p152 = scmp.eq.s32.totalorder %s17, 0
    %p153 = por %p151, %p152
    %p154 = scmp.ne.s32.totalorder %s140, %s141
    %p155 = scmp.eq.s32.totalorder %s18, 1
    %p156 = por %p154, %p155
    %p158 = scmp.ne.s32.totalorder %s141, %s157
    %p159 = scmp.eq.s32.totalorder %s18, 0
    %p160 = por %p158, %p159
    %p161 = scmp.le.s32.totalorder 1, %s12
    %p162 = scmp.lt.s32.totalorder %s12, 3
    %p163 = pnand %p161, %p162
    %p164 = pneg %p163
    // Predicated region
    $region9: #{res_block_down.2} parent=5 // pred_check
      _
    $region10: #{res_block_down.2} parent=5 // pred_check_branch
      %166 = sbr.rel (%p163) target = $region12
    $region11: #{res_block_down.2} parent=5 // pred_region
      %s167 = ssub.s32 %s12, 1
      // Predicated region
      $region13: #{res_block_down.2} parent=11 // pred_check
        %p168 = pneg %p59
      $region14: #{res_block_down.2} parent=11 // pred_check_branch
        %170 = sbr.rel (%p168) target = $region16
      $region15: #{res_block_down.2} parent=11 // pred_region
        _
      $region16: #{res_block_down.2} parent=11 // pred_fallthru
        _
      // Predicated region
      $region17: #{res_block_down.2} parent=11 // pred_check
        %p171 = pneg %p80
      $region18: #{res_block_down.2} parent=11 // pred_check_branch
        %173 = sbr.rel (%p171) target = $region20
      $region19: #{res_block_down.2} parent=11 // pred_region
        _
      $region20: #{res_block_down.2} parent=11 // pred_fallthru
        _
      // Predicated region
      $region21: #{res_block_down.2} parent=11 // pred_check
        %p174 = pneg %p101
      $region22: #{res_block_down.2} parent=11 // pred_check_branch
        %176 = sbr.rel (%p174) target = $region24
      $region23: #{res_block_down.2} parent=11 // pred_region
        _
      $region24: #{res_block_down.2} parent=11 // pred_fallthru
        _
    $region12: #{res_block_down.2} parent=5 // pred_fallthru
      _
    %p177 = scmp.lt.s32.totalorder %s12, 2
    // Predicated region
    $region25: #{res_block_down.2} parent=5 // pred_check
      %p178 = pneg %p177
    $region26: #{res_block_down.2} parent=5 // pred_check_branch
      %180 = sbr.rel (%p178) target = $region28
    $region27: #{res_block_down.2} parent=5 // pred_region
      // Predicated region
      $region29: #{res_block_down.2} parent=27 // pred_check
        %p181 = pneg %p32
      $region30: #{res_block_down.2} parent=27 // pred_check_branch
        %183 = sbr.rel (%p181) target = $region32
      $region31: #{res_block_down.2} parent=27 // pred_region
        %p184 = scmp.lt.s32.totalorder %s12, 1
        %s185 = scalar_select %p184, %s12, 1
        %s186 = smul.addr %s185, 108
        %s187 = smul.addr %s186, 4
        %s188 = scalar_lea.vmem %s0, %s187
      $region32: #{res_block_down.2} parent=27 // pred_fallthru
        _
    $region28: #{res_block_down.2} parent=5 // pred_fallthru
      _
    %p189 = scmp.le.s32.totalorder 1, %s12
    %p190 = scmp.lt.s32.totalorder %s12, 3
    %p191 = pnand %p189, %p190
    %p192 = pneg %p191
    // Predicated region
    $region33: #{res_block_down.2} parent=5 // pred_check
      _
    $region34: #{res_block_down.2} parent=5 // pred_check_branch
      %194 = sbr.rel (%p191) target = $region36
    $region35: #{res_block_down.2} parent=5 // pred_region
      %s195 = ssub.s32 %s12, 1
      %p196 = scmp.lt.s32.totalorder %s17, 1
      %s197 = scalar_select %p196, %s17, 1
      %s198 = smul.addr %s197, 108
      %s199 = smul.addr %s198, 4
      %s200 = scalar_lea.vmem %s0, %s199
      %p201 = pneg %p38
      %p202 = pneg %p35
      %p203 = pneg %p59
      %p204 = pneg %p56
      %p205 = pneg %p80
      %p206 = pneg %p77
      %p207 = pneg %p101
      %p208 = pneg %p98
      %p209 = pneg %p127
      %p210 = pneg %p124
      %p211 = scmp.lt.s32.totalorder %s17, 1
      %s212 = scalar_select %p211, %s17, 1
      %s213 = smul.addr %s212, 8
      %s214 = smul.addr %s213, 8
      %s215 = scalar_lea.vmem %s4, %s214
      %p216 = pneg %p153
      %p217 = pneg %p150
      %p218 = scmp.lt.s32.totalorder %s17, 1
      %s219 = scalar_select %p218, %s17, 1
      %s220 = smul.addr %s219, 32
      %s221 = smul.addr %s220, 4
      %s222 = scalar_lea.vmem %s5, %s221
      %p223 = scmp.lt.s32.totalorder %s17, 1
      %s224 = scalar_select %p223, %s17, 1
      %s225 = smul.addr %s224, 108
      %s226 = smul.addr %s225, 4
      %s227 = scalar_lea.vmem %s0, %s226
      %p228 = scmp.lt.s32.totalorder %s17, 1
      %s229 = scalar_select %p228, %s17, 1
      %s230 = smul.addr %s229, 8
      %s231 = smul.addr %s230, 8
      %s232 = scalar_lea.vmem %s4, %s231
      %p233 = scmp.lt.s32.totalorder %s17, 1
      %s234 = scalar_select %p233, %s17, 1
      %s235 = smul.addr %s234, 32
      %s236 = smul.addr %s235, 4
      %s237 = scalar_lea.vmem %s5, %s236
      %v240 = vld [vmem:[%s227] sm:$0xff]
      %v241 = vld [vmem:[%s227 + $0x8] sm:$0xf]
      %v242 = vld [vmem:[%s227 + $0xc] sm:$0xff]
      %v243 = vld [vmem:[%s227 + $0x14] sm:$0xf]
      %v244 = vld [vmem:[%s227 + $0x18] sm:$0xff]
      %v245 = vld [vmem:[%s227 + $0x20] sm:$0xf]
      %v246 = vld [vmem:[%s227 + $0x24] sm:$0xff]
      %v247 = vld [vmem:[%s227 + $0x2c] sm:$0xf]
      %v248 = vld [vmem:[%s227 + $0x30] sm:$0xff]
      %v249 = vld [vmem:[%s227 + $0x38] sm:$0xf]
      %v250 = vld [vmem:[%s227 + $0x3c] sm:$0xff]
      %v251 = vld [vmem:[%s227 + $0x44] sm:$0xf]
      %v252 = vld [vmem:[%s227 + $0x48] sm:$0xff]
      %v253 = vld [vmem:[%s227 + $0x50] sm:$0xf]
      %v254 = vld [vmem:[%s227 + $0x54] sm:$0xff]
      %v255 = vld [vmem:[%s227 + $0x5c] sm:$0xf]
      %v256 = vld [vmem:[%s227 + $0x60] sm:$0xff]
      %v257 = vld [vmem:[%s227 + $0x68] sm:$0xf]
      %v258 = vld [vmem:[%s227 + $0x6c] sm:$0xff]
      %v259 = vld [vmem:[%s227 + $0x74] sm:$0xf]
      %v260 = vld [vmem:[%s227 + $0x78] sm:$0xff]
      %v261 = vld [vmem:[%s227 + $0x80] sm:$0xf]
      %v262 = vld [vmem:[%s227 + $0x84] sm:$0xff]
      %v263 = vld [vmem:[%s227 + $0x8c] sm:$0xf]
      %v264 = vld [vmem:[%s227 + $0x90] sm:$0xff]
      %v265 = vld [vmem:[%s227 + $0x98] sm:$0xf]
      %v266 = vld [vmem:[%s227 + $0x9c] sm:$0xff]
      %v267 = vld [vmem:[%s227 + $0xa4] sm:$0xf]
      %v268 = vld [vmem:[%s227 + $0xa8] sm:$0xff]
      %v269 = vld [vmem:[%s227 + $0xb0] sm:$0xf]
      %v270 = vld [vmem:[%s227 + $0xb4] sm:$0xff]
      %v271 = vld [vmem:[%s227 + $0xbc] sm:$0xf]
      %v272 = vld [vmem:[%s227 + $0xc0] sm:$0xff]
      %v273 = vld [vmem:[%s227 + $0xc8] sm:$0xf]
      %v274 = vld [vmem:[%s227 + $0xcc] sm:$0xff]
      %v275 = vld [vmem:[%s227 + $0xd4] sm:$0xf]
      %v276 = vld [vmem:[%s227 + $0xd8] sm:$0xff]
      %v277 = vld [vmem:[%s227 + $0xe0] sm:$0xf]
      %v278 = vld [vmem:[%s227 + $0xe4] sm:$0xff]
      %v279 = vld [vmem:[%s227 + $0xec] sm:$0xf]
      %v280 = vld [vmem:[%s227 + $0xf0] sm:$0xff]
      %v281 = vld [vmem:[%s227 + $0xf8] sm:$0xf]
      %v282 = vld [vmem:[%s227 + $0xfc] sm:$0xff]
      %v283 = vld [vmem:[%s227 + $0x104] sm:$0xf]
      %v284 = vld [vmem:[%s227 + $0x108] sm:$0xff]
      %v285 = vld [vmem:[%s227 + $0x110] sm:$0xf]
      %v286 = vld [vmem:[%s227 + $0x114] sm:$0xff]
      %v287 = vld [vmem:[%s227 + $0x11c] sm:$0xf]
      %v288 = vld [vmem:[%s227 + $0x120] sm:$0xff]
      %v289 = vld [vmem:[%s227 + $0x128] sm:$0xf]
      %v290 = vld [vmem:[%s227 + $0x12c] sm:$0xff]
      %v291 = vld [vmem:[%s227 + $0x134] sm:$0xf]
      %v292 = vld [vmem:[%s227 + $0x138] sm:$0xff]
      %v293 = vld [vmem:[%s227 + $0x140] sm:$0xf]
      %v294 = vld [vmem:[%s227 + $0x144] sm:$0xff]
      %v295 = vld [vmem:[%s227 + $0x14c] sm:$0xf]
      %v296 = vld [vmem:[%s227 + $0x150] sm:$0xff]
      %v297 = vld [vmem:[%s227 + $0x158] sm:$0xf]
      %v298 = vld [vmem:[%s227 + $0x15c] sm:$0xff]
      %v299 = vld [vmem:[%s227 + $0x164] sm:$0xf]
      %v300 = vld [vmem:[%s227 + $0x168] sm:$0xff]
      %v301 = vld [vmem:[%s227 + $0x170] sm:$0xf]
      %v302 = vld [vmem:[%s227 + $0x174] sm:$0xff]
      %v303 = vld [vmem:[%s227 + $0x17c] sm:$0xf]
      %v304 = vld [vmem:[%s1] sm:$0xf]
      %v305 = vld [vmem:[%s1 + $0x4] sm:$0xf]
      %v306 = vld [vmem:[%s1 + $0x8] sm:$0xf]
      %v307 = vld [vmem:[%s1 + $0xc] sm:$0xf]
      %v308 = vld [vmem:[%s1 + $0x10] sm:$0xf]
      %v309 = vld [vmem:[%s1 + $0x14] sm:$0xf]
      %v310 = vld [vmem:[%s1 + $0x18] sm:$0xf]
      %v311 = vld [vmem:[%s1 + $0x1c] sm:$0xf]
      %v312 = vld [vmem:[%s1 + $0x20] sm:$0xf]
      %v313 = vld [vmem:[%s1 + $0x24] sm:$0xf]
      %v314 = vld [vmem:[%s1 + $0x28] sm:$0xf]
      %v315 = vld [vmem:[%s1 + $0x2c] sm:$0xf]
      %v316 = vld [vmem:[%s1 + $0x30] sm:$0xf]
      %v317 = vld [vmem:[%s1 + $0x34] sm:$0xf]
      %v318 = vld [vmem:[%s1 + $0x38] sm:$0xf]
      %v319 = vld [vmem:[%s1 + $0x3c] sm:$0xf]
      %v320 = vld [vmem:[%s1 + $0x40] sm:$0xf]
      %v321 = vld [vmem:[%s1 + $0x44] sm:$0xf]
      %v322 = vld [vmem:[%s1 + $0x48] sm:$0xf]
      %v323 = vld [vmem:[%s1 + $0x4c] sm:$0xf]
      %v324 = vld [vmem:[%s1 + $0x50] sm:$0xf]
      %v325 = vld [vmem:[%s1 + $0x54] sm:$0xf]
      %v326 = vld [vmem:[%s1 + $0x58] sm:$0xf]
      %v327 = vld [vmem:[%s1 + $0x5c] sm:$0xf]
      %v328 = vld [vmem:[%s1 + $0x60] sm:$0xf]
      %v329 = vld [vmem:[%s1 + $0x64] sm:$0xf]
      %v330 = vld [vmem:[%s1 + $0x68] sm:$0xf]
      %v331 = vld [vmem:[%s1 + $0x6c] sm:$0xf]
      %v332 = vld [vmem:[%s1 + $0x70] sm:$0xf]
      %v333 = vld [vmem:[%s1 + $0x74] sm:$0xf]
      %v334 = vld [vmem:[%s1 + $0x78] sm:$0xf]
      %v335 = vld [vmem:[%s1 + $0x7c] sm:$0xf]
      %v336 = vld [vmem:[%s1 + $0x80] sm:$0xf]
      %v337 = vld [vmem:[%s1 + $0x84] sm:$0xf]
      %v338 = vld [vmem:[%s1 + $0x88] sm:$0xf]
      %v339 = vld [vmem:[%s1 + $0x8c] sm:$0xf]
      %v340 = vld [vmem:[%s1 + $0x90] sm:$0xf]
      %v341 = vld [vmem:[%s1 + $0x94] sm:$0xf]
      %v342 = vld [vmem:[%s1 + $0x98] sm:$0xf]
      %v343 = vld [vmem:[%s1 + $0x9c] sm:$0xf]
      %v344 = vld [vmem:[%s1 + $0xa0] sm:$0xf]
      %v345 = vld [vmem:[%s1 + $0xa4] sm:$0xf]
      %v346 = vld [vmem:[%s1 + $0xa8] sm:$0xf]
      %v347 = vld [vmem:[%s1 + $0xac] sm:$0xf]
      %v348 = vld [vmem:[%s1 + $0xb0] sm:$0xf]
      %v349 = vld [vmem:[%s1 + $0xb4] sm:$0xf]
      %v350 = vld [vmem:[%s1 + $0xb8] sm:$0xf]
      %v351 = vld [vmem:[%s1 + $0xbc] sm:$0xf]
      %v352 = vld [vmem:[%s227 + $0x180] sm:$0xff]
      %v353 = vld [vmem:[%s227 + $0x188] sm:$0xf]
      %v354 = vld [vmem:[%s227 + $0x18c] sm:$0xff]
      %v355 = vld [vmem:[%s227 + $0x194] sm:$0xf]
      %s356 = scalar_lea.vmem %s1, 192
      %v357 = vld [vmem:[%s356] sm:$0xf]
      %v358 = vld [vmem:[%s356 + $0x4] sm:$0xf]
      %v359 = vld [vmem:[%s356 + $0x8] sm:$0xf]
      %v360 = vld [vmem:[%s356 + $0xc] sm:$0xf]
      %v361 = vld [vmem:[%s356 + $0x10] sm:$0xf]
      %v362 = vld [vmem:[%s356 + $0x14] sm:$0xf]
      %v363 = vld [vmem:[%s356 + $0x18] sm:$0xf]
      %v364 = vld [vmem:[%s356 + $0x1c] sm:$0xf]
      %v365 = vld [vmem:[%s356 + $0x20] sm:$0xf]
      %v366 = vld [vmem:[%s356 + $0x24] sm:$0xf]
      %v367 = vld [vmem:[%s356 + $0x28] sm:$0xf]
      %v368 = vld [vmem:[%s356 + $0x2c] sm:$0xf]
      %v369 = vld [vmem:[%s356 + $0x30] sm:$0xf]
      %v370 = vld [vmem:[%s356 + $0x34] sm:$0xf]
      %v371 = vld [vmem:[%s356 + $0x38] sm:$0xf]
      %v372 = vld [vmem:[%s356 + $0x3c] sm:$0xf]
      %v373 = vld [vmem:[%s356 + $0x40] sm:$0xf]
      %v374 = vld [vmem:[%s356 + $0x44] sm:$0xf]
      %v375 = vld [vmem:[%s356 + $0x48] sm:$0xf]
      %v376 = vld [vmem:[%s356 + $0x4c] sm:$0xf]
      %v377 = vld [vmem:[%s356 + $0x50] sm:$0xf]
      %v378 = vld [vmem:[%s356 + $0x54] sm:$0xf]
      %v379 = vld [vmem:[%s356 + $0x58] sm:$0xf]
      %v380 = vld [vmem:[%s356 + $0x5c] sm:$0xf]
      %v381 = vld [vmem:[%s356 + $0x60] sm:$0xf]
      %v382 = vld [vmem:[%s356 + $0x64] sm:$0xf]
      %v383 = vld [vmem:[%s356 + $0x68] sm:$0xf]
      %v384 = vld [vmem:[%s356 + $0x6c] sm:$0xf]
      %v385 = vld [vmem:[%s356 + $0x70] sm:$0xf]
      %v386 = vld [vmem:[%s356 + $0x74] sm:$0xf]
      %v387 = vld [vmem:[%s356 + $0x78] sm:$0xf]
      %v388 = vld [vmem:[%s356 + $0x7c] sm:$0xf]
      %v389 = vld [vmem:[%s356 + $0x80] sm:$0xf]
      %v390 = vld [vmem:[%s356 + $0x84] sm:$0xf]
      %v391 = vld [vmem:[%s356 + $0x88] sm:$0xf]
      %v392 = vld [vmem:[%s356 + $0x8c] sm:$0xf]
      %v393 = vld [vmem:[%s356 + $0x90] sm:$0xf]
      %v394 = vld [vmem:[%s356 + $0x94] sm:$0xf]
      %v395 = vld [vmem:[%s356 + $0x98] sm:$0xf]
      %v396 = vld [vmem:[%s356 + $0x9c] sm:$0xf]
      %v397 = vld [vmem:[%s356 + $0xa0] sm:$0xf]
      %v398 = vld [vmem:[%s356 + $0xa4] sm:$0xf]
      %v399 = vld [vmem:[%s356 + $0xa8] sm:$0xf]
      %v400 = vld [vmem:[%s356 + $0xac] sm:$0xf]
      %v401 = vld [vmem:[%s356 + $0xb0] sm:$0xf]
      %v402 = vld [vmem:[%s356 + $0xb4] sm:$0xf]
      %v403 = vld [vmem:[%s356 + $0xb8] sm:$0xf]
      %v404 = vld [vmem:[%s356 + $0xbc] sm:$0xf]
      %v469 = vunpack.c.l.b16 %v244
      %v470 = vunpack.c.h.b16 %v244
      %v471 = vunpack.c.l.b16 %v245
      %v472 = vunpack.c.l.b16 %v246
      %v473 = vunpack.c.h.b16 %v246
      %v474 = vunpack.c.l.b16 %v247
      %v475 = vunpack.c.l.b16 %v248
      %v476 = vunpack.c.h.b16 %v248
      %v477 = vunpack.c.l.b16 %v249
      %v478 = vunpack.c.l.b16 %v250
      %v479 = vunpack.c.h.b16 %v250
      %v480 = vunpack.c.l.b16 %v251
      %v481 = vunpack.c.l.b16 %v252
      %v482 = vunpack.c.h.b16 %v252
      %v483 = vunpack.c.l.b16 %v253
      %v484 = vunpack.c.l.b16 %v254
      %v485 = vunpack.c.h.b16 %v254
      %v486 = vunpack.c.l.b16 %v255
      %v487 = vunpack.c.l.b16 %v256
      %v488 = vunpack.c.h.b16 %v256
      %v489 = vunpack.c.l.b16 %v257
      %v490 = vunpack.c.l.b16 %v258
      %v491 = vunpack.c.h.b16 %v258
      %v492 = vunpack.c.l.b16 %v259
      %v493 = vunpack.c.l.b16 %v260
      %v494 = vunpack.c.h.b16 %v260
      %v495 = vunpack.c.l.b16 %v261
      %v496 = vunpack.c.l.b16 %v262
      %v497 = vunpack.c.h.b16 %v262
      %v498 = vunpack.c.l.b16 %v263
      %v499 = vunpack.c.l.b16 %v264
      %v500 = vunpack.c.h.b16 %v264
      %v501 = vunpack.c.l.b16 %v265
      %v502 = vunpack.c.l.b16 %v266
      %v503 = vunpack.c.h.b16 %v266
      %v504 = vunpack.c.l.b16 %v267
      %v505 = vunpack.c.l.b16 %v268
      %v506 = vunpack.c.h.b16 %v268
      %v507 = vunpack.c.l.b16 %v269
      %v508 = vunpack.c.l.b16 %v270
      %v509 = vunpack.c.h.b16 %v270
      %v510 = vunpack.c.l.b16 %v271
      %v511 = vunpack.c.l.b16 %v272
      %v512 = vunpack.c.h.b16 %v272
      %v513 = vunpack.c.l.b16 %v273
      %v514 = vunpack.c.l.b16 %v274
      %v515 = vunpack.c.h.b16 %v274
      %v516 = vunpack.c.l.b16 %v275
      %v517 = vunpack.c.l.b16 %v276
      %v518 = vunpack.c.h.b16 %v276
      %v519 = vunpack.c.l.b16 %v277
      %v520 = vunpack.c.l.b16 %v278
      %v521 = vunpack.c.h.b16 %v278
      %v522 = vunpack.c.l.b16 %v279
      %v523 = vunpack.c.l.b16 %v280
      %v524 = vunpack.c.h.b16 %v280
      %v525 = vunpack.c.l.b16 %v281
      %v526 = vunpack.c.l.b16 %v282
      %v527 = vunpack.c.h.b16 %v282
      %v528 = vunpack.c.l.b16 %v283
      %v529 = vunpack.c.l.b16 %v284
      %v530 = vunpack.c.h.b16 %v284
      %v531 = vunpack.c.l.b16 %v285
      %v532 = vunpack.c.l.b16 %v286
      %v533 = vunpack.c.h.b16 %v286
      %v534 = vunpack.c.l.b16 %v287
      %v535 = vunpack.c.l.b16 %v288
      %v536 = vunpack.c.h.b16 %v288
      %v537 = vunpack.c.l.b16 %v289
      %v538 = vunpack.c.l.b16 %v290
      %v539 = vunpack.c.h.b16 %v290
      %v540 = vunpack.c.l.b16 %v291
      %v541 = vunpack.c.l.b16 %v292
      %v542 = vunpack.c.h.b16 %v292
      %v543 = vunpack.c.l.b16 %v293
      %v544 = vunpack.c.l.b16 %v294
      %v545 = vunpack.c.h.b16 %v294
      %v546 = vunpack.c.l.b16 %v295
      %v547 = vunpack.c.l.b16 %v296
      %v548 = vunpack.c.h.b16 %v296
      %v549 = vunpack.c.l.b16 %v297
      %v550 = vunpack.c.l.b16 %v298
      %v551 = vunpack.c.h.b16 %v298
      %v552 = vunpack.c.l.b16 %v299
      %v553 = vunpack.c.l.b16 %v300
      %v554 = vunpack.c.h.b16 %v300
      %v555 = vunpack.c.l.b16 %v301
      %v556 = vunpack.c.l.b16 %v302
      %v557 = vunpack.c.h.b16 %v302
      %v558 = vunpack.c.l.b16 %v303
      %v559 = vunpack.c.l.b16 %v352
      %v560 = vunpack.c.h.b16 %v352
      %v561 = vunpack.c.l.b16 %v353
      %v562 = vunpack.c.l.b16 %v354
      %v563 = vunpack.c.h.b16 %v354
      %v564 = vunpack.c.l.b16 %v355
      %v565 = vpack.c.b16 %v472, %v469
      %v566 = vpack.c.b16 %v473, %v470
      %v567 = vpack.c.b16 %v474, %v471
      %v568 = vpack.c.b16 %v478, %v475
      %v569 = vpack.c.b16 %v479, %v476
      %v570 = vpack.c.b16 %v480, %v477
      %v571 = vpack.c.b16 %v484, %v481
      %v572 = vpack.c.b16 %v485, %v482
      %v573 = vpack.c.b16 %v486, %v483
      %v574 = vpack.c.b16 %v490, %v487
      %v575 = vpack.c.b16 %v491, %v488
      %v576 = vpack.c.b16 %v492, %v489
      %v577 = vpack.c.b16 %v496, %v493
      %v578 = vpack.c.b16 %v497, %v494
      %v579 = vpack.c.b16 %v498, %v495
      %v580 = vpack.c.b16 %v502, %v499
      %v581 = vpack.c.b16 %v503, %v500
      %v582 = vpack.c.b16 %v504, %v501
      %v583 = vpack.c.b16 %v508, %v505
      %v584 = vpack.c.b16 %v509, %v506
      %v585 = vpack.c.b16 %v510, %v507
      %v586 = vpack.c.b16 %v514, %v511
      %v587 = vpack.c.b16 %v515, %v512
      %v588 = vpack.c.b16 %v516, %v513
      %v589 = vpack.c.b16 %v520, %v517
      %v590 = vpack.c.b16 %v521, %v518
      %v591 = vpack.c.b16 %v522, %v519
      %v592 = vpack.c.b16 %v526, %v523
      %v593 = vpack.c.b16 %v527, %v524
      %v594 = vpack.c.b16 %v528, %v525
      %v595 = vpack.c.b16 %v532, %v529
      %v596 = vpack.c.b16 %v533, %v530
      %v597 = vpack.c.b16 %v534, %v531
      %v598 = vpack.c.b16 %v538, %v535
      %v599 = vpack.c.b16 %v539, %v536
      %v600 = vpack.c.b16 %v540, %v537
      %v601 = vpack.c.b16 %v544, %v541
      %v602 = vpack.c.b16 %v545, %v542
      %v603 = vpack.c.b16 %v546, %v543
      %v604 = vpack.c.b16 %v550, %v547
      %v605 = vpack.c.b16 %v551, %v548
      %v606 = vpack.c.b16 %v552, %v549
      %v607 = vpack.c.b16 %v556, %v553
      %v608 = vpack.c.b16 %v557, %v554
      %v609 = vpack.c.b16 %v558, %v555
      %v610 = vpack.c.b16 %v562, %v559
      %v611 = vpack.c.b16 %v563, %v560
      %v612 = vpack.c.b16 %v564, %v561
      %v709 = vunpack.c.l.b16 %v357
      %v710 = vunpack.c.l.b16 %v358
      %v711 = vunpack.c.l.b16 %v359
      %v712 = vunpack.c.l.b16 %v360
      %v713 = vunpack.c.l.b16 %v361
      %v714 = vunpack.c.l.b16 %v362
      %v715 = vunpack.c.l.b16 %v363
      %v716 = vunpack.c.l.b16 %v364
      %v717 = vunpack.c.l.b16 %v365
      %v718 = vunpack.c.l.b16 %v366
      %v719 = vunpack.c.l.b16 %v367
      %v720 = vunpack.c.l.b16 %v368
      %v721 = vunpack.c.l.b16 %v369
      %v722 = vunpack.c.l.b16 %v370
      %v723 = vunpack.c.l.b16 %v371
      %v724 = vunpack.c.l.b16 %v372
      %v725 = vunpack.c.l.b16 %v373
      %v726 = vunpack.c.l.b16 %v374
      %v727 = vunpack.c.l.b16 %v375
      %v728 = vunpack.c.l.b16 %v376
      %v729 = vunpack.c.l.b16 %v377
      %v730 = vunpack.c.l.b16 %v378
      %v731 = vunpack.c.l.b16 %v379
      %v732 = vunpack.c.l.b16 %v380
      %v733 = vunpack.c.l.b16 %v381
      %v734 = vunpack.c.l.b16 %v382
      %v735 = vunpack.c.l.b16 %v383
      %v736 = vunpack.c.l.b16 %v384
      %v737 = vunpack.c.l.b16 %v385
      %v738 = vunpack.c.l.b16 %v386
      %v739 = vunpack.c.l.b16 %v387
      %v740 = vunpack.c.l.b16 %v388
      %v741 = vunpack.c.l.b16 %v389
      %v742 = vunpack.c.l.b16 %v390
      %v743 = vunpack.c.l.b16 %v391
      %v744 = vunpack.c.l.b16 %v392
      %v745 = vunpack.c.l.b16 %v393
      %v746 = vunpack.c.l.b16 %v394
      %v747 = vunpack.c.l.b16 %v395
      %v748 = vunpack.c.l.b16 %v396
      %v749 = vunpack.c.l.b16 %v397
      %v750 = vunpack.c.l.b16 %v398
      %v751 = vunpack.c.l.b16 %v399
      %v752 = vunpack.c.l.b16 %v400
      %v753 = vunpack.c.l.b16 %v401
      %v754 = vunpack.c.l.b16 %v402
      %v755 = vunpack.c.l.b16 %v403
      %v756 = vunpack.c.l.b16 %v404
      %v757 = vpack.c.b16 %v710, %v709
      %v758 = vpack.c.b16 %v712, %v711
      %v759 = vpack.c.b16 %v714, %v713
      %v760 = vpack.c.b16 %v716, %v715
      %v761 = vpack.c.b16 %v718, %v717
      %v762 = vpack.c.b16 %v720, %v719
      %v763 = vpack.c.b16 %v722, %v721
      %v764 = vpack.c.b16 %v724, %v723
      %v765 = vpack.c.b16 %v726, %v725
      %v766 = vpack.c.b16 %v728, %v727
      %v767 = vpack.c.b16 %v730, %v729
      %v768 = vpack.c.b16 %v732, %v731
      %v769 = vpack.c.b16 %v734, %v733
      %v770 = vpack.c.b16 %v736, %v735
      %v771 = vpack.c.b16 %v738, %v737
      %v772 = vpack.c.b16 %v740, %v739
      %v773 = vpack.c.b16 %v742, %v741
      %v774 = vpack.c.b16 %v744, %v743
      %v775 = vpack.c.b16 %v746, %v745
      %v776 = vpack.c.b16 %v748, %v747
      %v777 = vpack.c.b16 %v750, %v749
      %v778 = vpack.c.b16 %v752, %v751
      %v779 = vpack.c.b16 %v754, %v753
      %v780 = vpack.c.b16 %v756, %v755
      %805 = vmatprep.subr.bf16.mxu0 0
      %806 = vmatpush1.bf16.msra.mxu0 %v757
      %807 = vmatprep.subr.bf16.mxu0 0
      %808 = vmatpush1.bf16.msra.mxu0 %v758
      %809 = vmatprep.subr.bf16.mxu0 0
      %810 = vmatpush1.bf16.msra.mxu0 %v759
      %811 = vmatprep.subr.bf16.mxu0 0
      %812 = vmatpush1.bf16.msra.mxu0 %v760
      %813 = vmatprep.subr.bf16.mxu0 0
      %814 = vmatpush1.bf16.msra.mxu0 %v761
      %815 = vmatprep.subr.bf16.mxu0 0
      %816 = vmatpush1.bf16.msra.mxu0 %v762
      %817 = vmatprep.subr.bf16.mxu0 0
      %818 = vmatpush1.bf16.msra.mxu0 %v763
      %819 = vmatprep.subr.bf16.mxu0 0
      %820 = vmatpush1.bf16.msra.mxu0 %v764
      %821 = vmatprep.subr.bf16.mxu0 0
      %822 = vmatpush1.bf16.msra.mxu0 %v765
      %823 = vmatprep.subr.bf16.mxu0 0
      %824 = vmatpush1.bf16.msra.mxu0 %v766
      %825 = vmatprep.subr.bf16.mxu0 0
      %826 = vmatpush1.bf16.msra.mxu0 %v767
      %827 = vmatprep.subr.bf16.mxu0 0
      %828 = vmatpush1.bf16.msra.mxu0 %v768
      %829 = vmatprep.subr.bf16.mxu0 0
      %830 = vmatpush1.bf16.msra.mxu0 %v769
      %831 = vmatprep.subr.bf16.mxu0 0
      %832 = vmatpush1.bf16.msra.mxu0 %v770
      %833 = vmatprep.subr.bf16.mxu0 0
      %834 = vmatpush1.bf16.msra.mxu0 %v771
      %835 = vmatprep.subr.bf16.mxu0 0
      %836 = vmatpush1.bf16.msra.mxu0 %v772
      %837 = vmatprep.mubr.bf16.mxu0 %v566
      %838 = vmatmul.mubr.bf16.gmra.mrb[0].mxu0 %v565
      %v839 = vpop.f32.mrb[0].mxu0
      %v840 = vadd.f32 0.0, %v839
      %v841 = vpop.f32.mrb[0].mxu0
      %v842 = vpop.f32.mrb[0].mxu0
      %v843 = vadd.f32 0.0, %v842
      %v844 = vpop.f32.mrb[0].mxu0
      %845 = vmatprep.mubr.bf16.mxu0 %v569
      %846 = vmatmul.mubr.bf16.gmra.mrb[0].mxu0 %v568
      %v847 = vpop.f32.mrb[0].mxu0
      %v848 = vadd.f32 0.0, %v847
      %v849 = vpop.f32.mrb[0].mxu0
      %v850 = vpop.f32.mrb[0].mxu0
      %v851 = vadd.f32 0.0, %v850
      %v852 = vpop.f32.mrb[0].mxu0
      %853 = vmatprep.mubr.bf16.mxu0 %v572
      %854 = vmatmul.mubr.bf16.gmra.mrb[0].mxu0 %v571
      %v855 = vpop.f32.mrb[0].mxu0
      %v856 = vadd.f32 0.0, %v855
      %v857 = vpop.f32.mrb[0].mxu0
      %v858 = vpop.f32.mrb[0].mxu0
      %v859 = vadd.f32 0.0, %v858
      %v860 = vpop.f32.mrb[0].mxu0
      %861 = vmatprep.mubr.bf16.mxu0 %v575
      %862 = vmatmul.mubr.bf16.gmra.mrb[0].mxu0 %v574
      %v863 = vpop.f32.mrb[0].mxu0
      %v864 = vadd.f32 0.0, %v863
      %v865 = vpop.f32.mrb[0].mxu0
      %v866 = vpop.f32.mrb[0].mxu0
      %v867 = vadd.f32 0.0, %v866
      %v868 = vpop.f32.mrb[0].mxu0
      %869 = vmatprep.mubr.bf16.mxu0 %v578
      %870 = vmatmul.mubr.bf16.gmra.mrb[0].mxu0 %v577
      %v871 = vpop.f32.mrb[0].mxu0
      %v872 = vadd.f32 0.0, %v871
      %v873 = vpop.f32.mrb[0].mxu0
      %v874 = vpop.f32.mrb[0].mxu0
      %v875 = vadd.f32 0.0, %v874
      %v876 = vpop.f32.mrb[0].mxu0
      %877 = vmatprep.mubr.bf16.mxu0 %v581
      %878 = vmatmul.mubr.bf16.gmra.mrb[0].mxu0 %v580
      %v879 = vpop.f32.mrb[0].mxu0
      %v880 = vadd.f32 0.0, %v879
      %v881 = vpop.f32.mrb[0].mxu0
      %v882 = vpop.f32.mrb[0].mxu0
      %v883 = vadd.f32 0.0, %v882
      %v884 = vpop.f32.mrb[0].mxu0
      %885 = vmatprep.mubr.bf16.mxu0 %v584
      %886 = vmatmul.mubr.bf16.gmra.mrb[0].mxu0 %v583
      %v887 = vpop.f32.mrb[0].mxu0
      %v888 = vadd.f32 0.0, %v887
      %v889 = vpop.f32.mrb[0].mxu0
      %v890 = vpop.f32.mrb[0].mxu0
      %v891 = vadd.f32 0.0, %v890
      %v892 = vpop.f32.mrb[0].mxu0
      %893 = vmatprep.mubr.bf16.mxu0 %v587
      %894 = vmatmul.mubr.bf16.gmra.mrb[0].mxu0 %v586
      %v895 = vpop.f32.mrb[0].mxu0
      %v896 = vadd.f32 0.0, %v895
      %v897 = vpop.f32.mrb[0].mxu0
      %v898 = vpop.f32.mrb[0].mxu0
      %v899 = vadd.f32 0.0, %v898
      %v900 = vpop.f32.mrb[0].mxu0
      %901 = vmatprep.mubr.bf16.mxu0 %v590
      %902 = vmatmul.mubr.bf16.gmra.mrb[0].mxu0 %v589
      %v903 = vpop.f32.mrb[0].mxu0
      %v904 = vadd.f32 0.0, %v903
      %v905 = vpop.f32.mrb[0].mxu0
      %v906 = vpop.f32.mrb[0].mxu0
      %v907 = vadd.f32 0.0, %v906
      %v908 = vpop.f32.mrb[0].mxu0
      %909 = vmatprep.mubr.bf16.mxu0 %v593
      %910 = vmatmul.mubr.bf16.gmra.mrb[0].mxu0 %v592
      %v911 = vpop.f32.mrb[0].mxu0
      %v912 = vadd.f32 0.0, %v911
      %v913 = vpop.f32.mrb[0].mxu0
      %v914 = vpop.f32.mrb[0].mxu0
      %v915 = vadd.f32 0.0, %v914
      %v916 = vpop.f32.mrb[0].mxu0
      %917 = vmatprep.mubr.bf16.mxu0 %v596
      %918 = vmatmul.mubr.bf16.gmra.mrb[0].mxu0 %v595
      %v919 = vpop.f32.mrb[0].mxu0
      %v920 = vadd.f32 0.0, %v919
      %v921 = vpop.f32.mrb[0].mxu0
      %v922 = vpop.f32.mrb[0].mxu0
      %v923 = vadd.f32 0.0, %v922
      %v924 = vpop.f32.mrb[0].mxu0
      %925 = vmatprep.mubr.bf16.mxu0 %v599
      %926 = vmatmul.mubr.bf16.gmra.mrb[0].mxu0 %v598
      %v927 = vpop.f32.mrb[0].mxu0
      %v928 = vadd.f32 0.0, %v927
      %v929 = vpop.f32.mrb[0].mxu0
      %v930 = vpop.f32.mrb[0].mxu0
      %v931 = vadd.f32 0.0, %v930
      %v932 = vpop.f32.mrb[0].mxu0
      %933 = vmatprep.mubr.bf16.mxu0 %v602
      %934 = vmatmul.mubr.bf16.gmra.mrb[0].mxu0 %v601
      %v935 = vpop.f32.mrb[0].mxu0
      %v936 = vadd.f32 0.0, %v935
      %v937 = vpop.f32.mrb[0].mxu0
      %v938 = vpop.f32.mrb[0].mxu0
      %v939 = vadd.f32 0.0, %v938
      %v940 = vpop.f32.mrb[0].mxu0
      %941 = vmatprep.mubr.bf16.mxu0 %v605
      %942 = vmatmul.mubr.bf16.gmra.mrb[0].mxu0 %v604
      %v943 = vpop.f32.mrb[0].mxu0
      %v944 = vadd.f32 0.0, %v943
      %v945 = vpop.f32.mrb[0].mxu0
      %v946 = vpop.f32.mrb[0].mxu0
      %v947 = vadd.f32 0.0, %v946
      %v948 = vpop.f32.mrb[0].mxu0
      %949 = vmatprep.mubr.bf16.mxu0 %v608
      %950 = vmatmul.mubr.bf16.gmra.mrb[0].mxu0 %v607
      %v951 = vpop.f32.mrb[0].mxu0
      %v952 = vadd.f32 0.0, %v951
      %v953 = vpop.f32.mrb[0].mxu0
      %v954 = vpop.f32.mrb[0].mxu0
      %v955 = vadd.f32 0.0, %v954
      %v956 = vpop.f32.mrb[0].mxu0
      %957 = vmatprep.mubr.bf16.mxu0 %v611
      %958 = vmatmul.mubr.bf16.gmra.mrb[0].mxu0 %v610
      %v959 = vpop.f32.mrb[0].mxu0
      %v960 = vadd.f32 0.0, %v959
      %v961 = vpop.f32.mrb[0].mxu0
      %v962 = vpop.f32.mrb[0].mxu0
      %v963 = vadd.f32 0.0, %v962
      %v964 = vpop.f32.mrb[0].mxu0
      %965 = vdwg.mxu0
      %966 = vmatprep.subr.bf16.mxu0 0
      %967 = vmatpush1.bf16.msra.mxu0 %v773
      %968 = vmatprep.subr.bf16.mxu0 0
      %969 = vmatpush1.bf16.msra.mxu0 %v774
      %970 = vmatprep.subr.bf16.mxu0 0
      %971 = vmatpush1.bf16.msra.mxu0 %v775
      %972 = vmatprep.subr.bf16.mxu0 0
      %973 = vmatpush1.bf16.msra.mxu0 %v776
      %974 = vmatprep.subr.bf16.mxu0 0
      %975 = vmatpush1.bf16.msra.mxu0 %v777
      %976 = vmatprep.subr.bf16.mxu0 0
      %977 = vmatpush1.bf16.msra.mxu0 %v778
      %978 = vmatprep.subr.bf16.mxu0 0
      %979 = vmatpush1.bf16.msra.mxu0 %v779
      %980 = vmatprep.subr.bf16.mxu0 0
      %981 = vmatpush1.bf16.msra.mxu0 %v780
      %982 = vmatprep.subr.bf16.mxu0 0
      %983 = vmatpush1.bf16.msra.mxu0 0
      %984 = vmatprep.subr.bf16.mxu0 0
      %985 = vmatpush1.bf16.msra.mxu0 0
      %986 = vmatprep.subr.bf16.mxu0 0
      %987 = vmatpush1.bf16.msra.mxu0 0
      %988 = vmatprep.subr.bf16.mxu0 0
      %989 = vmatpush1.bf16.msra.mxu0 0
      %990 = vmatprep.subr.bf16.mxu0 0
      %991 = vmatpush1.bf16.msra.mxu0 0
      %992 = vmatprep.subr.bf16.mxu0 0
      %993 = vmatpush1.bf16.msra.mxu0 0
      %994 = vmatprep.subr.bf16.mxu0 0
      %995 = vmatpush1.bf16.msra.mxu0 0
      %996 = vmatprep.subr.bf16.mxu0 0
      %997 = vmatpush1.bf16.msra.mxu0 0
      %998 = vmatprep.mubr.bf16.mxu0 0
      %999 = vmatmul.mubr.bf16.gmra.mrb[0].mxu0 %v567
      %v1000 = vpop.f32.mrb[0].mxu0
      %v1001 = vadd.f32 %v840, %v1000
      %v1002 = vpop.f32.mrb[0].mxu0
      %v1003 = vpop.f32.mrb[0].mxu0
      %v1004 = vadd.f32 %v843, %v1003
      %v1005 = vpop.f32.mrb[0].mxu0
      %1006 = vmatprep.mubr.bf16.mxu0 0
      %1007 = vmatmul.mubr.bf16.gmra.mrb[0].mxu0 %v570
      %v1008 = vpop.f32.mrb[0].mxu0
      %v1009 = vadd.f32 %v848, %v1008
      %v1010 = vpop.f32.mrb[0].mxu0
      %v1011 = vpop.f32.mrb[0].mxu0
      %v1012 = vadd.f32 %v851, %v1011
      %v1013 = vpop.f32.mrb[0].mxu0
      %1014 = vmatprep.mubr.bf16.mxu0 0
      %1015 = vmatmul.mubr.bf16.gmra.mrb[0].mxu0 %v573
      %v1016 = vpop.f32.mrb[0].mxu0
      %v1017 = vadd.f32 %v856, %v1016
      %v1018 = vpop.f32.mrb[0].mxu0
      %v1019 = vpop.f32.mrb[0].mxu0
      %v1020 = vadd.f32 %v859, %v1019
      %v1021 = vpop.f32.mrb[0].mxu0
      %1022 = vmatprep.mubr.bf16.mxu0 0
      %1023 = vmatmul.mubr.bf16.gmra.mrb[0].mxu0 %v576
      %v1024 = vpop.f32.mrb[0].mxu0
      %v1025 = vadd.f32 %v864, %v1024
      %v1026 = vpop.f32.mrb[0].mxu0
      %v1027 = vpop.f32.mrb[0].mxu0
      %v1028 = vadd.f32 %v867, %v1027
      %v1029 = vpop.f32.mrb[0].mxu0
      %1030 = vmatprep.mubr.bf16.mxu0 0
      %1031 = vmatmul.mubr.bf16.gmra.mrb[0].mxu0 %v579
      %v1032 = vpop.f32.mrb[0].mxu0
      %v1033 = vadd.f32 %v872, %v1032
      %v1034 = vpop.f32.mrb[0].mxu0
      %v1035 = vpop.f32.mrb[0].mxu0
      %v1036 = vadd.f32 %v875, %v1035
      %v1037 = vpop.f32.mrb[0].mxu0
      %1038 = vmatprep.mubr.bf16.mxu0 0
      %1039 = vmatmul.mubr.bf16.gmra.mrb[0].mxu0 %v582
      %v1040 = vpop.f32.mrb[0].mxu0
      %v1041 = vadd.f32 %v880, %v1040
      %v1042 = vpop.f32.mrb[0].mxu0
      %v1043 = vpop.f32.mrb[0].mxu0
      %v1044 = vadd.f32 %v883, %v1043
      %v1045 = vpop.f32.mrb[0].mxu0
      %1046 = vmatprep.mubr.bf16.mxu0 0
      %1047 = vmatmul.mubr.bf16.gmra.mrb[0].mxu0 %v585
      %v1048 = vpop.f32.mrb[0].mxu0
      %v1049 = vadd.f32 %v888, %v1048
      %v1050 = vpop.f32.mrb[0].mxu0
      %v1051 = vpop.f32.mrb[0].mxu0
      %v1052 = vadd.f32 %v891, %v1051
      %v1053 = vpop.f32.mrb[0].mxu0
      %1054 = vmatprep.mubr.bf16.mxu0 0
      %1055 = vmatmul.mubr.bf16.gmra.mrb[0].mxu0 %v588
      %v1056 = vpop.f32.mrb[0].mxu0
      %v1057 = vadd.f32 %v896, %v1056
      %v1058 = vpop.f32.mrb[0].mxu0
      %v1059 = vpop.f32.mrb[0].mxu0
      %v1060 = vadd.f32 %v899, %v1059
      %v1061 = vpop.f32.mrb[0].mxu0
      %1062 = vmatprep.mubr.bf16.mxu0 0
      %1063 = vmatmul.mubr.bf16.gmra.mrb[0].mxu0 %v591
      %v1064 = vpop.f32.mrb[0].mxu0
      %v1065 = vadd.f32 %v904, %v1064
      %v1066 = vpop.f32.mrb[0].mxu0
      %v1067 = vpop.f32.mrb[0].mxu0
      %v1068 = vadd.f32 %v907, %v1067
      %v1069 = vpop.f32.mrb[0].mxu0
      %1070 = vmatprep.mubr.bf16.mxu0 0
      %1071 = vmatmul.mubr.bf16.gmra.mrb[0].mxu0 %v594
      %v1072 = vpop.f32.mrb[0].mxu0
      %v1073 = vadd.f32 %v912, %v1072
      %v1074 = vpop.f32.mrb[0].mxu0
      %v1075 = vpop.f32.mrb[0].mxu0
      %v1076 = vadd.f32 %v915, %v1075
      %v1077 = vpop.f32.mrb[0].mxu0
      %1078 = vmatprep.mubr.bf16.mxu0 0
      %1079 = vmatmul.mubr.bf16.gmra.mrb[0].mxu0 %v597
      %v1080 = vpop.f32.mrb[0].mxu0
      %v1081 = vadd.f32 %v920, %v1080
      %v1082 = vpop.f32.mrb[0].mxu0
      %v1083 = vpop.f32.mrb[0].mxu0
      %v1084 = vadd.f32 %v923, %v1083
      %v1085 = vpop.f32.mrb[0].mxu0
      %1086 = vmatprep.mubr.bf16.mxu0 0
      %1087 = vmatmul.mubr.bf16.gmra.mrb[0].mxu0 %v600
      %v1088 = vpop.f32.mrb[0].mxu0
      %v1089 = vadd.f32 %v928, %v1088
      %v1090 = vpop.f32.mrb[0].mxu0
      %v1091 = vpop.f32.mrb[0].mxu0
      %v1092 = vadd.f32 %v931, %v1091
      %v1093 = vpop.f32.mrb[0].mxu0
      %1094 = vmatprep.mubr.bf16.mxu0 0
      %1095 = vmatmul.mubr.bf16.gmra.mrb[0].mxu0 %v603
      %v1096 = vpop.f32.mrb[0].mxu0
      %v1097 = vadd.f32 %v936, %v1096
      %v1098 = vpop.f32.mrb[0].mxu0
      %v1099 = vpop.f32.mrb[0].mxu0
      %v1100 = vadd.f32 %v939, %v1099
      %v1101 = vpop.f32.mrb[0].mxu0
      %1102 = vmatprep.mubr.bf16.mxu0 0
      %1103 = vmatmul.mubr.bf16.gmra.mrb[0].mxu0 %v606
      %v1104 = vpop.f32.mrb[0].mxu0
      %v1105 = vadd.f32 %v944, %v1104
      %v1106 = vpop.f32.mrb[0].mxu0
      %v1107 = vpop.f32.mrb[0].mxu0
      %v1108 = vadd.f32 %v947, %v1107
      %v1109 = vpop.f32.mrb[0].mxu0
      %1110 = vmatprep.mubr.bf16.mxu0 0
      %1111 = vmatmul.mubr.bf16.gmra.mrb[0].mxu0 %v609
      %v1112 = vpop.f32.mrb[0].mxu0
      %v1113 = vadd.f32 %v952, %v1112
      %v1114 = vpop.f32.mrb[0].mxu0
      %v1115 = vpop.f32.mrb[0].mxu0
      %v1116 = vadd.f32 %v955, %v1115
      %v1117 = vpop.f32.mrb[0].mxu0
      %1118 = vmatprep.mubr.bf16.mxu0 0
      %1119 = vmatmul.mubr.bf16.gmra.mrb[0].mxu0 %v612
      %v1120 = vpop.f32.mrb[0].mxu0
      %v1121 = vadd.f32 %v960, %v1120
      %v1122 = vpop.f32.mrb[0].mxu0
      %v1123 = vpop.f32.mrb[0].mxu0
      %v1124 = vadd.f32 %v963, %v1123
      %v1125 = vpop.f32.mrb[0].mxu0
      %1126 = vdwg.mxu0
      %v1131 = vunpack.c.l.b16 %v240
      %v1132 = vunpack.c.h.b16 %v240
      %v1133 = vunpack.c.l.b16 %v241
      %v1134 = vunpack.c.l.b16 %v242
      %v1135 = vunpack.c.h.b16 %v242
      %v1136 = vunpack.c.l.b16 %v243
      %v1137 = vpack.c.b16 %v1134, %v1131
      %v1138 = vpack.c.b16 %v1135, %v1132
      %v1139 = vpack.c.b16 %v1136, %v1133
      %v1191 = vunpack.c.l.b16 %v304
      %v1192 = vunpack.c.l.b16 %v305
      %v1193 = vunpack.c.l.b16 %v306
      %v1194 = vunpack.c.l.b16 %v307
      %v1195 = vunpack.c.l.b16 %v308
      %v1196 = vunpack.c.l.b16 %v309
      %v1197 = vunpack.c.l.b16 %v310
      %v1198 = vunpack.c.l.b16 %v311
      %v1199 = vunpack.c.l.b16 %v312
      %v1200 = vunpack.c.l.b16 %v313
      %v1201 = vunpack.c.l.b16 %v314
      %v1202 = vunpack.c.l.b16 %v315
      %v1203 = vunpack.c.l.b16 %v316
      %v1204 = vunpack.c.l.b16 %v317
      %v1205 = vunpack.c.l.b16 %v318
      %v1206 = vunpack.c.l.b16 %v319
      %v1207 = vunpack.c.l.b16 %v320
      %v1208 = vunpack.c.l.b16 %v321
      %v1209 = vunpack.c.l.b16 %v322
      %v1210 = vunpack.c.l.b16 %v323
      %v1211 = vunpack.c.l.b16 %v324
      %v1212 = vunpack.c.l.b16 %v325
      %v1213 = vunpack.c.l.b16 %v326
      %v1214 = vunpack.c.l.b16 %v327
      %v1215 = vunpack.c.l.b16 %v328
      %v1216 = vunpack.c.l.b16 %v329
      %v1217 = vunpack.c.l.b16 %v330
      %v1218 = vunpack.c.l.b16 %v331
      %v1219 = vunpack.c.l.b16 %v332
      %v1220 = vunpack.c.l.b16 %v333
      %v1221 = vunpack.c.l.b16 %v334
      %v1222 = vunpack.c.l.b16 %v335
      %v1223 = vunpack.c.l.b16 %v336
      %v1224 = vunpack.c.l.b16 %v337
      %v1225 = vunpack.c.l.b16 %v338
      %v1226 = vunpack.c.l.b16 %v339
      %v1227 = vunpack.c.l.b16 %v340
      %v1228 = vunpack.c.l.b16 %v341
      %v1229 = vunpack.c.l.b16 %v342
      %v1230 = vunpack.c.l.b16 %v343
      %v1231 = vunpack.c.l.b16 %v344
      %v1232 = vunpack.c.l.b16 %v345
      %v1233 = vunpack.c.l.b16 %v346
      %v1234 = vunpack.c.l.b16 %v347
      %v1235 = vunpack.c.l.b16 %v348
      %v1236 = vunpack.c.l.b16 %v349
      %v1237 = vunpack.c.l.b16 %v350
      %v1238 = vunpack.c.l.b16 %v351
      %v1239 = vpack.c.b16 %v1192, %v1191
      %v1240 = vpack.c.b16 %v1194, %v1193
      %v1241 = vpack.c.b16 %v1196, %v1195
      %v1242 = vpack.c.b16 %v1198, %v1197
      %v1243 = vpack.c.b16 %v1200, %v1199
      %v1244 = vpack.c.b16 %v1202, %v1201
      %v1245 = vpack.c.b16 %v1204, %v1203
      %v1246 = vpack.c.b16 %v1206, %v1205
      %v1247 = vpack.c.b16 %v1208, %v1207
      %v1248 = vpack.c.b16 %v1210, %v1209
      %v1249 = vpack.c.b16 %v1212, %v1211
      %v1250 = vpack.c.b16 %v1214, %v1213
      %v1251 = vpack.c.b16 %v1216, %v1215
      %v1252 = vpack.c.b16 %v1218, %v1217
      %v1253 = vpack.c.b16 %v1220, %v1219
      %v1254 = vpack.c.b16 %v1222, %v1221
      %v1255 = vpack.c.b16 %v1224, %v1223
      %v1256 = vpack.c.b16 %v1226, %v1225
      %v1257 = vpack.c.b16 %v1228, %v1227
      %v1258 = vpack.c.b16 %v1230, %v1229
      %v1259 = vpack.c.b16 %v1232, %v1231
      %v1260 = vpack.c.b16 %v1234, %v1233
      %v1261 = vpack.c.b16 %v1236, %v1235
      %v1262 = vpack.c.b16 %v1238, %v1237
      %1287 = vmatprep.subr.bf16.mxu0 0
      %1288 = vmatpush1.bf16.msra.mxu0 %v1239
      %1289 = vmatprep.subr.bf16.mxu0 0
      %1290 = vmatpush1.bf16.msra.mxu0 %v1240
      %1291 = vmatprep.subr.bf16.mxu0 0
      %1292 = vmatpush1.bf16.msra.mxu0 %v1241
      %1293 = vmatprep.subr.bf16.mxu0 0
      %1294 = vmatpush1.bf16.msra.mxu0 %v1242
      %1295 = vmatprep.subr.bf16.mxu0 0
      %1296 = vmatpush1.bf16.msra.mxu0 %v1243
      %1297 = vmatprep.subr.bf16.mxu0 0
      %1298 = vmatpush1.bf16.msra.mxu0 %v1244
      %1299 = vmatprep.subr.bf16.mxu0 0
      %1300 = vmatpush1.bf16.msra.mxu0 %v1245
      %1301 = vmatprep.subr.bf16.mxu0 0
      %1302 = vmatpush1.bf16.msra.mxu0 %v1246
      %1303 = vmatprep.subr.bf16.mxu0 0
      %1304 = vmatpush1.bf16.msra.mxu0 %v1247
      %1305 = vmatprep.subr.bf16.mxu0 0
      %1306 = vmatpush1.bf16.msra.mxu0 %v1248
      %1307 = vmatprep.subr.bf16.mxu0 0
      %1308 = vmatpush1.bf16.msra.mxu0 %v1249
      %1309 = vmatprep.subr.bf16.mxu0 0
      %1310 = vmatpush1.bf16.msra.mxu0 %v1250
      %1311 = vmatprep.subr.bf16.mxu0 0
      %1312 = vmatpush1.bf16.msra.mxu0 %v1251
      %1313 = vmatprep.subr.bf16.mxu0 0
      %1314 = vmatpush1.bf16.msra.mxu0 %v1252
      %1315 = vmatprep.subr.bf16.mxu0 0
      %1316 = vmatpush1.bf16.msra.mxu0 %v1253
      %1317 = vmatprep.subr.bf16.mxu0 0
      %1318 = vmatpush1.bf16.msra.mxu0 %v1254
      %1319 = vmatprep.mubr.bf16.mxu0 %v1138
      %1320 = vmatmul.mubr.bf16.gmra.mrb[0].mxu0 %v1137
      %v1321 = vpop.f32.mrb[0].mxu0
      %v1322 = vadd.f32 %v1001, %v1321
      %v1323 = vpop.f32.mrb[0].mxu0
      %v1324 = vpop.f32.mrb[0].mxu0
      %v1325 = vadd.f32 %v1004, %v1324
      %v1326 = vpop.f32.mrb[0].mxu0
      %1327 = vmatprep.mubr.bf16.mxu0 %v566
      %1328 = vmatmul.mubr.bf16.gmra.mrb[0].mxu0 %v565
      %v1329 = vpop.f32.mrb[0].mxu0
      %v1330 = vadd.f32 %v1009, %v1329
      %v1331 = vpop.f32.mrb[0].mxu0
      %v1332 = vpop.f32.mrb[0].mxu0
      %v1333 = vadd.f32 %v1012, %v1332
      %v1334 = vpop.f32.mrb[0].mxu0
      %1335 = vmatprep.mubr.bf16.mxu0 %v569
      %1336 = vmatmul.mubr.bf16.gmra.mrb[0].mxu0 %v568
      %v1337 = vpop.f32.mrb[0].mxu0
      %v1338 = vadd.f32 %v1017, %v1337
      %v1339 = vpop.f32.mrb[0].mxu0
      %v1340 = vpop.f32.mrb[0].mxu0
      %v1341 = vadd.f32 %v1020, %v1340
      %v1342 = vpop.f32.mrb[0].mxu0
      %1343 = vmatprep.mubr.bf16.mxu0 %v572
      %1344 = vmatmul.mubr.bf16.gmra.mrb[0].mxu0 %v571
      %v1345 = vpop.f32.mrb[0].mxu0
      %v1346 = vadd.f32 %v1025, %v1345
      %v1347 = vpop.f32.mrb[0].mxu0
      %v1348 = vpop.f32.mrb[0].mxu0
      %v1349 = vadd.f32 %v1028, %v1348
      %v1350 = vpop.f32.mrb[0].mxu0
      %1351 = vmatprep.mubr.bf16.mxu0 %v575
      %1352 = vmatmul.mubr.bf16.gmra.mrb[0].mxu0 %v574
      %v1353 = vpop.f32.mrb[0].mxu0
      %v1354 = vadd.f32 %v1033, %v1353
      %v1355 = vpop.f32.mrb[0].mxu0
      %v1356 = vpop.f32.mrb[0].mxu0
      %v1357 = vadd.f32 %v1036, %v1356
      %v1358 = vpop.f32.mrb[0].mxu0
      %1359 = vmatprep.mubr.bf16.mxu0 %v578
      %1360 = vmatmul.mubr.bf16.gmra.mrb[0].mxu0 %v577
      %v1361 = vpop.f32.mrb[0].mxu0
      %v1362 = vadd.f32 %v1041, %v1361
      %v1363 = vpop.f32.mrb[0].mxu0
      %v1364 = vpop.f32.mrb[0].mxu0
      %v1365 = vadd.f32 %v1044, %v1364
      %v1366 = vpop.f32.mrb[0].mxu0
      %1367 = vmatprep.mubr.bf16.mxu0 %v581
      %1368 = vmatmul.mubr.bf16.gmra.mrb[0].mxu0 %v580
      %v1369 = vpop.f32.mrb[0].mxu0
      %v1370 = vadd.f32 %v1049, %v1369
      %v1371 = vpop.f32.mrb[0].mxu0
      %v1372 = vpop.f32.mrb[0].mxu0
      %v1373 = vadd.f32 %v1052, %v1372
      %v1374 = vpop.f32.mrb[0].mxu0
      %1375 = vmatprep.mubr.bf16.mxu0 %v584
      %1376 = vmatmul.mubr.bf16.gmra.mrb[0].mxu0 %v583
      %v1377 = vpop.f32.mrb[0].mxu0
      %v1378 = vadd.f32 %v1057, %v1377
      %v1379 = vpop.f32.mrb[0].mxu0
      %v1380 = vpop.f32.mrb[0].mxu0
      %v1381 = vadd.f32 %v1060, %v1380
      %v1382 = vpop.f32.mrb[0].mxu0
      %1383 = vmatprep.mubr.bf16.mxu0 %v587
      %1384 = vmatmul.mubr.bf16.gmra.mrb[0].mxu0 %v586
      %v1385 = vpop.f32.mrb[0].mxu0
      %v1386 = vadd.f32 %v1065, %v1385
      %v1387 = vpop.f32.mrb[0].mxu0
      %v1388 = vpop.f32.mrb[0].mxu0
      %v1389 = vadd.f32 %v1068, %v1388
      %v1390 = vpop.f32.mrb[0].mxu0
      %1391 = vmatprep.mubr.bf16.mxu0 %v590
      %1392 = vmatmul.mubr.bf16.gmra.mrb[0].mxu0 %v589
      %v1393 = vpop.f32.mrb[0].mxu0
      %v1394 = vadd.f32 %v1073, %v1393
      %v1395 = vpop.f32.mrb[0].mxu0
      %v1396 = vpop.f32.mrb[0].mxu0
      %v1397 = vadd.f32 %v1076, %v1396
      %v1398 = vpop.f32.mrb[0].mxu0
      %1399 = vmatprep.mubr.bf16.mxu0 %v593
      %1400 = vmatmul.mubr.bf16.gmra.mrb[0].mxu0 %v592
      %v1401 = vpop.f32.mrb[0].mxu0
      %v1402 = vadd.f32 %v1081, %v1401
      %v1403 = vpop.f32.mrb[0].mxu0
      %v1404 = vpop.f32.mrb[0].mxu0
      %v1405 = vadd.f32 %v1084, %v1404
      %v1406 = vpop.f32.mrb[0].mxu0
      %1407 = vmatprep.mubr.bf16.mxu0 %v596
      %1408 = vmatmul.mubr.bf16.gmra.mrb[0].mxu0 %v595
      %v1409 = vpop.f32.mrb[0].mxu0
      %v1410 = vadd.f32 %v1089, %v1409
      %v1411 = vpop.f32.mrb[0].mxu0
      %v1412 = vpop.f32.mrb[0].mxu0
      %v1413 = vadd.f32 %v1092, %v1412
      %v1414 = vpop.f32.mrb[0].mxu0
      %1415 = vmatprep.mubr.bf16.mxu0 %v599
      %1416 = vmatmul.mubr.bf16.gmra.mrb[0].mxu0 %v598
      %v1417 = vpop.f32.mrb[0].mxu0
      %v1418 = vadd.f32 %v1097, %v1417
      %v1419 = vpop.f32.mrb[0].mxu0
      %v1420 = vpop.f32.mrb[0].mxu0
      %v1421 = vadd.f32 %v1100, %v1420
      %v1422 = vpop.f32.mrb[0].mxu0
      %1423 = vmatprep.mubr.bf16.mxu0 %v602
      %1424 = vmatmul.mubr.bf16.gmra.mrb[0].mxu0 %v601
      %v1425 = vpop.f32.mrb[0].mxu0
      %v1426 = vadd.f32 %v1105, %v1425
      %v1427 = vpop.f32.mrb[0].mxu0
      %v1428 = vpop.f32.mrb[0].mxu0
      %v1429 = vadd.f32 %v1108, %v1428
      %v1430 = vpop.f32.mrb[0].mxu0
      %1431 = vmatprep.mubr.bf16.mxu0 %v605
      %1432 = vmatmul.mubr.bf16.gmra.mrb[0].mxu0 %v604
      %v1433 = vpop.f32.mrb[0].mxu0
      %v1434 = vadd.f32 %v1113, %v1433
      %v1435 = vpop.f32.mrb[0].mxu0
      %v1436 = vpop.f32.mrb[0].mxu0
      %v1437 = vadd.f32 %v1116, %v1436
      %v1438 = vpop.f32.mrb[0].mxu0
      %1439 = vmatprep.mubr.bf16.mxu0 %v608
      %1440 = vmatmul.mubr.bf16.gmra.mrb[0].mxu0 %v607
      %v1441 = vpop.f32.mrb[0].mxu0
      %v1442 = vadd.f32 %v1121, %v1441
      %v1443 = vpop.f32.mrb[0].mxu0
      %v1444 = vpop.f32.mrb[0].mxu0
      %v1445 = vadd.f32 %v1124, %v1444
      %v1446 = vpop.f32.mrb[0].mxu0
      %1447 = vdwg.mxu0
      %1448 = vmatprep.subr.bf16.mxu0 0
      %1449 = vmatpush1.bf16.msra.mxu0 %v1255
      %1450 = vmatprep.subr.bf16.mxu0 0
      %1451 = vmatpush1.bf16.msra.mxu0 %v1256
      %1452 = vmatprep.subr.bf16.mxu0 0
      %1453 = vmatpush1.bf16.msra.mxu0 %v1257
      %1454 = vmatprep.subr.bf16.mxu0 0
      %1455 = vmatpush1.bf16.msra.mxu0 %v1258
      %1456 = vmatprep.subr.bf16.mxu0 0
      %1457 = vmatpush1.bf16.msra.mxu0 %v1259
      %1458 = vmatprep.subr.bf16.mxu0 0
      %1459 = vmatpush1.bf16.msra.mxu0 %v1260
      %1460 = vmatprep.subr.bf16.mxu0 0
      %1461 = vmatpush1.bf16.msra.mxu0 %v1261
      %1462 = vmatprep.subr.bf16.mxu0 0
      %1463 = vmatpush1.bf16.msra.mxu0 %v1262
      %1464 = vmatprep.subr.bf16.mxu0 0
      %1465 = vmatpush1.bf16.msra.mxu0 0
      %1466 = vmatprep.subr.bf16.mxu0 0
      %1467 = vmatpush1.bf16.msra.mxu0 0
      %1468 = vmatprep.subr.bf16.mxu0 0
      %1469 = vmatpush1.bf16.msra.mxu0 0
      %1470 = vmatprep.subr.bf16.mxu0 0
      %1471 = vmatpush1.bf16.msra.mxu0 0
      %1472 = vmatprep.subr.bf16.mxu0 0
      %1473 = vmatpush1.bf16.msra.mxu0 0
      %1474 = vmatprep.subr.bf16.mxu0 0
      %1475 = vmatpush1.bf16.msra.mxu0 0
      %1476 = vmatprep.subr.bf16.mxu0 0
      %1477 = vmatpush1.bf16.msra.mxu0 0
      %1478 = vmatprep.subr.bf16.mxu0 0
      %1479 = vmatpush1.bf16.msra.mxu0 0
      %1480 = vmatprep.mubr.bf16.mxu0 0
      %1481 = vmatmul.mubr.bf16.gmra.mrb[0].mxu0 %v1139
      %v1482 = vpop.f32.mrb[0].mxu0
      %v1483 = vadd.f32 %v1322, %v1482
      %v1484 = vpop.f32.mrb[0].mxu0
      %v1485 = vpop.f32.mrb[0].mxu0
      %v1486 = vadd.f32 %v1325, %v1485
      %v1487 = vpop.f32.mrb[0].mxu0
      %1488 = vmatprep.mubr.bf16.mxu0 0
      %1489 = vmatmul.mubr.bf16.gmra.mrb[0].mxu0 %v567
      %v1490 = vpop.f32.mrb[0].mxu0
      %v1491 = vadd.f32 %v1330, %v1490
      %v1492 = vpop.f32.mrb[0].mxu0
      %v1493 = vpop.f32.mrb[0].mxu0
      %v1494 = vadd.f32 %v1333, %v1493
      %v1495 = vpop.f32.mrb[0].mxu0
      %1496 = vmatprep.mubr.bf16.mxu0 0
      %1497 = vmatmul.mubr.bf16.gmra.mrb[0].mxu0 %v570
      %v1498 = vpop.f32.mrb[0].mxu0
      %v1499 = vadd.f32 %v1338, %v1498
      %v1500 = vpop.f32.mrb[0].mxu0
      %v1501 = vpop.f32.mrb[0].mxu0
      %v1502 = vadd.f32 %v1341, %v1501
      %v1503 = vpop.f32.mrb[0].mxu0
      %1504 = vmatprep.mubr.bf16.mxu0 0
      %1505 = vmatmul.mubr.bf16.gmra.mrb[0].mxu0 %v573
      %v1506 = vpop.f32.mrb[0].mxu0
      %v1507 = vadd.f32 %v1346, %v1506
      %v1508 = vpop.f32.mrb[0].mxu0
      %v1509 = vpop.f32.mrb[0].mxu0
      %v1510 = vadd.f32 %v1349, %v1509
      %v1511 = vpop.f32.mrb[0].mxu0
      %1512 = vmatprep.mubr.bf16.mxu0 0
      %1513 = vmatmul.mubr.bf16.gmra.mrb[0].mxu0 %v576
      %v1514 = vpop.f32.mrb[0].mxu0
      %v1515 = vadd.f32 %v1354, %v1514
      %v1516 = vpop.f32.mrb[0].mxu0
      %v1517 = vpop.f32.mrb[0].mxu0
      %v1518 = vadd.f32 %v1357, %v1517
      %v1519 = vpop.f32.mrb[0].mxu0
      %1520 = vmatprep.mubr.bf16.mxu0 0
      %1521 = vmatmul.mubr.bf16.gmra.mrb[0].mxu0 %v579
      %v1522 = vpop.f32.mrb[0].mxu0
      %v1523 = vadd.f32 %v1362, %v1522
      %v1524 = vpop.f32.mrb[0].mxu0
      %v1525 = vpop.f32.mrb[0].mxu0
      %v1526 = vadd.f32 %v1365, %v1525
      %v1527 = vpop.f32.mrb[0].mxu0
      %1528 = vmatprep.mubr.bf16.mxu0 0
      %1529 = vmatmul.mubr.bf16.gmra.mrb[0].mxu0 %v582
      %v1530 = vpop.f32.mrb[0].mxu0
      %v1531 = vadd.f32 %v1370, %v1530
      %v1532 = vpop.f32.mrb[0].mxu0
      %v1533 = vpop.f32.mrb[0].mxu0
      %v1534 = vadd.f32 %v1373, %v1533
      %v1535 = vpop.f32.mrb[0].mxu0
      %1536 = vmatprep.mubr.bf16.mxu0 0
      %1537 = vmatmul.mubr.bf16.gmra.mrb[0].mxu0 %v585
      %v1538 = vpop.f32.mrb[0].mxu0
      %v1539 = vadd.f32 %v1378, %v1538
      %v1540 = vpop.f32.mrb[0].mxu0
      %v1541 = vpop.f32.mrb[0].mxu0
      %v1542 = vadd.f32 %v1381, %v1541
      %v1543 = vpop.f32.mrb[0].mxu0
      %1544 = vmatprep.mubr.bf16.mxu0 0
      %1545 = vmatmul.mubr.bf16.gmra.mrb[0].mxu0 %v588
      %v1546 = vpop.f32.mrb[0].mxu0
      %v1547 = vadd.f32 %v1386, %v1546
      %v1548 = vpop.f32.mrb[0].mxu0
      %v1549 = vpop.f32.mrb[0].mxu0
      %v1550 = vadd.f32 %v1389, %v1549
      %v1551 = vpop.f32.mrb[0].mxu0
      %1552 = vmatprep.mubr.bf16.mxu0 0
      %1553 = vmatmul.mubr.bf16.gmra.mrb[0].mxu0 %v591
      %v1554 = vpop.f32.mrb[0].mxu0
      %v1555 = vadd.f32 %v1394, %v1554
      %v1556 = vpop.f32.mrb[0].mxu0
      %v1557 = vpop.f32.mrb[0].mxu0
      %v1558 = vadd.f32 %v1397, %v1557
      %v1559 = vpop.f32.mrb[0].mxu0
      %1560 = vmatprep.mubr.bf16.mxu0 0
      %1561 = vmatmul.mubr.bf16.gmra.mrb[0].mxu0 %v594
      %v1562 = vpop.f32.mrb[0].mxu0
      %v1563 = vadd.f32 %v1402, %v1562
      %v1564 = vpop.f32.mrb[0].mxu0
      %v1565 = vpop.f32.mrb[0].mxu0
      %v1566 = vadd.f32 %v1405, %v1565
      %v1567 = vpop.f32.mrb[0].mxu0
      %1568 = vmatprep.mubr.bf16.mxu0 0
      %1569 = vmatmul.mubr.bf16.gmra.mrb[0].mxu0 %v597
      %v1570 = vpop.f32.mrb[0].mxu0
      %v1571 = vadd.f32 %v1410, %v1570
      %v1572 = vpop.f32.mrb[0].mxu0
      %v1573 = vpop.f32.mrb[0].mxu0
      %v1574 = vadd.f32 %v1413, %v1573
      %v1575 = vpop.f32.mrb[0].mxu0
      %1576 = vmatprep.mubr.bf16.mxu0 0
      %1577 = vmatmul.mubr.bf16.gmra.mrb[0].mxu0 %v600
      %v1578 = vpop.f32.mrb[0].mxu0
      %v1579 = vadd.f32 %v1418, %v1578
      %v1580 = vpop.f32.mrb[0].mxu0
      %v1581 = vpop.f32.mrb[0].mxu0
      %v1582 = vadd.f32 %v1421, %v1581
      %v1583 = vpop.f32.mrb[0].mxu0
      %1584 = vmatprep.mubr.bf16.mxu0 0
      %1585 = vmatmul.mubr.bf16.gmra.mrb[0].mxu0 %v603
      %v1586 = vpop.f32.mrb[0].mxu0
      %v1587 = vadd.f32 %v1426, %v1586
      %v1588 = vpop.f32.mrb[0].mxu0
      %v1589 = vpop.f32.mrb[0].mxu0
      %v1590 = vadd.f32 %v1429, %v1589
      %v1591 = vpop.f32.mrb[0].mxu0
      %1592 = vmatprep.mubr.bf16.mxu0 0
      %1593 = vmatmul.mubr.bf16.gmra.mrb[0].mxu0 %v606
      %v1594 = vpop.f32.mrb[0].mxu0
      %v1595 = vadd.f32 %v1434, %v1594
      %v1596 = vpop.f32.mrb[0].mxu0
      %v1597 = vpop.f32.mrb[0].mxu0
      %v1598 = vadd.f32 %v1437, %v1597
      %v1599 = vpop.f32.mrb[0].mxu0
      %1600 = vmatprep.mubr.bf16.mxu0 0
      %1601 = vmatmul.mubr.bf16.gmra.mrb[0].mxu0 %v609
      %v1602 = vpop.f32.mrb[0].mxu0
      %v1603 = vadd.f32 %v1442, %v1602
      %v1604 = vpop.f32.mrb[0].mxu0
      %v1605 = vpop.f32.mrb[0].mxu0
      %v1606 = vadd.f32 %v1445, %v1605
      %v1607 = vpop.f32.mrb[0].mxu0
      %1608 = vdwg.mxu0
      %v1609 = vld [vmem:[%s227 + $0x30] sm:$0xff]
      %v1610 = vld [vmem:[%s227 + $0x38] sm:$0xf]
      %v1611 = vld [vmem:[%s227 + $0x3c] sm:$0xff]
      %v1612 = vld [vmem:[%s227 + $0x44] sm:$0xf]
      %v1613 = vld [vmem:[%s227 + $0x48] sm:$0xff]
      %v1614 = vld [vmem:[%s227 + $0x50] sm:$0xf]
      %v1615 = vld [vmem:[%s227 + $0x54] sm:$0xff]
      %v1616 = vld [vmem:[%s227 + $0x5c] sm:$0xf]
      %v1617 = vld [vmem:[%s227 + $0x60] sm:$0xff]
      %v1618 = vld [vmem:[%s227 + $0x68] sm:$0xf]
      %v1619 = vld [vmem:[%s227 + $0x6c] sm:$0xff]
      %v1620 = vld [vmem:[%s227 + $0x74] sm:$0xf]
      %v1621 = vld [vmem:[%s227 + $0x78] sm:$0xff]
      %v1622 = vld [vmem:[%s227 + $0x80] sm:$0xf]
      %v1623 = vld [vmem:[%s227 + $0x84] sm:$0xff]
      %v1624 = vld [vmem:[%s227 + $0x8c] sm:$0xf]
      %v1625 = vld [vmem:[%s227 + $0x90] sm:$0xff]
      %v1626 = vld [vmem:[%s227 + $0x98] sm:$0xf]
      %v1627 = vld [vmem:[%s227 + $0x9c] sm:$0xff]
      %v1628 = vld [vmem:[%s227 + $0xa4] sm:$0xf]
      %v1629 = vld [vmem:[%s227 + $0xa8] sm:$0xff]
      %v1630 = vld [vmem:[%s227 + $0xb0] sm:$0xf]
      %v1631 = vld [vmem:[%s227 + $0xb4] sm:$0xff]
      %v1632 = vld [vmem:[%s227 + $0xbc] sm:$0xf]
      %v1633 = vld [vmem:[%s227 + $0xc0] sm:$0xff]
      %v1634 = vld [vmem:[%s227 + $0xc8] sm:$0xf]
      %v1635 = vld [vmem:[%s227 + $0xcc] sm:$0xff]
      %v1636 = vld [vmem:[%s227 + $0xd4] sm:$0xf]
      %v1637 = vld [vmem:[%s227 + $0xd8] sm:$0xff]
      %v1638 = vld [vmem:[%s227 + $0xe0] sm:$0xf]
      %v1639 = vld [vmem:[%s227 + $0xe4] sm:$0xff]
      %v1640 = vld [vmem:[%s227 + $0xec] sm:$0xf]
      %v1641 = vld [vmem:[%s227 + $0xf0] sm:$0xff]
      %v1642 = vld [vmem:[%s227 + $0xf8] sm:$0xf]
      %v1643 = vld [vmem:[%s227 + $0xfc] sm:$0xff]
      %v1644 = vld [vmem:[%s227 + $0x104] sm:$0xf]
      %v1645 = vld [vmem:[%s227 + $0x108] sm:$0xff]
      %v1646 = vld [vmem:[%s227 + $0x110] sm:$0xf]
      %v1647 = vld [vmem:[%s227 + $0x114] sm:$0xff]
      %v1648 = vld [vmem:[%s227 + $0x11c] sm:$0xf]
      %v1649 = vld [vmem:[%s227 + $0x120] sm:$0xff]
      %v1650 = vld [vmem:[%s227 + $0x128] sm:$0xf]
      %v1651 = vld [vmem:[%s227 + $0x12c] sm:$0xff]
      %v1652 = vld [vmem:[%s227 + $0x134] sm:$0xf]
      %v1653 = vld [vmem:[%s227 + $0x138] sm:$0xff]
      %v1654 = vld [vmem:[%s227 + $0x140] sm:$0xf]
      %v1655 = vld [vmem:[%s227 + $0x144] sm:$0xff]
      %v1656 = vld [vmem:[%s227 + $0x14c] sm:$0xf]
      %v1657 = vld [vmem:[%s227 + $0x150] sm:$0xff]
      %v1658 = vld [vmem:[%s227 + $0x158] sm:$0xf]
      %v1659 = vld [vmem:[%s227 + $0x15c] sm:$0xff]
      %v1660 = vld [vmem:[%s227 + $0x164] sm:$0xf]
      %v1661 = vld [vmem:[%s227 + $0x168] sm:$0xff]
      %v1662 = vld [vmem:[%s227 + $0x170] sm:$0xf]
      %v1663 = vld [vmem:[%s227 + $0x174] sm:$0xff]
      %v1664 = vld [vmem:[%s227 + $0x17c] sm:$0xf]
      %v1665 = vld [vmem:[%s227 + $0x180] sm:$0xff]
      %v1666 = vld [vmem:[%s227 + $0x188] sm:$0xf]
      %v1667 = vld [vmem:[%s227 + $0x18c] sm:$0xff]
      %v1668 = vld [vmem:[%s227 + $0x194] sm:$0xf]
      %v1669 = vld [vmem:[%s227 + $0x198] sm:$0xff]
      %v1670 = vld [vmem:[%s227 + $0x1a0] sm:$0xf]
      %v1671 = vld [vmem:[%s227 + $0x1a4] sm:$0xff]
      %v1672 = vld [vmem:[%s227 + $0x1ac] sm:$0xf]
      %s1673 = scalar_lea.vmem %s1, 384
      %v1674 = vld [vmem:[%s1673] sm:$0xf]
      %v1675 = vld [vmem:[%s1673 + $0x4] sm:$0xf]
      %v1676 = vld [vmem:[%s1673 + $0x8] sm:$0xf]
      %v1677 = vld [vmem:[%s1673 + $0xc] sm:$0xf]
      %v1678 = vld [vmem:[%s1673 + $0x10] sm:$0xf]
      %v1679 = vld [vmem:[%s1673 + $0x14] sm:$0xf]
      %v1680 = vld [vmem:[%s1673 + $0x18] sm:$0xf]
      %v1681 = vld [vmem:[%s1673 + $0x1c] sm:$0xf]
      %v1682 = vld [vmem:[%s1673 + $0x20] sm:$0xf]
      %v1683 = vld [vmem:[%s1673 + $0x24] sm:$0xf]
      %v1684 = vld [vmem:[%s1673 + $0x28] sm:$0xf]
      %v1685 = vld [vmem:[%s1673 + $0x2c] sm:$0xf]
      %v1686 = vld [vmem:[%s1673 + $0x30] sm:$0xf]
      %v1687 = vld [vmem:[%s1673 + $0x34] sm:$0xf]
      %v1688 = vld [vmem:[%s1673 + $0x38] sm:$0xf]
      %v1689 = vld [vmem:[%s1673 + $0x3c] sm:$0xf]
      %v1690 = vld [vmem:[%s1673 + $0x40] sm:$0xf]
      %v1691 = vld [vmem:[%s1673 + $0x44] sm:$0xf]
      %v1692 = vld [vmem:[%s1673 + $0x48] sm:$0xf]
      %v1693 = vld [vmem:[%s1673 + $0x4c] sm:$0xf]
      %v1694 = vld [vmem:[%s1673 + $0x50] sm:$0xf]
      %v1695 = vld [vmem:[%s1673 + $0x54] sm:$0xf]
      %v1696 = vld [vmem:[%s1673 + $0x58] sm:$0xf]
      %v1697 = vld [vmem:[%s1673 + $0x5c] sm:$0xf]
      %v1698 = vld [vmem:[%s1673 + $0x60] sm:$0xf]
      %v1699 = vld [vmem:[%s1673 + $0x64] sm:$0xf]
      %v1700 = vld [vmem:[%s1673 + $0x68] sm:$0xf]
      %v1701 = vld [vmem:[%s1673 + $0x6c] sm:$0xf]
      %v1702 = vld [vmem:[%s1673 + $0x70] sm:$0xf]
      %v1703 = vld [vmem:[%s1673 + $0x74] sm:$0xf]
      %v1704 = vld [vmem:[%s1673 + $0x78] sm:$0xf]
      %v1705 = vld [vmem:[%s1673 + $0x7c] sm:$0xf]
      %v1706 = vld [vmem:[%s1673 + $0x80] sm:$0xf]
      %v1707 = vld [vmem:[%s1673 + $0x84] sm:$0xf]
      %v1708 = vld [vmem:[%s1673 + $0x88] sm:$0xf]
      %v1709 = vld [vmem:[%s1673 + $0x8c] sm:$0xf]
      %v1710 = vld [vmem:[%s1673 + $0x90] sm:$0xf]
      %v1711 = vld [vmem:[%s1673 + $0x94] sm:$0xf]
      %v1712 = vld [vmem:[%s1673 + $0x98] sm:$0xf]
      %v1713 = vld [vmem:[%s1673 + $0x9c] sm:$0xf]
      %v1714 = vld [vmem:[%s1673 + $0xa0] sm:$0xf]
      %v1715 = vld [vmem:[%s1673 + $0xa4] sm:$0xf]
      %v1716 = vld [vmem:[%s1673 + $0xa8] sm:$0xf]
      %v1717 = vld [vmem:[%s1673 + $0xac] sm:$0xf]
      %v1718 = vld [vmem:[%s1673 + $0xb0] sm:$0xf]
      %v1719 = vld [vmem:[%s1673 + $0xb4] sm:$0xf]
      %v1720 = vld [vmem:[%s1673 + $0xb8] sm:$0xf]
      %v1721 = vld [vmem:[%s1673 + $0xbc] sm:$0xf]
      %v1786 = vunpack.c.l.b16 %v1609
      %v1787 = vunpack.c.h.b16 %v1609
      %v1788 = vunpack.c.l.b16 %v1610
      %v1789 = vunpack.c.l.b16 %v1611
      %v1790 = vunpack.c.h.b16 %v1611
      %v1791 = vunpack.c.l.b16 %v1612
      %v1792 = vunpack.c.l.b16 %v1613
      %v1793 = vunpack.c.h.b16 %v1613
      %v1794 = vunpack.c.l.b16 %v1614
      %v1795 = vunpack.c.l.b16 %v1615
      %v1796 = vunpack.c.h.b16 %v1615
      %v1797 = vunpack.c.l.b16 %v1616
      %v1798 = vunpack.c.l.b16 %v1617
      %v1799 = vunpack.c.h.b16 %v1617
      %v1800 = vunpack.c.l.b16 %v1618
      %v1801 = vunpack.c.l.b16 %v1619
      %v1802 = vunpack.c.h.b16 %v1619
      %v1803 = vunpack.c.l.b16 %v1620
      %v1804 = vunpack.c.l.b16 %v1621
      %v1805 = vunpack.c.h.b16 %v1621
      %v1806 = vunpack.c.l.b16 %v1622
      %v1807 = vunpack.c.l.b16 %v1623
      %v1808 = vunpack.c.h.b16 %v1623
      %v1809 = vunpack.c.l.b16 %v1624
      %v1810 = vunpack.c.l.b16 %v1625
      %v1811 = vunpack.c.h.b16 %v1625
      %v1812 = vunpack.c.l.b16 %v1626
      %v1813 = vunpack.c.l.b16 %v1627
      %v1814 = vunpack.c.h.b16 %v1627
      %v1815 = vunpack.c.l.b16 %v1628
      %v1816 = vunpack.c.l.b16 %v1629
      %v1817 = vunpack.c.h.b16 %v1629
      %v1818 = vunpack.c.l.b16 %v1630
      %v1819 = vunpack.c.l.b16 %v1631
      %v1820 = vunpack.c.h.b16 %v1631
      %v1821 = vunpack.c.l.b16 %v1632
      %v1822 = vunpack.c.l.b16 %v1633
      %v1823 = vunpack.c.h.b16 %v1633
      %v1824 = vunpack.c.l.b16 %v1634
      %v1825 = vunpack.c.l.b16 %v1635
      %v1826 = vunpack.c.h.b16 %v1635
      %v1827 = vunpack.c.l.b16 %v1636
      %v1828 = vunpack.c.l.b16 %v1637
      %v1829 = vunpack.c.h.b16 %v1637
      %v1830 = vunpack.c.l.b16 %v1638
      %v1831 = vunpack.c.l.b16 %v1639
      %v1832 = vunpack.c.h.b16 %v1639
      %v1833 = vunpack.c.l.b16 %v1640
      %v1834 = vunpack.c.l.b16 %v1641
      %v1835 = vunpack.c.h.b16 %v1641
      %v1836 = vunpack.c.l.b16 %v1642
      %v1837 = vunpack.c.l.b16 %v1643
      %v1838 = vunpack.c.h.b16 %v1643
      %v1839 = vunpack.c.l.b16 %v1644
      %v1840 = vunpack.c.l.b16 %v1645
      %v1841 = vunpack.c.h.b16 %v1645
      %v1842 = vunpack.c.l.b16 %v1646
      %v1843 = vunpack.c.l.b16 %v1647
      %v1844 = vunpack.c.h.b16 %v1647
      %v1845 = vunpack.c.l.b16 %v1648
      %v1846 = vunpack.c.l.b16 %v1649
      %v1847 = vunpack.c.h.b16 %v1649
      %v1848 = vunpack.c.l.b16 %v1650
      %v1849 = vunpack.c.l.b16 %v1651
      %v1850 = vunpack.c.h.b16 %v1651
      %v1851 = vunpack.c.l.b16 %v1652
      %v1852 = vunpack.c.l.b16 %v1653
      %v1853 = vunpack.c.h.b16 %v1653
      %v1854 = vunpack.c.l.b16 %v1654
      %v1855 = vunpack.c.l.b16 %v1655
      %v1856 = vunpack.c.h.b16 %v1655
      %v1857 = vunpack.c.l.b16 %v1656
      %v1858 = vunpack.c.l.b16 %v1657
      %v1859 = vunpack.c.h.b16 %v1657
      %v1860 = vunpack.c.l.b16 %v1658
      %v1861 = vunpack.c.l.b16 %v1659
      %v1862 = vunpack.c.h.b16 %v1659
      %v1863 = vunpack.c.l.b16 %v1660
      %v1864 = vunpack.c.l.b16 %v1661
      %v1865 = vunpack.c.h.b16 %v1661
      %v1866 = vunpack.c.l.b16 %v1662
      %v1867 = vunpack.c.l.b16 %v1663
      %v1868 = vunpack.c.h.b16 %v1663
      %v1869 = vunpack.c.l.b16 %v1664
      %v1870 = vunpack.c.l.b16 %v1665
      %v1871 = vunpack.c.h.b16 %v1665
      %v1872 = vunpack.c.l.b16 %v1666
      %v1873 = vunpack.c.l.b16 %v1667
      %v1874 = vunpack.c.h.b16 %v1667
      %v1875 = vunpack.c.l.b16 %v1668
      %v1876 = vunpack.c.l.b16 %v1669
      %v1877 = vunpack.c.h.b16 %v1669
      %v1878 = vunpack.c.l.b16 %v1670
      %v1879 = vunpack.c.l.b16 %v1671
      %v1880 = vunpack.c.h.b16 %v1671
      %v1881 = vunpack.c.l.b16 %v1672
      %v1882 = vpack.c.b16 %v1789, %v1786
      %v1883 = vpack.c.b16 %v1790, %v1787
      %v1884 = vpack.c.b16 %v1791, %v1788
      %v1885 = vpack.c.b16 %v1795, %v1792
      %v1886 = vpack.c.b16 %v1796, %v1793
      %v1887 = vpack.c.b16 %v1797, %v1794
      %v1888 = vpack.c.b16 %v1801, %v1798
      %v1889 = vpack.c.b16 %v1802, %v1799
      %v1890 = vpack.c.b16 %v1803, %v1800
      %v1891 = vpack.c.b16 %v1807, %v1804
      %v1892 = vpack.c.b16 %v1808, %v1805
      %v1893 = vpack.c.b16 %v1809, %v1806
      %v1894 = vpack.c.b16 %v1813, %v1810
      %v1895 = vpack.c.b16 %v1814, %v1811
      %v1896 = vpack.c.b16 %v1815, %v1812
      %v1897 = vpack.c.b16 %v1819, %v1816
      %v1898 = vpack.c.b16 %v1820, %v1817
      %v1899 = vpack.c.b16 %v1821, %v1818
      %v1900 = vpack.c.b16 %v1825, %v1822
      %v1901 = vpack.c.b16 %v1826, %v1823
      %v1902 = vpack.c.b16 %v1827, %v1824
      %v1903 = vpack.c.b16 %v1831, %v1828
      %v1904 = vpack.c.b16 %v1832, %v1829
      %v1905 = vpack.c.b16 %v1833, %v1830
      %v1906 = vpack.c.b16 %v1837, %v1834
      %v1907 = vpack.c.b16 %v1838, %v1835
      %v1908 = vpack.c.b16 %v1839, %v1836
      %v1909 = vpack.c.b16 %v1843, %v1840
      %v1910 = vpack.c.b16 %v1844, %v1841
      %v1911 = vpack.c.b16 %v1845, %v1842
      %v1912 = vpack.c.b16 %v1849, %v1846
      %v1913 = vpack.c.b16 %v1850, %v1847
      %v1914 = vpack.c.b16 %v1851, %v1848
      %v1915 = vpack.c.b16 %v1855, %v1852
      %v1916 = vpack.c.b16 %v1856, %v1853
      %v1917 = vpack.c.b16 %v1857, %v1854
      %v1918 = vpack.c.b16 %v1861, %v1858
      %v1919 = vpack.c.b16 %v1862, %v1859
      %v1920 = vpack.c.b16 %v1863, %v1860
      %v1921 = vpack.c.b16 %v1867, %v1864
      %v1922 = vpack.c.b16 %v1868, %v1865
      %v1923 = vpack.c.b16 %v1869, %v1866
      %v1924 = vpack.c.b16 %v1873, %v1870
      %v1925 = vpack.c.b16 %v1874, %v1871
      %v1926 = vpack.c.b16 %v1875, %v1872
      %v1927 = vpack.c.b16 %v1879, %v1876
      %v1928 = vpack.c.b16 %v1880, %v1877
      %v1929 = vpack.c.b16 %v1881, %v1878
      %v2026 = vunpack.c.l.b16 %v1674
      %v2027 = vunpack.c.l.b16 %v1675
      %v2028 = vunpack.c.l.b16 %v1676
      %v2029 = vunpack.c.l.b16 %v1677
      %v2030 = vunpack.c.l.b16 %v1678
      %v2031 = vunpack.c.l.b16 %v1679
      %v2032 = vunpack.c.l.b16 %v1680
      %v2033 = vunpack.c.l.b16 %v1681
      %v2034 = vunpack.c.l.b16 %v1682
      %v2035 = vunpack.c.l.b16 %v1683
      %v2036 = vunpack.c.l.b16 %v1684
      %v2037 = vunpack.c.l.b16 %v1685
      %v2038 = vunpack.c.l.b16 %v1686
      %v2039 = vunpack.c.l.b16 %v1687
      %v2040 = vunpack.c.l.b16 %v1688
      %v2041 = vunpack.c.l.b16 %v1689
      %v2042 = vunpack.c.l.b16 %v1690
      %v2043 = vunpack.c.l.b16 %v1691
      %v2044 = vunpack.c.l.b16 %v1692
      %v2045 = vunpack.c.l.b16 %v1693
      %v2046 = vunpack.c.l.b16 %v1694
      %v2047 = vunpack.c.l.b16 %v1695
      %v2048 = vunpack.c.l.b16 %v1696
      %v2049 = vunpack.c.l.b16 %v1697
      %v2050 = vunpack.c.l.b16 %v1698
      %v2051 = vunpack.c.l.b16 %v1699
      %v2052 = vunpack.c.l.b16 %v1700
      %v2053 = vunpack.c.l.b16 %v1701
      %v2054 = vunpack.c.l.b16 %v1702
      %v2055 = vunpack.c.l.b16 %v1703
      %v2056 = vunpack.c.l.b16 %v1704
      %v2057 = vunpack.c.l.b16 %v1705
      %v2058 = vunpack.c.l.b16 %v1706
      %v2059 = vunpack.c.l.b16 %v1707
      %v2060 = vunpack.c.l.b16 %v1708
      %v2061 = vunpack.c.l.b16 %v1709
      %v2062 = vunpack.c.l.b16 %v1710
      %v2063 = vunpack.c.l.b16 %v1711
      %v2064 = vunpack.c.l.b16 %v1712
      %v2065 = vunpack.c.l.b16 %v1713
      %v2066 = vunpack.c.l.b16 %v1714
      %v2067 = vunpack.c.l.b16 %v1715
      %v2068 = vunpack.c.l.b16 %v1716
      %v2069 = vunpack.c.l.b16 %v1717
      %v2070 = vunpack.c.l.b16 %v1718
      %v2071 = vunpack.c.l.b16 %v1719
      %v2072 = vunpack.c.l.b16 %v1720
      %v2073 = vunpack.c.l.b16 %v1721
      %v2074 = vpack.c.b16 %v2027, %v2026
      %v2075 = vpack.c.b16 %v2029, %v2028
      %v2076 = vpack.c.b16 %v2031, %v2030
      %v2077 = vpack.c.b16 %v2033, %v2032
      %v2078 = vpack.c.b16 %v2035, %v2034
      %v2079 = vpack.c.b16 %v2037, %v2036
      %v2080 = vpack.c.b16 %v2039, %v2038
      %v2081 = vpack.c.b16 %v2041, %v2040
      %v2082 = vpack.c.b16 %v2043, %v2042
      %v2083 = vpack.c.b16 %v2045, %v2044
      %v2084 = vpack.c.b16 %v2047, %v2046
      %v2085 = vpack.c.b16 %v2049, %v2048
      %v2086 = vpack.c.b16 %v2051, %v2050
      %v2087 = vpack.c.b16 %v2053, %v2052
      %v2088 = vpack.c.b16 %v2055, %v2054
      %v2089 = vpack.c.b16 %v2057, %v2056
      %v2090 = vpack.c.b16 %v2059, %v2058
      %v2091 = vpack.c.b16 %v2061, %v2060
      %v2092 = vpack.c.b16 %v2063, %v2062
      %v2093 = vpack.c.b16 %v2065, %v2064
      %v2094 = vpack.c.b16 %v2067, %v2066
      %v2095 = vpack.c.b16 %v2069, %v2068
      %v2096 = vpack.c.b16 %v2071, %v2070
      %v2097 = vpack.c.b16 %v2073, %v2072
      %2122 = vmatprep.subr.bf16.mxu0 0
      %2123 = vmatpush1.bf16.msra.mxu0 %v2074
      %2124 = vmatprep.subr.bf16.mxu0 0
      %2125 = vmatpush1.bf16.msra.mxu0 %v2075
      %2126 = vmatprep.subr.bf16.mxu0 0
      %2127 = vmatpush1.bf16.msra.mxu0 %v2076
      %2128 = vmatprep.subr.bf16.mxu0 0
      %2129 = vmatpush1.bf16.msra.mxu0 %v2077
      %2130 = vmatprep.subr.bf16.mxu0 0
      %2131 = vmatpush1.bf16.msra.mxu0 %v2078
      %2132 = vmatprep.subr.bf16.mxu0 0
      %2133 = vmatpush1.bf16.msra.mxu0 %v2079
      %2134 = vmatprep.subr.bf16.mxu0 0
      %2135 = vmatpush1.bf16.msra.mxu0 %v2080
      %2136 = vmatprep.subr.bf16.mxu0 0
      %2137 = vmatpush1.bf16.msra.mxu0 %v2081
      %2138 = vmatprep.subr.bf16.mxu0 0
      %2139 = vmatpush1.bf16.msra.mxu0 %v2082
      %2140 = vmatprep.subr.bf16.mxu0 0
      %2141 = vmatpush1.bf16.msra.mxu0 %v2083
      %2142 = vmatprep.subr.bf16.mxu0 0
      %2143 = vmatpush1.bf16.msra.mxu0 %v2084
      %2144 = vmatprep.subr.bf16.mxu0 0
      %2145 = vmatpush1.bf16.msra.mxu0 %v2085
      %2146 = vmatprep.subr.bf16.mxu0 0
      %2147 = vmatpush1.bf16.msra.mxu0 %v2086
      %2148 = vmatprep.subr.bf16.mxu0 0
      %2149 = vmatpush1.bf16.msra.mxu0 %v2087
      %2150 = vmatprep.subr.bf16.mxu0 0
      %2151 = vmatpush1.bf16.msra.mxu0 %v2088
      %2152 = vmatprep.subr.bf16.mxu0 0
      %2153 = vmatpush1.bf16.msra.mxu0 %v2089
      %2154 = vmatprep.mubr.bf16.mxu0 %v1883
      %2155 = vmatmul.mubr.bf16.gmra.mrb[0].mxu0 %v1882
      %v2156 = vpop.f32.mrb[0].mxu0
      %v2157 = vadd.f32 0.0, %v2156
      %v2158 = vpop.f32.mrb[0].mxu0
      %v2159 = vpop.f32.mrb[0].mxu0
      %v2160 = vadd.f32 0.0, %v2159
      %v2161 = vpop.f32.mrb[0].mxu0
      %2162 = vmatprep.mubr.bf16.mxu0 %v1886
      %2163 = vmatmul.mubr.bf16.gmra.mrb[0].mxu0 %v1885
      %v2164 = vpop.f32.mrb[0].mxu0
      %v2165 = vadd.f32 0.0, %v2164
      %v2166 = vpop.f32.mrb[0].mxu0
      %v2167 = vpop.f32.mrb[0].mxu0
      %v2168 = vadd.f32 0.0, %v2167
      %v2169 = vpop.f32.mrb[0].mxu0
      %2170 = vmatprep.mubr.bf16.mxu0 %v1889
      %2171 = vmatmul.mubr.bf16.gmra.mrb[0].mxu0 %v1888
      %v2172 = vpop.f32.mrb[0].mxu0
      %v2173 = vadd.f32 0.0, %v2172
      %v2174 = vpop.f32.mrb[0].mxu0
      %v2175 = vpop.f32.mrb[0].mxu0
      %v2176 = vadd.f32 0.0, %v2175
      %v2177 = vpop.f32.mrb[0].mxu0
      %2178 = vmatprep.mubr.bf16.mxu0 %v1892
      %2179 = vmatmul.mubr.bf16.gmra.mrb[0].mxu0 %v1891
      %v2180 = vpop.f32.mrb[0].mxu0
      %v2181 = vadd.f32 0.0, %v2180
      %v2182 = vpop.f32.mrb[0].mxu0
      %v2183 = vpop.f32.mrb[0].mxu0
      %v2184 = vadd.f32 0.0, %v2183
      %v2185 = vpop.f32.mrb[0].mxu0
      %2186 = vmatprep.mubr.bf16.mxu0 %v1895
      %2187 = vmatmul.mubr.bf16.gmra.mrb[0].mxu0 %v1894
      %v2188 = vpop.f32.mrb[0].mxu0
      %v2189 = vadd.f32 0.0, %v2188
      %v2190 = vpop.f32.mrb[0].mxu0
      %v2191 = vpop.f32.mrb[0].mxu0
      %v2192 = vadd.f32 0.0, %v2191
      %v2193 = vpop.f32.mrb[0].mxu0
      %2194 = vmatprep.mubr.bf16.mxu0 %v1898
      %2195 = vmatmul.mubr.bf16.gmra.mrb[0].mxu0 %v1897
      %v2196 = vpop.f32.mrb[0].mxu0
      %v2197 = vadd.f32 0.0, %v2196
      %v2198 = vpop.f32.mrb[0].mxu0
      %v2199 = vpop.f32.mrb[0].mxu0
      %v2200 = vadd.f32 0.0, %v2199
      %v2201 = vpop.f32.mrb[0].mxu0
      %2202 = vmatprep.mubr.bf16.mxu0 %v1901
      %2203 = vmatmul.mubr.bf16.gmra.mrb[0].mxu0 %v1900
      %v2204 = vpop.f32.mrb[0].mxu0
      %v2205 = vadd.f32 0.0, %v2204
      %v2206 = vpop.f32.mrb[0].mxu0
      %v2207 = vpop.f32.mrb[0].mxu0
      %v2208 = vadd.f32 0.0, %v2207
      %v2209 = vpop.f32.mrb[0].mxu0
      %2210 = vmatprep.mubr.bf16.mxu0 %v1904
      %2211 = vmatmul.mubr.bf16.gmra.mrb[0].mxu0 %v1903
      %v2212 = vpop.f32.mrb[0].mxu0
      %v2213 = vadd.f32 0.0, %v2212
      %v2214 = vpop.f32.mrb[0].mxu0
      %v2215 = vpop.f32.mrb[0].mxu0
      %v2216 = vadd.f32 0.0, %v2215
      %v2217 = vpop.f32.mrb[0].mxu0
      %2218 = vmatprep.mubr.bf16.mxu0 %v1907
      %2219 = vmatmul.mubr.bf16.gmra.mrb[0].mxu0 %v1906
      %v2220 = vpop.f32.mrb[0].mxu0
      %v2221 = vadd.f32 0.0, %v2220
      %v2222 = vpop.f32.mrb[0].mxu0
      %v2223 = vpop.f32.mrb[0].mxu0
      %v2224 = vadd.f32 0.0, %v2223
      %v2225 = vpop.f32.mrb[0].mxu0
      %2226 = vmatprep.mubr.bf16.mxu0 %v1910
      %2227 = vmatmul.mubr.bf16.gmra.mrb[0].mxu0 %v1909
      %v2228 = vpop.f32.mrb[0].mxu0
      %v2229 = vadd.f32 0.0, %v2228
      %v2230 = vpop.f32.mrb[0].mxu0
      %v2231 = vpop.f32.mrb[0].mxu0
      %v2232 = vadd.f32 0.0, %v2231
      %v2233 = vpop.f32.mrb[0].mxu0
      %2234 = vmatprep.mubr.bf16.mxu0 %v1913
      %2235 = vmatmul.mubr.bf16.gmra.mrb[0].mxu0 %v1912
      %v2236 = vpop.f32.mrb[0].mxu0
      %v2237 = vadd.f32 0.0, %v2236
      %v2238 = vpop.f32.mrb[0].mxu0
      %v2239 = vpop.f32.mrb[0].mxu0
      %v2240 = vadd.f32 0.0, %v2239
      %v2241 = vpop.f32.mrb[0].mxu0
      %2242 = vmatprep.mubr.bf16.mxu0 %v1916
      %2243 = vmatmul.mubr.bf16.gmra.mrb[0].mxu0 %v1915
      %v2244 = vpop.f32.mrb[0].mxu0
      %v2245 = vadd.f32 0.0, %v2244
      %v2246 = vpop.f32.mrb[0].mxu0
      %v2247 = vpop.f32.mrb[0].mxu0
      %v2248 = vadd.f32 0.0, %v2247
      %v2249 = vpop.f32.mrb[0].mxu0
      %2250 = vmatprep.mubr.bf16.mxu0 %v1919
      %2251 = vmatmul.mubr.bf16.gmra.mrb[0].mxu0 %v1918
      %v2252 = vpop.f32.mrb[0].mxu0
      %v2253 = vadd.f32 0.0, %v2252
      %v2254 = vpop.f32.mrb[0].mxu0
      %v2255 = vpop.f32.mrb[0].mxu0
      %v2256 = vadd.f32 0.0, %v2255
      %v2257 = vpop.f32.mrb[0].mxu0
      %2258 = vmatprep.mubr.bf16.mxu0 %v1922
      %2259 = vmatmul.mubr.bf16.gmra.mrb[0].mxu0 %v1921
      %v2260 = vpop.f32.mrb[0].mxu0
      %v2261 = vadd.f32 0.0, %v2260
      %v2262 = vpop.f32.mrb[0].mxu0
      %v2263 = vpop.f32.mrb[0].mxu0
      %v2264 = vadd.f32 0.0, %v2263
      %v2265 = vpop.f32.mrb[0].mxu0
      %2266 = vmatprep.mubr.bf16.mxu0 %v1925
      %2267 = vmatmul.mubr.bf16.gmra.mrb[0].mxu0 %v1924
      %v2268 = vpop.f32.mrb[0].mxu0
      %v2269 = vadd.f32 0.0, %v2268
      %v2270 = vpop.f32.mrb[0].mxu0
      %v2271 = vpop.f32.mrb[0].mxu0
      %v2272 = vadd.f32 0.0, %v2271
      %v2273 = vpop.f32.mrb[0].mxu0
      %2274 = vmatprep.mubr.bf16.mxu0 %v1928
      %2275 = vmatmul.mubr.bf16.gmra.mrb[0].mxu0 %v1927
      %v2276 = vpop.f32.mrb[0].mxu0
      %v2277 = vadd.f32 0.0, %v2276
      %v2278 = vpop.f32.mrb[0].mxu0
      %v2279 = vpop.f32.mrb[0].mxu0
      %v2280 = vadd.f32 0.0, %v2279
      %v2281 = vpop.f32.mrb[0].mxu0
      %2282 = vdwg.mxu0
      %2283 = vmatprep.subr.bf16.mxu0 0
      %2284 = vmatpush1.bf16.msra.mxu0 %v2090
      %2285 = vmatprep.subr.bf16.mxu0 0
      %2286 = vmatpush1.bf16.msra.mxu0 %v2091
      %2287 = vmatprep.subr.bf16.mxu0 0
      %2288 = vmatpush1.bf16.msra.mxu0 %v2092
      %2289 = vmatprep.subr.bf16.mxu0 0
      %2290 = vmatpush1.bf16.msra.mxu0 %v2093
      %2291 = vmatprep.subr.bf16.mxu0 0
      %2292 = vmatpush1.bf16.msra.mxu0 %v2094
      %2293 = vmatprep.subr.bf16.mxu0 0
      %2294 = vmatpush1.bf16.msra.mxu0 %v2095
      %2295 = vmatprep.subr.bf16.mxu0 0
      %2296 = vmatpush1.bf16.msra.mxu0 %v2096
      %2297 = vmatprep.subr.bf16.mxu0 0
      %2298 = vmatpush1.bf16.msra.mxu0 %v2097
      %2299 = vmatprep.subr.bf16.mxu0 0
      %2300 = vmatpush1.bf16.msra.mxu0 0
      %2301 = vmatprep.subr.bf16.mxu0 0
      %2302 = vmatpush1.bf16.msra.mxu0 0
      %2303 = vmatprep.subr.bf16.mxu0 0
      %2304 = vmatpush1.bf16.msra.mxu0 0
      %2305 = vmatprep.subr.bf16.mxu0 0
      %2306 = vmatpush1.bf16.msra.mxu0 0
      %2307 = vmatprep.subr.bf16.mxu0 0
      %2308 = vmatpush1.bf16.msra.mxu0 0
      %2309 = vmatprep.subr.bf16.mxu0 0
      %2310 = vmatpush1.bf16.msra.mxu0 0
      %2311 = vmatprep.subr.bf16.mxu0 0
      %2312 = vmatpush1.bf16.msra.mxu0 0
      %2313 = vmatprep.subr.bf16.mxu0 0
      %2314 = vmatpush1.bf16.msra.mxu0 0
      %2315 = vmatprep.mubr.bf16.mxu0 0
      %2316 = vmatmul.mubr.bf16.gmra.mrb[0].mxu0 %v1884
      %v2317 = vpop.f32.mrb[0].mxu0
      %v2318 = vadd.f32 %v2157, %v2317
      %v2319 = vpop.f32.mrb[0].mxu0
      %v2320 = vpop.f32.mrb[0].mxu0
      %v2321 = vadd.f32 %v2160, %v2320
      %v2322 = vpop.f32.mrb[0].mxu0
      %2323 = vmatprep.mubr.bf16.mxu0 0
      %2324 = vmatmul.mubr.bf16.gmra.mrb[0].mxu0 %v1887
      %v2325 = vpop.f32.mrb[0].mxu0
      %v2326 = vadd.f32 %v2165, %v2325
      %v2327 = vpop.f32.mrb[0].mxu0
      %v2328 = vpop.f32.mrb[0].mxu0
      %v2329 = vadd.f32 %v2168, %v2328
      %v2330 = vpop.f32.mrb[0].mxu0
      %2331 = vmatprep.mubr.bf16.mxu0 0
      %2332 = vmatmul.mubr.bf16.gmra.mrb[0].mxu0 %v1890
      %v2333 = vpop.f32.mrb[0].mxu0
      %v2334 = vadd.f32 %v2173, %v2333
      %v2335 = vpop.f32.mrb[0].mxu0
      %v2336 = vpop.f32.mrb[0].mxu0
      %v2337 = vadd.f32 %v2176, %v2336
      %v2338 = vpop.f32.mrb[0].mxu0
      %2339 = vmatprep.mubr.bf16.mxu0 0
      %2340 = vmatmul.mubr.bf16.gmra.mrb[0].mxu0 %v1893
      %v2341 = vpop.f32.mrb[0].mxu0
      %v2342 = vadd.f32 %v2181, %v2341
      %v2343 = vpop.f32.mrb[0].mxu0
      %v2344 = vpop.f32.mrb[0].mxu0
      %v2345 = vadd.f32 %v2184, %v2344
      %v2346 = vpop.f32.mrb[0].mxu0
      %2347 = vmatprep.mubr.bf16.mxu0 0
      %2348 = vmatmul.mubr.bf16.gmra.mrb[0].mxu0 %v1896
      %v2349 = vpop.f32.mrb[0].mxu0
      %v2350 = vadd.f32 %v2189, %v2349
      %v2351 = vpop.f32.mrb[0].mxu0
      %v2352 = vpop.f32.mrb[0].mxu0
      %v2353 = vadd.f32 %v2192, %v2352
      %v2354 = vpop.f32.mrb[0].mxu0
      %2355 = vmatprep.mubr.bf16.mxu0 0
      %2356 = vmatmul.mubr.bf16.gmra.mrb[0].mxu0 %v1899
      %v2357 = vpop.f32.mrb[0].mxu0
      %v2358 = vadd.f32 %v2197, %v2357
      %v2359 = vpop.f32.mrb[0].mxu0
      %v2360 = vpop.f32.mrb[0].mxu0
      %v2361 = vadd.f32 %v2200, %v2360
      %v2362 = vpop.f32.mrb[0].mxu0
      %2363 = vmatprep.mubr.bf16.mxu0 0
      %2364 = vmatmul.mubr.bf16.gmra.mrb[0].mxu0 %v1902
      %v2365 = vpop.f32.mrb[0].mxu0
      %v2366 = vadd.f32 %v2205, %v2365
      %v2367 = vpop.f32.mrb[0].mxu0
      %v2368 = vpop.f32.mrb[0].mxu0
      %v2369 = vadd.f32 %v2208, %v2368
      %v2370 = vpop.f32.mrb[0].mxu0
      %2371 = vmatprep.mubr.bf16.mxu0 0
      %2372 = vmatmul.mubr.bf16.gmra.mrb[0].mxu0 %v1905
      %v2373 = vpop.f32.mrb[0].mxu0
      %v2374 = vadd.f32 %v2213, %v2373
      %v2375 = vpop.f32.mrb[0].mxu0
      %v2376 = vpop.f32.mrb[0].mxu0
      %v2377 = vadd.f32 %v2216, %v2376
      %v2378 = vpop.f32.mrb[0].mxu0
      %2379 = vmatprep.mubr.bf16.mxu0 0
      %2380 = vmatmul.mubr.bf16.gmra.mrb[0].mxu0 %v1908
      %v2381 = vpop.f32.mrb[0].mxu0
      %v2382 = vadd.f32 %v2221, %v2381
      %v2383 = vpop.f32.mrb[0].mxu0
      %v2384 = vpop.f32.mrb[0].mxu0
      %v2385 = vadd.f32 %v2224, %v2384
      %v2386 = vpop.f32.mrb[0].mxu0
      %2387 = vmatprep.mubr.bf16.mxu0 0
      %2388 = vmatmul.mubr.bf16.gmra.mrb[0].mxu0 %v1911
      %v2389 = vpop.f32.mrb[0].mxu0
      %v2390 = vadd.f32 %v2229, %v2389
      %v2391 = vpop.f32.mrb[0].mxu0
      %v2392 = vpop.f32.mrb[0].mxu0
      %v2393 = vadd.f32 %v2232, %v2392
      %v2394 = vpop.f32.mrb[0].mxu0
      %2395 = vmatprep.mubr.bf16.mxu0 0
      %2396 = vmatmul.mubr.bf16.gmra.mrb[0].mxu0 %v1914
      %v2397 = vpop.f32.mrb[0].mxu0
      %v2398 = vadd.f32 %v2237, %v2397
      %v2399 = vpop.f32.mrb[0].mxu0
      %v2400 = vpop.f32.mrb[0].mxu0
      %v2401 = vadd.f32 %v2240, %v2400
      %v2402 = vpop.f32.mrb[0].mxu0
      %2403 = vmatprep.mubr.bf16.mxu0 0
      %2404 = vmatmul.mubr.bf16.gmra.mrb[0].mxu0 %v1917
      %v2405 = vpop.f32.mrb[0].mxu0
      %v2406 = vadd.f32 %v2245, %v2405
      %v2407 = vpop.f32.mrb[0].mxu0
      %v2408 = vpop.f32.mrb[0].mxu0
      %v2409 = vadd.f32 %v2248, %v2408
      %v2410 = vpop.f32.mrb[0].mxu0
      %2411 = vmatprep.mubr.bf16.mxu0 0
      %2412 = vmatmul.mubr.bf16.gmra.mrb[0].mxu0 %v1920
      %v2413 = vpop.f32.mrb[0].mxu0
      %v2414 = vadd.f32 %v2253, %v2413
      %v2415 = vpop.f32.mrb[0].mxu0
      %v2416 = vpop.f32.mrb[0].mxu0
      %v2417 = vadd.f32 %v2256, %v2416
      %v2418 = vpop.f32.mrb[0].mxu0
      %2419 = vmatprep.mubr.bf16.mxu0 0
      %2420 = vmatmul.mubr.bf16.gmra.mrb[0].mxu0 %v1923
      %v2421 = vpop.f32.mrb[0].mxu0
      %v2422 = vadd.f32 %v2261, %v2421
      %v2423 = vpop.f32.mrb[0].mxu0
      %v2424 = vpop.f32.mrb[0].mxu0
      %v2425 = vadd.f32 %v2264, %v2424
      %v2426 = vpop.f32.mrb[0].mxu0
      %2427 = vmatprep.mubr.bf16.mxu0 0
      %2428 = vmatmul.mubr.bf16.gmra.mrb[0].mxu0 %v1926
      %v2429 = vpop.f32.mrb[0].mxu0
      %v2430 = vadd.f32 %v2269, %v2429
      %v2431 = vpop.f32.mrb[0].mxu0
      %v2432 = vpop.f32.mrb[0].mxu0
      %v2433 = vadd.f32 %v2272, %v2432
      %v2434 = vpop.f32.mrb[0].mxu0
      %2435 = vmatprep.mubr.bf16.mxu0 0
      %2436 = vmatmul.mubr.bf16.gmra.mrb[0].mxu0 %v1929
      %v2437 = vpop.f32.mrb[0].mxu0
      %v2438 = vadd.f32 %v2277, %v2437
      %v2439 = vpop.f32.mrb[0].mxu0
      %v2440 = vpop.f32.mrb[0].mxu0
      %v2441 = vadd.f32 %v2280, %v2440
      %v2442 = vpop.f32.mrb[0].mxu0
      %2443 = vdwg.mxu0
      %v2444 = vadd.f32 %v1483, %v2318
      %v2445 = vadd.f32 %v1486, %v2321
      %v2446 = vadd.f32 %v1491, %v2326
      %v2447 = vadd.f32 %v1494, %v2329
      %v2448 = vadd.f32 %v1499, %v2334
      %v2449 = vadd.f32 %v1502, %v2337
      %v2450 = vadd.f32 %v1507, %v2342
      %v2451 = vadd.f32 %v1510, %v2345
      %v2452 = vadd.f32 %v1515, %v2350
      %v2453 = vadd.f32 %v1518, %v2353
      %v2454 = vadd.f32 %v1523, %v2358
      %v2455 = vadd.f32 %v1526, %v2361
      %v2456 = vadd.f32 %v1531, %v2366
      %v2457 = vadd.f32 %v1534, %v2369
      %v2458 = vadd.f32 %v1539, %v2374
      %v2459 = vadd.f32 %v1542, %v2377
      %v2460 = vadd.f32 %v1547, %v2382
      %v2461 = vadd.f32 %v1550, %v2385
      %v2462 = vadd.f32 %v1555, %v2390
      %v2463 = vadd.f32 %v1558, %v2393
      %v2464 = vadd.f32 %v1563, %v2398
      %v2465 = vadd.f32 %v1566, %v2401
      %v2466 = vadd.f32 %v1571, %v2406
      %v2467 = vadd.f32 %v1574, %v2409
      %v2468 = vadd.f32 %v1579, %v2414
      %v2469 = vadd.f32 %v1582, %v2417
      %v2470 = vadd.f32 %v1587, %v2422
      %v2471 = vadd.f32 %v1590, %v2425
      %v2472 = vadd.f32 %v1595, %v2430
      %v2473 = vadd.f32 %v1598, %v2433
      %v2474 = vadd.f32 %v1603, %v2438
      %v2475 = vadd.f32 %v1606, %v2441
      %v2476 = vld [vmem:[%s3] sm:$0xff]
      %v2477 = vld [vmem:[%s3 + $0x8] sm:$0xff]
      %v2478 = vld [vmem:[%s3 + $0x10] sm:$0xff]
      %v2479 = vld [vmem:[%s3 + $0x18] sm:$0xff]
      %v2480 = vld [vmem:[%s3 + $0x20] sm:$0xff]
      %v2481 = vld [vmem:[%s3 + $0x28] sm:$0xff]
      %v2482 = vld [vmem:[%s3 + $0x30] sm:$0xff]
      %v2483 = vld [vmem:[%s3 + $0x38] sm:$0xff]
      %v2484 = vpack.c.bf16 %v2445, %v2444
      %v2485 = vpack.c.bf16 %v2447, %v2446
      %v2486 = vpack.c.bf16 %v2449, %v2448
      %v2487 = vpack.c.bf16 %v2451, %v2450
      %v2488 = vpack.c.bf16 %v2453, %v2452
      %v2489 = vpack.c.bf16 %v2455, %v2454
      %v2490 = vpack.c.bf16 %v2457, %v2456
      %v2491 = vpack.c.bf16 %v2459, %v2458
      %v2492 = vpack.c.bf16 %v2461, %v2460
      %v2493 = vpack.c.bf16 %v2463, %v2462
      %v2494 = vpack.c.bf16 %v2465, %v2464
      %v2495 = vpack.c.bf16 %v2467, %v2466
      %v2496 = vpack.c.bf16 %v2469, %v2468
      %v2497 = vpack.c.bf16 %v2471, %v2470
      %v2498 = vpack.c.bf16 %v2473, %v2472
      %v2499 = vpack.c.bf16 %v2475, %v2474
      %v2508 = vunpack.c.l.b16 %v2476
      %v2509 = vunpack.c.h.b16 %v2476
      %v2510 = vunpack.c.l.b16 %v2477
      %v2511 = vunpack.c.h.b16 %v2477
      %v2512 = vunpack.c.l.b16 %v2478
      %v2513 = vunpack.c.h.b16 %v2478
      %v2514 = vunpack.c.l.b16 %v2479
      %v2515 = vunpack.c.h.b16 %v2479
      %v2516 = vunpack.c.l.b16 %v2480
      %v2517 = vunpack.c.h.b16 %v2480
      %v2518 = vunpack.c.l.b16 %v2481
      %v2519 = vunpack.c.h.b16 %v2481
      %v2520 = vunpack.c.l.b16 %v2482
      %v2521 = vunpack.c.h.b16 %v2482
      %v2522 = vunpack.c.l.b16 %v2483
      %v2523 = vunpack.c.h.b16 %v2483
      %v2524 = vpack.c.b16 %v2510, %v2508
      %v2525 = vpack.c.b16 %v2511, %v2509
      %v2526 = vpack.c.b16 %v2514, %v2512
      %v2527 = vpack.c.b16 %v2515, %v2513
      %v2528 = vpack.c.b16 %v2518, %v2516
      %v2529 = vpack.c.b16 %v2519, %v2517
      %v2530 = vpack.c.b16 %v2522, %v2520
      %v2531 = vpack.c.b16 %v2523, %v2521
      %2540 = vmatprep.subr.bf16.mxu0 0
      %2541 = vmatpush1.bf16.msra.mxu0 %v2484
      %2542 = vmatprep.subr.bf16.mxu0 0
      %2543 = vmatpush1.bf16.msra.mxu0 %v2485
      %2544 = vmatprep.subr.bf16.mxu0 0
      %2545 = vmatpush1.bf16.msra.mxu0 %v2486
      %2546 = vmatprep.subr.bf16.mxu0 0
      %2547 = vmatpush1.bf16.msra.mxu0 %v2487
      %2548 = vmatprep.subr.bf16.mxu0 0
      %2549 = vmatpush1.bf16.msra.mxu0 %v2488
      %2550 = vmatprep.subr.bf16.mxu0 0
      %2551 = vmatpush1.bf16.msra.mxu0 %v2489
      %2552 = vmatprep.subr.bf16.mxu0 0
      %2553 = vmatpush1.bf16.msra.mxu0 %v2490
      %2554 = vmatprep.subr.bf16.mxu0 0
      %2555 = vmatpush1.bf16.msra.mxu0 %v2491
      %2556 = vmatprep.subr.bf16.mxu0 0
      %2557 = vmatpush1.bf16.msra.mxu0 %v2492
      %2558 = vmatprep.subr.bf16.mxu0 0
      %2559 = vmatpush1.bf16.msra.mxu0 %v2493
      %2560 = vmatprep.subr.bf16.mxu0 0
      %2561 = vmatpush1.bf16.msra.mxu0 %v2494
      %2562 = vmatprep.subr.bf16.mxu0 0
      %2563 = vmatpush1.bf16.msra.mxu0 %v2495
      %2564 = vmatprep.subr.bf16.mxu0 0
      %2565 = vmatpush1.bf16.msra.mxu0 %v2496
      %2566 = vmatprep.subr.bf16.mxu0 0
      %2567 = vmatpush1.bf16.msra.mxu0 %v2497
      %2568 = vmatprep.subr.bf16.mxu0 0
      %2569 = vmatpush1.bf16.msra.mxu0 %v2498
      %2570 = vmatprep.subr.bf16.mxu0 0
      %2571 = vmatpush1.bf16.msra.mxu0 %v2499
      %2572 = vmatprep.mubr.bf16.mxu0 %v2525
      %2573 = vmatmul.mubr.bf16.gmra.mrb[0].mxu0 %v2524
      %v2574 = vpop.f32.mrb[0].mxu0
      %v2575 = vadd.f32 0.0, %v2574
      %v2576 = vpop.f32.mrb[0].mxu0
      %v2577 = vpop.f32.mrb[0].mxu0
      %v2578 = vadd.f32 0.0, %v2577
      %v2579 = vpop.f32.mrb[0].mxu0
      %2580 = vmatprep.mubr.bf16.mxu0 %v2527
      %2581 = vmatmul.mubr.bf16.gmra.mrb[0].mxu0 %v2526
      %v2582 = vpop.f32.mrb[0].mxu0
      %v2583 = vadd.f32 0.0, %v2582
      %v2584 = vpop.f32.mrb[0].mxu0
      %v2585 = vpop.f32.mrb[0].mxu0
      %v2586 = vadd.f32 0.0, %v2585
      %v2587 = vpop.f32.mrb[0].mxu0
      %2588 = vmatprep.mubr.bf16.mxu0 %v2529
      %2589 = vmatmul.mubr.bf16.gmra.mrb[0].mxu0 %v2528
      %v2590 = vpop.f32.mrb[0].mxu0
      %v2591 = vadd.f32 0.0, %v2590
      %v2592 = vpop.f32.mrb[0].mxu0
      %v2593 = vpop.f32.mrb[0].mxu0
      %v2594 = vadd.f32 0.0, %v2593
      %v2595 = vpop.f32.mrb[0].mxu0
      %2596 = vmatprep.mubr.bf16.mxu0 %v2531
      %2597 = vmatmul.mubr.bf16.gmra.mrb[0].mxu0 %v2530
      %v2598 = vpop.f32.mrb[0].mxu0
      %v2599 = vadd.f32 0.0, %v2598
      %v2600 = vpop.f32.mrb[0].mxu0
      %v2601 = vpop.f32.mrb[0].mxu0
      %v2602 = vadd.f32 0.0, %v2601
      %v2603 = vpop.f32.mrb[0].mxu0
      %2604 = vdwg.mxu0
      %2605 = vst [vmem:[%s232] sm:$0xff] %v2575
      %2606 = vst [vmem:[%s232 + $0x8] sm:$0xff] %v2578
      %2607 = vst [vmem:[%s232 + $0x10] sm:$0xff] %v2583
      %2608 = vst [vmem:[%s232 + $0x18] sm:$0xff] %v2586
      %2609 = vst [vmem:[%s232 + $0x20] sm:$0xff] %v2591
      %2610 = vst [vmem:[%s232 + $0x28] sm:$0xff] %v2594
      %2611 = vst [vmem:[%s232 + $0x30] sm:$0xff] %v2599
      %2612 = vst [vmem:[%s232 + $0x38] sm:$0xff] %v2602
      %v2613 = vld [vmem:[%s227] sm:$0xff]
      %v2614 = vld [vmem:[%s227 + $0x8] sm:$0xf]
      %v2615 = vld [vmem:[%s227 + $0xc] sm:$0xff]
      %v2616 = vld [vmem:[%s227 + $0x14] sm:$0xf]
      %v2617 = vld [vmem:[%s227 + $0x18] sm:$0xff]
      %v2618 = vld [vmem:[%s227 + $0x20] sm:$0xf]
      %v2619 = vld [vmem:[%s227 + $0x24] sm:$0xff]
      %v2620 = vld [vmem:[%s227 + $0x2c] sm:$0xf]
      %v2621 = vld [vmem:[%s227 + $0x30] sm:$0xff]
      %v2622 = vld [vmem:[%s227 + $0x38] sm:$0xf]
      %v2623 = vld [vmem:[%s227 + $0x3c] sm:$0xff]
      %v2624 = vld [vmem:[%s227 + $0x44] sm:$0xf]
      %v2625 = vld [vmem:[%s227 + $0x48] sm:$0xff]
      %v2626 = vld [vmem:[%s227 + $0x50] sm:$0xf]
      %v2627 = vld [vmem:[%s227 + $0x54] sm:$0xff]
      %v2628 = vld [vmem:[%s227 + $0x5c] sm:$0xf]
      %v2629 = vld [vmem:[%s227 + $0x60] sm:$0xff]
      %v2630 = vld [vmem:[%s227 + $0x68] sm:$0xf]
      %v2631 = vld [vmem:[%s227 + $0x6c] sm:$0xff]
      %v2632 = vld [vmem:[%s227 + $0x74] sm:$0xf]
      %v2633 = vld [vmem:[%s227 + $0x78] sm:$0xff]
      %v2634 = vld [vmem:[%s227 + $0x80] sm:$0xf]
      %v2635 = vld [vmem:[%s227 + $0x84] sm:$0xff]
      %v2636 = vld [vmem:[%s227 + $0x8c] sm:$0xf]
      %v2637 = vld [vmem:[%s227 + $0x90] sm:$0xff]
      %v2638 = vld [vmem:[%s227 + $0x98] sm:$0xf]
      %v2639 = vld [vmem:[%s227 + $0x9c] sm:$0xff]
      %v2640 = vld [vmem:[%s227 + $0xa4] sm:$0xf]
      %v2641 = vld [vmem:[%s227 + $0xa8] sm:$0xff]
      %v2642 = vld [vmem:[%s227 + $0xb0] sm:$0xf]
      %v2643 = vld [vmem:[%s227 + $0xb4] sm:$0xff]
      %v2644 = vld [vmem:[%s227 + $0xbc] sm:$0xf]
      %v2645 = vld [vmem:[%s227 + $0xc0] sm:$0xff]
      %v2646 = vld [vmem:[%s227 + $0xc8] sm:$0xf]
      %v2647 = vld [vmem:[%s227 + $0xcc] sm:$0xff]
      %v2648 = vld [vmem:[%s227 + $0xd4] sm:$0xf]
      %v2649 = vld [vmem:[%s227 + $0xd8] sm:$0xff]
      %v2650 = vld [vmem:[%s227 + $0xe0] sm:$0xf]
      %v2651 = vld [vmem:[%s227 + $0xe4] sm:$0xff]
      %v2652 = vld [vmem:[%s227 + $0xec] sm:$0xf]
      %v2653 = vld [vmem:[%s227 + $0xf0] sm:$0xff]
      %v2654 = vld [vmem:[%s227 + $0xf8] sm:$0xf]
      %v2655 = vld [vmem:[%s227 + $0xfc] sm:$0xff]
      %v2656 = vld [vmem:[%s227 + $0x104] sm:$0xf]
      %v2657 = vld [vmem:[%s227 + $0x108] sm:$0xff]
      %v2658 = vld [vmem:[%s227 + $0x110] sm:$0xf]
      %v2659 = vld [vmem:[%s227 + $0x114] sm:$0xff]
      %v2660 = vld [vmem:[%s227 + $0x11c] sm:$0xf]
      %v2661 = vld [vmem:[%s227 + $0x120] sm:$0xff]
      %v2662 = vld [vmem:[%s227 + $0x128] sm:$0xf]
      %v2663 = vld [vmem:[%s227 + $0x12c] sm:$0xff]
      %v2664 = vld [vmem:[%s227 + $0x134] sm:$0xf]
      %v2665 = vld [vmem:[%s227 + $0x138] sm:$0xff]
      %v2666 = vld [vmem:[%s227 + $0x140] sm:$0xf]
      %v2667 = vld [vmem:[%s227 + $0x144] sm:$0xff]
      %v2668 = vld [vmem:[%s227 + $0x14c] sm:$0xf]
      %v2669 = vld [vmem:[%s227 + $0x150] sm:$0xff]
      %v2670 = vld [vmem:[%s227 + $0x158] sm:$0xf]
      %v2671 = vld [vmem:[%s227 + $0x15c] sm:$0xff]
      %v2672 = vld [vmem:[%s227 + $0x164] sm:$0xf]
      %v2673 = vld [vmem:[%s227 + $0x168] sm:$0xff]
      %v2674 = vld [vmem:[%s227 + $0x170] sm:$0xf]
      %v2675 = vld [vmem:[%s227 + $0x174] sm:$0xff]
      %v2676 = vld [vmem:[%s227 + $0x17c] sm:$0xf]
      %vm2677 = vcmp.ge.bf16.partialorder %v2613, 0
      %vm2678 = vcmp.ge.bf16.partialorder %v2614, 0
      %vm2679 = vcmp.ge.bf16.partialorder %v2615, 0
      %vm2680 = vcmp.ge.bf16.partialorder %v2616, 0
      %vm2681 = vcmp.ge.bf16.partialorder %v2617, 0
      %vm2682 = vcmp.ge.bf16.partialorder %v2618, 0
      %vm2683 = vcmp.ge.bf16.partialorder %v2619, 0
      %vm2684 = vcmp.ge.bf16.partialorder %v2620, 0
      %vm2685 = vcmp.ge.bf16.partialorder %v2621, 0
      %vm2686 = vcmp.ge.bf16.partialorder %v2622, 0
      %vm2687 = vcmp.ge.bf16.partialorder %v2623, 0
      %vm2688 = vcmp.ge.bf16.partialorder %v2624, 0
      %vm2689 = vcmp.ge.bf16.partialorder %v2625, 0
      %vm2690 = vcmp.ge.bf16.partialorder %v2626, 0
      %vm2691 = vcmp.ge.bf16.partialorder %v2627, 0
      %vm2692 = vcmp.ge.bf16.partialorder %v2628, 0
      %vm2693 = vcmp.ge.bf16.partialorder %v2629, 0
      %vm2694 = vcmp.ge.bf16.partialorder %v2630, 0
      %vm2695 = vcmp.ge.bf16.partialorder %v2631, 0
      %vm2696 = vcmp.ge.bf16.partialorder %v2632, 0
      %vm2697 = vcmp.ge.bf16.partialorder %v2633, 0
      %vm2698 = vcmp.ge.bf16.partialorder %v2634, 0
      %vm2699 = vcmp.ge.bf16.partialorder %v2635, 0
      %vm2700 = vcmp.ge.bf16.partialorder %v2636, 0
      %vm2701 = vcmp.ge.bf16.partialorder %v2637, 0
      %vm2702 = vcmp.ge.bf16.partialorder %v2638, 0
      %vm2703 = vcmp.ge.bf16.partialorder %v2639, 0
      %vm2704 = vcmp.ge.bf16.partialorder %v2640, 0
      %vm2705 = vcmp.ge.bf16.partialorder %v2641, 0
      %vm2706 = vcmp.ge.bf16.partialorder %v2642, 0
      %vm2707 = vcmp.ge.bf16.partialorder %v2643, 0
      %vm2708 = vcmp.ge.bf16.partialorder %v2644, 0
      %vm2709 = vcmp.ge.bf16.partialorder %v2645, 0
      %vm2710 = vcmp.ge.bf16.partialorder %v2646, 0
      %vm2711 = vcmp.ge.bf16.partialorder %v2647, 0
      %vm2712 = vcmp.ge.bf16.partialorder %v2648, 0
      %vm2713 = vcmp.ge.bf16.partialorder %v2649, 0
      %vm2714 = vcmp.ge.bf16.partialorder %v2650, 0
      %vm2715 = vcmp.ge.bf16.partialorder %v2651, 0
      %vm2716 = vcmp.ge.bf16.partialorder %v2652, 0
      %vm2717 = vcmp.ge.bf16.partialorder %v2653, 0
      %vm2718 = vcmp.ge.bf16.partialorder %v2654, 0
      %vm2719 = vcmp.ge.bf16.partialorder %v2655, 0
      %vm2720 = vcmp.ge.bf16.partialorder %v2656, 0
      %vm2721 = vcmp.ge.bf16.partialorder %v2657, 0
      %vm2722 = vcmp.ge.bf16.partialorder %v2658, 0
      %vm2723 = vcmp.ge.bf16.partialorder %v2659, 0
      %vm2724 = vcmp.ge.bf16.partialorder %v2660, 0
      %vm2725 = vcmp.ge.bf16.partialorder %v2661, 0
      %vm2726 = vcmp.ge.bf16.partialorder %v2662, 0
      %vm2727 = vcmp.ge.bf16.partialorder %v2663, 0
      %vm2728 = vcmp.ge.bf16.partialorder %v2664, 0
      %vm2729 = vcmp.ge.bf16.partialorder %v2665, 0
      %vm2730 = vcmp.ge.bf16.partialorder %v2666, 0
      %vm2731 = vcmp.ge.bf16.partialorder %v2667, 0
      %vm2732 = vcmp.ge.bf16.partialorder %v2668, 0
      %vm2733 = vcmp.ge.bf16.partialorder %v2669, 0
      %vm2734 = vcmp.ge.bf16.partialorder %v2670, 0
      %vm2735 = vcmp.ge.bf16.partialorder %v2671, 0
      %vm2736 = vcmp.ge.bf16.partialorder %v2672, 0
      %vm2737 = vcmp.ge.bf16.partialorder %v2673, 0
      %vm2738 = vcmp.ge.bf16.partialorder %v2674, 0
      %vm2739 = vcmp.ge.bf16.partialorder %v2675, 0
      %vm2740 = vcmp.ge.bf16.partialorder %v2676, 0
      %v2741 = vmul.bf16 %v2613, 1009007652
      %v2742 = vmul.bf16 %v2614, 1009007652
      %v2743 = vmul.bf16 %v2615, 1009007652
      %v2744 = vmul.bf16 %v2616, 1009007652
      %v2745 = vmul.bf16 %v2617, 1009007652
      %v2746 = vmul.bf16 %v2618, 1009007652
      %v2747 = vmul.bf16 %v2619, 1009007652
      %v2748 = vmul.bf16 %v2620, 1009007652
      %v2749 = vmul.bf16 %v2621, 1009007652
      %v2750 = vmul.bf16 %v2622, 1009007652
      %v2751 = vmul.bf16 %v2623, 1009007652
      %v2752 = vmul.bf16 %v2624, 1009007652
      %v2753 = vmul.bf16 %v2625, 1009007652
      %v2754 = vmul.bf16 %v2626, 1009007652
      %v2755 = vmul.bf16 %v2627, 1009007652
      %v2756 = vmul.bf16 %v2628, 1009007652
      %v2757 = vmul.bf16 %v2629, 1009007652
      %v2758 = vmul.bf16 %v2630, 1009007652
      %v2759 = vmul.bf16 %v2631, 1009007652
      %v2760 = vmul.bf16 %v2632, 1009007652
      %v2761 = vmul.bf16 %v2633, 1009007652
      %v2762 = vmul.bf16 %v2634, 1009007652
      %v2763 = vmul.bf16 %v2635, 1009007652
      %v2764 = vmul.bf16 %v2636, 1009007652
      %v2765 = vmul.bf16 %v2637, 1009007652
      %v2766 = vmul.bf16 %v2638, 1009007652
      %v2767 = vmul.bf16 %v2639, 1009007652
      %v2768 = vmul.bf16 %v2640, 1009007652
      %v2769 = vmul.bf16 %v2641, 1009007652
      %v2770 = vmul.bf16 %v2642, 1009007652
      %v2771 = vmul.bf16 %v2643, 1009007652
      %v2772 = vmul.bf16 %v2644, 1009007652
      %v2773 = vmul.bf16 %v2645, 1009007652
      %v2774 = vmul.bf16 %v2646, 1009007652
      %v2775 = vmul.bf16 %v2647, 1009007652
      %v2776 = vmul.bf16 %v2648, 1009007652
      %v2777 = vmul.bf16 %v2649, 1009007652
      %v2778 = vmul.bf16 %v2650, 1009007652
      %v2779 = vmul.bf16 %v2651, 1009007652
      %v2780 = vmul.bf16 %v2652, 1009007652
      %v2781 = vmul.bf16 %v2653, 1009007652
      %v2782 = vmul.bf16 %v2654, 1009007652
      %v2783 = vmul.bf16 %v2655, 1009007652
      %v2784 = vmul.bf16 %v2656, 1009007652
      %v2785 = vmul.bf16 %v2657, 1009007652
      %v2786 = vmul.bf16 %v2658, 1009007652
      %v2787 = vmul.bf16 %v2659, 1009007652
      %v2788 = vmul.bf16 %v2660, 1009007652
      %v2789 = vmul.bf16 %v2661, 1009007652
      %v2790 = vmul.bf16 %v2662, 1009007652
      %v2791 = vmul.bf16 %v2663, 1009007652
      %v2792 = vmul.bf16 %v2664, 1009007652
      %v2793 = vmul.bf16 %v2665, 1009007652
      %v2794 = vmul.bf16 %v2666, 1009007652
      %v2795 = vmul.bf16 %v2667, 1009007652
      %v2796 = vmul.bf16 %v2668, 1009007652
      %v2797 = vmul.bf16 %v2669, 1009007652
      %v2798 = vmul.bf16 %v2670, 1009007652
      %v2799 = vmul.bf16 %v2671, 1009007652
      %v2800 = vmul.bf16 %v2672, 1009007652
      %v2801 = vmul.bf16 %v2673, 1009007652
      %v2802 = vmul.bf16 %v2674, 1009007652
      %v2803 = vmul.bf16 %v2675, 1009007652
      %v2804 = vmul.bf16 %v2676, 1009007652
      %v2805 = vsel %vm2677, %v2613, %v2741
      %v2806 = vsel %vm2678, %v2614, %v2742
      %v2807 = vsel %vm2679, %v2615, %v2743
      %v2808 = vsel %vm2680, %v2616, %v2744
      %v2809 = vsel %vm2681, %v2617, %v2745
      %v2810 = vsel %vm2682, %v2618, %v2746
      %v2811 = vsel %vm2683, %v2619, %v2747
      %v2812 = vsel %vm2684, %v2620, %v2748
      %v2813 = vsel %vm2685, %v2621, %v2749
      %v2814 = vsel %vm2686, %v2622, %v2750
      %v2815 = vsel %vm2687, %v2623, %v2751
      %v2816 = vsel %vm2688, %v2624, %v2752
      %v2817 = vsel %vm2689, %v2625, %v2753
      %v2818 = vsel %vm2690, %v2626, %v2754
      %v2819 = vsel %vm2691, %v2627, %v2755
      %v2820 = vsel %vm2692, %v2628, %v2756
      %v2821 = vsel %vm2693, %v2629, %v2757
      %v2822 = vsel %vm2694, %v2630, %v2758
      %v2823 = vsel %vm2695, %v2631, %v2759
      %v2824 = vsel %vm2696, %v2632, %v2760
      %v2825 = vsel %vm2697, %v2633, %v2761
      %v2826 = vsel %vm2698, %v2634, %v2762
      %v2827 = vsel %vm2699, %v2635, %v2763
      %v2828 = vsel %vm2700, %v2636, %v2764
      %v2829 = vsel %vm2701, %v2637, %v2765
      %v2830 = vsel %vm2702, %v2638, %v2766
      %v2831 = vsel %vm2703, %v2639, %v2767
      %v2832 = vsel %vm2704, %v2640, %v2768
      %v2833 = vsel %vm2705, %v2641, %v2769
      %v2834 = vsel %vm2706, %v2642, %v2770
      %v2835 = vsel %vm2707, %v2643, %v2771
      %v2836 = vsel %vm2708, %v2644, %v2772
      %v2837 = vsel %vm2709, %v2645, %v2773
      %v2838 = vsel %vm2710, %v2646, %v2774
      %v2839 = vsel %vm2711, %v2647, %v2775
      %v2840 = vsel %vm2712, %v2648, %v2776
      %v2841 = vsel %vm2713, %v2649, %v2777
      %v2842 = vsel %vm2714, %v2650, %v2778
      %v2843 = vsel %vm2715, %v2651, %v2779
      %v2844 = vsel %vm2716, %v2652, %v2780
      %v2845 = vsel %vm2717, %v2653, %v2781
      %v2846 = vsel %vm2718, %v2654, %v2782
      %v2847 = vsel %vm2719, %v2655, %v2783
      %v2848 = vsel %vm2720, %v2656, %v2784
      %v2849 = vsel %vm2721, %v2657, %v2785
      %v2850 = vsel %vm2722, %v2658, %v2786
      %v2851 = vsel %vm2723, %v2659, %v2787
      %v2852 = vsel %vm2724, %v2660, %v2788
      %v2853 = vsel %vm2725, %v2661, %v2789
      %v2854 = vsel %vm2726, %v2662, %v2790
      %v2855 = vsel %vm2727, %v2663, %v2791
      %v2856 = vsel %vm2728, %v2664, %v2792
      %v2857 = vsel %vm2729, %v2665, %v2793
      %v2858 = vsel %vm2730, %v2666, %v2794
      %v2859 = vsel %vm2731, %v2667, %v2795
      %v2860 = vsel %vm2732, %v2668, %v2796
      %v2861 = vsel %vm2733, %v2669, %v2797
      %v2862 = vsel %vm2734, %v2670, %v2798
      %v2863 = vsel %vm2735, %v2671, %v2799
      %v2864 = vsel %vm2736, %v2672, %v2800
      %v2865 = vsel %vm2737, %v2673, %v2801
      %v2866 = vsel %vm2738, %v2674, %v2802
      %v2867 = vsel %vm2739, %v2675, %v2803
      %v2868 = vsel %vm2740, %v2676, %v2804
      %v2869 = vld [vmem:[%s2] sm:$0xf]
      %v2870 = vld [vmem:[%s2 + $0x4] sm:$0xf]
      %v2871 = vld [vmem:[%s2 + $0x8] sm:$0xf]
      %v2872 = vld [vmem:[%s2 + $0xc] sm:$0xf]
      %v2873 = vld [vmem:[%s2 + $0x10] sm:$0xf]
      %v2874 = vld [vmem:[%s2 + $0x14] sm:$0xf]
      %v2875 = vld [vmem:[%s2 + $0x18] sm:$0xf]
      %v2876 = vld [vmem:[%s2 + $0x1c] sm:$0xf]
      %v2877 = vld [vmem:[%s2 + $0x20] sm:$0xf]
      %v2878 = vld [vmem:[%s2 + $0x24] sm:$0xf]
      %v2879 = vld [vmem:[%s2 + $0x28] sm:$0xf]
      %v2880 = vld [vmem:[%s2 + $0x2c] sm:$0xf]
      %v2881 = vld [vmem:[%s2 + $0x30] sm:$0xf]
      %v2882 = vld [vmem:[%s2 + $0x34] sm:$0xf]
      %v2883 = vld [vmem:[%s2 + $0x38] sm:$0xf]
      %v2884 = vld [vmem:[%s2 + $0x3c] sm:$0xf]
      %v2885 = vld [vmem:[%s2 + $0x40] sm:$0xf]
      %v2886 = vld [vmem:[%s2 + $0x44] sm:$0xf]
      %v2887 = vld [vmem:[%s2 + $0x48] sm:$0xf]
      %v2888 = vld [vmem:[%s2 + $0x4c] sm:$0xf]
      %v2889 = vld [vmem:[%s2 + $0x50] sm:$0xf]
      %v2890 = vld [vmem:[%s2 + $0x54] sm:$0xf]
      %v2891 = vld [vmem:[%s2 + $0x58] sm:$0xf]
      %v2892 = vld [vmem:[%s2 + $0x5c] sm:$0xf]
      %v2893 = vld [vmem:[%s2 + $0x60] sm:$0xf]
      %v2894 = vld [vmem:[%s2 + $0x64] sm:$0xf]
      %v2895 = vld [vmem:[%s2 + $0x68] sm:$0xf]
      %v2896 = vld [vmem:[%s2 + $0x6c] sm:$0xf]
      %v2897 = vld [vmem:[%s2 + $0x70] sm:$0xf]
      %v2898 = vld [vmem:[%s2 + $0x74] sm:$0xf]
      %v2899 = vld [vmem:[%s2 + $0x78] sm:$0xf]
      %v2900 = vld [vmem:[%s2 + $0x7c] sm:$0xf]
      %v2901 = vld [vmem:[%s2 + $0x80] sm:$0xf]
      %v2902 = vld [vmem:[%s2 + $0x84] sm:$0xf]
      %v2903 = vld [vmem:[%s2 + $0x88] sm:$0xf]
      %v2904 = vld [vmem:[%s2 + $0x8c] sm:$0xf]
      %v2905 = vld [vmem:[%s2 + $0x90] sm:$0xf]
      %v2906 = vld [vmem:[%s2 + $0x94] sm:$0xf]
      %v2907 = vld [vmem:[%s2 + $0x98] sm:$0xf]
      %v2908 = vld [vmem:[%s2 + $0x9c] sm:$0xf]
      %v2909 = vld [vmem:[%s2 + $0xa0] sm:$0xf]
      %v2910 = vld [vmem:[%s2 + $0xa4] sm:$0xf]
      %v2911 = vld [vmem:[%s2 + $0xa8] sm:$0xf]
      %v2912 = vld [vmem:[%s2 + $0xac] sm:$0xf]
      %v2913 = vld [vmem:[%s2 + $0xb0] sm:$0xf]
      %v2914 = vld [vmem:[%s2 + $0xb4] sm:$0xf]
      %v2915 = vld [vmem:[%s2 + $0xb8] sm:$0xf]
      %v2916 = vld [vmem:[%s2 + $0xbc] sm:$0xf]
      %v2917 = vld [vmem:[%s227 + $0x180] sm:$0xff]
      %v2918 = vld [vmem:[%s227 + $0x188] sm:$0xf]
      %v2919 = vld [vmem:[%s227 + $0x18c] sm:$0xff]
      %v2920 = vld [vmem:[%s227 + $0x194] sm:$0xf]
      %vm2921 = vcmp.ge.bf16.partialorder %v2917, 0
      %vm2922 = vcmp.ge.bf16.partialorder %v2918, 0
      %vm2923 = vcmp.ge.bf16.partialorder %v2919, 0
      %vm2924 = vcmp.ge.bf16.partialorder %v2920, 0
      %v2925 = vmul.bf16 %v2917, 1009007652
      %v2926 = vmul.bf16 %v2918, 1009007652
      %v2927 = vmul.bf16 %v2919, 1009007652
      %v2928 = vmul.bf16 %v2920, 1009007652
      %v2929 = vsel %vm2921, %v2917, %v2925
      %v2930 = vsel %vm2922, %v2918, %v2926
      %v2931 = vsel %vm2923, %v2919, %v2927
      %v2932 = vsel %vm2924, %v2920, %v2928
      %s2933 = scalar_lea.vmem %s2, 192
      %v2934 = vld [vmem:[%s2933] sm:$0xf]
      %v2935 = vld [vmem:[%s2933 + $0x4] sm:$0xf]
      %v2936 = vld [vmem:[%s2933 + $0x8] sm:$0xf]
      %v2937 = vld [vmem:[%s2933 + $0xc] sm:$0xf]
      %v2938 = vld [vmem:[%s2933 + $0x10] sm:$0xf]
      %v2939 = vld [vmem:[%s2933 + $0x14] sm:$0xf]
      %v2940 = vld [vmem:[%s2933 + $0x18] sm:$0xf]
      %v2941 = vld [vmem:[%s2933 + $0x1c] sm:$0xf]
      %v2942 = vld [vmem:[%s2933 + $0x20] sm:$0xf]
      %v2943 = vld [vmem:[%s2933 + $0x24] sm:$0xf]
      %v2944 = vld [vmem:[%s2933 + $0x28] sm:$0xf]
      %v2945 = vld [vmem:[%s2933 + $0x2c] sm:$0xf]
      %v2946 = vld [vmem:[%s2933 + $0x30] sm:$0xf]
      %v2947 = vld [vmem:[%s2933 + $0x34] sm:$0xf]
      %v2948 = vld [vmem:[%s2933 + $0x38] sm:$0xf]
      %v2949 = vld [vmem:[%s2933 + $0x3c] sm:$0xf]
      %v2950 = vld [vmem:[%s2933 + $0x40] sm:$0xf]
      %v2951 = vld [vmem:[%s2933 + $0x44] sm:$0xf]
      %v2952 = vld [vmem:[%s2933 + $0x48] sm:$0xf]
      %v2953 = vld [vmem:[%s2933 + $0x4c] sm:$0xf]
      %v2954 = vld [vmem:[%s2933 + $0x50] sm:$0xf]
      %v2955 = vld [vmem:[%s2933 + $0x54] sm:$0xf]
      %v2956 = vld [vmem:[%s2933 + $0x58] sm:$0xf]
      %v2957 = vld [vmem:[%s2933 + $0x5c] sm:$0xf]
      %v2958 = vld [vmem:[%s2933 + $0x60] sm:$0xf]
      %v2959 = vld [vmem:[%s2933 + $0x64] sm:$0xf]
      %v2960 = vld [vmem:[%s2933 + $0x68] sm:$0xf]
      %v2961 = vld [vmem:[%s2933 + $0x6c] sm:$0xf]
      %v2962 = vld [vmem:[%s2933 + $0x70] sm:$0xf]
      %v2963 = vld [vmem:[%s2933 + $0x74] sm:$0xf]
      %v2964 = vld [vmem:[%s2933 + $0x78] sm:$0xf]
      %v2965 = vld [vmem:[%s2933 + $0x7c] sm:$0xf]
      %v2966 = vld [vmem:[%s2933 + $0x80] sm:$0xf]
      %v2967 = vld [vmem:[%s2933 + $0x84] sm:$0xf]
      %v2968 = vld [vmem:[%s2933 + $0x88] sm:$0xf]
      %v2969 = vld [vmem:[%s2933 + $0x8c] sm:$0xf]
      %v2970 = vld [vmem:[%s2933 + $0x90] sm:$0xf]
      %v2971 = vld [vmem:[%s2933 + $0x94] sm:$0xf]
      %v2972 = vld [vmem:[%s2933 + $0x98] sm:$0xf]
      %v2973 = vld [vmem:[%s2933 + $0x9c] sm:$0xf]
      %v2974 = vld [vmem:[%s2933 + $0xa0] sm:$0xf]
      %v2975 = vld [vmem:[%s2933 + $0xa4] sm:$0xf]
      %v2976 = vld [vmem:[%s2933 + $0xa8] sm:$0xf]
      %v2977 = vld [vmem:[%s2933 + $0xac] sm:$0xf]
      %v2978 = vld [vmem:[%s2933 + $0xb0] sm:$0xf]
      %v2979 = vld [vmem:[%s2933 + $0xb4] sm:$0xf]
      %v2980 = vld [vmem:[%s2933 + $0xb8] sm:$0xf]
      %v2981 = vld [vmem:[%s2933 + $0xbc] sm:$0xf]
      %v3046 = vunpack.c.l.b16 %v2809
      %v3047 = vunpack.c.h.b16 %v2809
      %v3048 = vunpack.c.l.b16 %v2810
      %v3049 = vunpack.c.l.b16 %v2811
      %v3050 = vunpack.c.h.b16 %v2811
      %v3051 = vunpack.c.l.b16 %v2812
      %v3052 = vunpack.c.l.b16 %v2813
      %v3053 = vunpack.c.h.b16 %v2813
      %v3054 = vunpack.c.l.b16 %v2814
      %v3055 = vunpack.c.l.b16 %v2815
      %v3056 = vunpack.c.h.b16 %v2815
      %v3057 = vunpack.c.l.b16 %v2816
      %v3058 = vunpack.c.l.b16 %v2817
      %v3059 = vunpack.c.h.b16 %v2817
      %v3060 = vunpack.c.l.b16 %v2818
      %v3061 = vunpack.c.l.b16 %v2819
      %v3062 = vunpack.c.h.b16 %v2819
      %v3063 = vunpack.c.l.b16 %v2820
      %v3064 = vunpack.c.l.b16 %v2821
      %v3065 = vunpack.c.h.b16 %v2821
      %v3066 = vunpack.c.l.b16 %v2822
      %v3067 = vunpack.c.l.b16 %v2823
      %v3068 = vunpack.c.h.b16 %v2823
      %v3069 = vunpack.c.l.b16 %v2824
      %v3070 = vunpack.c.l.b16 %v2825
      %v3071 = vunpack.c.h.b16 %v2825
      %v3072 = vunpack.c.l.b16 %v2826
      %v3073 = vunpack.c.l.b16 %v2827
      %v3074 = vunpack.c.h.b16 %v2827
      %v3075 = vunpack.c.l.b16 %v2828
      %v3076 = vunpack.c.l.b16 %v2829
      %v3077 = vunpack.c.h.b16 %v2829
      %v3078 = vunpack.c.l.b16 %v2830
      %v3079 = vunpack.c.l.b16 %v2831
      %v3080 = vunpack.c.h.b16 %v2831
      %v3081 = vunpack.c.l.b16 %v2832
      %v3082 = vunpack.c.l.b16 %v2833
      %v3083 = vunpack.c.h.b16 %v2833
      %v3084 = vunpack.c.l.b16 %v2834
      %v3085 = vunpack.c.l.b16 %v2835
      %v3086 = vunpack.c.h.b16 %v2835
      %v3087 = vunpack.c.l.b16 %v2836
      %v3088 = vunpack.c.l.b16 %v2837
      %v3089 = vunpack.c.h.b16 %v2837
      %v3090 = vunpack.c.l.b16 %v2838
      %v3091 = vunpack.c.l.b16 %v2839
      %v3092 = vunpack.c.h.b16 %v2839
      %v3093 = vunpack.c.l.b16 %v2840
      %v3094 = vunpack.c.l.b16 %v2841
      %v3095 = vunpack.c.h.b16 %v2841
      %v3096 = vunpack.c.l.b16 %v2842
      %v3097 = vunpack.c.l.b16 %v2843
      %v3098 = vunpack.c.h.b16 %v2843
      %v3099 = vunpack.c.l.b16 %v2844
      %v3100 = vunpack.c.l.b16 %v2845
      %v3101 = vunpack.c.h.b16 %v2845
      %v3102 = vunpack.c.l.b16 %v2846
      %v3103 = vunpack.c.l.b16 %v2847
      %v3104 = vunpack.c.h.b16 %v2847
      %v3105 = vunpack.c.l.b16 %v2848
      %v3106 = vunpack.c.l.b16 %v2849
      %v3107 = vunpack.c.h.b16 %v2849
      %v3108 = vunpack.c.l.b16 %v2850
      %v3109 = vunpack.c.l.b16 %v2851
      %v3110 = vunpack.c.h.b16 %v2851
      %v3111 = vunpack.c.l.b16 %v2852
      %v3112 = vunpack.c.l.b16 %v2853
      %v3113 = vunpack.c.h.b16 %v2853
      %v3114 = vunpack.c.l.b16 %v2854
      %v3115 = vunpack.c.l.b16 %v2855
      %v3116 = vunpack.c.h.b16 %v2855
      %v3117 = vunpack.c.l.b16 %v2856
      %v3118 = vunpack.c.l.b16 %v2857
      %v3119 = vunpack.c.h.b16 %v2857
      %v3120 = vunpack.c.l.b16 %v2858
      %v3121 = vunpack.c.l.b16 %v2859
      %v3122 = vunpack.c.h.b16 %v2859
      %v3123 = vunpack.c.l.b16 %v2860
      %v3124 = vunpack.c.l.b16 %v2861
      %v3125 = vunpack.c.h.b16 %v2861
      %v3126 = vunpack.c.l.b16 %v2862
      %v3127 = vunpack.c.l.b16 %v2863
      %v3128 = vunpack.c.h.b16 %v2863
      %v3129 = vunpack.c.l.b16 %v2864
      %v3130 = vunpack.c.l.b16 %v2865
      %v3131 = vunpack.c.h.b16 %v2865
      %v3132 = vunpack.c.l.b16 %v2866
      %v3133 = vunpack.c.l.b16 %v2867
      %v3134 = vunpack.c.h.b16 %v2867
      %v3135 = vunpack.c.l.b16 %v2868
      %v3136 = vunpack.c.l.b16 %v2929
      %v3137 = vunpack.c.h.b16 %v2929
      %v3138 = vunpack.c.l.b16 %v2930
      %v3139 = vunpack.c.l.b16 %v2931
      %v3140 = vunpack.c.h.b16 %v2931
      %v3141 = vunpack.c.l.b16 %v2932
      %v3142 = vpack.c.b16 %v3049, %v3046
      %v3143 = vpack.c.b16 %v3050, %v3047
      %v3144 = vpack.c.b16 %v3051, %v3048
      %v3145 = vpack.c.b16 %v3055, %v3052
      %v3146 = vpack.c.b16 %v3056, %v3053
      %v3147 = vpack.c.b16 %v3057, %v3054
      %v3148 = vpack.c.b16 %v3061, %v3058
      %v3149 = vpack.c.b16 %v3062, %v3059
      %v3150 = vpack.c.b16 %v3063, %v3060
      %v3151 = vpack.c.b16 %v3067, %v3064
      %v3152 = vpack.c.b16 %v3068, %v3065
      %v3153 = vpack.c.b16 %v3069, %v3066
      %v3154 = vpack.c.b16 %v3073, %v3070
      %v3155 = vpack.c.b16 %v3074, %v3071
      %v3156 = vpack.c.b16 %v3075, %v3072
      %v3157 = vpack.c.b16 %v3079, %v3076
      %v3158 = vpack.c.b16 %v3080, %v3077
      %v3159 = vpack.c.b16 %v3081, %v3078
      %v3160 = vpack.c.b16 %v3085, %v3082
      %v3161 = vpack.c.b16 %v3086, %v3083
      %v3162 = vpack.c.b16 %v3087, %v3084
      %v3163 = vpack.c.b16 %v3091, %v3088
      %v3164 = vpack.c.b16 %v3092, %v3089
      %v3165 = vpack.c.b16 %v3093, %v3090
      %v3166 = vpack.c.b16 %v3097, %v3094
      %v3167 = vpack.c.b16 %v3098, %v3095
      %v3168 = vpack.c.b16 %v3099, %v3096
      %v3169 = vpack.c.b16 %v3103, %v3100
      %v3170 = vpack.c.b16 %v3104, %v3101
      %v3171 = vpack.c.b16 %v3105, %v3102
      %v3172 = vpack.c.b16 %v3109, %v3106
      %v3173 = vpack.c.b16 %v3110, %v3107
      %v3174 = vpack.c.b16 %v3111, %v3108
      %v3175 = vpack.c.b16 %v3115, %v3112
      %v3176 = vpack.c.b16 %v3116, %v3113
      %v3177 = vpack.c.b16 %v3117, %v3114
      %v3178 = vpack.c.b16 %v3121, %v3118
      %v3179 = vpack.c.b16 %v3122, %v3119
      %v3180 = vpack.c.b16 %v3123, %v3120
      %v3181 = vpack.c.b16 %v3127, %v3124
      %v3182 = vpack.c.b16 %v3128, %v3125
      %v3183 = vpack.c.b16 %v3129, %v3126
      %v3184 = vpack.c.b16 %v3133, %v3130
      %v3185 = vpack.c.b16 %v3134, %v3131
      %v3186 = vpack.c.b16 %v3135, %v3132
      %v3187 = vpack.c.b16 %v3139, %v3136
      %v3188 = vpack.c.b16 %v3140, %v3137
      %v3189 = vpack.c.b16 %v3141, %v3138
      %v3286 = vunpack.c.l.b16 %v2934
      %v3287 = vunpack.c.l.b16 %v2935
      %v3288 = vunpack.c.l.b16 %v2936
      %v3289 = vunpack.c.l.b16 %v2937
      %v3290 = vunpack.c.l.b16 %v2938
      %v3291 = vunpack.c.l.b16 %v2939
      %v3292 = vunpack.c.l.b16 %v2940
      %v3293 = vunpack.c.l.b16 %v2941
      %v3294 = vunpack.c.l.b16 %v2942
      %v3295 = vunpack.c.l.b16 %v2943
      %v3296 = vunpack.c.l.b16 %v2944
      %v3297 = vunpack.c.l.b16 %v2945
      %v3298 = vunpack.c.l.b16 %v2946
      %v3299 = vunpack.c.l.b16 %v2947
      %v3300 = vunpack.c.l.b16 %v2948
      %v3301 = vunpack.c.l.b16 %v2949
      %v3302 = vunpack.c.l.b16 %v2950
      %v3303 = vunpack.c.l.b16 %v2951
      %v3304 = vunpack.c.l.b16 %v2952
      %v3305 = vunpack.c.l.b16 %v2953
      %v3306 = vunpack.c.l.b16 %v2954
      %v3307 = vunpack.c.l.b16 %v2955
      %v3308 = vunpack.c.l.b16 %v2956
      %v3309 = vunpack.c.l.b16 %v2957
      %v3310 = vunpack.c.l.b16 %v2958
      %v3311 = vunpack.c.l.b16 %v2959
      %v3312 = vunpack.c.l.b16 %v2960
      %v3313 = vunpack.c.l.b16 %v2961
      %v3314 = vunpack.c.l.b16 %v2962
      %v3315 = vunpack.c.l.b16 %v2963
      %v3316 = vunpack.c.l.b16 %v2964
      %v3317 = vunpack.c.l.b16 %v2965
      %v3318 = vunpack.c.l.b16 %v2966
      %v3319 = vunpack.c.l.b16 %v2967
      %v3320 = vunpack.c.l.b16 %v2968
      %v3321 = vunpack.c.l.b16 %v2969
      %v3322 = vunpack.c.l.b16 %v2970
      %v3323 = vunpack.c.l.b16 %v2971
      %v3324 = vunpack.c.l.b16 %v2972
      %v3325 = vunpack.c.l.b16 %v2973
      %v3326 = vunpack.c.l.b16 %v2974
      %v3327 = vunpack.c.l.b16 %v2975
      %v3328 = vunpack.c.l.b16 %v2976
      %v3329 = vunpack.c.l.b16 %v2977
      %v3330 = vunpack.c.l.b16 %v2978
      %v3331 = vunpack.c.l.b16 %v2979
      %v3332 = vunpack.c.l.b16 %v2980
      %v3333 = vunpack.c.l.b16 %v2981
      %v3334 = vpack.c.b16 %v3287, %v3286
      %v3335 = vpack.c.b16 %v3289, %v3288
      %v3336 = vpack.c.b16 %v3291, %v3290
      %v3337 = vpack.c.b16 %v3293, %v3292
      %v3338 = vpack.c.b16 %v3295, %v3294
      %v3339 = vpack.c.b16 %v3297, %v3296
      %v3340 = vpack.c.b16 %v3299, %v3298
      %v3341 = vpack.c.b16 %v3301, %v3300
      %v3342 = vpack.c.b16 %v3303, %v3302
      %v3343 = vpack.c.b16 %v3305, %v3304
      %v3344 = vpack.c.b16 %v3307, %v3306
      %v3345 = vpack.c.b16 %v3309, %v3308
      %v3346 = vpack.c.b16 %v3311, %v3310
      %v3347 = vpack.c.b16 %v3313, %v3312
      %v3348 = vpack.c.b16 %v3315, %v3314
      %v3349 = vpack.c.b16 %v3317, %v3316
      %v3350 = vpack.c.b16 %v3319, %v3318
      %v3351 = vpack.c.b16 %v3321, %v3320
      %v3352 = vpack.c.b16 %v3323, %v3322
      %v3353 = vpack.c.b16 %v3325, %v3324
      %v3354 = vpack.c.b16 %v3327, %v3326
      %v3355 = vpack.c.b16 %v3329, %v3328
      %v3356 = vpack.c.b16 %v3331, %v3330
      %v3357 = vpack.c.b16 %v3333, %v3332
      %3382 = vmatprep.subr.bf16.mxu0 0
      %3383 = vmatpush1.bf16.msra.mxu0 %v3334
      %3384 = vmatprep.subr.bf16.mxu0 0
      %3385 = vmatpush1.bf16.msra.mxu0 %v3335
      %3386 = vmatprep.subr.bf16.mxu0 0
      %3387 = vmatpush1.bf16.msra.mxu0 %v3336
      %3388 = vmatprep.subr.bf16.mxu0 0
      %3389 = vmatpush1.bf16.msra.mxu0 %v3337
      %3390 = vmatprep.subr.bf16.mxu0 0
      %3391 = vmatpush1.bf16.msra.mxu0 %v3338
      %3392 = vmatprep.subr.bf16.mxu0 0
      %3393 = vmatpush1.bf16.msra.mxu0 %v3339
      %3394 = vmatprep.subr.bf16.mxu0 0
      %3395 = vmatpush1.bf16.msra.mxu0 %v3340
      %3396 = vmatprep.subr.bf16.mxu0 0
      %3397 = vmatpush1.bf16.msra.mxu0 %v3341
      %3398 = vmatprep.subr.bf16.mxu0 0
      %3399 = vmatpush1.bf16.msra.mxu0 %v3342
      %3400 = vmatprep.subr.bf16.mxu0 0
      %3401 = vmatpush1.bf16.msra.mxu0 %v3343
      %3402 = vmatprep.subr.bf16.mxu0 0
      %3403 = vmatpush1.bf16.msra.mxu0 %v3344
      %3404 = vmatprep.subr.bf16.mxu0 0
      %3405 = vmatpush1.bf16.msra.mxu0 %v3345
      %3406 = vmatprep.subr.bf16.mxu0 0
      %3407 = vmatpush1.bf16.msra.mxu0 %v3346
      %3408 = vmatprep.subr.bf16.mxu0 0
      %3409 = vmatpush1.bf16.msra.mxu0 %v3347
      %3410 = vmatprep.subr.bf16.mxu0 0
      %3411 = vmatpush1.bf16.msra.mxu0 %v3348
      %3412 = vmatprep.subr.bf16.mxu0 0
      %3413 = vmatpush1.bf16.msra.mxu0 %v3349
      %3414 = vmatprep.mubr.bf16.mxu0 %v3143
      %3415 = vmatmul.mubr.bf16.gmra.mrb[0].mxu0 %v3142
      %v3416 = vpop.f32.mrb[0].mxu0
      %v3417 = vadd.f32 0.0, %v3416
      %v3418 = vpop.f32.mrb[0].mxu0
      %v3419 = vpop.f32.mrb[0].mxu0
      %v3420 = vadd.f32 0.0, %v3419
      %v3421 = vpop.f32.mrb[0].mxu0
      %3422 = vmatprep.mubr.bf16.mxu0 %v3146
      %3423 = vmatmul.mubr.bf16.gmra.mrb[0].mxu0 %v3145
      %v3424 = vpop.f32.mrb[0].mxu0
      %v3425 = vadd.f32 0.0, %v3424
      %v3426 = vpop.f32.mrb[0].mxu0
      %v3427 = vpop.f32.mrb[0].mxu0
      %v3428 = vadd.f32 0.0, %v3427
      %v3429 = vpop.f32.mrb[0].mxu0
      %3430 = vmatprep.mubr.bf16.mxu0 %v3149
      %3431 = vmatmul.mubr.bf16.gmra.mrb[0].mxu0 %v3148
      %v3432 = vpop.f32.mrb[0].mxu0
      %v3433 = vadd.f32 0.0, %v3432
      %v3434 = vpop.f32.mrb[0].mxu0
      %v3435 = vpop.f32.mrb[0].mxu0
      %v3436 = vadd.f32 0.0, %v3435
      %v3437 = vpop.f32.mrb[0].mxu0
      %3438 = vmatprep.mubr.bf16.mxu0 %v3152
      %3439 = vmatmul.mubr.bf16.gmra.mrb[0].mxu0 %v3151
      %v3440 = vpop.f32.mrb[0].mxu0
      %v3441 = vadd.f32 0.0, %v3440
      %v3442 = vpop.f32.mrb[0].mxu0
      %v3443 = vpop.f32.mrb[0].mxu0
      %v3444 = vadd.f32 0.0, %v3443
      %v3445 = vpop.f32.mrb[0].mxu0
      %3446 = vmatprep.mubr.bf16.mxu0 %v3155
      %3447 = vmatmul.mubr.bf16.gmra.mrb[0].mxu0 %v3154
      %v3448 = vpop.f32.mrb[0].mxu0
      %v3449 = vadd.f32 0.0, %v3448
      %v3450 = vpop.f32.mrb[0].mxu0
      %v3451 = vpop.f32.mrb[0].mxu0
      %v3452 = vadd.f32 0.0, %v3451
      %v3453 = vpop.f32.mrb[0].mxu0
      %3454 = vmatprep.mubr.bf16.mxu0 %v3158
      %3455 = vmatmul.mubr.bf16.gmra.mrb[0].mxu0 %v3157
      %v3456 = vpop.f32.mrb[0].mxu0
      %v3457 = vadd.f32 0.0, %v3456
      %v3458 = vpop.f32.mrb[0].mxu0
      %v3459 = vpop.f32.mrb[0].mxu0
      %v3460 = vadd.f32 0.0, %v3459
      %v3461 = vpop.f32.mrb[0].mxu0
      %3462 = vmatprep.mubr.bf16.mxu0 %v3161
      %3463 = vmatmul.mubr.bf16.gmra.mrb[0].mxu0 %v3160
      %v3464 = vpop.f32.mrb[0].mxu0
      %v3465 = vadd.f32 0.0, %v3464
      %v3466 = vpop.f32.mrb[0].mxu0
      %v3467 = vpop.f32.mrb[0].mxu0
      %v3468 = vadd.f32 0.0, %v3467
      %v3469 = vpop.f32.mrb[0].mxu0
      %3470 = vmatprep.mubr.bf16.mxu0 %v3164
      %3471 = vmatmul.mubr.bf16.gmra.mrb[0].mxu0 %v3163
      %v3472 = vpop.f32.mrb[0].mxu0
      %v3473 = vadd.f32 0.0, %v3472
      %v3474 = vpop.f32.mrb[0].mxu0
      %v3475 = vpop.f32.mrb[0].mxu0
      %v3476 = vadd.f32 0.0, %v3475
      %v3477 = vpop.f32.mrb[0].mxu0
      %3478 = vmatprep.mubr.bf16.mxu0 %v3167
      %3479 = vmatmul.mubr.bf16.gmra.mrb[0].mxu0 %v3166
      %v3480 = vpop.f32.mrb[0].mxu0
      %v3481 = vadd.f32 0.0, %v3480
      %v3482 = vpop.f32.mrb[0].mxu0
      %v3483 = vpop.f32.mrb[0].mxu0
      %v3484 = vadd.f32 0.0, %v3483
      %v3485 = vpop.f32.mrb[0].mxu0
      %3486 = vmatprep.mubr.bf16.mxu0 %v3170
      %3487 = vmatmul.mubr.bf16.gmra.mrb[0].mxu0 %v3169
      %v3488 = vpop.f32.mrb[0].mxu0
      %v3489 = vadd.f32 0.0, %v3488
      %v3490 = vpop.f32.mrb[0].mxu0
      %v3491 = vpop.f32.mrb[0].mxu0
      %v3492 = vadd.f32 0.0, %v3491
      %v3493 = vpop.f32.mrb[0].mxu0
      %3494 = vmatprep.mubr.bf16.mxu0 %v3173
      %3495 = vmatmul.mubr.bf16.gmra.mrb[0].mxu0 %v3172
      %v3496 = vpop.f32.mrb[0].mxu0
      %v3497 = vadd.f32 0.0, %v3496
      %v3498 = vpop.f32.mrb[0].mxu0
      %v3499 = vpop.f32.mrb[0].mxu0
      %v3500 = vadd.f32 0.0, %v3499
      %v3501 = vpop.f32.mrb[0].mxu0
      %3502 = vmatprep.mubr.bf16.mxu0 %v3176
      %3503 = vmatmul.mubr.bf16.gmra.mrb[0].mxu0 %v3175
      %v3504 = vpop.f32.mrb[0].mxu0
      %v3505 = vadd.f32 0.0, %v3504
      %v3506 = vpop.f32.mrb[0].mxu0
      %v3507 = vpop.f32.mrb[0].mxu0
      %v3508 = vadd.f32 0.0, %v3507
      %v3509 = vpop.f32.mrb[0].mxu0
      %3510 = vmatprep.mubr.bf16.mxu0 %v3179
      %3511 = vmatmul.mubr.bf16.gmra.mrb[0].mxu0 %v3178
      %v3512 = vpop.f32.mrb[0].mxu0
      %v3513 = vadd.f32 0.0, %v3512
      %v3514 = vpop.f32.mrb[0].mxu0
      %v3515 = vpop.f32.mrb[0].mxu0
      %v3516 = vadd.f32 0.0, %v3515
      %v3517 = vpop.f32.mrb[0].mxu0
      %3518 = vmatprep.mubr.bf16.mxu0 %v3182
      %3519 = vmatmul.mubr.bf16.gmra.mrb[0].mxu0 %v3181
      %v3520 = vpop.f32.mrb[0].mxu0
      %v3521 = vadd.f32 0.0, %v3520
      %v3522 = vpop.f32.mrb[0].mxu0
      %v3523 = vpop.f32.mrb[0].mxu0
      %v3524 = vadd.f32 0.0, %v3523
      %v3525 = vpop.f32.mrb[0].mxu0
      %3526 = vmatprep.mubr.bf16.mxu0 %v3185
      %3527 = vmatmul.mubr.bf16.gmra.mrb[0].mxu0 %v3184
      %v3528 = vpop.f32.mrb[0].mxu0
      %v3529 = vadd.f32 0.0, %v3528
      %v3530 = vpop.f32.mrb[0].mxu0
      %v3531 = vpop.f32.mrb[0].mxu0
      %v3532 = vadd.f32 0.0, %v3531
      %v3533 = vpop.f32.mrb[0].mxu0
      %3534 = vmatprep.mubr.bf16.mxu0 %v3188
      %3535 = vmatmul.mubr.bf16.gmra.mrb[0].mxu0 %v3187
      %v3536 = vpop.f32.mrb[0].mxu0
      %v3537 = vadd.f32 0.0, %v3536
      %v3538 = vpop.f32.mrb[0].mxu0
      %v3539 = vpop.f32.mrb[0].mxu0
      %v3540 = vadd.f32 0.0, %v3539
      %v3541 = vpop.f32.mrb[0].mxu0
      %3542 = vdwg.mxu0
      %3543 = vmatprep.subr.bf16.mxu0 0
      %3544 = vmatpush1.bf16.msra.mxu0 %v3350
      %3545 = vmatprep.subr.bf16.mxu0 0
      %3546 = vmatpush1.bf16.msra.mxu0 %v3351
      %3547 = vmatprep.subr.bf16.mxu0 0
      %3548 = vmatpush1.bf16.msra.mxu0 %v3352
      %3549 = vmatprep.subr.bf16.mxu0 0
      %3550 = vmatpush1.bf16.msra.mxu0 %v3353
      %3551 = vmatprep.subr.bf16.mxu0 0
      %3552 = vmatpush1.bf16.msra.mxu0 %v3354
      %3553 = vmatprep.subr.bf16.mxu0 0
      %3554 = vmatpush1.bf16.msra.mxu0 %v3355
      %3555 = vmatprep.subr.bf16.mxu0 0
      %3556 = vmatpush1.bf16.msra.mxu0 %v3356
      %3557 = vmatprep.subr.bf16.mxu0 0
      %3558 = vmatpush1.bf16.msra.mxu0 %v3357
      %3559 = vmatprep.subr.bf16.mxu0 0
      %3560 = vmatpush1.bf16.msra.mxu0 0
      %3561 = vmatprep.subr.bf16.mxu0 0
      %3562 = vmatpush1.bf16.msra.mxu0 0
      %3563 = vmatprep.subr.bf16.mxu0 0
      %3564 = vmatpush1.bf16.msra.mxu0 0
      %3565 = vmatprep.subr.bf16.mxu0 0
      %3566 = vmatpush1.bf16.msra.mxu0 0
      %3567 = vmatprep.subr.bf16.mxu0 0
      %3568 = vmatpush1.bf16.msra.mxu0 0
      %3569 = vmatprep.subr.bf16.mxu0 0
      %3570 = vmatpush1.bf16.msra.mxu0 0
      %3571 = vmatprep.subr.bf16.mxu0 0
      %3572 = vmatpush1.bf16.msra.mxu0 0
      %3573 = vmatprep.subr.bf16.mxu0 0
      %3574 = vmatpush1.bf16.msra.mxu0 0
      %3575 = vmatprep.mubr.bf16.mxu0 0
      %3576 = vmatmul.mubr.bf16.gmra.mrb[0].mxu0 %v3144
      %v3577 = vpop.f32.mrb[0].mxu0
      %v3578 = vadd.f32 %v3417, %v3577
      %v3579 = vpop.f32.mrb[0].mxu0
      %v3580 = vpop.f32.mrb[0].mxu0
      %v3581 = vadd.f32 %v3420, %v3580
      %v3582 = vpop.f32.mrb[0].mxu0
      %3583 = vmatprep.mubr.bf16.mxu0 0
      %3584 = vmatmul.mubr.bf16.gmra.mrb[0].mxu0 %v3147
      %v3585 = vpop.f32.mrb[0].mxu0
      %v3586 = vadd.f32 %v3425, %v3585
      %v3587 = vpop.f32.mrb[0].mxu0
      %v3588 = vpop.f32.mrb[0].mxu0
      %v3589 = vadd.f32 %v3428, %v3588
      %v3590 = vpop.f32.mrb[0].mxu0
      %3591 = vmatprep.mubr.bf16.mxu0 0
      %3592 = vmatmul.mubr.bf16.gmra.mrb[0].mxu0 %v3150
      %v3593 = vpop.f32.mrb[0].mxu0
      %v3594 = vadd.f32 %v3433, %v3593
      %v3595 = vpop.f32.mrb[0].mxu0
      %v3596 = vpop.f32.mrb[0].mxu0
      %v3597 = vadd.f32 %v3436, %v3596
      %v3598 = vpop.f32.mrb[0].mxu0
      %3599 = vmatprep.mubr.bf16.mxu0 0
      %3600 = vmatmul.mubr.bf16.gmra.mrb[0].mxu0 %v3153
      %v3601 = vpop.f32.mrb[0].mxu0
      %v3602 = vadd.f32 %v3441, %v3601
      %v3603 = vpop.f32.mrb[0].mxu0
      %v3604 = vpop.f32.mrb[0].mxu0
      %v3605 = vadd.f32 %v3444, %v3604
      %v3606 = vpop.f32.mrb[0].mxu0
      %3607 = vmatprep.mubr.bf16.mxu0 0
      %3608 = vmatmul.mubr.bf16.gmra.mrb[0].mxu0 %v3156
      %v3609 = vpop.f32.mrb[0].mxu0
      %v3610 = vadd.f32 %v3449, %v3609
      %v3611 = vpop.f32.mrb[0].mxu0
      %v3612 = vpop.f32.mrb[0].mxu0
      %v3613 = vadd.f32 %v3452, %v3612
      %v3614 = vpop.f32.mrb[0].mxu0
      %3615 = vmatprep.mubr.bf16.mxu0 0
      %3616 = vmatmul.mubr.bf16.gmra.mrb[0].mxu0 %v3159
      %v3617 = vpop.f32.mrb[0].mxu0
      %v3618 = vadd.f32 %v3457, %v3617
      %v3619 = vpop.f32.mrb[0].mxu0
      %v3620 = vpop.f32.mrb[0].mxu0
      %v3621 = vadd.f32 %v3460, %v3620
      %v3622 = vpop.f32.mrb[0].mxu0
      %3623 = vmatprep.mubr.bf16.mxu0 0
      %3624 = vmatmul.mubr.bf16.gmra.mrb[0].mxu0 %v3162
      %v3625 = vpop.f32.mrb[0].mxu0
      %v3626 = vadd.f32 %v3465, %v3625
      %v3627 = vpop.f32.mrb[0].mxu0
      %v3628 = vpop.f32.mrb[0].mxu0
      %v3629 = vadd.f32 %v3468, %v3628
      %v3630 = vpop.f32.mrb[0].mxu0
      %3631 = vmatprep.mubr.bf16.mxu0 0
      %3632 = vmatmul.mubr.bf16.gmra.mrb[0].mxu0 %v3165
      %v3633 = vpop.f32.mrb[0].mxu0
      %v3634 = vadd.f32 %v3473, %v3633
      %v3635 = vpop.f32.mrb[0].mxu0
      %v3636 = vpop.f32.mrb[0].mxu0
      %v3637 = vadd.f32 %v3476, %v3636
      %v3638 = vpop.f32.mrb[0].mxu0
      %3639 = vmatprep.mubr.bf16.mxu0 0
      %3640 = vmatmul.mubr.bf16.gmra.mrb[0].mxu0 %v3168
      %v3641 = vpop.f32.mrb[0].mxu0
      %v3642 = vadd.f32 %v3481, %v3641
      %v3643 = vpop.f32.mrb[0].mxu0
      %v3644 = vpop.f32.mrb[0].mxu0
      %v3645 = vadd.f32 %v3484, %v3644
      %v3646 = vpop.f32.mrb[0].mxu0
      %3647 = vmatprep.mubr.bf16.mxu0 0
      %3648 = vmatmul.mubr.bf16.gmra.mrb[0].mxu0 %v3171
      %v3649 = vpop.f32.mrb[0].mxu0
      %v3650 = vadd.f32 %v3489, %v3649
      %v3651 = vpop.f32.mrb[0].mxu0
      %v3652 = vpop.f32.mrb[0].mxu0
      %v3653 = vadd.f32 %v3492, %v3652
      %v3654 = vpop.f32.mrb[0].mxu0
      %3655 = vmatprep.mubr.bf16.mxu0 0
      %3656 = vmatmul.mubr.bf16.gmra.mrb[0].mxu0 %v3174
      %v3657 = vpop.f32.mrb[0].mxu0
      %v3658 = vadd.f32 %v3497, %v3657
      %v3659 = vpop.f32.mrb[0].mxu0
      %v3660 = vpop.f32.mrb[0].mxu0
      %v3661 = vadd.f32 %v3500, %v3660
      %v3662 = vpop.f32.mrb[0].mxu0
      %3663 = vmatprep.mubr.bf16.mxu0 0
      %3664 = vmatmul.mubr.bf16.gmra.mrb[0].mxu0 %v3177
      %v3665 = vpop.f32.mrb[0].mxu0
      %v3666 = vadd.f32 %v3505, %v3665
      %v3667 = vpop.f32.mrb[0].mxu0
      %v3668 = vpop.f32.mrb[0].mxu0
      %v3669 = vadd.f32 %v3508, %v3668
      %v3670 = vpop.f32.mrb[0].mxu0
      %3671 = vmatprep.mubr.bf16.mxu0 0
      %3672 = vmatmul.mubr.bf16.gmra.mrb[0].mxu0 %v3180
      %v3673 = vpop.f32.mrb[0].mxu0
      %v3674 = vadd.f32 %v3513, %v3673
      %v3675 = vpop.f32.mrb[0].mxu0
      %v3676 = vpop.f32.mrb[0].mxu0
      %v3677 = vadd.f32 %v3516, %v3676
      %v3678 = vpop.f32.mrb[0].mxu0
      %3679 = vmatprep.mubr.bf16.mxu0 0
      %3680 = vmatmul.mubr.bf16.gmra.mrb[0].mxu0 %v3183
      %v3681 = vpop.f32.mrb[0].mxu0
      %v3682 = vadd.f32 %v3521, %v3681
      %v3683 = vpop.f32.mrb[0].mxu0
      %v3684 = vpop.f32.mrb[0].mxu0
      %v3685 = vadd.f32 %v3524, %v3684
      %v3686 = vpop.f32.mrb[0].mxu0
      %3687 = vmatprep.mubr.bf16.mxu0 0
      %3688 = vmatmul.mubr.bf16.gmra.mrb[0].mxu0 %v3186
      %v3689 = vpop.f32.mrb[0].mxu0
      %v3690 = vadd.f32 %v3529, %v3689
      %v3691 = vpop.f32.mrb[0].mxu0
      %v3692 = vpop.f32.mrb[0].mxu0
      %v3693 = vadd.f32 %v3532, %v3692
      %v3694 = vpop.f32.mrb[0].mxu0
      %3695 = vmatprep.mubr.bf16.mxu0 0
      %3696 = vmatmul.mubr.bf16.gmra.mrb[0].mxu0 %v3189
      %v3697 = vpop.f32.mrb[0].mxu0
      %v3698 = vadd.f32 %v3537, %v3697
      %v3699 = vpop.f32.mrb[0].mxu0
      %v3700 = vpop.f32.mrb[0].mxu0
      %v3701 = vadd.f32 %v3540, %v3700
      %v3702 = vpop.f32.mrb[0].mxu0
      %3703 = vdwg.mxu0
      %v3708 = vunpack.c.l.b16 %v2805
      %v3709 = vunpack.c.h.b16 %v2805
      %v3710 = vunpack.c.l.b16 %v2806
      %v3711 = vunpack.c.l.b16 %v2807
      %v3712 = vunpack.c.h.b16 %v2807
      %v3713 = vunpack.c.l.b16 %v2808
      %v3714 = vpack.c.b16 %v3711, %v3708
      %v3715 = vpack.c.b16 %v3712, %v3709
      %v3716 = vpack.c.b16 %v3713, %v3710
      %v3768 = vunpack.c.l.b16 %v2869
      %v3769 = vunpack.c.l.b16 %v2870
      %v3770 = vunpack.c.l.b16 %v2871
      %v3771 = vunpack.c.l.b16 %v2872
      %v3772 = vunpack.c.l.b16 %v2873
      %v3773 = vunpack.c.l.b16 %v2874
      %v3774 = vunpack.c.l.b16 %v2875
      %v3775 = vunpack.c.l.b16 %v2876
      %v3776 = vunpack.c.l.b16 %v2877
      %v3777 = vunpack.c.l.b16 %v2878
      %v3778 = vunpack.c.l.b16 %v2879
      %v3779 = vunpack.c.l.b16 %v2880
      %v3780 = vunpack.c.l.b16 %v2881
      %v3781 = vunpack.c.l.b16 %v2882
      %v3782 = vunpack.c.l.b16 %v2883
      %v3783 = vunpack.c.l.b16 %v2884
      %v3784 = vunpack.c.l.b16 %v2885
      %v3785 = vunpack.c.l.b16 %v2886
      %v3786 = vunpack.c.l.b16 %v2887
      %v3787 = vunpack.c.l.b16 %v2888
      %v3788 = vunpack.c.l.b16 %v2889
      %v3789 = vunpack.c.l.b16 %v2890
      %v3790 = vunpack.c.l.b16 %v2891
      %v3791 = vunpack.c.l.b16 %v2892
      %v3792 = vunpack.c.l.b16 %v2893
      %v3793 = vunpack.c.l.b16 %v2894
      %v3794 = vunpack.c.l.b16 %v2895
      %v3795 = vunpack.c.l.b16 %v2896
      %v3796 = vunpack.c.l.b16 %v2897
      %v3797 = vunpack.c.l.b16 %v2898
      %v3798 = vunpack.c.l.b16 %v2899
      %v3799 = vunpack.c.l.b16 %v2900
      %v3800 = vunpack.c.l.b16 %v2901
      %v3801 = vunpack.c.l.b16 %v2902
      %v3802 = vunpack.c.l.b16 %v2903
      %v3803 = vunpack.c.l.b16 %v2904
      %v3804 = vunpack.c.l.b16 %v2905
      %v3805 = vunpack.c.l.b16 %v2906
      %v3806 = vunpack.c.l.b16 %v2907
      %v3807 = vunpack.c.l.b16 %v2908
      %v3808 = vunpack.c.l.b16 %v2909
      %v3809 = vunpack.c.l.b16 %v2910
      %v3810 = vunpack.c.l.b16 %v2911
      %v3811 = vunpack.c.l.b16 %v2912
      %v3812 = vunpack.c.l.b16 %v2913
      %v3813 = vunpack.c.l.b16 %v2914
      %v3814 = vunpack.c.l.b16 %v2915
      %v3815 = vunpack.c.l.b16 %v2916
      %v3816 = vpack.c.b16 %v3769, %v3768
      %v3817 = vpack.c.b16 %v3771, %v3770
      %v3818 = vpack.c.b16 %v3773, %v3772
      %v3819 = vpack.c.b16 %v3775, %v3774
      %v3820 = vpack.c.b16 %v3777, %v3776
      %v3821 = vpack.c.b16 %v3779, %v3778
      %v3822 = vpack.c.b16 %v3781, %v3780
      %v3823 = vpack.c.b16 %v3783, %v3782
      %v3824 = vpack.c.b16 %v3785, %v3784
      %v3825 = vpack.c.b16 %v3787, %v3786
      %v3826 = vpack.c.b16 %v3789, %v3788
      %v3827 = vpack.c.b16 %v3791, %v3790
      %v3828 = vpack.c.b16 %v3793, %v3792
      %v3829 = vpack.c.b16 %v3795, %v3794
      %v3830 = vpack.c.b16 %v3797, %v3796
      %v3831 = vpack.c.b16 %v3799, %v3798
      %v3832 = vpack.c.b16 %v3801, %v3800
      %v3833 = vpack.c.b16 %v3803, %v3802
      %v3834 = vpack.c.b16 %v3805, %v3804
      %v3835 = vpack.c.b16 %v3807, %v3806
      %v3836 = vpack.c.b16 %v3809, %v3808
      %v3837 = vpack.c.b16 %v3811, %v3810
      %v3838 = vpack.c.b16 %v3813, %v3812
      %v3839 = vpack.c.b16 %v3815, %v3814
      %3864 = vmatprep.subr.bf16.mxu0 0
      %3865 = vmatpush1.bf16.msra.mxu0 %v3816
      %3866 = vmatprep.subr.bf16.mxu0 0
      %3867 = vmatpush1.bf16.msra.mxu0 %v3817
      %3868 = vmatprep.subr.bf16.mxu0 0
      %3869 = vmatpush1.bf16.msra.mxu0 %v3818
      %3870 = vmatprep.subr.bf16.mxu0 0
      %3871 = vmatpush1.bf16.msra.mxu0 %v3819
      %3872 = vmatprep.subr.bf16.mxu0 0
      %3873 = vmatpush1.bf16.msra.mxu0 %v3820
      %3874 = vmatprep.subr.bf16.mxu0 0
      %3875 = vmatpush1.bf16.msra.mxu0 %v3821
      %3876 = vmatprep.subr.bf16.mxu0 0
      %3877 = vmatpush1.bf16.msra.mxu0 %v3822
      %3878 = vmatprep.subr.bf16.mxu0 0
      %3879 = vmatpush1.bf16.msra.mxu0 %v3823
      %3880 = vmatprep.subr.bf16.mxu0 0
      %3881 = vmatpush1.bf16.msra.mxu0 %v3824
      %3882 = vmatprep.subr.bf16.mxu0 0
      %3883 = vmatpush1.bf16.msra.mxu0 %v3825
      %3884 = vmatprep.subr.bf16.mxu0 0
      %3885 = vmatpush1.bf16.msra.mxu0 %v3826
      %3886 = vmatprep.subr.bf16.mxu0 0
      %3887 = vmatpush1.bf16.msra.mxu0 %v3827
      %3888 = vmatprep.subr.bf16.mxu0 0
      %3889 = vmatpush1.bf16.msra.mxu0 %v3828
      %3890 = vmatprep.subr.bf16.mxu0 0
      %3891 = vmatpush1.bf16.msra.mxu0 %v3829
      %3892 = vmatprep.subr.bf16.mxu0 0
      %3893 = vmatpush1.bf16.msra.mxu0 %v3830
      %3894 = vmatprep.subr.bf16.mxu0 0
      %3895 = vmatpush1.bf16.msra.mxu0 %v3831
      %3896 = vmatprep.mubr.bf16.mxu0 %v3715
      %3897 = vmatmul.mubr.bf16.gmra.mrb[0].mxu0 %v3714
      %v3898 = vpop.f32.mrb[0].mxu0
      %v3899 = vadd.f32 %v3578, %v3898
      %v3900 = vpop.f32.mrb[0].mxu0
      %v3901 = vpop.f32.mrb[0].mxu0
      %v3902 = vadd.f32 %v3581, %v3901
      %v3903 = vpop.f32.mrb[0].mxu0
      %3904 = vmatprep.mubr.bf16.mxu0 %v3143
      %3905 = vmatmul.mubr.bf16.gmra.mrb[0].mxu0 %v3142
      %v3906 = vpop.f32.mrb[0].mxu0
      %v3907 = vadd.f32 %v3586, %v3906
      %v3908 = vpop.f32.mrb[0].mxu0
      %v3909 = vpop.f32.mrb[0].mxu0
      %v3910 = vadd.f32 %v3589, %v3909
      %v3911 = vpop.f32.mrb[0].mxu0
      %3912 = vmatprep.mubr.bf16.mxu0 %v3146
      %3913 = vmatmul.mubr.bf16.gmra.mrb[0].mxu0 %v3145
      %v3914 = vpop.f32.mrb[0].mxu0
      %v3915 = vadd.f32 %v3594, %v3914
      %v3916 = vpop.f32.mrb[0].mxu0
      %v3917 = vpop.f32.mrb[0].mxu0
      %v3918 = vadd.f32 %v3597, %v3917
      %v3919 = vpop.f32.mrb[0].mxu0
      %3920 = vmatprep.mubr.bf16.mxu0 %v3149
      %3921 = vmatmul.mubr.bf16.gmra.mrb[0].mxu0 %v3148
      %v3922 = vpop.f32.mrb[0].mxu0
      %v3923 = vadd.f32 %v3602, %v3922
      %v3924 = vpop.f32.mrb[0].mxu0
      %v3925 = vpop.f32.mrb[0].mxu0
      %v3926 = vadd.f32 %v3605, %v3925
      %v3927 = vpop.f32.mrb[0].mxu0
      %3928 = vmatprep.mubr.bf16.mxu0 %v3152
      %3929 = vmatmul.mubr.bf16.gmra.mrb[0].mxu0 %v3151
      %v3930 = vpop.f32.mrb[0].mxu0
      %v3931 = vadd.f32 %v3610, %v3930
      %v3932 = vpop.f32.mrb[0].mxu0
      %v3933 = vpop.f32.mrb[0].mxu0
      %v3934 = vadd.f32 %v3613, %v3933
      %v3935 = vpop.f32.mrb[0].mxu0
      %3936 = vmatprep.mubr.bf16.mxu0 %v3155
      %3937 = vmatmul.mubr.bf16.gmra.mrb[0].mxu0 %v3154
      %v3938 = vpop.f32.mrb[0].mxu0
      %v3939 = vadd.f32 %v3618, %v3938
      %v3940 = vpop.f32.mrb[0].mxu0
      %v3941 = vpop.f32.mrb[0].mxu0
      %v3942 = vadd.f32 %v3621, %v3941
      %v3943 = vpop.f32.mrb[0].mxu0
      %3944 = vmatprep.mubr.bf16.mxu0 %v3158
      %3945 = vmatmul.mubr.bf16.gmra.mrb[0].mxu0 %v3157
      %v3946 = vpop.f32.mrb[0].mxu0
      %v3947 = vadd.f32 %v3626, %v3946
      %v3948 = vpop.f32.mrb[0].mxu0
      %v3949 = vpop.f32.mrb[0].mxu0
      %v3950 = vadd.f32 %v3629, %v3949
      %v3951 = vpop.f32.mrb[0].mxu0
      %3952 = vmatprep.mubr.bf16.mxu0 %v3161
      %3953 = vmatmul.mubr.bf16.gmra.mrb[0].mxu0 %v3160
      %v3954 = vpop.f32.mrb[0].mxu0
      %v3955 = vadd.f32 %v3634, %v3954
      %v3956 = vpop.f32.mrb[0].mxu0
      %v3957 = vpop.f32.mrb[0].mxu0
      %v3958 = vadd.f32 %v3637, %v3957
      %v3959 = vpop.f32.mrb[0].mxu0
      %3960 = vmatprep.mubr.bf16.mxu0 %v3164
      %3961 = vmatmul.mubr.bf16.gmra.mrb[0].mxu0 %v3163
      %v3962 = vpop.f32.mrb[0].mxu0
      %v3963 = vadd.f32 %v3642, %v3962
      %v3964 = vpop.f32.mrb[0].mxu0
      %v3965 = vpop.f32.mrb[0].mxu0
      %v3966 = vadd.f32 %v3645, %v3965
      %v3967 = vpop.f32.mrb[0].mxu0
      %3968 = vmatprep.mubr.bf16.mxu0 %v3167
      %3969 = vmatmul.mubr.bf16.gmra.mrb[0].mxu0 %v3166
      %v3970 = vpop.f32.mrb[0].mxu0
      %v3971 = vadd.f32 %v3650, %v3970
      %v3972 = vpop.f32.mrb[0].mxu0
      %v3973 = vpop.f32.mrb[0].mxu0
      %v3974 = vadd.f32 %v3653, %v3973
      %v3975 = vpop.f32.mrb[0].mxu0
      %3976 = vmatprep.mubr.bf16.mxu0 %v3170
      %3977 = vmatmul.mubr.bf16.gmra.mrb[0].mxu0 %v3169
      %v3978 = vpop.f32.mrb[0].mxu0
      %v3979 = vadd.f32 %v3658, %v3978
      %v3980 = vpop.f32.mrb[0].mxu0
      %v3981 = vpop.f32.mrb[0].mxu0
      %v3982 = vadd.f32 %v3661, %v3981
      %v3983 = vpop.f32.mrb[0].mxu0
      %3984 = vmatprep.mubr.bf16.mxu0 %v3173
      %3985 = vmatmul.mubr.bf16.gmra.mrb[0].mxu0 %v3172
      %v3986 = vpop.f32.mrb[0].mxu0
      %v3987 = vadd.f32 %v3666, %v3986
      %v3988 = vpop.f32.mrb[0].mxu0
      %v3989 = vpop.f32.mrb[0].mxu0
      %v3990 = vadd.f32 %v3669, %v3989
      %v3991 = vpop.f32.mrb[0].mxu0
      %3992 = vmatprep.mubr.bf16.mxu0 %v3176
      %3993 = vmatmul.mubr.bf16.gmra.mrb[0].mxu0 %v3175
      %v3994 = vpop.f32.mrb[0].mxu0
      %v3995 = vadd.f32 %v3674, %v3994
      %v3996 = vpop.f32.mrb[0].mxu0
      %v3997 = vpop.f32.mrb[0].mxu0
      %v3998 = vadd.f32 %v3677, %v3997
      %v3999 = vpop.f32.mrb[0].mxu0
      %4000 = vmatprep.mubr.bf16.mxu0 %v3179
      %4001 = vmatmul.mubr.bf16.gmra.mrb[0].mxu0 %v3178
      %v4002 = vpop.f32.mrb[0].mxu0
      %v4003 = vadd.f32 %v3682, %v4002
      %v4004 = vpop.f32.mrb[0].mxu0
      %v4005 = vpop.f32.mrb[0].mxu0
      %v4006 = vadd.f32 %v3685, %v4005
      %v4007 = vpop.f32.mrb[0].mxu0
      %4008 = vmatprep.mubr.bf16.mxu0 %v3182
      %4009 = vmatmul.mubr.bf16.gmra.mrb[0].mxu0 %v3181
      %v4010 = vpop.f32.mrb[0].mxu0
      %v4011 = vadd.f32 %v3690, %v4010
      %v4012 = vpop.f32.mrb[0].mxu0
      %v4013 = vpop.f32.mrb[0].mxu0
      %v4014 = vadd.f32 %v3693, %v4013
      %v4015 = vpop.f32.mrb[0].mxu0
      %4016 = vmatprep.mubr.bf16.mxu0 %v3185
      %4017 = vmatmul.mubr.bf16.gmra.mrb[0].mxu0 %v3184
      %v4018 = vpop.f32.mrb[0].mxu0
      %v4019 = vadd.f32 %v3698, %v4018
      %v4020 = vpop.f32.mrb[0].mxu0
      %v4021 = vpop.f32.mrb[0].mxu0
      %v4022 = vadd.f32 %v3701, %v4021
      %v4023 = vpop.f32.mrb[0].mxu0
      %4024 = vdwg.mxu0
      %4025 = vmatprep.subr.bf16.mxu0 0
      %4026 = vmatpush1.bf16.msra.mxu0 %v3832
      %4027 = vmatprep.subr.bf16.mxu0 0
      %4028 = vmatpush1.bf16.msra.mxu0 %v3833
      %4029 = vmatprep.subr.bf16.mxu0 0
      %4030 = vmatpush1.bf16.msra.mxu0 %v3834
      %4031 = vmatprep.subr.bf16.mxu0 0
      %4032 = vmatpush1.bf16.msra.mxu0 %v3835
      %4033 = vmatprep.subr.bf16.mxu0 0
      %4034 = vmatpush1.bf16.msra.mxu0 %v3836
      %4035 = vmatprep.subr.bf16.mxu0 0
      %4036 = vmatpush1.bf16.msra.mxu0 %v3837
      %4037 = vmatprep.subr.bf16.mxu0 0
      %4038 = vmatpush1.bf16.msra.mxu0 %v3838
      %4039 = vmatprep.subr.bf16.mxu0 0
      %4040 = vmatpush1.bf16.msra.mxu0 %v3839
      %4041 = vmatprep.subr.bf16.mxu0 0
      %4042 = vmatpush1.bf16.msra.mxu0 0
      %4043 = vmatprep.subr.bf16.mxu0 0
      %4044 = vmatpush1.bf16.msra.mxu0 0
      %4045 = vmatprep.subr.bf16.mxu0 0
      %4046 = vmatpush1.bf16.msra.mxu0 0
      %4047 = vmatprep.subr.bf16.mxu0 0
      %4048 = vmatpush1.bf16.msra.mxu0 0
      %4049 = vmatprep.subr.bf16.mxu0 0
      %4050 = vmatpush1.bf16.msra.mxu0 0
      %4051 = vmatprep.subr.bf16.mxu0 0
      %4052 = vmatpush1.bf16.msra.mxu0 0
      %4053 = vmatprep.subr.bf16.mxu0 0
      %4054 = vmatpush1.bf16.msra.mxu0 0
      %4055 = vmatprep.subr.bf16.mxu0 0
      %4056 = vmatpush1.bf16.msra.mxu0 0
      %4057 = vmatprep.mubr.bf16.mxu0 0
      %4058 = vmatmul.mubr.bf16.gmra.mrb[0].mxu0 %v3716
      %v4059 = vpop.f32.mrb[0].mxu0
      %v4060 = vadd.f32 %v3899, %v4059
      %v4061 = vpop.f32.mrb[0].mxu0
      %v4062 = vpop.f32.mrb[0].mxu0
      %v4063 = vadd.f32 %v3902, %v4062
      %v4064 = vpop.f32.mrb[0].mxu0
      %4065 = vmatprep.mubr.bf16.mxu0 0
      %4066 = vmatmul.mubr.bf16.gmra.mrb[0].mxu0 %v3144
      %v4067 = vpop.f32.mrb[0].mxu0
      %v4068 = vadd.f32 %v3907, %v4067
      %v4069 = vpop.f32.mrb[0].mxu0
      %v4070 = vpop.f32.mrb[0].mxu0
      %v4071 = vadd.f32 %v3910, %v4070
      %v4072 = vpop.f32.mrb[0].mxu0
      %4073 = vmatprep.mubr.bf16.mxu0 0
      %4074 = vmatmul.mubr.bf16.gmra.mrb[0].mxu0 %v3147
      %v4075 = vpop.f32.mrb[0].mxu0
      %v4076 = vadd.f32 %v3915, %v4075
      %v4077 = vpop.f32.mrb[0].mxu0
      %v4078 = vpop.f32.mrb[0].mxu0
      %v4079 = vadd.f32 %v3918, %v4078
      %v4080 = vpop.f32.mrb[0].mxu0
      %4081 = vmatprep.mubr.bf16.mxu0 0
      %4082 = vmatmul.mubr.bf16.gmra.mrb[0].mxu0 %v3150
      %v4083 = vpop.f32.mrb[0].mxu0
      %v4084 = vadd.f32 %v3923, %v4083
      %v4085 = vpop.f32.mrb[0].mxu0
      %v4086 = vpop.f32.mrb[0].mxu0
      %v4087 = vadd.f32 %v3926, %v4086
      %v4088 = vpop.f32.mrb[0].mxu0
      %4089 = vmatprep.mubr.bf16.mxu0 0
      %4090 = vmatmul.mubr.bf16.gmra.mrb[0].mxu0 %v3153
      %v4091 = vpop.f32.mrb[0].mxu0
      %v4092 = vadd.f32 %v3931, %v4091
      %v4093 = vpop.f32.mrb[0].mxu0
      %v4094 = vpop.f32.mrb[0].mxu0
      %v4095 = vadd.f32 %v3934, %v4094
      %v4096 = vpop.f32.mrb[0].mxu0
      %4097 = vmatprep.mubr.bf16.mxu0 0
      %4098 = vmatmul.mubr.bf16.gmra.mrb[0].mxu0 %v3156
      %v4099 = vpop.f32.mrb[0].mxu0
      %v4100 = vadd.f32 %v3939, %v4099
      %v4101 = vpop.f32.mrb[0].mxu0
      %v4102 = vpop.f32.mrb[0].mxu0
      %v4103 = vadd.f32 %v3942, %v4102
      %v4104 = vpop.f32.mrb[0].mxu0
      %4105 = vmatprep.mubr.bf16.mxu0 0
      %4106 = vmatmul.mubr.bf16.gmra.mrb[0].mxu0 %v3159
      %v4107 = vpop.f32.mrb[0].mxu0
      %v4108 = vadd.f32 %v3947, %v4107
      %v4109 = vpop.f32.mrb[0].mxu0
      %v4110 = vpop.f32.mrb[0].mxu0
      %v4111 = vadd.f32 %v3950, %v4110
      %v4112 = vpop.f32.mrb[0].mxu0
      %4113 = vmatprep.mubr.bf16.mxu0 0
      %4114 = vmatmul.mubr.bf16.gmra.mrb[0].mxu0 %v3162
      %v4115 = vpop.f32.mrb[0].mxu0
      %v4116 = vadd.f32 %v3955, %v4115
      %v4117 = vpop.f32.mrb[0].mxu0
      %v4118 = vpop.f32.mrb[0].mxu0
      %v4119 = vadd.f32 %v3958, %v4118
      %v4120 = vpop.f32.mrb[0].mxu0
      %4121 = vmatprep.mubr.bf16.mxu0 0
      %4122 = vmatmul.mubr.bf16.gmra.mrb[0].mxu0 %v3165
      %v4123 = vpop.f32.mrb[0].mxu0
      %v4124 = vadd.f32 %v3963, %v4123
      %v4125 = vpop.f32.mrb[0].mxu0
      %v4126 = vpop.f32.mrb[0].mxu0
      %v4127 = vadd.f32 %v3966, %v4126
      %v4128 = vpop.f32.mrb[0].mxu0
      %4129 = vmatprep.mubr.bf16.mxu0 0
      %4130 = vmatmul.mubr.bf16.gmra.mrb[0].mxu0 %v3168
      %v4131 = vpop.f32.mrb[0].mxu0
      %v4132 = vadd.f32 %v3971, %v4131
      %v4133 = vpop.f32.mrb[0].mxu0
      %v4134 = vpop.f32.mrb[0].mxu0
      %v4135 = vadd.f32 %v3974, %v4134
      %v4136 = vpop.f32.mrb[0].mxu0
      %4137 = vmatprep.mubr.bf16.mxu0 0
      %4138 = vmatmul.mubr.bf16.gmra.mrb[0].mxu0 %v3171
      %v4139 = vpop.f32.mrb[0].mxu0
      %v4140 = vadd.f32 %v3979, %v4139
      %v4141 = vpop.f32.mrb[0].mxu0
      %v4142 = vpop.f32.mrb[0].mxu0
      %v4143 = vadd.f32 %v3982, %v4142
      %v4144 = vpop.f32.mrb[0].mxu0
      %4145 = vmatprep.mubr.bf16.mxu0 0
      %4146 = vmatmul.mubr.bf16.gmra.mrb[0].mxu0 %v3174
      %v4147 = vpop.f32.mrb[0].mxu0
      %v4148 = vadd.f32 %v3987, %v4147
      %v4149 = vpop.f32.mrb[0].mxu0
      %v4150 = vpop.f32.mrb[0].mxu0
      %v4151 = vadd.f32 %v3990, %v4150
      %v4152 = vpop.f32.mrb[0].mxu0
      %4153 = vmatprep.mubr.bf16.mxu0 0
      %4154 = vmatmul.mubr.bf16.gmra.mrb[0].mxu0 %v3177
      %v4155 = vpop.f32.mrb[0].mxu0
      %v4156 = vadd.f32 %v3995, %v4155
      %v4157 = vpop.f32.mrb[0].mxu0
      %v4158 = vpop.f32.mrb[0].mxu0
      %v4159 = vadd.f32 %v3998, %v4158
      %v4160 = vpop.f32.mrb[0].mxu0
      %4161 = vmatprep.mubr.bf16.mxu0 0
      %4162 = vmatmul.mubr.bf16.gmra.mrb[0].mxu0 %v3180
      %v4163 = vpop.f32.mrb[0].mxu0
      %v4164 = vadd.f32 %v4003, %v4163
      %v4165 = vpop.f32.mrb[0].mxu0
      %v4166 = vpop.f32.mrb[0].mxu0
      %v4167 = vadd.f32 %v4006, %v4166
      %v4168 = vpop.f32.mrb[0].mxu0
      %4169 = vmatprep.mubr.bf16.mxu0 0
      %4170 = vmatmul.mubr.bf16.gmra.mrb[0].mxu0 %v3183
      %v4171 = vpop.f32.mrb[0].mxu0
      %v4172 = vadd.f32 %v4011, %v4171
      %v4173 = vpop.f32.mrb[0].mxu0
      %v4174 = vpop.f32.mrb[0].mxu0
      %v4175 = vadd.f32 %v4014, %v4174
      %v4176 = vpop.f32.mrb[0].mxu0
      %4177 = vmatprep.mubr.bf16.mxu0 0
      %4178 = vmatmul.mubr.bf16.gmra.mrb[0].mxu0 %v3186
      %v4179 = vpop.f32.mrb[0].mxu0
      %v4180 = vadd.f32 %v4019, %v4179
      %v4181 = vpop.f32.mrb[0].mxu0
      %v4182 = vpop.f32.mrb[0].mxu0
      %v4183 = vadd.f32 %v4022, %v4182
      %v4184 = vpop.f32.mrb[0].mxu0
      %4185 = vdwg.mxu0
      %v4186 = vld [vmem:[%s227 + $0x30] sm:$0xff]
      %v4187 = vld [vmem:[%s227 + $0x38] sm:$0xf]
      %v4188 = vld [vmem:[%s227 + $0x3c] sm:$0xff]
      %v4189 = vld [vmem:[%s227 + $0x44] sm:$0xf]
      %v4190 = vld [vmem:[%s227 + $0x48] sm:$0xff]
      %v4191 = vld [vmem:[%s227 + $0x50] sm:$0xf]
      %v4192 = vld [vmem:[%s227 + $0x54] sm:$0xff]
      %v4193 = vld [vmem:[%s227 + $0x5c] sm:$0xf]
      %v4194 = vld [vmem:[%s227 + $0x60] sm:$0xff]
      %v4195 = vld [vmem:[%s227 + $0x68] sm:$0xf]
      %v4196 = vld [vmem:[%s227 + $0x6c] sm:$0xff]
      %v4197 = vld [vmem:[%s227 + $0x74] sm:$0xf]
      %v4198 = vld [vmem:[%s227 + $0x78] sm:$0xff]
      %v4199 = vld [vmem:[%s227 + $0x80] sm:$0xf]
      %v4200 = vld [vmem:[%s227 + $0x84] sm:$0xff]
      %v4201 = vld [vmem:[%s227 + $0x8c] sm:$0xf]
      %v4202 = vld [vmem:[%s227 + $0x90] sm:$0xff]
      %v4203 = vld [vmem:[%s227 + $0x98] sm:$0xf]
      %v4204 = vld [vmem:[%s227 + $0x9c] sm:$0xff]
      %v4205 = vld [vmem:[%s227 + $0xa4] sm:$0xf]
      %v4206 = vld [vmem:[%s227 + $0xa8] sm:$0xff]
      %v4207 = vld [vmem:[%s227 + $0xb0] sm:$0xf]
      %v4208 = vld [vmem:[%s227 + $0xb4] sm:$0xff]
      %v4209 = vld [vmem:[%s227 + $0xbc] sm:$0xf]
      %v4210 = vld [vmem:[%s227 + $0xc0] sm:$0xff]
      %v4211 = vld [vmem:[%s227 + $0xc8] sm:$0xf]
      %v4212 = vld [vmem:[%s227 + $0xcc] sm:$0xff]
      %v4213 = vld [vmem:[%s227 + $0xd4] sm:$0xf]
      %v4214 = vld [vmem:[%s227 + $0xd8] sm:$0xff]
      %v4215 = vld [vmem:[%s227 + $0xe0] sm:$0xf]
      %v4216 = vld [vmem:[%s227 + $0xe4] sm:$0xff]
      %v4217 = vld [vmem:[%s227 + $0xec] sm:$0xf]
      %v4218 = vld [vmem:[%s227 + $0xf0] sm:$0xff]
      %v4219 = vld [vmem:[%s227 + $0xf8] sm:$0xf]
      %v4220 = vld [vmem:[%s227 + $0xfc] sm:$0xff]
      %v4221 = vld [vmem:[%s227 + $0x104] sm:$0xf]
      %v4222 = vld [vmem:[%s227 + $0x108] sm:$0xff]
      %v4223 = vld [vmem:[%s227 + $0x110] sm:$0xf]
      %v4224 = vld [vmem:[%s227 + $0x114] sm:$0xff]
      %v4225 = vld [vmem:[%s227 + $0x11c] sm:$0xf]
      %v4226 = vld [vmem:[%s227 + $0x120] sm:$0xff]
      %v4227 = vld [vmem:[%s227 + $0x128] sm:$0xf]
      %v4228 = vld [vmem:[%s227 + $0x12c] sm:$0xff]
      %v4229 = vld [vmem:[%s227 + $0x134] sm:$0xf]
      %v4230 = vld [vmem:[%s227 + $0x138] sm:$0xff]
      %v4231 = vld [vmem:[%s227 + $0x140] sm:$0xf]
      %v4232 = vld [vmem:[%s227 + $0x144] sm:$0xff]
      %v4233 = vld [vmem:[%s227 + $0x14c] sm:$0xf]
      %v4234 = vld [vmem:[%s227 + $0x150] sm:$0xff]
      %v4235 = vld [vmem:[%s227 + $0x158] sm:$0xf]
      %v4236 = vld [vmem:[%s227 + $0x15c] sm:$0xff]
      %v4237 = vld [vmem:[%s227 + $0x164] sm:$0xf]
      %v4238 = vld [vmem:[%s227 + $0x168] sm:$0xff]
      %v4239 = vld [vmem:[%s227 + $0x170] sm:$0xf]
      %v4240 = vld [vmem:[%s227 + $0x174] sm:$0xff]
      %v4241 = vld [vmem:[%s227 + $0x17c] sm:$0xf]
      %v4242 = vld [vmem:[%s227 + $0x180] sm:$0xff]
      %v4243 = vld [vmem:[%s227 + $0x188] sm:$0xf]
      %v4244 = vld [vmem:[%s227 + $0x18c] sm:$0xff]
      %v4245 = vld [vmem:[%s227 + $0x194] sm:$0xf]
      %v4246 = vld [vmem:[%s227 + $0x198] sm:$0xff]
      %v4247 = vld [vmem:[%s227 + $0x1a0] sm:$0xf]
      %v4248 = vld [vmem:[%s227 + $0x1a4] sm:$0xff]
      %v4249 = vld [vmem:[%s227 + $0x1ac] sm:$0xf]
      %vm4250 = vcmp.ge.bf16.partialorder %v4186, 0
      %vm4251 = vcmp.ge.bf16.partialorder %v4187, 0
      %vm4252 = vcmp.ge.bf16.partialorder %v4188, 0
      %vm4253 = vcmp.ge.bf16.partialorder %v4189, 0
      %vm4254 = vcmp.ge.bf16.partialorder %v4190, 0
      %vm4255 = vcmp.ge.bf16.partialorder %v4191, 0
      %vm4256 = vcmp.ge.bf16.partialorder %v4192, 0
      %vm4257 = vcmp.ge.bf16.partialorder %v4193, 0
      %vm4258 = vcmp.ge.bf16.partialorder %v4194, 0
      %vm4259 = vcmp.ge.bf16.partialorder %v4195, 0
      %vm4260 = vcmp.ge.bf16.partialorder %v4196, 0
      %vm4261 = vcmp.ge.bf16.partialorder %v4197, 0
      %vm4262 = vcmp.ge.bf16.partialorder %v4198, 0
      %vm4263 = vcmp.ge.bf16.partialorder %v4199, 0
      %vm4264 = vcmp.ge.bf16.partialorder %v4200, 0
      %vm4265 = vcmp.ge.bf16.partialorder %v4201, 0
      %vm4266 = vcmp.ge.bf16.partialorder %v4202, 0
      %vm4267 = vcmp.ge.bf16.partialorder %v4203, 0
      %vm4268 = vcmp.ge.bf16.partialorder %v4204, 0
      %vm4269 = vcmp.ge.bf16.partialorder %v4205, 0
      %vm4270 = vcmp.ge.bf16.partialorder %v4206, 0
      %vm4271 = vcmp.ge.bf16.partialorder %v4207, 0
      %vm4272 = vcmp.ge.bf16.partialorder %v4208, 0
      %vm4273 = vcmp.ge.bf16.partialorder %v4209, 0
      %vm4274 = vcmp.ge.bf16.partialorder %v4210, 0
      %vm4275 = vcmp.ge.bf16.partialorder %v4211, 0
      %vm4276 = vcmp.ge.bf16.partialorder %v4212, 0
      %vm4277 = vcmp.ge.bf16.partialorder %v4213, 0
      %vm4278 = vcmp.ge.bf16.partialorder %v4214, 0
      %vm4279 = vcmp.ge.bf16.partialorder %v4215, 0
      %vm4280 = vcmp.ge.bf16.partialorder %v4216, 0
      %vm4281 = vcmp.ge.bf16.partialorder %v4217, 0
      %vm4282 = vcmp.ge.bf16.partialorder %v4218, 0
      %vm4283 = vcmp.ge.bf16.partialorder %v4219, 0
      %vm4284 = vcmp.ge.bf16.partialorder %v4220, 0
      %vm4285 = vcmp.ge.bf16.partialorder %v4221, 0
      %vm4286 = vcmp.ge.bf16.partialorder %v4222, 0
      %vm4287 = vcmp.ge.bf16.partialorder %v4223, 0
      %vm4288 = vcmp.ge.bf16.partialorder %v4224, 0
      %vm4289 = vcmp.ge.bf16.partialorder %v4225, 0
      %vm4290 = vcmp.ge.bf16.partialorder %v4226, 0
      %vm4291 = vcmp.ge.bf16.partialorder %v4227, 0
      %vm4292 = vcmp.ge.bf16.partialorder %v4228, 0
      %vm4293 = vcmp.ge.bf16.partialorder %v4229, 0
      %vm4294 = vcmp.ge.bf16.partialorder %v4230, 0
      %vm4295 = vcmp.ge.bf16.partialorder %v4231, 0
      %vm4296 = vcmp.ge.bf16.partialorder %v4232, 0
      %vm4297 = vcmp.ge.bf16.partialorder %v4233, 0
      %vm4298 = vcmp.ge.bf16.partialorder %v4234, 0
      %vm4299 = vcmp.ge.bf16.partialorder %v4235, 0
      %vm4300 = vcmp.ge.bf16.partialorder %v4236, 0
      %vm4301 = vcmp.ge.bf16.partialorder %v4237, 0
      %vm4302 = vcmp.ge.bf16.partialorder %v4238, 0
      %vm4303 = vcmp.ge.bf16.partialorder %v4239, 0
      %vm4304 = vcmp.ge.bf16.partialorder %v4240, 0
      %vm4305 = vcmp.ge.bf16.partialorder %v4241, 0
      %vm4306 = vcmp.ge.bf16.partialorder %v4242, 0
      %vm4307 = vcmp.ge.bf16.partialorder %v4243, 0
      %vm4308 = vcmp.ge.bf16.partialorder %v4244, 0
      %vm4309 = vcmp.ge.bf16.partialorder %v4245, 0
      %vm4310 = vcmp.ge.bf16.partialorder %v4246, 0
      %vm4311 = vcmp.ge.bf16.partialorder %v4247, 0
      %vm4312 = vcmp.ge.bf16.partialorder %v4248, 0
      %vm4313 = vcmp.ge.bf16.partialorder %v4249, 0
      %v4314 = vmul.bf16 %v4186, 1009007652
      %v4315 = vmul.bf16 %v4187, 1009007652
      %v4316 = vmul.bf16 %v4188, 1009007652
      %v4317 = vmul.bf16 %v4189, 1009007652
      %v4318 = vmul.bf16 %v4190, 1009007652
      %v4319 = vmul.bf16 %v4191, 1009007652
      %v4320 = vmul.bf16 %v4192, 1009007652
      %v4321 = vmul.bf16 %v4193, 1009007652
      %v4322 = vmul.bf16 %v4194, 1009007652
      %v4323 = vmul.bf16 %v4195, 1009007652
      %v4324 = vmul.bf16 %v4196, 1009007652
      %v4325 = vmul.bf16 %v4197, 1009007652
      %v4326 = vmul.bf16 %v4198, 1009007652
      %v4327 = vmul.bf16 %v4199, 1009007652
      %v4328 = vmul.bf16 %v4200, 1009007652
      %v4329 = vmul.bf16 %v4201, 1009007652
      %v4330 = vmul.bf16 %v4202, 1009007652
      %v4331 = vmul.bf16 %v4203, 1009007652
      %v4332 = vmul.bf16 %v4204, 1009007652
      %v4333 = vmul.bf16 %v4205, 1009007652
      %v4334 = vmul.bf16 %v4206, 1009007652
      %v4335 = vmul.bf16 %v4207, 1009007652
      %v4336 = vmul.bf16 %v4208, 1009007652
      %v4337 = vmul.bf16 %v4209, 1009007652
      %v4338 = vmul.bf16 %v4210, 1009007652
      %v4339 = vmul.bf16 %v4211, 1009007652
      %v4340 = vmul.bf16 %v4212, 1009007652
      %v4341 = vmul.bf16 %v4213, 1009007652
      %v4342 = vmul.bf16 %v4214, 1009007652
      %v4343 = vmul.bf16 %v4215, 1009007652
      %v4344 = vmul.bf16 %v4216, 1009007652
      %v4345 = vmul.bf16 %v4217, 1009007652
      %v4346 = vmul.bf16 %v4218, 1009007652
      %v4347 = vmul.bf16 %v4219, 1009007652
      %v4348 = vmul.bf16 %v4220, 1009007652
      %v4349 = vmul.bf16 %v4221, 1009007652
      %v4350 = vmul.bf16 %v4222, 1009007652
      %v4351 = vmul.bf16 %v4223, 1009007652
      %v4352 = vmul.bf16 %v4224, 1009007652
      %v4353 = vmul.bf16 %v4225, 1009007652
      %v4354 = vmul.bf16 %v4226, 1009007652
      %v4355 = vmul.bf16 %v4227, 1009007652
      %v4356 = vmul.bf16 %v4228, 1009007652
      %v4357 = vmul.bf16 %v4229, 1009007652
      %v4358 = vmul.bf16 %v4230, 1009007652
      %v4359 = vmul.bf16 %v4231, 1009007652
      %v4360 = vmul.bf16 %v4232, 1009007652
      %v4361 = vmul.bf16 %v4233, 1009007652
      %v4362 = vmul.bf16 %v4234, 1009007652
      %v4363 = vmul.bf16 %v4235, 1009007652
      %v4364 = vmul.bf16 %v4236, 1009007652
      %v4365 = vmul.bf16 %v4237, 1009007652
      %v4366 = vmul.bf16 %v4238, 1009007652
      %v4367 = vmul.bf16 %v4239, 1009007652
      %v4368 = vmul.bf16 %v4240, 1009007652
      %v4369 = vmul.bf16 %v4241, 1009007652
      %v4370 = vmul.bf16 %v4242, 1009007652
      %v4371 = vmul.bf16 %v4243, 1009007652
      %v4372 = vmul.bf16 %v4244, 1009007652
      %v4373 = vmul.bf16 %v4245, 1009007652
      %v4374 = vmul.bf16 %v4246, 1009007652
      %v4375 = vmul.bf16 %v4247, 1009007652
      %v4376 = vmul.bf16 %v4248, 1009007652
      %v4377 = vmul.bf16 %v4249, 1009007652
      %v4378 = vsel %vm4250, %v4186, %v4314
      %v4379 = vsel %vm4251, %v4187, %v4315
      %v4380 = vsel %vm4252, %v4188, %v4316
      %v4381 = vsel %vm4253, %v4189, %v4317
      %v4382 = vsel %vm4254, %v4190, %v4318
      %v4383 = vsel %vm4255, %v4191, %v4319
      %v4384 = vsel %vm4256, %v4192, %v4320
      %v4385 = vsel %vm4257, %v4193, %v4321
      %v4386 = vsel %vm4258, %v4194, %v4322
      %v4387 = vsel %vm4259, %v4195, %v4323
      %v4388 = vsel %vm4260, %v4196, %v4324
      %v4389 = vsel %vm4261, %v4197, %v4325
      %v4390 = vsel %vm4262, %v4198, %v4326
      %v4391 = vsel %vm4263, %v4199, %v4327
      %v4392 = vsel %vm4264, %v4200, %v4328
      %v4393 = vsel %vm4265, %v4201, %v4329
      %v4394 = vsel %vm4266, %v4202, %v4330
      %v4395 = vsel %vm4267, %v4203, %v4331
      %v4396 = vsel %vm4268, %v4204, %v4332
      %v4397 = vsel %vm4269, %v4205, %v4333
      %v4398 = vsel %vm4270, %v4206, %v4334
      %v4399 = vsel %vm4271, %v4207, %v4335
      %v4400 = vsel %vm4272, %v4208, %v4336
      %v4401 = vsel %vm4273, %v4209, %v4337
      %v4402 = vsel %vm4274, %v4210, %v4338
      %v4403 = vsel %vm4275, %v4211, %v4339
      %v4404 = vsel %vm4276, %v4212, %v4340
      %v4405 = vsel %vm4277, %v4213, %v4341
      %v4406 = vsel %vm4278, %v4214, %v4342
      %v4407 = vsel %vm4279, %v4215, %v4343
      %v4408 = vsel %vm4280, %v4216, %v4344
      %v4409 = vsel %vm4281, %v4217, %v4345
      %v4410 = vsel %vm4282, %v4218, %v4346
      %v4411 = vsel %vm4283, %v4219, %v4347
      %v4412 = vsel %vm4284, %v4220, %v4348
      %v4413 = vsel %vm4285, %v4221, %v4349
      %v4414 = vsel %vm4286, %v4222, %v4350
      %v4415 = vsel %vm4287, %v4223, %v4351
      %v4416 = vsel %vm4288, %v4224, %v4352
      %v4417 = vsel %vm4289, %v4225, %v4353
      %v4418 = vsel %vm4290, %v4226, %v4354
      %v4419 = vsel %vm4291, %v4227, %v4355
      %v4420 = vsel %vm4292, %v4228, %v4356
      %v4421 = vsel %vm4293, %v4229, %v4357
      %v4422 = vsel %vm4294, %v4230, %v4358
      %v4423 = vsel %vm4295, %v4231, %v4359
      %v4424 = vsel %vm4296, %v4232, %v4360
      %v4425 = vsel %vm4297, %v4233, %v4361
      %v4426 = vsel %vm4298, %v4234, %v4362
      %v4427 = vsel %vm4299, %v4235, %v4363
      %v4428 = vsel %vm4300, %v4236, %v4364
      %v4429 = vsel %vm4301, %v4237, %v4365
      %v4430 = vsel %vm4302, %v4238, %v4366
      %v4431 = vsel %vm4303, %v4239, %v4367
      %v4432 = vsel %vm4304, %v4240, %v4368
      %v4433 = vsel %vm4305, %v4241, %v4369
      %v4434 = vsel %vm4306, %v4242, %v4370
      %v4435 = vsel %vm4307, %v4243, %v4371
      %v4436 = vsel %vm4308, %v4244, %v4372
      %v4437 = vsel %vm4309, %v4245, %v4373
      %v4438 = vsel %vm4310, %v4246, %v4374
      %v4439 = vsel %vm4311, %v4247, %v4375
      %v4440 = vsel %vm4312, %v4248, %v4376
      %v4441 = vsel %vm4313, %v4249, %v4377
      %s4442 = scalar_lea.vmem %s2, 384
      %v4443 = vld [vmem:[%s4442] sm:$0xf]
      %v4444 = vld [vmem:[%s4442 + $0x4] sm:$0xf]
      %v4445 = vld [vmem:[%s4442 + $0x8] sm:$0xf]
      %v4446 = vld [vmem:[%s4442 + $0xc] sm:$0xf]
      %v4447 = vld [vmem:[%s4442 + $0x10] sm:$0xf]
      %v4448 = vld [vmem:[%s4442 + $0x14] sm:$0xf]
      %v4449 = vld [vmem:[%s4442 + $0x18] sm:$0xf]
      %v4450 = vld [vmem:[%s4442 + $0x1c] sm:$0xf]
      %v4451 = vld [vmem:[%s4442 + $0x20] sm:$0xf]
      %v4452 = vld [vmem:[%s4442 + $0x24] sm:$0xf]
      %v4453 = vld [vmem:[%s4442 + $0x28] sm:$0xf]
      %v4454 = vld [vmem:[%s4442 + $0x2c] sm:$0xf]
      %v4455 = vld [vmem:[%s4442 + $0x30] sm:$0xf]
      %v4456 = vld [vmem:[%s4442 + $0x34] sm:$0xf]
      %v4457 = vld [vmem:[%s4442 + $0x38] sm:$0xf]
      %v4458 = vld [vmem:[%s4442 + $0x3c] sm:$0xf]
      %v4459 = vld [vmem:[%s4442 + $0x40] sm:$0xf]
      %v4460 = vld [vmem:[%s4442 + $0x44] sm:$0xf]
      %v4461 = vld [vmem:[%s4442 + $0x48] sm:$0xf]
      %v4462 = vld [vmem:[%s4442 + $0x4c] sm:$0xf]
      %v4463 = vld [vmem:[%s4442 + $0x50] sm:$0xf]
      %v4464 = vld [vmem:[%s4442 + $0x54] sm:$0xf]
      %v4465 = vld [vmem:[%s4442 + $0x58] sm:$0xf]
      %v4466 = vld [vmem:[%s4442 + $0x5c] sm:$0xf]
      %v4467 = vld [vmem:[%s4442 + $0x60] sm:$0xf]
      %v4468 = vld [vmem:[%s4442 + $0x64] sm:$0xf]
      %v4469 = vld [vmem:[%s4442 + $0x68] sm:$0xf]
      %v4470 = vld [vmem:[%s4442 + $0x6c] sm:$0xf]
      %v4471 = vld [vmem:[%s4442 + $0x70] sm:$0xf]
      %v4472 = vld [vmem:[%s4442 + $0x74] sm:$0xf]
      %v4473 = vld [vmem:[%s4442 + $0x78] sm:$0xf]
      %v4474 = vld [vmem:[%s4442 + $0x7c] sm:$0xf]
      %v4475 = vld [vmem:[%s4442 + $0x80] sm:$0xf]
      %v4476 = vld [vmem:[%s4442 + $0x84] sm:$0xf]
      %v4477 = vld [vmem:[%s4442 + $0x88] sm:$0xf]
      %v4478 = vld [vmem:[%s4442 + $0x8c] sm:$0xf]
      %v4479 = vld [vmem:[%s4442 + $0x90] sm:$0xf]
      %v4480 = vld [vmem:[%s4442 + $0x94] sm:$0xf]
      %v4481 = vld [vmem:[%s4442 + $0x98] sm:$0xf]
      %v4482 = vld [vmem:[%s4442 + $0x9c] sm:$0xf]
      %v4483 = vld [vmem:[%s4442 + $0xa0] sm:$0xf]
      %v4484 = vld [vmem:[%s4442 + $0xa4] sm:$0xf]
      %v4485 = vld [vmem:[%s4442 + $0xa8] sm:$0xf]
      %v4486 = vld [vmem:[%s4442 + $0xac] sm:$0xf]
      %v4487 = vld [vmem:[%s4442 + $0xb0] sm:$0xf]
      %v4488 = vld [vmem:[%s4442 + $0xb4] sm:$0xf]
      %v4489 = vld [vmem:[%s4442 + $0xb8] sm:$0xf]
      %v4490 = vld [vmem:[%s4442 + $0xbc] sm:$0xf]
      %v4555 = vunpack.c.l.b16 %v4378
      %v4556 = vunpack.c.h.b16 %v4378
      %v4557 = vunpack.c.l.b16 %v4379
      %v4558 = vunpack.c.l.b16 %v4380
      %v4559 = vunpack.c.h.b16 %v4380
      %v4560 = vunpack.c.l.b16 %v4381
      %v4561 = vunpack.c.l.b16 %v4382
      %v4562 = vunpack.c.h.b16 %v4382
      %v4563 = vunpack.c.l.b16 %v4383
      %v4564 = vunpack.c.l.b16 %v4384
      %v4565 = vunpack.c.h.b16 %v4384
      %v4566 = vunpack.c.l.b16 %v4385
      %v4567 = vunpack.c.l.b16 %v4386
      %v4568 = vunpack.c.h.b16 %v4386
      %v4569 = vunpack.c.l.b16 %v4387
      %v4570 = vunpack.c.l.b16 %v4388
      %v4571 = vunpack.c.h.b16 %v4388
      %v4572 = vunpack.c.l.b16 %v4389
      %v4573 = vunpack.c.l.b16 %v4390
      %v4574 = vunpack.c.h.b16 %v4390
      %v4575 = vunpack.c.l.b16 %v4391
      %v4576 = vunpack.c.l.b16 %v4392
      %v4577 = vunpack.c.h.b16 %v4392
      %v4578 = vunpack.c.l.b16 %v4393
      %v4579 = vunpack.c.l.b16 %v4394
      %v4580 = vunpack.c.h.b16 %v4394
      %v4581 = vunpack.c.l.b16 %v4395
      %v4582 = vunpack.c.l.b16 %v4396
      %v4583 = vunpack.c.h.b16 %v4396
      %v4584 = vunpack.c.l.b16 %v4397
      %v4585 = vunpack.c.l.b16 %v4398
      %v4586 = vunpack.c.h.b16 %v4398
      %v4587 = vunpack.c.l.b16 %v4399
      %v4588 = vunpack.c.l.b16 %v4400
      %v4589 = vunpack.c.h.b16 %v4400
      %v4590 = vunpack.c.l.b16 %v4401
      %v4591 = vunpack.c.l.b16 %v4402
      %v4592 = vunpack.c.h.b16 %v4402
      %v4593 = vunpack.c.l.b16 %v4403
      %v4594 = vunpack.c.l.b16 %v4404
      %v4595 = vunpack.c.h.b16 %v4404
      %v4596 = vunpack.c.l.b16 %v4405
      %v4597 = vunpack.c.l.b16 %v4406
      %v4598 = vunpack.c.h.b16 %v4406
      %v4599 = vunpack.c.l.b16 %v4407
      %v4600 = vunpack.c.l.b16 %v4408
      %v4601 = vunpack.c.h.b16 %v4408
      %v4602 = vunpack.c.l.b16 %v4409
      %v4603 = vunpack.c.l.b16 %v4410
      %v4604 = vunpack.c.h.b16 %v4410
      %v4605 = vunpack.c.l.b16 %v4411
      %v4606 = vunpack.c.l.b16 %v4412
      %v4607 = vunpack.c.h.b16 %v4412
      %v4608 = vunpack.c.l.b16 %v4413
      %v4609 = vunpack.c.l.b16 %v4414
      %v4610 = vunpack.c.h.b16 %v4414
      %v4611 = vunpack.c.l.b16 %v4415
      %v4612 = vunpack.c.l.b16 %v4416
      %v4613 = vunpack.c.h.b16 %v4416
      %v4614 = vunpack.c.l.b16 %v4417
      %v4615 = vunpack.c.l.b16 %v4418
      %v4616 = vunpack.c.h.b16 %v4418
      %v4617 = vunpack.c.l.b16 %v4419
      %v4618 = vunpack.c.l.b16 %v4420
      %v4619 = vunpack.c.h.b16 %v4420
      %v4620 = vunpack.c.l.b16 %v4421
      %v4621 = vunpack.c.l.b16 %v4422
      %v4622 = vunpack.c.h.b16 %v4422
      %v4623 = vunpack.c.l.b16 %v4423
      %v4624 = vunpack.c.l.b16 %v4424
      %v4625 = vunpack.c.h.b16 %v4424
      %v4626 = vunpack.c.l.b16 %v4425
      %v4627 = vunpack.c.l.b16 %v4426
      %v4628 = vunpack.c.h.b16 %v4426
      %v4629 = vunpack.c.l.b16 %v4427
      %v4630 = vunpack.c.l.b16 %v4428
      %v4631 = vunpack.c.h.b16 %v4428
      %v4632 = vunpack.c.l.b16 %v4429
      %v4633 = vunpack.c.l.b16 %v4430
      %v4634 = vunpack.c.h.b16 %v4430
      %v4635 = vunpack.c.l.b16 %v4431
      %v4636 = vunpack.c.l.b16 %v4432
      %v4637 = vunpack.c.h.b16 %v4432
      %v4638 = vunpack.c.l.b16 %v4433
      %v4639 = vunpack.c.l.b16 %v4434
      %v4640 = vunpack.c.h.b16 %v4434
      %v4641 = vunpack.c.l.b16 %v4435
      %v4642 = vunpack.c.l.b16 %v4436
      %v4643 = vunpack.c.h.b16 %v4436
      %v4644 = vunpack.c.l.b16 %v4437
      %v4645 = vunpack.c.l.b16 %v4438
      %v4646 = vunpack.c.h.b16 %v4438
      %v4647 = vunpack.c.l.b16 %v4439
      %v4648 = vunpack.c.l.b16 %v4440
      %v4649 = vunpack.c.h.b16 %v4440
      %v4650 = vunpack.c.l.b16 %v4441
      %v4651 = vpack.c.b16 %v4558, %v4555
      %v4652 = vpack.c.b16 %v4559, %v4556
      %v4653 = vpack.c.b16 %v4560, %v4557
      %v4654 = vpack.c.b16 %v4564, %v4561
      %v4655 = vpack.c.b16 %v4565, %v4562
      %v4656 = vpack.c.b16 %v4566, %v4563
      %v4657 = vpack.c.b16 %v4570, %v4567
      %v4658 = vpack.c.b16 %v4571, %v4568
      %v4659 = vpack.c.b16 %v4572, %v4569
      %v4660 = vpack.c.b16 %v4576, %v4573
      %v4661 = vpack.c.b16 %v4577, %v4574
      %v4662 = vpack.c.b16 %v4578, %v4575
      %v4663 = vpack.c.b16 %v4582, %v4579
      %v4664 = vpack.c.b16 %v4583, %v4580
      %v4665 = vpack.c.b16 %v4584, %v4581
      %v4666 = vpack.c.b16 %v4588, %v4585
      %v4667 = vpack.c.b16 %v4589, %v4586
      %v4668 = vpack.c.b16 %v4590, %v4587
      %v4669 = vpack.c.b16 %v4594, %v4591
      %v4670 = vpack.c.b16 %v4595, %v4592
      %v4671 = vpack.c.b16 %v4596, %v4593
      %v4672 = vpack.c.b16 %v4600, %v4597
      %v4673 = vpack.c.b16 %v4601, %v4598
      %v4674 = vpack.c.b16 %v4602, %v4599
      %v4675 = vpack.c.b16 %v4606, %v4603
      %v4676 = vpack.c.b16 %v4607, %v4604
      %v4677 = vpack.c.b16 %v4608, %v4605
      %v4678 = vpack.c.b16 %v4612, %v4609
      %v4679 = vpack.c.b16 %v4613, %v4610
      %v4680 = vpack.c.b16 %v4614, %v4611
      %v4681 = vpack.c.b16 %v4618, %v4615
      %v4682 = vpack.c.b16 %v4619, %v4616
      %v4683 = vpack.c.b16 %v4620, %v4617
      %v4684 = vpack.c.b16 %v4624, %v4621
      %v4685 = vpack.c.b16 %v4625, %v4622
      %v4686 = vpack.c.b16 %v4626, %v4623
      %v4687 = vpack.c.b16 %v4630, %v4627
      %v4688 = vpack.c.b16 %v4631, %v4628
      %v4689 = vpack.c.b16 %v4632, %v4629
      %v4690 = vpack.c.b16 %v4636, %v4633
      %v4691 = vpack.c.b16 %v4637, %v4634
      %v4692 = vpack.c.b16 %v4638, %v4635
      %v4693 = vpack.c.b16 %v4642, %v4639
      %v4694 = vpack.c.b16 %v4643, %v4640
      %v4695 = vpack.c.b16 %v4644, %v4641
      %v4696 = vpack.c.b16 %v4648, %v4645
      %v4697 = vpack.c.b16 %v4649, %v4646
      %v4698 = vpack.c.b16 %v4650, %v4647
      %v4795 = vunpack.c.l.b16 %v4443
      %v4796 = vunpack.c.l.b16 %v4444
      %v4797 = vunpack.c.l.b16 %v4445
      %v4798 = vunpack.c.l.b16 %v4446
      %v4799 = vunpack.c.l.b16 %v4447
      %v4800 = vunpack.c.l.b16 %v4448
      %v4801 = vunpack.c.l.b16 %v4449
      %v4802 = vunpack.c.l.b16 %v4450
      %v4803 = vunpack.c.l.b16 %v4451
      %v4804 = vunpack.c.l.b16 %v4452
      %v4805 = vunpack.c.l.b16 %v4453
      %v4806 = vunpack.c.l.b16 %v4454
      %v4807 = vunpack.c.l.b16 %v4455
      %v4808 = vunpack.c.l.b16 %v4456
      %v4809 = vunpack.c.l.b16 %v4457
      %v4810 = vunpack.c.l.b16 %v4458
      %v4811 = vunpack.c.l.b16 %v4459
      %v4812 = vunpack.c.l.b16 %v4460
      %v4813 = vunpack.c.l.b16 %v4461
      %v4814 = vunpack.c.l.b16 %v4462
      %v4815 = vunpack.c.l.b16 %v4463
      %v4816 = vunpack.c.l.b16 %v4464
      %v4817 = vunpack.c.l.b16 %v4465
      %v4818 = vunpack.c.l.b16 %v4466
      %v4819 = vunpack.c.l.b16 %v4467
      %v4820 = vunpack.c.l.b16 %v4468
      %v4821 = vunpack.c.l.b16 %v4469
      %v4822 = vunpack.c.l.b16 %v4470
      %v4823 = vunpack.c.l.b16 %v4471
      %v4824 = vunpack.c.l.b16 %v4472
      %v4825 = vunpack.c.l.b16 %v4473
      %v4826 = vunpack.c.l.b16 %v4474
      %v4827 = vunpack.c.l.b16 %v4475
      %v4828 = vunpack.c.l.b16 %v4476
      %v4829 = vunpack.c.l.b16 %v4477
      %v4830 = vunpack.c.l.b16 %v4478
      %v4831 = vunpack.c.l.b16 %v4479
      %v4832 = vunpack.c.l.b16 %v4480
      %v4833 = vunpack.c.l.b16 %v4481
      %v4834 = vunpack.c.l.b16 %v4482
      %v4835 = vunpack.c.l.b16 %v4483
      %v4836 = vunpack.c.l.b16 %v4484
      %v4837 = vunpack.c.l.b16 %v4485
      %v4838 = vunpack.c.l.b16 %v4486
      %v4839 = vunpack.c.l.b16 %v4487
      %v4840 = vunpack.c.l.b16 %v4488
      %v4841 = vunpack.c.l.b16 %v4489
      %v4842 = vunpack.c.l.b16 %v4490
      %v4843 = vpack.c.b16 %v4796, %v4795
      %v4844 = vpack.c.b16 %v4798, %v4797
      %v4845 = vpack.c.b16 %v4800, %v4799
      %v4846 = vpack.c.b16 %v4802, %v4801
      %v4847 = vpack.c.b16 %v4804, %v4803
      %v4848 = vpack.c.b16 %v4806, %v4805
      %v4849 = vpack.c.b16 %v4808, %v4807
      %v4850 = vpack.c.b16 %v4810, %v4809
      %v4851 = vpack.c.b16 %v4812, %v4811
      %v4852 = vpack.c.b16 %v4814, %v4813
      %v4853 = vpack.c.b16 %v4816, %v4815
      %v4854 = vpack.c.b16 %v4818, %v4817
      %v4855 = vpack.c.b16 %v4820, %v4819
      %v4856 = vpack.c.b16 %v4822, %v4821
      %v4857 = vpack.c.b16 %v4824, %v4823
      %v4858 = vpack.c.b16 %v4826, %v4825
      %v4859 = vpack.c.b16 %v4828, %v4827
      %v4860 = vpack.c.b16 %v4830, %v4829
      %v4861 = vpack.c.b16 %v4832, %v4831
      %v4862 = vpack.c.b16 %v4834, %v4833
      %v4863 = vpack.c.b16 %v4836, %v4835
      %v4864 = vpack.c.b16 %v4838, %v4837
      %v4865 = vpack.c.b16 %v4840, %v4839
      %v4866 = vpack.c.b16 %v4842, %v4841
      %4891 = vmatprep.subr.bf16.mxu0 0
      %4892 = vmatpush1.bf16.msra.mxu0 %v4843
      %4893 = vmatprep.subr.bf16.mxu0 0
      %4894 = vmatpush1.bf16.msra.mxu0 %v4844
      %4895 = vmatprep.subr.bf16.mxu0 0
      %4896 = vmatpush1.bf16.msra.mxu0 %v4845
      %4897 = vmatprep.subr.bf16.mxu0 0
      %4898 = vmatpush1.bf16.msra.mxu0 %v4846
      %4899 = vmatprep.subr.bf16.mxu0 0
      %4900 = vmatpush1.bf16.msra.mxu0 %v4847
      %4901 = vmatprep.subr.bf16.mxu0 0
      %4902 = vmatpush1.bf16.msra.mxu0 %v4848
      %4903 = vmatprep.subr.bf16.mxu0 0
      %4904 = vmatpush1.bf16.msra.mxu0 %v4849
      %4905 = vmatprep.subr.bf16.mxu0 0
      %4906 = vmatpush1.bf16.msra.mxu0 %v4850
      %4907 = vmatprep.subr.bf16.mxu0 0
      %4908 = vmatpush1.bf16.msra.mxu0 %v4851
      %4909 = vmatprep.subr.bf16.mxu0 0
      %4910 = vmatpush1.bf16.msra.mxu0 %v4852
      %4911 = vmatprep.subr.bf16.mxu0 0
      %4912 = vmatpush1.bf16.msra.mxu0 %v4853
      %4913 = vmatprep.subr.bf16.mxu0 0
      %4914 = vmatpush1.bf16.msra.mxu0 %v4854
      %4915 = vmatprep.subr.bf16.mxu0 0
      %4916 = vmatpush1.bf16.msra.mxu0 %v4855
      %4917 = vmatprep.subr.bf16.mxu0 0
      %4918 = vmatpush1.bf16.msra.mxu0 %v4856
      %4919 = vmatprep.subr.bf16.mxu0 0
      %4920 = vmatpush1.bf16.msra.mxu0 %v4857
      %4921 = vmatprep.subr.bf16.mxu0 0
      %4922 = vmatpush1.bf16.msra.mxu0 %v4858
      %4923 = vmatprep.mubr.bf16.mxu0 %v4652
      %4924 = vmatmul.mubr.bf16.gmra.mrb[0].mxu0 %v4651
      %v4925 = vpop.f32.mrb[0].mxu0
      %v4926 = vadd.f32 0.0, %v4925
      %v4927 = vpop.f32.mrb[0].mxu0
      %v4928 = vpop.f32.mrb[0].mxu0
      %v4929 = vadd.f32 0.0, %v4928
      %v4930 = vpop.f32.mrb[0].mxu0
      %4931 = vmatprep.mubr.bf16.mxu0 %v4655
      %4932 = vmatmul.mubr.bf16.gmra.mrb[0].mxu0 %v4654
      %v4933 = vpop.f32.mrb[0].mxu0
      %v4934 = vadd.f32 0.0, %v4933
      %v4935 = vpop.f32.mrb[0].mxu0
      %v4936 = vpop.f32.mrb[0].mxu0
      %v4937 = vadd.f32 0.0, %v4936
      %v4938 = vpop.f32.mrb[0].mxu0
      %4939 = vmatprep.mubr.bf16.mxu0 %v4658
      %4940 = vmatmul.mubr.bf16.gmra.mrb[0].mxu0 %v4657
      %v4941 = vpop.f32.mrb[0].mxu0
      %v4942 = vadd.f32 0.0, %v4941
      %v4943 = vpop.f32.mrb[0].mxu0
      %v4944 = vpop.f32.mrb[0].mxu0
      %v4945 = vadd.f32 0.0, %v4944
      %v4946 = vpop.f32.mrb[0].mxu0
      %4947 = vmatprep.mubr.bf16.mxu0 %v4661
      %4948 = vmatmul.mubr.bf16.gmra.mrb[0].mxu0 %v4660
      %v4949 = vpop.f32.mrb[0].mxu0
      %v4950 = vadd.f32 0.0, %v4949
      %v4951 = vpop.f32.mrb[0].mxu0
      %v4952 = vpop.f32.mrb[0].mxu0
      %v4953 = vadd.f32 0.0, %v4952
      %v4954 = vpop.f32.mrb[0].mxu0
      %4955 = vmatprep.mubr.bf16.mxu0 %v4664
      %4956 = vmatmul.mubr.bf16.gmra.mrb[0].mxu0 %v4663
      %v4957 = vpop.f32.mrb[0].mxu0
      %v4958 = vadd.f32 0.0, %v4957
      %v4959 = vpop.f32.mrb[0].mxu0
      %v4960 = vpop.f32.mrb[0].mxu0
      %v4961 = vadd.f32 0.0, %v4960
      %v4962 = vpop.f32.mrb[0].mxu0
      %4963 = vmatprep.mubr.bf16.mxu0 %v4667
      %4964 = vmatmul.mubr.bf16.gmra.mrb[0].mxu0 %v4666
      %v4965 = vpop.f32.mrb[0].mxu0
      %v4966 = vadd.f32 0.0, %v4965
      %v4967 = vpop.f32.mrb[0].mxu0
      %v4968 = vpop.f32.mrb[0].mxu0
      %v4969 = vadd.f32 0.0, %v4968
      %v4970 = vpop.f32.mrb[0].mxu0
      %4971 = vmatprep.mubr.bf16.mxu0 %v4670
      %4972 = vmatmul.mubr.bf16.gmra.mrb[0].mxu0 %v4669
      %v4973 = vpop.f32.mrb[0].mxu0
      %v4974 = vadd.f32 0.0, %v4973
      %v4975 = vpop.f32.mrb[0].mxu0
      %v4976 = vpop.f32.mrb[0].mxu0
      %v4977 = vadd.f32 0.0, %v4976
      %v4978 = vpop.f32.mrb[0].mxu0
      %4979 = vmatprep.mubr.bf16.mxu0 %v4673
      %4980 = vmatmul.mubr.bf16.gmra.mrb[0].mxu0 %v4672
      %v4981 = vpop.f32.mrb[0].mxu0
      %v4982 = vadd.f32 0.0, %v4981
      %v4983 = vpop.f32.mrb[0].mxu0
      %v4984 = vpop.f32.mrb[0].mxu0
      %v4985 = vadd.f32 0.0, %v4984
      %v4986 = vpop.f32.mrb[0].mxu0
      %4987 = vmatprep.mubr.bf16.mxu0 %v4676
      %4988 = vmatmul.mubr.bf16.gmra.mrb[0].mxu0 %v4675
      %v4989 = vpop.f32.mrb[0].mxu0
      %v4990 = vadd.f32 0.0, %v4989
      %v4991 = vpop.f32.mrb[0].mxu0
      %v4992 = vpop.f32.mrb[0].mxu0
      %v4993 = vadd.f32 0.0, %v4992
      %v4994 = vpop.f32.mrb[0].mxu0
      %4995 = vmatprep.mubr.bf16.mxu0 %v4679
      %4996 = vmatmul.mubr.bf16.gmra.mrb[0].mxu0 %v4678
      %v4997 = vpop.f32.mrb[0].mxu0
      %v4998 = vadd.f32 0.0, %v4997
      %v4999 = vpop.f32.mrb[0].mxu0
      %v5000 = vpop.f32.mrb[0].mxu0
      %v5001 = vadd.f32 0.0, %v5000
      %v5002 = vpop.f32.mrb[0].mxu0
      %5003 = vmatprep.mubr.bf16.mxu0 %v4682
      %5004 = vmatmul.mubr.bf16.gmra.mrb[0].mxu0 %v4681
      %v5005 = vpop.f32.mrb[0].mxu0
      %v5006 = vadd.f32 0.0, %v5005
      %v5007 = vpop.f32.mrb[0].mxu0
      %v5008 = vpop.f32.mrb[0].mxu0
      %v5009 = vadd.f32 0.0, %v5008
      %v5010 = vpop.f32.mrb[0].mxu0
      %5011 = vmatprep.mubr.bf16.mxu0 %v4685
      %5012 = vmatmul.mubr.bf16.gmra.mrb[0].mxu0 %v4684
      %v5013 = vpop.f32.mrb[0].mxu0
      %v5014 = vadd.f32 0.0, %v5013
      %v5015 = vpop.f32.mrb[0].mxu0
      %v5016 = vpop.f32.mrb[0].mxu0
      %v5017 = vadd.f32 0.0, %v5016
      %v5018 = vpop.f32.mrb[0].mxu0
      %5019 = vmatprep.mubr.bf16.mxu0 %v4688
      %5020 = vmatmul.mubr.bf16.gmra.mrb[0].mxu0 %v4687
      %v5021 = vpop.f32.mrb[0].mxu0
      %v5022 = vadd.f32 0.0, %v5021
      %v5023 = vpop.f32.mrb[0].mxu0
      %v5024 = vpop.f32.mrb[0].mxu0
      %v5025 = vadd.f32 0.0, %v5024
      %v5026 = vpop.f32.mrb[0].mxu0
      %5027 = vmatprep.mubr.bf16.mxu0 %v4691
      %5028 = vmatmul.mubr.bf16.gmra.mrb[0].mxu0 %v4690
      %v5029 = vpop.f32.mrb[0].mxu0
      %v5030 = vadd.f32 0.0, %v5029
      %v5031 = vpop.f32.mrb[0].mxu0
      %v5032 = vpop.f32.mrb[0].mxu0
      %v5033 = vadd.f32 0.0, %v5032
      %v5034 = vpop.f32.mrb[0].mxu0
      %5035 = vmatprep.mubr.bf16.mxu0 %v4694
      %5036 = vmatmul.mubr.bf16.gmra.mrb[0].mxu0 %v4693
      %v5037 = vpop.f32.mrb[0].mxu0
      %v5038 = vadd.f32 0.0, %v5037
      %v5039 = vpop.f32.mrb[0].mxu0
      %v5040 = vpop.f32.mrb[0].mxu0
      %v5041 = vadd.f32 0.0, %v5040
      %v5042 = vpop.f32.mrb[0].mxu0
      %5043 = vmatprep.mubr.bf16.mxu0 %v4697
      %5044 = vmatmul.mubr.bf16.gmra.mrb[0].mxu0 %v4696
      %v5045 = vpop.f32.mrb[0].mxu0
      %v5046 = vadd.f32 0.0, %v5045
      %v5047 = vpop.f32.mrb[0].mxu0
      %v5048 = vpop.f32.mrb[0].mxu0
      %v5049 = vadd.f32 0.0, %v5048
      %v5050 = vpop.f32.mrb[0].mxu0
      %5051 = vdwg.mxu0
      %5052 = vmatprep.subr.bf16.mxu0 0
      %5053 = vmatpush1.bf16.msra.mxu0 %v4859
      %5054 = vmatprep.subr.bf16.mxu0 0
      %5055 = vmatpush1.bf16.msra.mxu0 %v4860
      %5056 = vmatprep.subr.bf16.mxu0 0
      %5057 = vmatpush1.bf16.msra.mxu0 %v4861
      %5058 = vmatprep.subr.bf16.mxu0 0
      %5059 = vmatpush1.bf16.msra.mxu0 %v4862
      %5060 = vmatprep.subr.bf16.mxu0 0
      %5061 = vmatpush1.bf16.msra.mxu0 %v4863
      %5062 = vmatprep.subr.bf16.mxu0 0
      %5063 = vmatpush1.bf16.msra.mxu0 %v4864
      %5064 = vmatprep.subr.bf16.mxu0 0
      %5065 = vmatpush1.bf16.msra.mxu0 %v4865
      %5066 = vmatprep.subr.bf16.mxu0 0
      %5067 = vmatpush1.bf16.msra.mxu0 %v4866
      %5068 = vmatprep.subr.bf16.mxu0 0
      %5069 = vmatpush1.bf16.msra.mxu0 0
      %5070 = vmatprep.subr.bf16.mxu0 0
      %5071 = vmatpush1.bf16.msra.mxu0 0
      %5072 = vmatprep.subr.bf16.mxu0 0
      %5073 = vmatpush1.bf16.msra.mxu0 0
      %5074 = vmatprep.subr.bf16.mxu0 0
      %5075 = vmatpush1.bf16.msra.mxu0 0
      %5076 = vmatprep.subr.bf16.mxu0 0
      %5077 = vmatpush1.bf16.msra.mxu0 0
      %5078 = vmatprep.subr.bf16.mxu0 0
      %5079 = vmatpush1.bf16.msra.mxu0 0
      %5080 = vmatprep.subr.bf16.mxu0 0
      %5081 = vmatpush1.bf16.msra.mxu0 0
      %5082 = vmatprep.subr.bf16.mxu0 0
      %5083 = vmatpush1.bf16.msra.mxu0 0
      %5084 = vmatprep.mubr.bf16.mxu0 0
      %5085 = vmatmul.mubr.bf16.gmra.mrb[0].mxu0 %v4653
      %v5086 = vpop.f32.mrb[0].mxu0
      %v5087 = vadd.f32 %v4926, %v5086
      %v5088 = vpop.f32.mrb[0].mxu0
      %v5089 = vpop.f32.mrb[0].mxu0
      %v5090 = vadd.f32 %v4929, %v5089
      %v5091 = vpop.f32.mrb[0].mxu0
      %5092 = vmatprep.mubr.bf16.mxu0 0
      %5093 = vmatmul.mubr.bf16.gmra.mrb[0].mxu0 %v4656
      %v5094 = vpop.f32.mrb[0].mxu0
      %v5095 = vadd.f32 %v4934, %v5094
      %v5096 = vpop.f32.mrb[0].mxu0
      %v5097 = vpop.f32.mrb[0].mxu0
      %v5098 = vadd.f32 %v4937, %v5097
      %v5099 = vpop.f32.mrb[0].mxu0
      %5100 = vmatprep.mubr.bf16.mxu0 0
      %5101 = vmatmul.mubr.bf16.gmra.mrb[0].mxu0 %v4659
      %v5102 = vpop.f32.mrb[0].mxu0
      %v5103 = vadd.f32 %v4942, %v5102
      %v5104 = vpop.f32.mrb[0].mxu0
      %v5105 = vpop.f32.mrb[0].mxu0
      %v5106 = vadd.f32 %v4945, %v5105
      %v5107 = vpop.f32.mrb[0].mxu0
      %5108 = vmatprep.mubr.bf16.mxu0 0
      %5109 = vmatmul.mubr.bf16.gmra.mrb[0].mxu0 %v4662
      %v5110 = vpop.f32.mrb[0].mxu0
      %v5111 = vadd.f32 %v4950, %v5110
      %v5112 = vpop.f32.mrb[0].mxu0
      %v5113 = vpop.f32.mrb[0].mxu0
      %v5114 = vadd.f32 %v4953, %v5113
      %v5115 = vpop.f32.mrb[0].mxu0
      %5116 = vmatprep.mubr.bf16.mxu0 0
      %5117 = vmatmul.mubr.bf16.gmra.mrb[0].mxu0 %v4665
      %v5118 = vpop.f32.mrb[0].mxu0
      %v5119 = vadd.f32 %v4958, %v5118
      %v5120 = vpop.f32.mrb[0].mxu0
      %v5121 = vpop.f32.mrb[0].mxu0
      %v5122 = vadd.f32 %v4961, %v5121
      %v5123 = vpop.f32.mrb[0].mxu0
      %5124 = vmatprep.mubr.bf16.mxu0 0
      %5125 = vmatmul.mubr.bf16.gmra.mrb[0].mxu0 %v4668
      %v5126 = vpop.f32.mrb[0].mxu0
      %v5127 = vadd.f32 %v4966, %v5126
      %v5128 = vpop.f32.mrb[0].mxu0
      %v5129 = vpop.f32.mrb[0].mxu0
      %v5130 = vadd.f32 %v4969, %v5129
      %v5131 = vpop.f32.mrb[0].mxu0
      %5132 = vmatprep.mubr.bf16.mxu0 0
      %5133 = vmatmul.mubr.bf16.gmra.mrb[0].mxu0 %v4671
      %v5134 = vpop.f32.mrb[0].mxu0
      %v5135 = vadd.f32 %v4974, %v5134
      %v5136 = vpop.f32.mrb[0].mxu0
      %v5137 = vpop.f32.mrb[0].mxu0
      %v5138 = vadd.f32 %v4977, %v5137
      %v5139 = vpop.f32.mrb[0].mxu0
      %5140 = vmatprep.mubr.bf16.mxu0 0
      %5141 = vmatmul.mubr.bf16.gmra.mrb[0].mxu0 %v4674
      %v5142 = vpop.f32.mrb[0].mxu0
      %v5143 = vadd.f32 %v4982, %v5142
      %v5144 = vpop.f32.mrb[0].mxu0
      %v5145 = vpop.f32.mrb[0].mxu0
      %v5146 = vadd.f32 %v4985, %v5145
      %v5147 = vpop.f32.mrb[0].mxu0
      %5148 = vmatprep.mubr.bf16.mxu0 0
      %5149 = vmatmul.mubr.bf16.gmra.mrb[0].mxu0 %v4677
      %v5150 = vpop.f32.mrb[0].mxu0
      %v5151 = vadd.f32 %v4990, %v5150
      %v5152 = vpop.f32.mrb[0].mxu0
      %v5153 = vpop.f32.mrb[0].mxu0
      %v5154 = vadd.f32 %v4993, %v5153
      %v5155 = vpop.f32.mrb[0].mxu0
      %5156 = vmatprep.mubr.bf16.mxu0 0
      %5157 = vmatmul.mubr.bf16.gmra.mrb[0].mxu0 %v4680
      %v5158 = vpop.f32.mrb[0].mxu0
      %v5159 = vadd.f32 %v4998, %v5158
      %v5160 = vpop.f32.mrb[0].mxu0
      %v5161 = vpop.f32.mrb[0].mxu0
      %v5162 = vadd.f32 %v5001, %v5161
      %v5163 = vpop.f32.mrb[0].mxu0
      %5164 = vmatprep.mubr.bf16.mxu0 0
      %5165 = vmatmul.mubr.bf16.gmra.mrb[0].mxu0 %v4683
      %v5166 = vpop.f32.mrb[0].mxu0
      %v5167 = vadd.f32 %v5006, %v5166
      %v5168 = vpop.f32.mrb[0].mxu0
      %v5169 = vpop.f32.mrb[0].mxu0
      %v5170 = vadd.f32 %v5009, %v5169
      %v5171 = vpop.f32.mrb[0].mxu0
      %5172 = vmatprep.mubr.bf16.mxu0 0
      %5173 = vmatmul.mubr.bf16.gmra.mrb[0].mxu0 %v4686
      %v5174 = vpop.f32.mrb[0].mxu0
      %v5175 = vadd.f32 %v5014, %v5174
      %v5176 = vpop.f32.mrb[0].mxu0
      %v5177 = vpop.f32.mrb[0].mxu0
      %v5178 = vadd.f32 %v5017, %v5177
      %v5179 = vpop.f32.mrb[0].mxu0
      %5180 = vmatprep.mubr.bf16.mxu0 0
      %5181 = vmatmul.mubr.bf16.gmra.mrb[0].mxu0 %v4689
      %v5182 = vpop.f32.mrb[0].mxu0
      %v5183 = vadd.f32 %v5022, %v5182
      %v5184 = vpop.f32.mrb[0].mxu0
      %v5185 = vpop.f32.mrb[0].mxu0
      %v5186 = vadd.f32 %v5025, %v5185
      %v5187 = vpop.f32.mrb[0].mxu0
      %5188 = vmatprep.mubr.bf16.mxu0 0
      %5189 = vmatmul.mubr.bf16.gmra.mrb[0].mxu0 %v4692
      %v5190 = vpop.f32.mrb[0].mxu0
      %v5191 = vadd.f32 %v5030, %v5190
      %v5192 = vpop.f32.mrb[0].mxu0
      %v5193 = vpop.f32.mrb[0].mxu0
      %v5194 = vadd.f32 %v5033, %v5193
      %v5195 = vpop.f32.mrb[0].mxu0
      %5196 = vmatprep.mubr.bf16.mxu0 0
      %5197 = vmatmul.mubr.bf16.gmra.mrb[0].mxu0 %v4695
      %v5198 = vpop.f32.mrb[0].mxu0
      %v5199 = vadd.f32 %v5038, %v5198
      %v5200 = vpop.f32.mrb[0].mxu0
      %v5201 = vpop.f32.mrb[0].mxu0
      %v5202 = vadd.f32 %v5041, %v5201
      %v5203 = vpop.f32.mrb[0].mxu0
      %5204 = vmatprep.mubr.bf16.mxu0 0
      %5205 = vmatmul.mubr.bf16.gmra.mrb[0].mxu0 %v4698
      %v5206 = vpop.f32.mrb[0].mxu0
      %v5207 = vadd.f32 %v5046, %v5206
      %v5208 = vpop.f32.mrb[0].mxu0
      %v5209 = vpop.f32.mrb[0].mxu0
      %v5210 = vadd.f32 %v5049, %v5209
      %v5211 = vpop.f32.mrb[0].mxu0
      %5212 = vdwg.mxu0
      %v5213 = vadd.f32 %v4060, %v5087
      %v5214 = vadd.f32 %v4063, %v5090
      %v5215 = vadd.f32 %v4068, %v5095
      %v5216 = vadd.f32 %v4071, %v5098
      %v5217 = vadd.f32 %v4076, %v5103
      %v5218 = vadd.f32 %v4079, %v5106
      %v5219 = vadd.f32 %v4084, %v5111
      %v5220 = vadd.f32 %v4087, %v5114
      %v5221 = vadd.f32 %v4092, %v5119
      %v5222 = vadd.f32 %v4095, %v5122
      %v5223 = vadd.f32 %v4100, %v5127
      %v5224 = vadd.f32 %v4103, %v5130
      %v5225 = vadd.f32 %v4108, %v5135
      %v5226 = vadd.f32 %v4111, %v5138
      %v5227 = vadd.f32 %v4116, %v5143
      %v5228 = vadd.f32 %v4119, %v5146
      %v5229 = vadd.f32 %v4124, %v5151
      %v5230 = vadd.f32 %v4127, %v5154
      %v5231 = vadd.f32 %v4132, %v5159
      %v5232 = vadd.f32 %v4135, %v5162
      %v5233 = vadd.f32 %v4140, %v5167
      %v5234 = vadd.f32 %v4143, %v5170
      %v5235 = vadd.f32 %v4148, %v5175
      %v5236 = vadd.f32 %v4151, %v5178
      %v5237 = vadd.f32 %v4156, %v5183
      %v5238 = vadd.f32 %v4159, %v5186
      %v5239 = vadd.f32 %v4164, %v5191
      %v5240 = vadd.f32 %v4167, %v5194
      %v5241 = vadd.f32 %v4172, %v5199
      %v5242 = vadd.f32 %v4175, %v5202
      %v5243 = vadd.f32 %v4180, %v5207
      %v5244 = vadd.f32 %v4183, %v5210
      %vm5245 = vcmp.ge.f32.partialorder %v5213, 0.0
      %vm5246 = vcmp.ge.f32.partialorder %v5214, 0.0
      %vm5247 = vcmp.ge.f32.partialorder %v5215, 0.0
      %vm5248 = vcmp.ge.f32.partialorder %v5216, 0.0
      %vm5249 = vcmp.ge.f32.partialorder %v5217, 0.0
      %vm5250 = vcmp.ge.f32.partialorder %v5218, 0.0
      %vm5251 = vcmp.ge.f32.partialorder %v5219, 0.0
      %vm5252 = vcmp.ge.f32.partialorder %v5220, 0.0
      %vm5253 = vcmp.ge.f32.partialorder %v5221, 0.0
      %vm5254 = vcmp.ge.f32.partialorder %v5222, 0.0
      %vm5255 = vcmp.ge.f32.partialorder %v5223, 0.0
      %vm5256 = vcmp.ge.f32.partialorder %v5224, 0.0
      %vm5257 = vcmp.ge.f32.partialorder %v5225, 0.0
      %vm5258 = vcmp.ge.f32.partialorder %v5226, 0.0
      %vm5259 = vcmp.ge.f32.partialorder %v5227, 0.0
      %vm5260 = vcmp.ge.f32.partialorder %v5228, 0.0
      %vm5261 = vcmp.ge.f32.partialorder %v5229, 0.0
      %vm5262 = vcmp.ge.f32.partialorder %v5230, 0.0
      %vm5263 = vcmp.ge.f32.partialorder %v5231, 0.0
      %vm5264 = vcmp.ge.f32.partialorder %v5232, 0.0
      %vm5265 = vcmp.ge.f32.partialorder %v5233, 0.0
      %vm5266 = vcmp.ge.f32.partialorder %v5234, 0.0
      %vm5267 = vcmp.ge.f32.partialorder %v5235, 0.0
      %vm5268 = vcmp.ge.f32.partialorder %v5236, 0.0
      %vm5269 = vcmp.ge.f32.partialorder %v5237, 0.0
      %vm5270 = vcmp.ge.f32.partialorder %v5238, 0.0
      %vm5271 = vcmp.ge.f32.partialorder %v5239, 0.0
      %vm5272 = vcmp.ge.f32.partialorder %v5240, 0.0
      %vm5273 = vcmp.ge.f32.partialorder %v5241, 0.0
      %vm5274 = vcmp.ge.f32.partialorder %v5242, 0.0
      %vm5275 = vcmp.ge.f32.partialorder %v5243, 0.0
      %vm5276 = vcmp.ge.f32.partialorder %v5244, 0.0
      %v5277 = vmul.f32 %v5213, 0.01
      %v5278 = vmul.f32 %v5214, 0.01
      %v5279 = vmul.f32 %v5215, 0.01
      %v5280 = vmul.f32 %v5216, 0.01
      %v5281 = vmul.f32 %v5217, 0.01
      %v5282 = vmul.f32 %v5218, 0.01
      %v5283 = vmul.f32 %v5219, 0.01
      %v5284 = vmul.f32 %v5220, 0.01
      %v5285 = vmul.f32 %v5221, 0.01
      %v5286 = vmul.f32 %v5222, 0.01
      %v5287 = vmul.f32 %v5223, 0.01
      %v5288 = vmul.f32 %v5224, 0.01
      %v5289 = vmul.f32 %v5225, 0.01
      %v5290 = vmul.f32 %v5226, 0.01
      %v5291 = vmul.f32 %v5227, 0.01
      %v5292 = vmul.f32 %v5228, 0.01
      %v5293 = vmul.f32 %v5229, 0.01
      %v5294 = vmul.f32 %v5230, 0.01
      %v5295 = vmul.f32 %v5231, 0.01
      %v5296 = vmul.f32 %v5232, 0.01
      %v5297 = vmul.f32 %v5233, 0.01
      %v5298 = vmul.f32 %v5234, 0.01
      %v5299 = vmul.f32 %v5235, 0.01
      %v5300 = vmul.f32 %v5236, 0.01
      %v5301 = vmul.f32 %v5237, 0.01
      %v5302 = vmul.f32 %v5238, 0.01
      %v5303 = vmul.f32 %v5239, 0.01
      %v5304 = vmul.f32 %v5240, 0.01
      %v5305 = vmul.f32 %v5241, 0.01
      %v5306 = vmul.f32 %v5242, 0.01
      %v5307 = vmul.f32 %v5243, 0.01
      %v5308 = vmul.f32 %v5244, 0.01
      %v5309 = vsel %vm5245, %v5213, %v5277
      %v5310 = vsel %vm5246, %v5214, %v5278
      %v5311 = vsel %vm5247, %v5215, %v5279
      %v5312 = vsel %vm5248, %v5216, %v5280
      %v5313 = vsel %vm5249, %v5217, %v5281
      %v5314 = vsel %vm5250, %v5218, %v5282
      %v5315 = vsel %vm5251, %v5219, %v5283
      %v5316 = vsel %vm5252, %v5220, %v5284
      %v5317 = vsel %vm5253, %v5221, %v5285
      %v5318 = vsel %vm5254, %v5222, %v5286
      %v5319 = vsel %vm5255, %v5223, %v5287
      %v5320 = vsel %vm5256, %v5224, %v5288
      %v5321 = vsel %vm5257, %v5225, %v5289
      %v5322 = vsel %vm5258, %v5226, %v5290
      %v5323 = vsel %vm5259, %v5227, %v5291
      %v5324 = vsel %vm5260, %v5228, %v5292
      %v5325 = vsel %vm5261, %v5229, %v5293
      %v5326 = vsel %vm5262, %v5230, %v5294
      %v5327 = vsel %vm5263, %v5231, %v5295
      %v5328 = vsel %vm5264, %v5232, %v5296
      %v5329 = vsel %vm5265, %v5233, %v5297
      %v5330 = vsel %vm5266, %v5234, %v5298
      %v5331 = vsel %vm5267, %v5235, %v5299
      %v5332 = vsel %vm5268, %v5236, %v5300
      %v5333 = vsel %vm5269, %v5237, %v5301
      %v5334 = vsel %vm5270, %v5238, %v5302
      %v5335 = vsel %vm5271, %v5239, %v5303
      %v5336 = vsel %vm5272, %v5240, %v5304
      %v5337 = vsel %vm5273, %v5241, %v5305
      %v5338 = vsel %vm5274, %v5242, %v5306
      %v5339 = vsel %vm5275, %v5243, %v5307
      %v5340 = vsel %vm5276, %v5244, %v5308
      %v5341 = vpack.c.bf16 %v5310, %v5309
      %v5342 = vpack.c.bf16 %v5312, %v5311
      %v5343 = vpack.c.bf16 %v5314, %v5313
      %v5344 = vpack.c.bf16 %v5316, %v5315
      %v5345 = vpack.c.bf16 %v5318, %v5317
      %v5346 = vpack.c.bf16 %v5320, %v5319
      %v5347 = vpack.c.bf16 %v5322, %v5321
      %v5348 = vpack.c.bf16 %v5324, %v5323
      %v5349 = vpack.c.bf16 %v5326, %v5325
      %v5350 = vpack.c.bf16 %v5328, %v5327
      %v5351 = vpack.c.bf16 %v5330, %v5329
      %v5352 = vpack.c.bf16 %v5332, %v5331
      %v5353 = vpack.c.bf16 %v5334, %v5333
      %v5354 = vpack.c.bf16 %v5336, %v5335
      %v5355 = vpack.c.bf16 %v5338, %v5337
      %v5356 = vpack.c.bf16 %v5340, %v5339
      %v5373 = vunpack.c.l.b16 %v5341
      %v5374 = vunpack.c.h.b16 %v5341
      %v5375 = vunpack.c.l.b16 %v5342
      %v5376 = vunpack.c.h.b16 %v5342
      %v5377 = vunpack.c.l.b16 %v5343
      %v5378 = vunpack.c.h.b16 %v5343
      %v5379 = vunpack.c.l.b16 %v5344
      %v5380 = vunpack.c.h.b16 %v5344
      %v5381 = vunpack.c.l.b16 %v5345
      %v5382 = vunpack.c.h.b16 %v5345
      %v5383 = vunpack.c.l.b16 %v5346
      %v5384 = vunpack.c.h.b16 %v5346
      %v5385 = vunpack.c.l.b16 %v5347
      %v5386 = vunpack.c.h.b16 %v5347
      %v5387 = vunpack.c.l.b16 %v5348
      %v5388 = vunpack.c.h.b16 %v5348
      %v5389 = vunpack.c.l.b16 %v5349
      %v5390 = vunpack.c.h.b16 %v5349
      %v5391 = vunpack.c.l.b16 %v5350
      %v5392 = vunpack.c.h.b16 %v5350
      %v5393 = vunpack.c.l.b16 %v5351
      %v5394 = vunpack.c.h.b16 %v5351
      %v5395 = vunpack.c.l.b16 %v5352
      %v5396 = vunpack.c.h.b16 %v5352
      %v5397 = vunpack.c.l.b16 %v5353
      %v5398 = vunpack.c.h.b16 %v5353
      %v5399 = vunpack.c.l.b16 %v5354
      %v5400 = vunpack.c.h.b16 %v5354
      %v5401 = vunpack.c.l.b16 %v5355
      %v5402 = vunpack.c.h.b16 %v5355
      %v5403 = vunpack.c.l.b16 %v5356
      %v5404 = vunpack.c.h.b16 %v5356
      %v5405 = vpack.c.b16 %v5373, %v5373
      %v5406 = vpack.c.b16 %v5374, %v5374
      %v5407 = vpack.c.b16 %v5375, %v5375
      %v5408 = vpack.c.b16 %v5376, %v5376
      %v5409 = vpack.c.b16 %v5377, %v5377
      %v5410 = vpack.c.b16 %v5378, %v5378
      %v5411 = vpack.c.b16 %v5379, %v5379
      %v5412 = vpack.c.b16 %v5380, %v5380
      %v5413 = vpack.c.b16 %v5381, %v5381
      %v5414 = vpack.c.b16 %v5382, %v5382
      %v5415 = vpack.c.b16 %v5383, %v5383
      %v5416 = vpack.c.b16 %v5384, %v5384
      %v5417 = vpack.c.b16 %v5385, %v5385
      %v5418 = vpack.c.b16 %v5386, %v5386
      %v5419 = vpack.c.b16 %v5387, %v5387
      %v5420 = vpack.c.b16 %v5388, %v5388
      %v5421 = vpack.c.b16 %v5389, %v5389
      %v5422 = vpack.c.b16 %v5390, %v5390
      %v5423 = vpack.c.b16 %v5391, %v5391
      %v5424 = vpack.c.b16 %v5392, %v5392
      %v5425 = vpack.c.b16 %v5393, %v5393
      %v5426 = vpack.c.b16 %v5394, %v5394
      %v5427 = vpack.c.b16 %v5395, %v5395
      %v5428 = vpack.c.b16 %v5396, %v5396
      %v5429 = vpack.c.b16 %v5397, %v5397
      %v5430 = vpack.c.b16 %v5398, %v5398
      %v5431 = vpack.c.b16 %v5399, %v5399
      %v5432 = vpack.c.b16 %v5400, %v5400
      %v5433 = vpack.c.b16 %v5401, %v5401
      %v5434 = vpack.c.b16 %v5402, %v5402
      %v5435 = vpack.c.b16 %v5403, %v5403
      %v5436 = vpack.c.b16 %v5404, %v5404
      %5469 = vst [vmem:[%s237] sm:$0xf] %v5405
      %5470 = vst [vmem:[%s237 + $0x4] sm:$0xf] %v5406
      %5471 = vst [vmem:[%s237 + $0x8] sm:$0xf] %v5407
      %5472 = vst [vmem:[%s237 + $0xc] sm:$0xf] %v5408
      %5473 = vst [vmem:[%s237 + $0x10] sm:$0xf] %v5409
      %5474 = vst [vmem:[%s237 + $0x14] sm:$0xf] %v5410
      %5475 = vst [vmem:[%s237 + $0x18] sm:$0xf] %v5411
      %5476 = vst [vmem:[%s237 + $0x1c] sm:$0xf] %v5412
      %5477 = vst [vmem:[%s237 + $0x20] sm:$0xf] %v5413
      %5478 = vst [vmem:[%s237 + $0x24] sm:$0xf] %v5414
      %5479 = vst [vmem:[%s237 + $0x28] sm:$0xf] %v5415
      %5480 = vst [vmem:[%s237 + $0x2c] sm:$0xf] %v5416
      %5481 = vst [vmem:[%s237 + $0x30] sm:$0xf] %v5417
      %5482 = vst [vmem:[%s237 + $0x34] sm:$0xf] %v5418
      %5483 = vst [vmem:[%s237 + $0x38] sm:$0xf] %v5419
      %5484 = vst [vmem:[%s237 + $0x3c] sm:$0xf] %v5420
      %5485 = vst [vmem:[%s237 + $0x40] sm:$0xf] %v5421
      %5486 = vst [vmem:[%s237 + $0x44] sm:$0xf] %v5422
      %5487 = vst [vmem:[%s237 + $0x48] sm:$0xf] %v5423
      %5488 = vst [vmem:[%s237 + $0x4c] sm:$0xf] %v5424
      %5489 = vst [vmem:[%s237 + $0x50] sm:$0xf] %v5425
      %5490 = vst [vmem:[%s237 + $0x54] sm:$0xf] %v5426
      %5491 = vst [vmem:[%s237 + $0x58] sm:$0xf] %v5427
      %5492 = vst [vmem:[%s237 + $0x5c] sm:$0xf] %v5428
      %5493 = vst [vmem:[%s237 + $0x60] sm:$0xf] %v5429
      %5494 = vst [vmem:[%s237 + $0x64] sm:$0xf] %v5430
      %5495 = vst [vmem:[%s237 + $0x68] sm:$0xf] %v5431
      %5496 = vst [vmem:[%s237 + $0x6c] sm:$0xf] %v5432
      %5497 = vst [vmem:[%s237 + $0x70] sm:$0xf] %v5433
      %5498 = vst [vmem:[%s237 + $0x74] sm:$0xf] %v5434
      %5499 = vst [vmem:[%s237 + $0x78] sm:$0xf] %v5435
      %5500 = vst [vmem:[%s237 + $0x7c] sm:$0xf] %v5436
      %p5501 = scmp.lt.s32.totalorder %s17, 1
      %s5502 = scalar_select %p5501, %s17, 1
      %s5503 = smul.addr %s5502, 8
      %s5504 = smul.addr %s5503, 8
      %s5505 = scalar_lea.vmem %s4, %s5504
      %p5506 = scmp.lt.s32.totalorder %s17, 1
      %s5507 = scalar_select %p5506, %s17, 1
      %s5508 = smul.addr %s5507, 32
      %s5509 = smul.addr %s5508, 4
      %s5510 = scalar_lea.vmem %s5, %s5509
      // Predicated region
      $region37: #{res_block_down.2} parent=35 // pred_check
        %p5511 = pneg %p124
      $region38: #{res_block_down.2} parent=35 // pred_check_branch
        %5513 = sbr.rel (%p5511) target = $region40
      $region39: #{res_block_down.2} parent=35 // pred_region
        _
      $region40: #{res_block_down.2} parent=35 // pred_fallthru
        _
      // Predicated region
      $region41: #{res_block_down.2} parent=35 // pred_check
        %p5514 = pneg %p150
      $region42: #{res_block_down.2} parent=35 // pred_check_branch
        %5516 = sbr.rel (%p5514) target = $region44
      $region43: #{res_block_down.2} parent=35 // pred_region
        _
      $region44: #{res_block_down.2} parent=35 // pred_fallthru
        _
    $region36: #{res_block_down.2} parent=5 // pred_fallthru
      _
    %p5517 = scmp.le.s32.totalorder 2, %s12
    // Predicated region
    $region45: #{res_block_down.2} parent=5 // pred_check
      %p5518 = pneg %p5517
    $region46: #{res_block_down.2} parent=5 // pred_check_branch
      %5520 = sbr.rel (%p5518) target = $region48
    $region47: #{res_block_down.2} parent=5 // pred_region
      %s5521 = ssub.s32 %s12, 2
      // Predicated region
      $region49: #{res_block_down.2} parent=47 // pred_check
        %p5522 = pneg %p130
      $region50: #{res_block_down.2} parent=47 // pred_check_branch
        %5524 = sbr.rel (%p5522) target = $region52
      $region51: #{res_block_down.2} parent=47 // pred_region
        %p5525 = scmp.lt.s32.totalorder %s18, 1
        %s5526 = scalar_select %p5525, %s18, 1
        %s5527 = smul.addr %s5526, 8
        %s5528 = smul.addr %s5527, 8
        %s5529 = scalar_lea.vmem %s4, %s5528
      $region52: #{res_block_down.2} parent=47 // pred_fallthru
        _
      // Predicated region
      $region53: #{res_block_down.2} parent=47 // pred_check
        %p5530 = pneg %p156
      $region54: #{res_block_down.2} parent=47 // pred_check_branch
        %5532 = sbr.rel (%p5530) target = $region56
      $region55: #{res_block_down.2} parent=47 // pred_region
        %p5533 = scmp.lt.s32.totalorder %s18, 1
        %s5534 = scalar_select %p5533, %s18, 1
        %s5535 = smul.addr %s5534, 32
        %s5536 = smul.addr %s5535, 4
        %s5537 = scalar_lea.vmem %s5, %s5536
      $region56: #{res_block_down.2} parent=47 // pred_fallthru
        _
    $region48: #{res_block_down.2} parent=5 // pred_fallthru
      _
  $region6: #{res_block_down.2} parent=0 // loop_footer
    %s16 = sadd.s32 1, %s12
  $region7: #{res_block_down.2} parent=0 // loop_footer_branch
    %11 = sbr.rel target = $region3
  $region8: #{res_block_down.2} parent=0 // loop_exit
    _

</llo_original>
